<compile_context>
chip_gen: v5e
topology: v5e:2x2
jax: 0.10.0
libtpu: 0.0.40
codegen_flags: <defaults>
</compile_context>

<pallas_src>
import jax
import jax.numpy as jnp
from jax.experimental import pallas as pl
from jax.experimental.pallas import tpu as pltpu

H = 512  # LSTM hidden size (hard-coded by the PyTorch module)


# ---------------------------------------------------------------------------
# Kernel (entire forward pass, single program)
# ---------------------------------------------------------------------------
def _fused_kernel(x_ref, w0_ref, b0_ref, w1_ref, b1_ref, out_ref):
    """Whole dsn_temporal forward in one program.

    x_ref  : (B, F)    f32   (cast to bf16 in-kernel)
    w0_ref : (F, 8H)   bf16  cols = [fwd: i|g|o|res_lo | bwd: i|g|o|res_hi]
    b0_ref : (1, 8H)   f32
    w1_ref : (2H, 6H)  bf16  cols = [fwd: i|g|o | bwd: i|g|o]
    b1_ref : (1, 6H)   f32
    out_ref: (B, 2H)   f32
    """

    def cell(i, g, o):
        # zero-state single-step LSTM: c = sig(i)*tanh(g); h = sig(o)*tanh(c)
        return jax.nn.sigmoid(o) * jnp.tanh(jax.nn.sigmoid(i) * jnp.tanh(g))

    x = x_ref[...].astype(jnp.bfloat16)

    # ---- layer-0 LSTM (both directions) + residual Linear: one fused dot ----
    fused = jnp.dot(x, w0_ref[...],
                    preferred_element_type=jnp.float32) + b0_ref[...]
    h0f = cell(fused[:, 0 * H:1 * H], fused[:, 1 * H:2 * H], fused[:, 2 * H:3 * H])
    res_f = fused[:, 3 * H:4 * H]
    h0b = cell(fused[:, 4 * H:5 * H], fused[:, 5 * H:6 * H], fused[:, 6 * H:7 * H])
    res_b = fused[:, 7 * H:8 * H]

    # ---- layer-1 LSTM (both directions) on concat(h0f, h0b): one fused dot ----
    y0 = jnp.concatenate([h0f, h0b], axis=-1).astype(jnp.bfloat16)
    gates = jnp.dot(y0, w1_ref[...],
                    preferred_element_type=jnp.float32) + b1_ref[...]
    h1f = cell(gates[:, 0 * H:1 * H], gates[:, 1 * H:2 * H], gates[:, 2 * H:3 * H])
    h1b = cell(gates[:, 3 * H:4 * H], gates[:, 4 * H:5 * H], gates[:, 5 * H:6 * H])

    # ---- out = res * blstm, single lane-dense f32 full-tile store ----
    out_ref[...] = jnp.concatenate([res_f * h1f, res_b * h1b], axis=-1)


# ---------------------------------------------------------------------------
# Wrapper
# ---------------------------------------------------------------------------
def _vmem_limit_bytes(arrays, out_bytes):
    # Single program, no grid: every operand/result block is single-buffered
    # and used exactly once; add f32 intermediates + compiler headroom.
    blocks = sum(int(a.size) * a.dtype.itemsize for a in arrays) + out_bytes
    need = blocks + (4 << 20) + (8 << 20)
    # Floor at the 16 MiB default; cap safely below v7x's 64 MiB physical VMEM.
    return int(min(max(need, 16 << 20), 56 << 20))


def dsn_temporal_forward(x, params):
    """x: (B, C, F) float32. Returns (B, 1024) float32."""
    B = x.shape[0]
    x_flat = x.reshape(B, -1)          # flatten(1, 2); bf16 cast happens in-kernel

    w0 = params["w0_pack"]             # (F, 8H)  bf16
    b0 = params["b0_pack"]             # (1, 8H)  f32
    w1 = params["w1_pack"]             # (2H, 6H) bf16
    b1 = params["b1_pack"]             # (1, 6H)  f32

    vmem = _vmem_limit_bytes((x_flat, w0, b0, w1, b1), out_bytes=B * 2 * H * 4)

    return pl.pallas_call(
        _fused_kernel,
        out_shape=jax.ShapeDtypeStruct((B, 2 * H), jnp.float32),
        compiler_params=pltpu.CompilerParams(vmem_limit_bytes=vmem),
    )(x_flat, w0, b0, w1, b1)


# ---------------------------------------------------------------------------
# Parameter construction (synthetic, PyTorch-layout faithful conversion)
# ---------------------------------------------------------------------------
def init_params(key, features_len):
    """Synthetic params in PyTorch layout, converted to the packed kernel form.

    Conversion from a real PyTorch `dsn_temporal`:
      * per layer/direction: take weight_ih (4H, in), bias_ih + bias_hh (4H,),
        gate row order [i, f, g, o]; DROP the f rows (c_prev == 0), transpose.
        weight_hh never contributes (multiplies zero state).
      * residual Linear(F, 1024): weight (1024, F) transposed, bias (1024,).
      * pack: W0 = [w0f(i,g,o) | wres[:, :H] | w0b(i,g,o) | wres[:, H:]],
              W1 = [w1f(i,g,o) | w1b(i,g,o)]; weights stored as bfloat16.
    """
    ks = jax.random.split(key, 16)
    s_lstm = 1.0 / jnp.sqrt(jnp.float32(H))
    s_lin = 1.0 / jnp.sqrt(jnp.float32(features_len))

    def u(k, shape, s):
        return jax.random.uniform(k, shape, jnp.float32, -s, s)

    def lstm_dir(kw, kbi, kbh, in_dim):
        w_ih = u(kw, (4 * H, in_dim), s_lstm)                       # rows: [i, f, g, o]
        bias = u(kbi, (4 * H,), s_lstm) + u(kbh, (4 * H,), s_lstm)  # bias_ih + bias_hh
        w_keep = jnp.concatenate([w_ih[:H], w_ih[2 * H:]], axis=0)  # drop f rows
        b_keep = jnp.concatenate([bias[:H], bias[2 * H:]], axis=0)
        return w_keep.T, b_keep[None, :]                            # (in, 3H), (1, 3H)

    w0f, b0f = lstm_dir(ks[0], ks[1], ks[2], features_len)
    w0b, b0b = lstm_dir(ks[3], ks[4], ks[5], features_len)
    w1f, b1f = lstm_dir(ks[6], ks[7], ks[8], 2 * H)
    w1b, b1b = lstm_dir(ks[9], ks[10], ks[11], 2 * H)

    w_res = u(ks[12], (2 * H, features_len), s_lin).T               # (F, 2H)
    b_res = u(ks[13], (2 * H,), s_lin)[None, :]                     # (1, 2H)

    params = {
        "w0_pack": jnp.concatenate(
            [w0f, w_res[:, :H], w0b, w_res[:, H:]], axis=1).astype(jnp.bfloat16),
        "b0_pack": jnp.concatenate(
            [b0f, b_res[:, :H], b0b, b_res[:, H:]], axis=1),
        "w1_pack": jnp.concatenate([w1f, w1b], axis=1).astype(jnp.bfloat16),
        "b1_pack": jnp.concatenate([b1f, b1b], axis=1),
        # unpacked f32 copies, used only by the pure-JAX reference below
        "ref": {"w0f": w0f, "b0f": b0f, "w0b": w0b, "b0b": b0b,
                "w1f": w1f, "b1f": b1f, "w1b": w1b, "b1b": b1b,
                "wres": w_res, "bres": b_res},
    }
    return params


# ---------------------------------------------------------------------------
# Pure-JAX reference (mirrors the PyTorch forward at bf16 weight/act precision)
# ---------------------------------------------------------------------------
def _reference(x, params):
    p = params["ref"]
    xf = x.reshape(x.shape[0], -1).astype(jnp.bfloat16)

    def dot(a, w):
        return jnp.dot(a, w.astype(jnp.bfloat16),
                       preferred_element_type=jnp.float32)

    def cell(gates):
        i = jax.nn.sigmoid(gates[:, :H])
        g = jnp.tanh(gates[:, H:2 * H])
        o = jax.nn.sigmoid(gates[:, 2 * H:])
        return o * jnp.tanh(i * g)

    h0f = cell(dot(xf, p["w0f"]) + p["b0f"])
    h0b = cell(dot(xf, p["w0b"]) + p["b0b"])
    y0 = jnp.concatenate([h0f, h0b], axis=-1).astype(jnp.bfloat16)
    h1f = cell(dot(y0, p["w1f"]) + p["b1f"])
    h1b = cell(dot(y0, p["w1b"]) + p["b1b"])
    blstm = jnp.concatenate([h1f, h1b], axis=-1)
    res = dot(xf, p["wres"]) + p["bres"]
    return res * blstm


if __name__ == "__main__":
    key = jax.random.PRNGKey(0)
    k_x, k_p = jax.random.split(key)

    B, C, F = 8, 4, 32            # features_len = C * F = 128
    features_len = C * F

    x = jax.random.normal(k_x, (B, C, F), dtype=jnp.float32)
    params = init_params(k_p, features_len)

    out = jax.block_until_ready(dsn_temporal_forward(x, params))
    ref = _reference(x, params)

    assert out.shape == (B, 2 * H)
    max_err = float(jnp.max(jnp.abs(out - ref)))
    assert jnp.allclose(out, ref, atol=2e-3, rtol=2e-3), f"mismatch: {max_err}"

    print("KERNEL_OK")
</pallas_src>

<mosaic_0001>
module attributes {stable_mosaic.version = 11 : i64} {
  func.func @_fused_kernel(%arg0: memref<8x128xf32, #tpu.memory_space<vmem>>, %arg1: memref<128x4096xbf16, #tpu.memory_space<vmem>>, %arg2: memref<1x4096xf32, #tpu.memory_space<vmem>>, %arg3: memref<1024x3072xbf16, #tpu.memory_space<vmem>>, %arg4: memref<1x3072xf32, #tpu.memory_space<vmem>>, %arg5: memref<8x1024xf32, #tpu.memory_space<vmem>>) attributes {dimension_semantics = [], scalar_prefetch = 0 : i64, scratch_operands = 0 : i64, tpu.core_type = #tpu.core_type<tc>} {
    %c0 = arith.constant 0 : index
    %c0_0 = arith.constant 0 : index
    %0 = vector.load %arg0[%c0, %c0_0] : memref<8x128xf32, #tpu.memory_space<vmem>>, vector<8x128xf32>
    %1 = arith.truncf %0 : vector<8x128xf32> to vector<8x128xbf16>
    %c0_1 = arith.constant 0 : index
    %c0_2 = arith.constant 0 : index
    %2 = vector.load %arg1[%c0_1, %c0_2] : memref<128x4096xbf16, #tpu.memory_space<vmem>>, vector<128x4096xbf16>
    %cst = arith.constant dense<0.000000e+00> : vector<8x4096xf32>
    %3 = tpu.matmul %1, %2, %cst {dimension_numbers = #tpu.dot_dimension_numbers<[1], [0], [0], [1], [0, 0, 1, 1], [], []>} : vector<8x128xbf16>, vector<128x4096xbf16>, vector<8x4096xf32> -> vector<8x4096xf32>
    %c0_3 = arith.constant 0 : index
    %c0_4 = arith.constant 0 : index
    %4 = vector.load %arg2[%c0_3, %c0_4] : memref<1x4096xf32, #tpu.memory_space<vmem>>, vector<1x4096xf32>
    %5 = vector.broadcast %4 : vector<1x4096xf32> to vector<8x4096xf32>
    %6 = arith.addf %3, %5 : vector<8x4096xf32>
    %7 = vector.extract_strided_slice %6 {offsets = [0, 0], sizes = [8, 512], strides = [1, 1]} : vector<8x4096xf32> to vector<8x512xf32>
    %8 = vector.extract_strided_slice %6 {offsets = [0, 512], sizes = [8, 512], strides = [1, 1]} : vector<8x4096xf32> to vector<8x512xf32>
    %9 = vector.extract_strided_slice %6 {offsets = [0, 1024], sizes = [8, 512], strides = [1, 1]} : vector<8x4096xf32> to vector<8x512xf32>
    %10 = arith.negf %9 : vector<8x512xf32>
    %11 = math.exp %10 : vector<8x512xf32>
    %cst_5 = arith.constant 1.000000e+00 : f32
    %12 = vector.broadcast %cst_5 : f32 to vector<8x512xf32>
    %13 = arith.addf %12, %11 : vector<8x512xf32>
    %14 = arith.divf %12, %13 : vector<8x512xf32>
    %15 = arith.negf %7 : vector<8x512xf32>
    %16 = math.exp %15 : vector<8x512xf32>
    %cst_6 = arith.constant 1.000000e+00 : f32
    %17 = vector.broadcast %cst_6 : f32 to vector<8x512xf32>
    %18 = arith.addf %17, %16 : vector<8x512xf32>
    %19 = arith.divf %17, %18 : vector<8x512xf32>
    %20 = math.tanh %8 : vector<8x512xf32>
    %21 = arith.mulf %19, %20 : vector<8x512xf32>
    %22 = math.tanh %21 : vector<8x512xf32>
    %23 = arith.mulf %14, %22 : vector<8x512xf32>
    %24 = vector.extract_strided_slice %6 {offsets = [0, 1536], sizes = [8, 512], strides = [1, 1]} : vector<8x4096xf32> to vector<8x512xf32>
    %25 = vector.extract_strided_slice %6 {offsets = [0, 2048], sizes = [8, 512], strides = [1, 1]} : vector<8x4096xf32> to vector<8x512xf32>
    %26 = vector.extract_strided_slice %6 {offsets = [0, 2560], sizes = [8, 512], strides = [1, 1]} : vector<8x4096xf32> to vector<8x512xf32>
    %27 = vector.extract_strided_slice %6 {offsets = [0, 3072], sizes = [8, 512], strides = [1, 1]} : vector<8x4096xf32> to vector<8x512xf32>
    %28 = arith.negf %27 : vector<8x512xf32>
    %29 = math.exp %28 : vector<8x512xf32>
    %cst_7 = arith.constant 1.000000e+00 : f32
    %30 = vector.broadcast %cst_7 : f32 to vector<8x512xf32>
    %31 = arith.addf %30, %29 : vector<8x512xf32>
    %32 = arith.divf %30, %31 : vector<8x512xf32>
    %33 = arith.negf %25 : vector<8x512xf32>
    %34 = math.exp %33 : vector<8x512xf32>
    %cst_8 = arith.constant 1.000000e+00 : f32
    %35 = vector.broadcast %cst_8 : f32 to vector<8x512xf32>
    %36 = arith.addf %35, %34 : vector<8x512xf32>
    %37 = arith.divf %35, %36 : vector<8x512xf32>
    %38 = math.tanh %26 : vector<8x512xf32>
    %39 = arith.mulf %37, %38 : vector<8x512xf32>
    %40 = math.tanh %39 : vector<8x512xf32>
    %41 = arith.mulf %32, %40 : vector<8x512xf32>
    %42 = vector.extract_strided_slice %6 {offsets = [0, 3584], sizes = [8, 512], strides = [1, 1]} : vector<8x4096xf32> to vector<8x512xf32>
    %43 = tpu.concatenate %23, %41 in 1 : vector<8x512xf32>, vector<8x512xf32> -> vector<8x1024xf32>
    %44 = arith.truncf %43 : vector<8x1024xf32> to vector<8x1024xbf16>
    %c0_9 = arith.constant 0 : index
    %c0_10 = arith.constant 0 : index
    %45 = vector.load %arg3[%c0_9, %c0_10] : memref<1024x3072xbf16, #tpu.memory_space<vmem>>, vector<1024x3072xbf16>
    %cst_11 = arith.constant dense<0.000000e+00> : vector<8x3072xf32>
    %46 = tpu.matmul %44, %45, %cst_11 {dimension_numbers = #tpu.dot_dimension_numbers<[1], [0], [0], [1], [0, 0, 1, 1], [], []>} : vector<8x1024xbf16>, vector<1024x3072xbf16>, vector<8x3072xf32> -> vector<8x3072xf32>
    %c0_12 = arith.constant 0 : index
    %c0_13 = arith.constant 0 : index
    %47 = vector.load %arg4[%c0_12, %c0_13] : memref<1x3072xf32, #tpu.memory_space<vmem>>, vector<1x3072xf32>
    %48 = vector.broadcast %47 : vector<1x3072xf32> to vector<8x3072xf32>
    %49 = arith.addf %46, %48 : vector<8x3072xf32>
    %50 = vector.extract_strided_slice %49 {offsets = [0, 0], sizes = [8, 512], strides = [1, 1]} : vector<8x3072xf32> to vector<8x512xf32>
    %51 = vector.extract_strided_slice %49 {offsets = [0, 512], sizes = [8, 512], strides = [1, 1]} : vector<8x3072xf32> to vector<8x512xf32>
    %52 = vector.extract_strided_slice %49 {offsets = [0, 1024], sizes = [8, 512], strides = [1, 1]} : vector<8x3072xf32> to vector<8x512xf32>
    %53 = arith.negf %52 : vector<8x512xf32>
    %54 = math.exp %53 : vector<8x512xf32>
    %cst_14 = arith.constant 1.000000e+00 : f32
    %55 = vector.broadcast %cst_14 : f32 to vector<8x512xf32>
    %56 = arith.addf %55, %54 : vector<8x512xf32>
    %57 = arith.divf %55, %56 : vector<8x512xf32>
    %58 = arith.negf %50 : vector<8x512xf32>
    %59 = math.exp %58 : vector<8x512xf32>
    %cst_15 = arith.constant 1.000000e+00 : f32
    %60 = vector.broadcast %cst_15 : f32 to vector<8x512xf32>
    %61 = arith.addf %60, %59 : vector<8x512xf32>
    %62 = arith.divf %60, %61 : vector<8x512xf32>
    %63 = math.tanh %51 : vector<8x512xf32>
    %64 = arith.mulf %62, %63 : vector<8x512xf32>
    %65 = math.tanh %64 : vector<8x512xf32>
    %66 = arith.mulf %57, %65 : vector<8x512xf32>
    %67 = vector.extract_strided_slice %49 {offsets = [0, 1536], sizes = [8, 512], strides = [1, 1]} : vector<8x3072xf32> to vector<8x512xf32>
    %68 = vector.extract_strided_slice %49 {offsets = [0, 2048], sizes = [8, 512], strides = [1, 1]} : vector<8x3072xf32> to vector<8x512xf32>
    %69 = vector.extract_strided_slice %49 {offsets = [0, 2560], sizes = [8, 512], strides = [1, 1]} : vector<8x3072xf32> to vector<8x512xf32>
    %70 = arith.negf %69 : vector<8x512xf32>
    %71 = math.exp %70 : vector<8x512xf32>
    %cst_16 = arith.constant 1.000000e+00 : f32
    %72 = vector.broadcast %cst_16 : f32 to vector<8x512xf32>
    %73 = arith.addf %72, %71 : vector<8x512xf32>
    %74 = arith.divf %72, %73 : vector<8x512xf32>
    %75 = arith.negf %67 : vector<8x512xf32>
    %76 = math.exp %75 : vector<8x512xf32>
    %cst_17 = arith.constant 1.000000e+00 : f32
    %77 = vector.broadcast %cst_17 : f32 to vector<8x512xf32>
    %78 = arith.addf %77, %76 : vector<8x512xf32>
    %79 = arith.divf %77, %78 : vector<8x512xf32>
    %80 = math.tanh %68 : vector<8x512xf32>
    %81 = arith.mulf %79, %80 : vector<8x512xf32>
    %82 = math.tanh %81 : vector<8x512xf32>
    %83 = arith.mulf %74, %82 : vector<8x512xf32>
    %84 = arith.mulf %24, %66 : vector<8x512xf32>
    %85 = arith.mulf %42, %83 : vector<8x512xf32>
    %86 = tpu.concatenate %84, %85 in 1 : vector<8x512xf32>, vector<8x512xf32> -> vector<8x1024xf32>
    %c0_18 = arith.constant 0 : index
    %c0_19 = arith.constant 0 : index
    %87 = vector.load %arg5[%c0_18, %c0_19] : memref<8x1024xf32, #tpu.memory_space<vmem>>, vector<8x1024xf32>
    tpu.vector_store %arg5[%c0_18, %c0_19], %86 {strides = array<i32>} : memref<8x1024xf32, #tpu.memory_space<vmem>>, vector<8x1024xf32>,
    return
  }
}

</mosaic_0001>

<llo_original>
// kernel: tpu_custom_call.1
$region0: #{tpu_custom_call.1}
  #allocation0 [shape = 'u32[]', space=smem, size = 0x4, offset = 0x4, fixed_abs, tag = 'smem constant byte address 0x4 - core index']
  #allocation1 [shape = 'u32[72,128]{1,0:T(1,128)}', space=vmem, size = 0x9000, scoped, tag = 'internal scratch']
  %s0 = inlined_call_operand.hbm [shape: f32[8,128], index: 0, kind: input, shape index: {}]
  %s1 = inlined_call_operand.hbm [shape: bf16[128,4096], index: 1, kind: input, shape index: {}]
  %s2 = inlined_call_operand.hbm [shape: f32[1,4096], index: 2, kind: input, shape index: {}]
  %s3 = inlined_call_operand.hbm [shape: bf16[1024,3072], index: 3, kind: input, shape index: {}]
  %s4 = inlined_call_operand.hbm [shape: f32[1,3072], index: 4, kind: input, shape index: {}]
  %s5 = inlined_call_operand.hbm [shape: f32[8,1024], index: 5, kind: output, shape index: {}]
  %s6 = sld [smem:[#allocation0]]
  $region50: #{tpu_custom_call.1} parent=0
    _
  %s8 = ssub.s32 1, %s6
  %s9 = scalar_select 0, %s8, %s6
  $region1: #{tpu_custom_call.1} parent=0
    #allocation2 [shape = 'u8[4096]{0}', space=vmem, size = 0x1000, scoped, tag = 'input window, operand 0, single buffered']
    #allocation3 [shape = 's32[1]{0}', space=sflag, size = 0x4, scoped, tag = 'scoped memory for tpu_custom_call.1']
    #allocation4 [shape = 's32[1]{0}', space=sflag, size = 0x4, scoped, tag = 'scoped memory for tpu_custom_call.1']
    #allocation5 [shape = 'u8[1048576]{0}', space=vmem, size = 0x100000, scoped, tag = 'input window, operand 1, single buffered']
    #allocation6 [shape = 's32[1]{0}', space=sflag, size = 0x4, scoped, tag = 'scoped memory for tpu_custom_call.1']
    #allocation7 [shape = 'u8[16384]{0}', space=vmem, size = 0x4000, scoped, tag = 'input window, operand 2, single buffered']
    #allocation8 [shape = 'u8[6291456]{0}', space=vmem, size = 0x600000, scoped, tag = 'input window, operand 3, single buffered']
    #allocation9 [shape = 's32[1]{0}', space=sflag, size = 0x4, scoped, tag = 'scoped memory for tpu_custom_call.1']
    #allocation10 [shape = 'u8[12288]{0}', space=vmem, size = 0x3000, scoped, tag = 'input window, operand 4, single buffered']
    #allocation11 [shape = 'u8[32768]{0}', space=vmem, size = 0x8000, scoped, tag = 'output window, operand 0, single buffered']
    %10 = vsyncpa [#allocation3], 0
    %11 = vsyncpa [#allocation6], 0
    %12 = vsyncpa [#allocation9], 0
    %13 = vsyncpa [#allocation4], 0
    // Predicated region
    $region2: #{tpu_custom_call.1} parent=1 // pred_check
      _
    $region3: #{tpu_custom_call.1} parent=1 // pred_check_branch
      %15 = sbr.rel (0) target = $region5
    $region4: #{tpu_custom_call.1} parent=1 // pred_region
      %17 = vsyncadd [#allocation3], 0
      %s19 = sshll.u32 %s0, 4
      %s20 = int_to_ptr.hbm [resolvable:$true] %s19
      %s21 = sshll.u32 [#allocation2], 4
      %s22 = int_to_ptr.vmem [resolvable:$true] %s21
      %24 = dma.hbm_to_vmem [thread:$0]  %s20, 128, %s22, [#allocation3]
    $region5: #{tpu_custom_call.1} parent=1 // pred_fallthru
      _
    // Predicated region
    $region6: #{tpu_custom_call.1} parent=1 // pred_check
      _
    $region7: #{tpu_custom_call.1} parent=1 // pred_check_branch
      %26 = sbr.rel (0) target = $region9
    $region8: #{tpu_custom_call.1} parent=1 // pred_region
      %28 = vsyncadd [#allocation6], 0
      %s29 = sshll.u32 %s1, 4
      %s30 = int_to_ptr.hbm [resolvable:$true] %s29
      %s31 = sshll.u32 [#allocation5], 4
      %s32 = int_to_ptr.vmem [resolvable:$true] %s31
      %37 = dma.hbm_to_vmem [thread:$0]  %s30, 32768, %s32, [#allocation6], 2048, 2048, 128
    $region9: #{tpu_custom_call.1} parent=1 // pred_fallthru
      _
    // Predicated region
    $region10: #{tpu_custom_call.1} parent=1 // pred_check
      _
    $region11: #{tpu_custom_call.1} parent=1 // pred_check_branch
      %39 = sbr.rel (0) target = $region13
    $region12: #{tpu_custom_call.1} parent=1 // pred_region
      %41 = vsyncadd [#allocation6], 0
      %s43 = sshll.u32 %s2, 4
      %s44 = int_to_ptr.hbm [resolvable:$true] %s43
      %s45 = sshll.u32 [#allocation7], 4
      %s46 = int_to_ptr.vmem [resolvable:$true] %s45
      %48 = dma.hbm_to_vmem [thread:$0]  %s44, 512, %s46, [#allocation6]
    $region13: #{tpu_custom_call.1} parent=1 // pred_fallthru
      _
    // Predicated region
    $region14: #{tpu_custom_call.1} parent=1 // pred_check
      _
    $region15: #{tpu_custom_call.1} parent=1 // pred_check_branch
      %50 = sbr.rel (0) target = $region17
    $region16: #{tpu_custom_call.1} parent=1 // pred_region
      %52 = vsyncadd [#allocation9], 0
      %s53 = sshll.u32 %s3, 4
      %s54 = int_to_ptr.hbm [resolvable:$true] %s53
      %s55 = sshll.u32 [#allocation8], 4
      %s56 = int_to_ptr.vmem [resolvable:$true] %s55
      %61 = dma.hbm_to_vmem [thread:$0]  %s54, 196608, %s56, [#allocation9], 1536, 1536, 96
    $region17: #{tpu_custom_call.1} parent=1 // pred_fallthru
      _
    // Predicated region
    $region18: #{tpu_custom_call.1} parent=1 // pred_check
      _
    $region19: #{tpu_custom_call.1} parent=1 // pred_check_branch
      %63 = sbr.rel (0) target = $region21
    $region20: #{tpu_custom_call.1} parent=1 // pred_region
      %65 = vsyncadd [#allocation9], 0
      %s67 = sshll.u32 %s4, 4
      %s68 = int_to_ptr.hbm [resolvable:$true] %s67
      %s69 = sshll.u32 [#allocation10], 4
      %s70 = int_to_ptr.vmem [resolvable:$true] %s69
      %72 = dma.hbm_to_vmem [thread:$0]  %s68, 384, %s70, [#allocation9]
    $region21: #{tpu_custom_call.1} parent=1 // pred_fallthru
      _
    // Predicated region
    $region22: #{tpu_custom_call.1} parent=1 // pred_check
      _
    $region23: #{tpu_custom_call.1} parent=1 // pred_check_branch
      %74 = sbr.rel (0) target = $region25
    $region24: #{tpu_custom_call.1} parent=1 // pred_region
      %76 = dma.done [#allocation3], 128
    $region25: #{tpu_custom_call.1} parent=1 // pred_fallthru
      _
    // Predicated region
    $region26: #{tpu_custom_call.1} parent=1 // pred_check
      _
    $region27: #{tpu_custom_call.1} parent=1 // pred_check_branch
      %78 = sbr.rel (0) target = $region29
    $region28: #{tpu_custom_call.1} parent=1 // pred_region
      %80 = dma.done [#allocation6], 32768
    $region29: #{tpu_custom_call.1} parent=1 // pred_fallthru
      _
    // Predicated region
    $region30: #{tpu_custom_call.1} parent=1 // pred_check
      _
    $region31: #{tpu_custom_call.1} parent=1 // pred_check_branch
      %82 = sbr.rel (0) target = $region33
    $region32: #{tpu_custom_call.1} parent=1 // pred_region
      %84 = dma.done [#allocation6], 512
    $region33: #{tpu_custom_call.1} parent=1 // pred_fallthru
      _
    // Predicated region
    $region34: #{tpu_custom_call.1} parent=1 // pred_check
      _
    $region35: #{tpu_custom_call.1} parent=1 // pred_check_branch
      %86 = sbr.rel (0) target = $region37
    $region36: #{tpu_custom_call.1} parent=1 // pred_region
      %88 = dma.done [#allocation9], 196608
    $region37: #{tpu_custom_call.1} parent=1 // pred_fallthru
      _
    // Predicated region
    $region38: #{tpu_custom_call.1} parent=1 // pred_check
      _
    $region39: #{tpu_custom_call.1} parent=1 // pred_check_branch
      %90 = sbr.rel (0) target = $region41
    $region40: #{tpu_custom_call.1} parent=1 // pred_region
      %92 = dma.done [#allocation9], 384
    $region41: #{tpu_custom_call.1} parent=1 // pred_fallthru
      _
    %v93 = vld [vmem:[#allocation2] sm:$0xff]
    %v94 = vpack.c.bf16 %v93, %v93
    %v95 = vld [vmem:[#allocation5] sm:$0xff]
    %v96 = vld [vmem:[#allocation5 + $0x8] sm:$0xff]
    %v97 = vld [vmem:[#allocation5 + $0x10] sm:$0xff]
    %v98 = vld [vmem:[#allocation5 + $0x18] sm:$0xff]
    %v99 = vld [vmem:[#allocation5 + $0x20] sm:$0xff]
    %v100 = vld [vmem:[#allocation5 + $0x28] sm:$0xff]
    %v101 = vld [vmem:[#allocation5 + $0x30] sm:$0xff]
    %v102 = vld [vmem:[#allocation5 + $0x38] sm:$0xff]
    %v103 = vld [vmem:[#allocation5 + $0x40] sm:$0xff]
    %v104 = vld [vmem:[#allocation5 + $0x48] sm:$0xff]
    %v105 = vld [vmem:[#allocation5 + $0x50] sm:$0xff]
    %v106 = vld [vmem:[#allocation5 + $0x58] sm:$0xff]
    %v107 = vld [vmem:[#allocation5 + $0x60] sm:$0xff]
    %v108 = vld [vmem:[#allocation5 + $0x68] sm:$0xff]
    %v109 = vld [vmem:[#allocation5 + $0x70] sm:$0xff]
    %v110 = vld [vmem:[#allocation5 + $0x78] sm:$0xff]
    %v111 = vld [vmem:[#allocation5 + $0x80] sm:$0xff]
    %v112 = vld [vmem:[#allocation5 + $0x88] sm:$0xff]
    %v113 = vld [vmem:[#allocation5 + $0x90] sm:$0xff]
    %v114 = vld [vmem:[#allocation5 + $0x98] sm:$0xff]
    %v115 = vld [vmem:[#allocation5 + $0xa0] sm:$0xff]
    %v116 = vld [vmem:[#allocation5 + $0xa8] sm:$0xff]
    %v117 = vld [vmem:[#allocation5 + $0xb0] sm:$0xff]
    %v118 = vld [vmem:[#allocation5 + $0xb8] sm:$0xff]
    %v119 = vld [vmem:[#allocation5 + $0xc0] sm:$0xff]
    %v120 = vld [vmem:[#allocation5 + $0xc8] sm:$0xff]
    %v121 = vld [vmem:[#allocation5 + $0xd0] sm:$0xff]
    %v122 = vld [vmem:[#allocation5 + $0xd8] sm:$0xff]
    %v123 = vld [vmem:[#allocation5 + $0xe0] sm:$0xff]
    %v124 = vld [vmem:[#allocation5 + $0xe8] sm:$0xff]
    %v125 = vld [vmem:[#allocation5 + $0xf0] sm:$0xff]
    %v126 = vld [vmem:[#allocation5 + $0xf8] sm:$0xff]
    %v127 = vld [vmem:[#allocation5 + $0x100] sm:$0xff]
    %v128 = vld [vmem:[#allocation5 + $0x108] sm:$0xff]
    %v129 = vld [vmem:[#allocation5 + $0x110] sm:$0xff]
    %v130 = vld [vmem:[#allocation5 + $0x118] sm:$0xff]
    %v131 = vld [vmem:[#allocation5 + $0x120] sm:$0xff]
    %v132 = vld [vmem:[#allocation5 + $0x128] sm:$0xff]
    %v133 = vld [vmem:[#allocation5 + $0x130] sm:$0xff]
    %v134 = vld [vmem:[#allocation5 + $0x138] sm:$0xff]
    %v135 = vld [vmem:[#allocation5 + $0x140] sm:$0xff]
    %v136 = vld [vmem:[#allocation5 + $0x148] sm:$0xff]
    %v137 = vld [vmem:[#allocation5 + $0x150] sm:$0xff]
    %v138 = vld [vmem:[#allocation5 + $0x158] sm:$0xff]
    %v139 = vld [vmem:[#allocation5 + $0x160] sm:$0xff]
    %v140 = vld [vmem:[#allocation5 + $0x168] sm:$0xff]
    %v141 = vld [vmem:[#allocation5 + $0x170] sm:$0xff]
    %v142 = vld [vmem:[#allocation5 + $0x178] sm:$0xff]
    %v143 = vld [vmem:[#allocation5 + $0x180] sm:$0xff]
    %v144 = vld [vmem:[#allocation5 + $0x188] sm:$0xff]
    %v145 = vld [vmem:[#allocation5 + $0x190] sm:$0xff]
    %v146 = vld [vmem:[#allocation5 + $0x198] sm:$0xff]
    %v147 = vld [vmem:[#allocation5 + $0x1a0] sm:$0xff]
    %v148 = vld [vmem:[#allocation5 + $0x1a8] sm:$0xff]
    %v149 = vld [vmem:[#allocation5 + $0x1b0] sm:$0xff]
    %v150 = vld [vmem:[#allocation5 + $0x1b8] sm:$0xff]
    %v151 = vld [vmem:[#allocation5 + $0x1c0] sm:$0xff]
    %v152 = vld [vmem:[#allocation5 + $0x1c8] sm:$0xff]
    %v153 = vld [vmem:[#allocation5 + $0x1d0] sm:$0xff]
    %v154 = vld [vmem:[#allocation5 + $0x1d8] sm:$0xff]
    %v155 = vld [vmem:[#allocation5 + $0x1e0] sm:$0xff]
    %v156 = vld [vmem:[#allocation5 + $0x1e8] sm:$0xff]
    %v157 = vld [vmem:[#allocation5 + $0x1f0] sm:$0xff]
    %v158 = vld [vmem:[#allocation5 + $0x1f8] sm:$0xff]
    %v159 = vld [vmem:[#allocation5 + $0x200] sm:$0xff]
    %v160 = vld [vmem:[#allocation5 + $0x208] sm:$0xff]
    %v161 = vld [vmem:[#allocation5 + $0x210] sm:$0xff]
    %v162 = vld [vmem:[#allocation5 + $0x218] sm:$0xff]
    %v163 = vld [vmem:[#allocation5 + $0x220] sm:$0xff]
    %v164 = vld [vmem:[#allocation5 + $0x228] sm:$0xff]
    %v165 = vld [vmem:[#allocation5 + $0x230] sm:$0xff]
    %v166 = vld [vmem:[#allocation5 + $0x238] sm:$0xff]
    %v167 = vld [vmem:[#allocation5 + $0x240] sm:$0xff]
    %v168 = vld [vmem:[#allocation5 + $0x248] sm:$0xff]
    %v169 = vld [vmem:[#allocation5 + $0x250] sm:$0xff]
    %v170 = vld [vmem:[#allocation5 + $0x258] sm:$0xff]
    %v171 = vld [vmem:[#allocation5 + $0x260] sm:$0xff]
    %v172 = vld [vmem:[#allocation5 + $0x268] sm:$0xff]
    %v173 = vld [vmem:[#allocation5 + $0x270] sm:$0xff]
    %v174 = vld [vmem:[#allocation5 + $0x278] sm:$0xff]
    %v175 = vld [vmem:[#allocation5 + $0x280] sm:$0xff]
    %v176 = vld [vmem:[#allocation5 + $0x288] sm:$0xff]
    %v177 = vld [vmem:[#allocation5 + $0x290] sm:$0xff]
    %v178 = vld [vmem:[#allocation5 + $0x298] sm:$0xff]
    %v179 = vld [vmem:[#allocation5 + $0x2a0] sm:$0xff]
    %v180 = vld [vmem:[#allocation5 + $0x2a8] sm:$0xff]
    %v181 = vld [vmem:[#allocation5 + $0x2b0] sm:$0xff]
    %v182 = vld [vmem:[#allocation5 + $0x2b8] sm:$0xff]
    %v183 = vld [vmem:[#allocation5 + $0x2c0] sm:$0xff]
    %v184 = vld [vmem:[#allocation5 + $0x2c8] sm:$0xff]
    %v185 = vld [vmem:[#allocation5 + $0x2d0] sm:$0xff]
    %v186 = vld [vmem:[#allocation5 + $0x2d8] sm:$0xff]
    %v187 = vld [vmem:[#allocation5 + $0x2e0] sm:$0xff]
    %v188 = vld [vmem:[#allocation5 + $0x2e8] sm:$0xff]
    %v189 = vld [vmem:[#allocation5 + $0x2f0] sm:$0xff]
    %v190 = vld [vmem:[#allocation5 + $0x2f8] sm:$0xff]
    %v191 = vld [vmem:[#allocation5 + $0x300] sm:$0xff]
    %v192 = vld [vmem:[#allocation5 + $0x308] sm:$0xff]
    %v193 = vld [vmem:[#allocation5 + $0x310] sm:$0xff]
    %v194 = vld [vmem:[#allocation5 + $0x318] sm:$0xff]
    %v195 = vld [vmem:[#allocation5 + $0x320] sm:$0xff]
    %v196 = vld [vmem:[#allocation5 + $0x328] sm:$0xff]
    %v197 = vld [vmem:[#allocation5 + $0x330] sm:$0xff]
    %v198 = vld [vmem:[#allocation5 + $0x338] sm:$0xff]
    %v199 = vld [vmem:[#allocation5 + $0x340] sm:$0xff]
    %v200 = vld [vmem:[#allocation5 + $0x348] sm:$0xff]
    %v201 = vld [vmem:[#allocation5 + $0x350] sm:$0xff]
    %v202 = vld [vmem:[#allocation5 + $0x358] sm:$0xff]
    %v203 = vld [vmem:[#allocation5 + $0x360] sm:$0xff]
    %v204 = vld [vmem:[#allocation5 + $0x368] sm:$0xff]
    %v205 = vld [vmem:[#allocation5 + $0x370] sm:$0xff]
    %v206 = vld [vmem:[#allocation5 + $0x378] sm:$0xff]
    %v207 = vld [vmem:[#allocation5 + $0x380] sm:$0xff]
    %v208 = vld [vmem:[#allocation5 + $0x388] sm:$0xff]
    %v209 = vld [vmem:[#allocation5 + $0x390] sm:$0xff]
    %v210 = vld [vmem:[#allocation5 + $0x398] sm:$0xff]
    %v211 = vld [vmem:[#allocation5 + $0x3a0] sm:$0xff]
    %v212 = vld [vmem:[#allocation5 + $0x3a8] sm:$0xff]
    %v213 = vld [vmem:[#allocation5 + $0x3b0] sm:$0xff]
    %v214 = vld [vmem:[#allocation5 + $0x3b8] sm:$0xff]
    %v215 = vld [vmem:[#allocation5 + $0x3c0] sm:$0xff]
    %v216 = vld [vmem:[#allocation5 + $0x3c8] sm:$0xff]
    %v217 = vld [vmem:[#allocation5 + $0x3d0] sm:$0xff]
    %v218 = vld [vmem:[#allocation5 + $0x3d8] sm:$0xff]
    %v219 = vld [vmem:[#allocation5 + $0x3e0] sm:$0xff]
    %v220 = vld [vmem:[#allocation5 + $0x3e8] sm:$0xff]
    %v221 = vld [vmem:[#allocation5 + $0x3f0] sm:$0xff]
    %v222 = vld [vmem:[#allocation5 + $0x3f8] sm:$0xff]
    %v223 = vld [vmem:[#allocation5 + $0x400] sm:$0xff]
    %v224 = vld [vmem:[#allocation5 + $0x408] sm:$0xff]
    %v225 = vld [vmem:[#allocation5 + $0x410] sm:$0xff]
    %v226 = vld [vmem:[#allocation5 + $0x418] sm:$0xff]
    %v227 = vld [vmem:[#allocation5 + $0x420] sm:$0xff]
    %v228 = vld [vmem:[#allocation5 + $0x428] sm:$0xff]
    %v229 = vld [vmem:[#allocation5 + $0x430] sm:$0xff]
    %v230 = vld [vmem:[#allocation5 + $0x438] sm:$0xff]
    %v231 = vld [vmem:[#allocation5 + $0x440] sm:$0xff]
    %v232 = vld [vmem:[#allocation5 + $0x448] sm:$0xff]
    %v233 = vld [vmem:[#allocation5 + $0x450] sm:$0xff]
    %v234 = vld [vmem:[#allocation5 + $0x458] sm:$0xff]
    %v235 = vld [vmem:[#allocation5 + $0x460] sm:$0xff]
    %v236 = vld [vmem:[#allocation5 + $0x468] sm:$0xff]
    %v237 = vld [vmem:[#allocation5 + $0x470] sm:$0xff]
    %v238 = vld [vmem:[#allocation5 + $0x478] sm:$0xff]
    %v239 = vld [vmem:[#allocation5 + $0x480] sm:$0xff]
    %v240 = vld [vmem:[#allocation5 + $0x488] sm:$0xff]
    %v241 = vld [vmem:[#allocation5 + $0x490] sm:$0xff]
    %v242 = vld [vmem:[#allocation5 + $0x498] sm:$0xff]
    %v243 = vld [vmem:[#allocation5 + $0x4a0] sm:$0xff]
    %v244 = vld [vmem:[#allocation5 + $0x4a8] sm:$0xff]
    %v245 = vld [vmem:[#allocation5 + $0x4b0] sm:$0xff]
    %v246 = vld [vmem:[#allocation5 + $0x4b8] sm:$0xff]
    %v247 = vld [vmem:[#allocation5 + $0x4c0] sm:$0xff]
    %v248 = vld [vmem:[#allocation5 + $0x4c8] sm:$0xff]
    %v249 = vld [vmem:[#allocation5 + $0x4d0] sm:$0xff]
    %v250 = vld [vmem:[#allocation5 + $0x4d8] sm:$0xff]
    %v251 = vld [vmem:[#allocation5 + $0x4e0] sm:$0xff]
    %v252 = vld [vmem:[#allocation5 + $0x4e8] sm:$0xff]
    %v253 = vld [vmem:[#allocation5 + $0x4f0] sm:$0xff]
    %v254 = vld [vmem:[#allocation5 + $0x4f8] sm:$0xff]
    %v255 = vld [vmem:[#allocation5 + $0x500] sm:$0xff]
    %v256 = vld [vmem:[#allocation5 + $0x508] sm:$0xff]
    %v257 = vld [vmem:[#allocation5 + $0x510] sm:$0xff]
    %v258 = vld [vmem:[#allocation5 + $0x518] sm:$0xff]
    %v259 = vld [vmem:[#allocation5 + $0x520] sm:$0xff]
    %v260 = vld [vmem:[#allocation5 + $0x528] sm:$0xff]
    %v261 = vld [vmem:[#allocation5 + $0x530] sm:$0xff]
    %v262 = vld [vmem:[#allocation5 + $0x538] sm:$0xff]
    %v263 = vld [vmem:[#allocation5 + $0x540] sm:$0xff]
    %v264 = vld [vmem:[#allocation5 + $0x548] sm:$0xff]
    %v265 = vld [vmem:[#allocation5 + $0x550] sm:$0xff]
    %v266 = vld [vmem:[#allocation5 + $0x558] sm:$0xff]
    %v267 = vld [vmem:[#allocation5 + $0x560] sm:$0xff]
    %v268 = vld [vmem:[#allocation5 + $0x568] sm:$0xff]
    %v269 = vld [vmem:[#allocation5 + $0x570] sm:$0xff]
    %v270 = vld [vmem:[#allocation5 + $0x578] sm:$0xff]
    %v271 = vld [vmem:[#allocation5 + $0x580] sm:$0xff]
    %v272 = vld [vmem:[#allocation5 + $0x588] sm:$0xff]
    %v273 = vld [vmem:[#allocation5 + $0x590] sm:$0xff]
    %v274 = vld [vmem:[#allocation5 + $0x598] sm:$0xff]
    %v275 = vld [vmem:[#allocation5 + $0x5a0] sm:$0xff]
    %v276 = vld [vmem:[#allocation5 + $0x5a8] sm:$0xff]
    %v277 = vld [vmem:[#allocation5 + $0x5b0] sm:$0xff]
    %v278 = vld [vmem:[#allocation5 + $0x5b8] sm:$0xff]
    %v279 = vld [vmem:[#allocation5 + $0x5c0] sm:$0xff]
    %v280 = vld [vmem:[#allocation5 + $0x5c8] sm:$0xff]
    %v281 = vld [vmem:[#allocation5 + $0x5d0] sm:$0xff]
    %v282 = vld [vmem:[#allocation5 + $0x5d8] sm:$0xff]
    %v283 = vld [vmem:[#allocation5 + $0x5e0] sm:$0xff]
    %v284 = vld [vmem:[#allocation5 + $0x5e8] sm:$0xff]
    %v285 = vld [vmem:[#allocation5 + $0x5f0] sm:$0xff]
    %v286 = vld [vmem:[#allocation5 + $0x5f8] sm:$0xff]
    %v287 = vld [vmem:[#allocation5 + $0x600] sm:$0xff]
    %v288 = vld [vmem:[#allocation5 + $0x608] sm:$0xff]
    %v289 = vld [vmem:[#allocation5 + $0x610] sm:$0xff]
    %v290 = vld [vmem:[#allocation5 + $0x618] sm:$0xff]
    %v291 = vld [vmem:[#allocation5 + $0x620] sm:$0xff]
    %v292 = vld [vmem:[#allocation5 + $0x628] sm:$0xff]
    %v293 = vld [vmem:[#allocation5 + $0x630] sm:$0xff]
    %v294 = vld [vmem:[#allocation5 + $0x638] sm:$0xff]
    %v295 = vld [vmem:[#allocation5 + $0x640] sm:$0xff]
    %v296 = vld [vmem:[#allocation5 + $0x648] sm:$0xff]
    %v297 = vld [vmem:[#allocation5 + $0x650] sm:$0xff]
    %v298 = vld [vmem:[#allocation5 + $0x658] sm:$0xff]
    %v299 = vld [vmem:[#allocation5 + $0x660] sm:$0xff]
    %v300 = vld [vmem:[#allocation5 + $0x668] sm:$0xff]
    %v301 = vld [vmem:[#allocation5 + $0x670] sm:$0xff]
    %v302 = vld [vmem:[#allocation5 + $0x678] sm:$0xff]
    %v303 = vld [vmem:[#allocation5 + $0x680] sm:$0xff]
    %v304 = vld [vmem:[#allocation5 + $0x688] sm:$0xff]
    %v305 = vld [vmem:[#allocation5 + $0x690] sm:$0xff]
    %v306 = vld [vmem:[#allocation5 + $0x698] sm:$0xff]
    %v307 = vld [vmem:[#allocation5 + $0x6a0] sm:$0xff]
    %v308 = vld [vmem:[#allocation5 + $0x6a8] sm:$0xff]
    %v309 = vld [vmem:[#allocation5 + $0x6b0] sm:$0xff]
    %v310 = vld [vmem:[#allocation5 + $0x6b8] sm:$0xff]
    %v311 = vld [vmem:[#allocation5 + $0x6c0] sm:$0xff]
    %v312 = vld [vmem:[#allocation5 + $0x6c8] sm:$0xff]
    %v313 = vld [vmem:[#allocation5 + $0x6d0] sm:$0xff]
    %v314 = vld [vmem:[#allocation5 + $0x6d8] sm:$0xff]
    %v315 = vld [vmem:[#allocation5 + $0x6e0] sm:$0xff]
    %v316 = vld [vmem:[#allocation5 + $0x6e8] sm:$0xff]
    %v317 = vld [vmem:[#allocation5 + $0x6f0] sm:$0xff]
    %v318 = vld [vmem:[#allocation5 + $0x6f8] sm:$0xff]
    %v319 = vld [vmem:[#allocation5 + $0x700] sm:$0xff]
    %v320 = vld [vmem:[#allocation5 + $0x708] sm:$0xff]
    %v321 = vld [vmem:[#allocation5 + $0x710] sm:$0xff]
    %v322 = vld [vmem:[#allocation5 + $0x718] sm:$0xff]
    %v323 = vld [vmem:[#allocation5 + $0x720] sm:$0xff]
    %v324 = vld [vmem:[#allocation5 + $0x728] sm:$0xff]
    %v325 = vld [vmem:[#allocation5 + $0x730] sm:$0xff]
    %v326 = vld [vmem:[#allocation5 + $0x738] sm:$0xff]
    %v327 = vld [vmem:[#allocation5 + $0x740] sm:$0xff]
    %v328 = vld [vmem:[#allocation5 + $0x748] sm:$0xff]
    %v329 = vld [vmem:[#allocation5 + $0x750] sm:$0xff]
    %v330 = vld [vmem:[#allocation5 + $0x758] sm:$0xff]
    %v331 = vld [vmem:[#allocation5 + $0x760] sm:$0xff]
    %v332 = vld [vmem:[#allocation5 + $0x768] sm:$0xff]
    %v333 = vld [vmem:[#allocation5 + $0x770] sm:$0xff]
    %v334 = vld [vmem:[#allocation5 + $0x778] sm:$0xff]
    %v335 = vld [vmem:[#allocation5 + $0x780] sm:$0xff]
    %v336 = vld [vmem:[#allocation5 + $0x788] sm:$0xff]
    %v337 = vld [vmem:[#allocation5 + $0x790] sm:$0xff]
    %v338 = vld [vmem:[#allocation5 + $0x798] sm:$0xff]
    %v339 = vld [vmem:[#allocation5 + $0x7a0] sm:$0xff]
    %v340 = vld [vmem:[#allocation5 + $0x7a8] sm:$0xff]
    %v341 = vld [vmem:[#allocation5 + $0x7b0] sm:$0xff]
    %v342 = vld [vmem:[#allocation5 + $0x7b8] sm:$0xff]
    %v343 = vld [vmem:[#allocation5 + $0x7c0] sm:$0xff]
    %v344 = vld [vmem:[#allocation5 + $0x7c8] sm:$0xff]
    %v345 = vld [vmem:[#allocation5 + $0x7d0] sm:$0xff]
    %v346 = vld [vmem:[#allocation5 + $0x7d8] sm:$0xff]
    %v347 = vld [vmem:[#allocation5 + $0x7e0] sm:$0xff]
    %v348 = vld [vmem:[#allocation5 + $0x7e8] sm:$0xff]
    %v349 = vld [vmem:[#allocation5 + $0x7f0] sm:$0xff]
    %v350 = vld [vmem:[#allocation5 + $0x7f8] sm:$0xff]
    %v351 = vld [vmem:[#allocation7] sm:$0xff]
    %v352 = vld [vmem:[#allocation7 + $0x8] sm:$0xff]
    %v353 = vld [vmem:[#allocation7 + $0x10] sm:$0xff]
    %v354 = vld [vmem:[#allocation7 + $0x18] sm:$0xff]
    %v359 = vperm.slane %v351, 0
    %v360 = vperm.slane %v351, 1
    %v361 = vperm.slane %v351, 2
    %v362 = vperm.slane %v351, 3
    %v363 = vperm.slane %v351, 4
    %v364 = vperm.slane %v351, 5
    %v365 = vperm.slane %v351, 6
    %v366 = vperm.slane %v351, 7
    %v367 = vperm.slane %v352, 0
    %v368 = vperm.slane %v352, 1
    %v369 = vperm.slane %v352, 2
    %v370 = vperm.slane %v352, 3
    %v371 = vperm.slane %v352, 4
    %v372 = vperm.slane %v352, 5
    %v373 = vperm.slane %v352, 6
    %v374 = vperm.slane %v352, 7
    %v375 = vperm.slane %v353, 0
    %v376 = vperm.slane %v353, 1
    %v377 = vperm.slane %v353, 2
    %v378 = vperm.slane %v353, 3
    %v379 = vperm.slane %v353, 4
    %v380 = vperm.slane %v353, 5
    %v381 = vperm.slane %v353, 6
    %v382 = vperm.slane %v353, 7
    %v383 = vperm.slane %v354, 0
    %v384 = vperm.slane %v354, 1
    %v385 = vperm.slane %v354, 2
    %v386 = vperm.slane %v354, 3
    %v387 = vperm.slane %v354, 4
    %v388 = vperm.slane %v354, 5
    %v389 = vperm.slane %v354, 6
    %v390 = vperm.slane %v354, 7
    %v679 = vunpack.c.l.b16 %v95
    %v680 = vunpack.c.h.b16 %v95
    %v681 = vunpack.c.l.b16 %v96
    %v682 = vunpack.c.h.b16 %v96
    %v683 = vunpack.c.l.b16 %v97
    %v684 = vunpack.c.h.b16 %v97
    %v685 = vunpack.c.l.b16 %v98
    %v686 = vunpack.c.h.b16 %v98
    %v687 = vunpack.c.l.b16 %v99
    %v688 = vunpack.c.h.b16 %v99
    %v689 = vunpack.c.l.b16 %v100
    %v690 = vunpack.c.h.b16 %v100
    %v691 = vunpack.c.l.b16 %v101
    %v692 = vunpack.c.h.b16 %v101
    %v693 = vunpack.c.l.b16 %v102
    %v694 = vunpack.c.h.b16 %v102
    %v695 = vunpack.c.l.b16 %v103
    %v696 = vunpack.c.h.b16 %v103
    %v697 = vunpack.c.l.b16 %v104
    %v698 = vunpack.c.h.b16 %v104
    %v699 = vunpack.c.l.b16 %v105
    %v700 = vunpack.c.h.b16 %v105
    %v701 = vunpack.c.l.b16 %v106
    %v702 = vunpack.c.h.b16 %v106
    %v703 = vunpack.c.l.b16 %v107
    %v704 = vunpack.c.h.b16 %v107
    %v705 = vunpack.c.l.b16 %v108
    %v706 = vunpack.c.h.b16 %v108
    %v707 = vunpack.c.l.b16 %v109
    %v708 = vunpack.c.h.b16 %v109
    %v709 = vunpack.c.l.b16 %v110
    %v710 = vunpack.c.h.b16 %v110
    %v711 = vunpack.c.l.b16 %v111
    %v712 = vunpack.c.h.b16 %v111
    %v713 = vunpack.c.l.b16 %v112
    %v714 = vunpack.c.h.b16 %v112
    %v715 = vunpack.c.l.b16 %v113
    %v716 = vunpack.c.h.b16 %v113
    %v717 = vunpack.c.l.b16 %v114
    %v718 = vunpack.c.h.b16 %v114
    %v719 = vunpack.c.l.b16 %v115
    %v720 = vunpack.c.h.b16 %v115
    %v721 = vunpack.c.l.b16 %v116
    %v722 = vunpack.c.h.b16 %v116
    %v723 = vunpack.c.l.b16 %v117
    %v724 = vunpack.c.h.b16 %v117
    %v725 = vunpack.c.l.b16 %v118
    %v726 = vunpack.c.h.b16 %v118
    %v727 = vunpack.c.l.b16 %v119
    %v728 = vunpack.c.h.b16 %v119
    %v729 = vunpack.c.l.b16 %v120
    %v730 = vunpack.c.h.b16 %v120
    %v731 = vunpack.c.l.b16 %v121
    %v732 = vunpack.c.h.b16 %v121
    %v733 = vunpack.c.l.b16 %v122
    %v734 = vunpack.c.h.b16 %v122
    %v735 = vunpack.c.l.b16 %v123
    %v736 = vunpack.c.h.b16 %v123
    %v737 = vunpack.c.l.b16 %v124
    %v738 = vunpack.c.h.b16 %v124
    %v739 = vunpack.c.l.b16 %v125
    %v740 = vunpack.c.h.b16 %v125
    %v741 = vunpack.c.l.b16 %v126
    %v742 = vunpack.c.h.b16 %v126
    %v743 = vunpack.c.l.b16 %v127
    %v744 = vunpack.c.h.b16 %v127
    %v745 = vunpack.c.l.b16 %v128
    %v746 = vunpack.c.h.b16 %v128
    %v747 = vunpack.c.l.b16 %v129
    %v748 = vunpack.c.h.b16 %v129
    %v749 = vunpack.c.l.b16 %v130
    %v750 = vunpack.c.h.b16 %v130
    %v751 = vunpack.c.l.b16 %v131
    %v752 = vunpack.c.h.b16 %v131
    %v753 = vunpack.c.l.b16 %v132
    %v754 = vunpack.c.h.b16 %v132
    %v755 = vunpack.c.l.b16 %v133
    %v756 = vunpack.c.h.b16 %v133
    %v757 = vunpack.c.l.b16 %v134
    %v758 = vunpack.c.h.b16 %v134
    %v759 = vunpack.c.l.b16 %v135
    %v760 = vunpack.c.h.b16 %v135
    %v761 = vunpack.c.l.b16 %v136
    %v762 = vunpack.c.h.b16 %v136
    %v763 = vunpack.c.l.b16 %v137
    %v764 = vunpack.c.h.b16 %v137
    %v765 = vunpack.c.l.b16 %v138
    %v766 = vunpack.c.h.b16 %v138
    %v767 = vunpack.c.l.b16 %v139
    %v768 = vunpack.c.h.b16 %v139
    %v769 = vunpack.c.l.b16 %v140
    %v770 = vunpack.c.h.b16 %v140
    %v771 = vunpack.c.l.b16 %v141
    %v772 = vunpack.c.h.b16 %v141
    %v773 = vunpack.c.l.b16 %v142
    %v774 = vunpack.c.h.b16 %v142
    %v775 = vunpack.c.l.b16 %v143
    %v776 = vunpack.c.h.b16 %v143
    %v777 = vunpack.c.l.b16 %v144
    %v778 = vunpack.c.h.b16 %v144
    %v779 = vunpack.c.l.b16 %v145
    %v780 = vunpack.c.h.b16 %v145
    %v781 = vunpack.c.l.b16 %v146
    %v782 = vunpack.c.h.b16 %v146
    %v783 = vunpack.c.l.b16 %v147
    %v784 = vunpack.c.h.b16 %v147
    %v785 = vunpack.c.l.b16 %v148
    %v786 = vunpack.c.h.b16 %v148
    %v787 = vunpack.c.l.b16 %v149
    %v788 = vunpack.c.h.b16 %v149
    %v789 = vunpack.c.l.b16 %v150
    %v790 = vunpack.c.h.b16 %v150
    %v791 = vunpack.c.l.b16 %v151
    %v792 = vunpack.c.h.b16 %v151
    %v793 = vunpack.c.l.b16 %v152
    %v794 = vunpack.c.h.b16 %v152
    %v795 = vunpack.c.l.b16 %v153
    %v796 = vunpack.c.h.b16 %v153
    %v797 = vunpack.c.l.b16 %v154
    %v798 = vunpack.c.h.b16 %v154
    %v799 = vunpack.c.l.b16 %v155
    %v800 = vunpack.c.h.b16 %v155
    %v801 = vunpack.c.l.b16 %v156
    %v802 = vunpack.c.h.b16 %v156
    %v803 = vunpack.c.l.b16 %v157
    %v804 = vunpack.c.h.b16 %v157
    %v805 = vunpack.c.l.b16 %v158
    %v806 = vunpack.c.h.b16 %v158
    %v807 = vunpack.c.l.b16 %v159
    %v808 = vunpack.c.h.b16 %v159
    %v809 = vunpack.c.l.b16 %v160
    %v810 = vunpack.c.h.b16 %v160
    %v811 = vunpack.c.l.b16 %v161
    %v812 = vunpack.c.h.b16 %v161
    %v813 = vunpack.c.l.b16 %v162
    %v814 = vunpack.c.h.b16 %v162
    %v815 = vunpack.c.l.b16 %v163
    %v816 = vunpack.c.h.b16 %v163
    %v817 = vunpack.c.l.b16 %v164
    %v818 = vunpack.c.h.b16 %v164
    %v819 = vunpack.c.l.b16 %v165
    %v820 = vunpack.c.h.b16 %v165
    %v821 = vunpack.c.l.b16 %v166
    %v822 = vunpack.c.h.b16 %v166
    %v823 = vunpack.c.l.b16 %v167
    %v824 = vunpack.c.h.b16 %v167
    %v825 = vunpack.c.l.b16 %v168
    %v826 = vunpack.c.h.b16 %v168
    %v827 = vunpack.c.l.b16 %v169
    %v828 = vunpack.c.h.b16 %v169
    %v829 = vunpack.c.l.b16 %v170
    %v830 = vunpack.c.h.b16 %v170
    %v831 = vunpack.c.l.b16 %v171
    %v832 = vunpack.c.h.b16 %v171
    %v833 = vunpack.c.l.b16 %v172
    %v834 = vunpack.c.h.b16 %v172
    %v835 = vunpack.c.l.b16 %v173
    %v836 = vunpack.c.h.b16 %v173
    %v837 = vunpack.c.l.b16 %v174
    %v838 = vunpack.c.h.b16 %v174
    %v839 = vunpack.c.l.b16 %v175
    %v840 = vunpack.c.h.b16 %v175
    %v841 = vunpack.c.l.b16 %v176
    %v842 = vunpack.c.h.b16 %v176
    %v843 = vunpack.c.l.b16 %v177
    %v844 = vunpack.c.h.b16 %v177
    %v845 = vunpack.c.l.b16 %v178
    %v846 = vunpack.c.h.b16 %v178
    %v847 = vunpack.c.l.b16 %v179
    %v848 = vunpack.c.h.b16 %v179
    %v849 = vunpack.c.l.b16 %v180
    %v850 = vunpack.c.h.b16 %v180
    %v851 = vunpack.c.l.b16 %v181
    %v852 = vunpack.c.h.b16 %v181
    %v853 = vunpack.c.l.b16 %v182
    %v854 = vunpack.c.h.b16 %v182
    %v855 = vunpack.c.l.b16 %v183
    %v856 = vunpack.c.h.b16 %v183
    %v857 = vunpack.c.l.b16 %v184
    %v858 = vunpack.c.h.b16 %v184
    %v859 = vunpack.c.l.b16 %v185
    %v860 = vunpack.c.h.b16 %v185
    %v861 = vunpack.c.l.b16 %v186
    %v862 = vunpack.c.h.b16 %v186
    %v863 = vunpack.c.l.b16 %v187
    %v864 = vunpack.c.h.b16 %v187
    %v865 = vunpack.c.l.b16 %v188
    %v866 = vunpack.c.h.b16 %v188
    %v867 = vunpack.c.l.b16 %v189
    %v868 = vunpack.c.h.b16 %v189
    %v869 = vunpack.c.l.b16 %v190
    %v870 = vunpack.c.h.b16 %v190
    %v871 = vunpack.c.l.b16 %v191
    %v872 = vunpack.c.h.b16 %v191
    %v873 = vunpack.c.l.b16 %v192
    %v874 = vunpack.c.h.b16 %v192
    %v875 = vunpack.c.l.b16 %v193
    %v876 = vunpack.c.h.b16 %v193
    %v877 = vunpack.c.l.b16 %v194
    %v878 = vunpack.c.h.b16 %v194
    %v879 = vunpack.c.l.b16 %v195
    %v880 = vunpack.c.h.b16 %v195
    %v881 = vunpack.c.l.b16 %v196
    %v882 = vunpack.c.h.b16 %v196
    %v883 = vunpack.c.l.b16 %v197
    %v884 = vunpack.c.h.b16 %v197
    %v885 = vunpack.c.l.b16 %v198
    %v886 = vunpack.c.h.b16 %v198
    %v887 = vunpack.c.l.b16 %v199
    %v888 = vunpack.c.h.b16 %v199
    %v889 = vunpack.c.l.b16 %v200
    %v890 = vunpack.c.h.b16 %v200
    %v891 = vunpack.c.l.b16 %v201
    %v892 = vunpack.c.h.b16 %v201
    %v893 = vunpack.c.l.b16 %v202
    %v894 = vunpack.c.h.b16 %v202
    %v895 = vunpack.c.l.b16 %v203
    %v896 = vunpack.c.h.b16 %v203
    %v897 = vunpack.c.l.b16 %v204
    %v898 = vunpack.c.h.b16 %v204
    %v899 = vunpack.c.l.b16 %v205
    %v900 = vunpack.c.h.b16 %v205
    %v901 = vunpack.c.l.b16 %v206
    %v902 = vunpack.c.h.b16 %v206
    %v903 = vunpack.c.l.b16 %v207
    %v904 = vunpack.c.h.b16 %v207
    %v905 = vunpack.c.l.b16 %v208
    %v906 = vunpack.c.h.b16 %v208
    %v907 = vunpack.c.l.b16 %v209
    %v908 = vunpack.c.h.b16 %v209
    %v909 = vunpack.c.l.b16 %v210
    %v910 = vunpack.c.h.b16 %v210
    %v911 = vunpack.c.l.b16 %v211
    %v912 = vunpack.c.h.b16 %v211
    %v913 = vunpack.c.l.b16 %v212
    %v914 = vunpack.c.h.b16 %v212
    %v915 = vunpack.c.l.b16 %v213
    %v916 = vunpack.c.h.b16 %v213
    %v917 = vunpack.c.l.b16 %v214
    %v918 = vunpack.c.h.b16 %v214
    %v919 = vunpack.c.l.b16 %v215
    %v920 = vunpack.c.h.b16 %v215
    %v921 = vunpack.c.l.b16 %v216
    %v922 = vunpack.c.h.b16 %v216
    %v923 = vunpack.c.l.b16 %v217
    %v924 = vunpack.c.h.b16 %v217
    %v925 = vunpack.c.l.b16 %v218
    %v926 = vunpack.c.h.b16 %v218
    %v927 = vunpack.c.l.b16 %v219
    %v928 = vunpack.c.h.b16 %v219
    %v929 = vunpack.c.l.b16 %v220
    %v930 = vunpack.c.h.b16 %v220
    %v931 = vunpack.c.l.b16 %v221
    %v932 = vunpack.c.h.b16 %v221
    %v933 = vunpack.c.l.b16 %v222
    %v934 = vunpack.c.h.b16 %v222
    %v935 = vunpack.c.l.b16 %v223
    %v936 = vunpack.c.h.b16 %v223
    %v937 = vunpack.c.l.b16 %v224
    %v938 = vunpack.c.h.b16 %v224
    %v939 = vunpack.c.l.b16 %v225
    %v940 = vunpack.c.h.b16 %v225
    %v941 = vunpack.c.l.b16 %v226
    %v942 = vunpack.c.h.b16 %v226
    %v943 = vunpack.c.l.b16 %v227
    %v944 = vunpack.c.h.b16 %v227
    %v945 = vunpack.c.l.b16 %v228
    %v946 = vunpack.c.h.b16 %v228
    %v947 = vunpack.c.l.b16 %v229
    %v948 = vunpack.c.h.b16 %v229
    %v949 = vunpack.c.l.b16 %v230
    %v950 = vunpack.c.h.b16 %v230
    %v951 = vunpack.c.l.b16 %v231
    %v952 = vunpack.c.h.b16 %v231
    %v953 = vunpack.c.l.b16 %v232
    %v954 = vunpack.c.h.b16 %v232
    %v955 = vunpack.c.l.b16 %v233
    %v956 = vunpack.c.h.b16 %v233
    %v957 = vunpack.c.l.b16 %v234
    %v958 = vunpack.c.h.b16 %v234
    %v959 = vunpack.c.l.b16 %v235
    %v960 = vunpack.c.h.b16 %v235
    %v961 = vunpack.c.l.b16 %v236
    %v962 = vunpack.c.h.b16 %v236
    %v963 = vunpack.c.l.b16 %v237
    %v964 = vunpack.c.h.b16 %v237
    %v965 = vunpack.c.l.b16 %v238
    %v966 = vunpack.c.h.b16 %v238
    %v967 = vunpack.c.l.b16 %v239
    %v968 = vunpack.c.h.b16 %v239
    %v969 = vunpack.c.l.b16 %v240
    %v970 = vunpack.c.h.b16 %v240
    %v971 = vunpack.c.l.b16 %v241
    %v972 = vunpack.c.h.b16 %v241
    %v973 = vunpack.c.l.b16 %v242
    %v974 = vunpack.c.h.b16 %v242
    %v975 = vunpack.c.l.b16 %v243
    %v976 = vunpack.c.h.b16 %v243
    %v977 = vunpack.c.l.b16 %v244
    %v978 = vunpack.c.h.b16 %v244
    %v979 = vunpack.c.l.b16 %v245
    %v980 = vunpack.c.h.b16 %v245
    %v981 = vunpack.c.l.b16 %v246
    %v982 = vunpack.c.h.b16 %v246
    %v983 = vunpack.c.l.b16 %v247
    %v984 = vunpack.c.h.b16 %v247
    %v985 = vunpack.c.l.b16 %v248
    %v986 = vunpack.c.h.b16 %v248
    %v987 = vunpack.c.l.b16 %v249
    %v988 = vunpack.c.h.b16 %v249
    %v989 = vunpack.c.l.b16 %v250
    %v990 = vunpack.c.h.b16 %v250
    %v991 = vunpack.c.l.b16 %v251
    %v992 = vunpack.c.h.b16 %v251
    %v993 = vunpack.c.l.b16 %v252
    %v994 = vunpack.c.h.b16 %v252
    %v995 = vunpack.c.l.b16 %v253
    %v996 = vunpack.c.h.b16 %v253
    %v997 = vunpack.c.l.b16 %v254
    %v998 = vunpack.c.h.b16 %v254
    %v999 = vunpack.c.l.b16 %v255
    %v1000 = vunpack.c.h.b16 %v255
    %v1001 = vunpack.c.l.b16 %v256
    %v1002 = vunpack.c.h.b16 %v256
    %v1003 = vunpack.c.l.b16 %v257
    %v1004 = vunpack.c.h.b16 %v257
    %v1005 = vunpack.c.l.b16 %v258
    %v1006 = vunpack.c.h.b16 %v258
    %v1007 = vunpack.c.l.b16 %v259
    %v1008 = vunpack.c.h.b16 %v259
    %v1009 = vunpack.c.l.b16 %v260
    %v1010 = vunpack.c.h.b16 %v260
    %v1011 = vunpack.c.l.b16 %v261
    %v1012 = vunpack.c.h.b16 %v261
    %v1013 = vunpack.c.l.b16 %v262
    %v1014 = vunpack.c.h.b16 %v262
    %v1015 = vunpack.c.l.b16 %v263
    %v1016 = vunpack.c.h.b16 %v263
    %v1017 = vunpack.c.l.b16 %v264
    %v1018 = vunpack.c.h.b16 %v264
    %v1019 = vunpack.c.l.b16 %v265
    %v1020 = vunpack.c.h.b16 %v265
    %v1021 = vunpack.c.l.b16 %v266
    %v1022 = vunpack.c.h.b16 %v266
    %v1023 = vunpack.c.l.b16 %v267
    %v1024 = vunpack.c.h.b16 %v267
    %v1025 = vunpack.c.l.b16 %v268
    %v1026 = vunpack.c.h.b16 %v268
    %v1027 = vunpack.c.l.b16 %v269
    %v1028 = vunpack.c.h.b16 %v269
    %v1029 = vunpack.c.l.b16 %v270
    %v1030 = vunpack.c.h.b16 %v270
    %v1031 = vunpack.c.l.b16 %v271
    %v1032 = vunpack.c.h.b16 %v271
    %v1033 = vunpack.c.l.b16 %v272
    %v1034 = vunpack.c.h.b16 %v272
    %v1035 = vunpack.c.l.b16 %v273
    %v1036 = vunpack.c.h.b16 %v273
    %v1037 = vunpack.c.l.b16 %v274
    %v1038 = vunpack.c.h.b16 %v274
    %v1039 = vunpack.c.l.b16 %v275
    %v1040 = vunpack.c.h.b16 %v275
    %v1041 = vunpack.c.l.b16 %v276
    %v1042 = vunpack.c.h.b16 %v276
    %v1043 = vunpack.c.l.b16 %v277
    %v1044 = vunpack.c.h.b16 %v277
    %v1045 = vunpack.c.l.b16 %v278
    %v1046 = vunpack.c.h.b16 %v278
    %v1047 = vunpack.c.l.b16 %v279
    %v1048 = vunpack.c.h.b16 %v279
    %v1049 = vunpack.c.l.b16 %v280
    %v1050 = vunpack.c.h.b16 %v280
    %v1051 = vunpack.c.l.b16 %v281
    %v1052 = vunpack.c.h.b16 %v281
    %v1053 = vunpack.c.l.b16 %v282
    %v1054 = vunpack.c.h.b16 %v282
    %v1055 = vunpack.c.l.b16 %v283
    %v1056 = vunpack.c.h.b16 %v283
    %v1057 = vunpack.c.l.b16 %v284
    %v1058 = vunpack.c.h.b16 %v284
    %v1059 = vunpack.c.l.b16 %v285
    %v1060 = vunpack.c.h.b16 %v285
    %v1061 = vunpack.c.l.b16 %v286
    %v1062 = vunpack.c.h.b16 %v286
    %v1063 = vunpack.c.l.b16 %v287
    %v1064 = vunpack.c.h.b16 %v287
    %v1065 = vunpack.c.l.b16 %v288
    %v1066 = vunpack.c.h.b16 %v288
    %v1067 = vunpack.c.l.b16 %v289
    %v1068 = vunpack.c.h.b16 %v289
    %v1069 = vunpack.c.l.b16 %v290
    %v1070 = vunpack.c.h.b16 %v290
    %v1071 = vunpack.c.l.b16 %v291
    %v1072 = vunpack.c.h.b16 %v291
    %v1073 = vunpack.c.l.b16 %v292
    %v1074 = vunpack.c.h.b16 %v292
    %v1075 = vunpack.c.l.b16 %v293
    %v1076 = vunpack.c.h.b16 %v293
    %v1077 = vunpack.c.l.b16 %v294
    %v1078 = vunpack.c.h.b16 %v294
    %v1079 = vunpack.c.l.b16 %v295
    %v1080 = vunpack.c.h.b16 %v295
    %v1081 = vunpack.c.l.b16 %v296
    %v1082 = vunpack.c.h.b16 %v296
    %v1083 = vunpack.c.l.b16 %v297
    %v1084 = vunpack.c.h.b16 %v297
    %v1085 = vunpack.c.l.b16 %v298
    %v1086 = vunpack.c.h.b16 %v298
    %v1087 = vunpack.c.l.b16 %v299
    %v1088 = vunpack.c.h.b16 %v299
    %v1089 = vunpack.c.l.b16 %v300
    %v1090 = vunpack.c.h.b16 %v300
    %v1091 = vunpack.c.l.b16 %v301
    %v1092 = vunpack.c.h.b16 %v301
    %v1093 = vunpack.c.l.b16 %v302
    %v1094 = vunpack.c.h.b16 %v302
    %v1095 = vunpack.c.l.b16 %v303
    %v1096 = vunpack.c.h.b16 %v303
    %v1097 = vunpack.c.l.b16 %v304
    %v1098 = vunpack.c.h.b16 %v304
    %v1099 = vunpack.c.l.b16 %v305
    %v1100 = vunpack.c.h.b16 %v305
    %v1101 = vunpack.c.l.b16 %v306
    %v1102 = vunpack.c.h.b16 %v306
    %v1103 = vunpack.c.l.b16 %v307
    %v1104 = vunpack.c.h.b16 %v307
    %v1105 = vunpack.c.l.b16 %v308
    %v1106 = vunpack.c.h.b16 %v308
    %v1107 = vunpack.c.l.b16 %v309
    %v1108 = vunpack.c.h.b16 %v309
    %v1109 = vunpack.c.l.b16 %v310
    %v1110 = vunpack.c.h.b16 %v310
    %v1111 = vunpack.c.l.b16 %v311
    %v1112 = vunpack.c.h.b16 %v311
    %v1113 = vunpack.c.l.b16 %v312
    %v1114 = vunpack.c.h.b16 %v312
    %v1115 = vunpack.c.l.b16 %v313
    %v1116 = vunpack.c.h.b16 %v313
    %v1117 = vunpack.c.l.b16 %v314
    %v1118 = vunpack.c.h.b16 %v314
    %v1119 = vunpack.c.l.b16 %v315
    %v1120 = vunpack.c.h.b16 %v315
    %v1121 = vunpack.c.l.b16 %v316
    %v1122 = vunpack.c.h.b16 %v316
    %v1123 = vunpack.c.l.b16 %v317
    %v1124 = vunpack.c.h.b16 %v317
    %v1125 = vunpack.c.l.b16 %v318
    %v1126 = vunpack.c.h.b16 %v318
    %v1127 = vunpack.c.l.b16 %v319
    %v1128 = vunpack.c.h.b16 %v319
    %v1129 = vunpack.c.l.b16 %v320
    %v1130 = vunpack.c.h.b16 %v320
    %v1131 = vunpack.c.l.b16 %v321
    %v1132 = vunpack.c.h.b16 %v321
    %v1133 = vunpack.c.l.b16 %v322
    %v1134 = vunpack.c.h.b16 %v322
    %v1135 = vunpack.c.l.b16 %v323
    %v1136 = vunpack.c.h.b16 %v323
    %v1137 = vunpack.c.l.b16 %v324
    %v1138 = vunpack.c.h.b16 %v324
    %v1139 = vunpack.c.l.b16 %v325
    %v1140 = vunpack.c.h.b16 %v325
    %v1141 = vunpack.c.l.b16 %v326
    %v1142 = vunpack.c.h.b16 %v326
    %v1143 = vunpack.c.l.b16 %v327
    %v1144 = vunpack.c.h.b16 %v327
    %v1145 = vunpack.c.l.b16 %v328
    %v1146 = vunpack.c.h.b16 %v328
    %v1147 = vunpack.c.l.b16 %v329
    %v1148 = vunpack.c.h.b16 %v329
    %v1149 = vunpack.c.l.b16 %v330
    %v1150 = vunpack.c.h.b16 %v330
    %v1151 = vunpack.c.l.b16 %v331
    %v1152 = vunpack.c.h.b16 %v331
    %v1153 = vunpack.c.l.b16 %v332
    %v1154 = vunpack.c.h.b16 %v332
    %v1155 = vunpack.c.l.b16 %v333
    %v1156 = vunpack.c.h.b16 %v333
    %v1157 = vunpack.c.l.b16 %v334
    %v1158 = vunpack.c.h.b16 %v334
    %v1159 = vunpack.c.l.b16 %v335
    %v1160 = vunpack.c.h.b16 %v335
    %v1161 = vunpack.c.l.b16 %v336
    %v1162 = vunpack.c.h.b16 %v336
    %v1163 = vunpack.c.l.b16 %v337
    %v1164 = vunpack.c.h.b16 %v337
    %v1165 = vunpack.c.l.b16 %v338
    %v1166 = vunpack.c.h.b16 %v338
    %v1167 = vunpack.c.l.b16 %v339
    %v1168 = vunpack.c.h.b16 %v339
    %v1169 = vunpack.c.l.b16 %v340
    %v1170 = vunpack.c.h.b16 %v340
    %v1171 = vunpack.c.l.b16 %v341
    %v1172 = vunpack.c.h.b16 %v341
    %v1173 = vunpack.c.l.b16 %v342
    %v1174 = vunpack.c.h.b16 %v342
    %v1175 = vunpack.c.l.b16 %v343
    %v1176 = vunpack.c.h.b16 %v343
    %v1177 = vunpack.c.l.b16 %v344
    %v1178 = vunpack.c.h.b16 %v344
    %v1179 = vunpack.c.l.b16 %v345
    %v1180 = vunpack.c.h.b16 %v345
    %v1181 = vunpack.c.l.b16 %v346
    %v1182 = vunpack.c.h.b16 %v346
    %v1183 = vunpack.c.l.b16 %v347
    %v1184 = vunpack.c.h.b16 %v347
    %v1185 = vunpack.c.l.b16 %v348
    %v1186 = vunpack.c.h.b16 %v348
    %v1187 = vunpack.c.l.b16 %v349
    %v1188 = vunpack.c.h.b16 %v349
    %v1189 = vunpack.c.l.b16 %v350
    %v1190 = vunpack.c.h.b16 %v350
    %v1191 = vpack.c.b16 %v711, %v679
    %v1192 = vpack.c.b16 %v712, %v680
    %v1193 = vpack.c.b16 %v713, %v681
    %v1194 = vpack.c.b16 %v714, %v682
    %v1195 = vpack.c.b16 %v715, %v683
    %v1196 = vpack.c.b16 %v716, %v684
    %v1197 = vpack.c.b16 %v717, %v685
    %v1198 = vpack.c.b16 %v718, %v686
    %v1199 = vpack.c.b16 %v719, %v687
    %v1200 = vpack.c.b16 %v720, %v688
    %v1201 = vpack.c.b16 %v721, %v689
    %v1202 = vpack.c.b16 %v722, %v690
    %v1203 = vpack.c.b16 %v723, %v691
    %v1204 = vpack.c.b16 %v724, %v692
    %v1205 = vpack.c.b16 %v725, %v693
    %v1206 = vpack.c.b16 %v726, %v694
    %v1207 = vpack.c.b16 %v727, %v695
    %v1208 = vpack.c.b16 %v728, %v696
    %v1209 = vpack.c.b16 %v729, %v697
    %v1210 = vpack.c.b16 %v730, %v698
    %v1211 = vpack.c.b16 %v731, %v699
    %v1212 = vpack.c.b16 %v732, %v700
    %v1213 = vpack.c.b16 %v733, %v701
    %v1214 = vpack.c.b16 %v734, %v702
    %v1215 = vpack.c.b16 %v735, %v703
    %v1216 = vpack.c.b16 %v736, %v704
    %v1217 = vpack.c.b16 %v737, %v705
    %v1218 = vpack.c.b16 %v738, %v706
    %v1219 = vpack.c.b16 %v739, %v707
    %v1220 = vpack.c.b16 %v740, %v708
    %v1221 = vpack.c.b16 %v741, %v709
    %v1222 = vpack.c.b16 %v742, %v710
    %v1223 = vpack.c.b16 %v775, %v743
    %v1224 = vpack.c.b16 %v776, %v744
    %v1225 = vpack.c.b16 %v777, %v745
    %v1226 = vpack.c.b16 %v778, %v746
    %v1227 = vpack.c.b16 %v779, %v747
    %v1228 = vpack.c.b16 %v780, %v748
    %v1229 = vpack.c.b16 %v781, %v749
    %v1230 = vpack.c.b16 %v782, %v750
    %v1231 = vpack.c.b16 %v783, %v751
    %v1232 = vpack.c.b16 %v784, %v752
    %v1233 = vpack.c.b16 %v785, %v753
    %v1234 = vpack.c.b16 %v786, %v754
    %v1235 = vpack.c.b16 %v787, %v755
    %v1236 = vpack.c.b16 %v788, %v756
    %v1237 = vpack.c.b16 %v789, %v757
    %v1238 = vpack.c.b16 %v790, %v758
    %v1239 = vpack.c.b16 %v791, %v759
    %v1240 = vpack.c.b16 %v792, %v760
    %v1241 = vpack.c.b16 %v793, %v761
    %v1242 = vpack.c.b16 %v794, %v762
    %v1243 = vpack.c.b16 %v795, %v763
    %v1244 = vpack.c.b16 %v796, %v764
    %v1245 = vpack.c.b16 %v797, %v765
    %v1246 = vpack.c.b16 %v798, %v766
    %v1247 = vpack.c.b16 %v799, %v767
    %v1248 = vpack.c.b16 %v800, %v768
    %v1249 = vpack.c.b16 %v801, %v769
    %v1250 = vpack.c.b16 %v802, %v770
    %v1251 = vpack.c.b16 %v803, %v771
    %v1252 = vpack.c.b16 %v804, %v772
    %v1253 = vpack.c.b16 %v805, %v773
    %v1254 = vpack.c.b16 %v806, %v774
    %v1255 = vpack.c.b16 %v839, %v807
    %v1256 = vpack.c.b16 %v840, %v808
    %v1257 = vpack.c.b16 %v841, %v809
    %v1258 = vpack.c.b16 %v842, %v810
    %v1259 = vpack.c.b16 %v843, %v811
    %v1260 = vpack.c.b16 %v844, %v812
    %v1261 = vpack.c.b16 %v845, %v813
    %v1262 = vpack.c.b16 %v846, %v814
    %v1263 = vpack.c.b16 %v847, %v815
    %v1264 = vpack.c.b16 %v848, %v816
    %v1265 = vpack.c.b16 %v849, %v817
    %v1266 = vpack.c.b16 %v850, %v818
    %v1267 = vpack.c.b16 %v851, %v819
    %v1268 = vpack.c.b16 %v852, %v820
    %v1269 = vpack.c.b16 %v853, %v821
    %v1270 = vpack.c.b16 %v854, %v822
    %v1271 = vpack.c.b16 %v855, %v823
    %v1272 = vpack.c.b16 %v856, %v824
    %v1273 = vpack.c.b16 %v857, %v825
    %v1274 = vpack.c.b16 %v858, %v826
    %v1275 = vpack.c.b16 %v859, %v827
    %v1276 = vpack.c.b16 %v860, %v828
    %v1277 = vpack.c.b16 %v861, %v829
    %v1278 = vpack.c.b16 %v862, %v830
    %v1279 = vpack.c.b16 %v863, %v831
    %v1280 = vpack.c.b16 %v864, %v832
    %v1281 = vpack.c.b16 %v865, %v833
    %v1282 = vpack.c.b16 %v866, %v834
    %v1283 = vpack.c.b16 %v867, %v835
    %v1284 = vpack.c.b16 %v868, %v836
    %v1285 = vpack.c.b16 %v869, %v837
    %v1286 = vpack.c.b16 %v870, %v838
    %v1287 = vpack.c.b16 %v903, %v871
    %v1288 = vpack.c.b16 %v904, %v872
    %v1289 = vpack.c.b16 %v905, %v873
    %v1290 = vpack.c.b16 %v906, %v874
    %v1291 = vpack.c.b16 %v907, %v875
    %v1292 = vpack.c.b16 %v908, %v876
    %v1293 = vpack.c.b16 %v909, %v877
    %v1294 = vpack.c.b16 %v910, %v878
    %v1295 = vpack.c.b16 %v911, %v879
    %v1296 = vpack.c.b16 %v912, %v880
    %v1297 = vpack.c.b16 %v913, %v881
    %v1298 = vpack.c.b16 %v914, %v882
    %v1299 = vpack.c.b16 %v915, %v883
    %v1300 = vpack.c.b16 %v916, %v884
    %v1301 = vpack.c.b16 %v917, %v885
    %v1302 = vpack.c.b16 %v918, %v886
    %v1303 = vpack.c.b16 %v919, %v887
    %v1304 = vpack.c.b16 %v920, %v888
    %v1305 = vpack.c.b16 %v921, %v889
    %v1306 = vpack.c.b16 %v922, %v890
    %v1307 = vpack.c.b16 %v923, %v891
    %v1308 = vpack.c.b16 %v924, %v892
    %v1309 = vpack.c.b16 %v925, %v893
    %v1310 = vpack.c.b16 %v926, %v894
    %v1311 = vpack.c.b16 %v927, %v895
    %v1312 = vpack.c.b16 %v928, %v896
    %v1313 = vpack.c.b16 %v929, %v897
    %v1314 = vpack.c.b16 %v930, %v898
    %v1315 = vpack.c.b16 %v931, %v899
    %v1316 = vpack.c.b16 %v932, %v900
    %v1317 = vpack.c.b16 %v933, %v901
    %v1318 = vpack.c.b16 %v934, %v902
    %v1319 = vpack.c.b16 %v967, %v935
    %v1320 = vpack.c.b16 %v968, %v936
    %v1321 = vpack.c.b16 %v969, %v937
    %v1322 = vpack.c.b16 %v970, %v938
    %v1323 = vpack.c.b16 %v971, %v939
    %v1324 = vpack.c.b16 %v972, %v940
    %v1325 = vpack.c.b16 %v973, %v941
    %v1326 = vpack.c.b16 %v974, %v942
    %v1327 = vpack.c.b16 %v975, %v943
    %v1328 = vpack.c.b16 %v976, %v944
    %v1329 = vpack.c.b16 %v977, %v945
    %v1330 = vpack.c.b16 %v978, %v946
    %v1331 = vpack.c.b16 %v979, %v947
    %v1332 = vpack.c.b16 %v980, %v948
    %v1333 = vpack.c.b16 %v981, %v949
    %v1334 = vpack.c.b16 %v982, %v950
    %v1335 = vpack.c.b16 %v983, %v951
    %v1336 = vpack.c.b16 %v984, %v952
    %v1337 = vpack.c.b16 %v985, %v953
    %v1338 = vpack.c.b16 %v986, %v954
    %v1339 = vpack.c.b16 %v987, %v955
    %v1340 = vpack.c.b16 %v988, %v956
    %v1341 = vpack.c.b16 %v989, %v957
    %v1342 = vpack.c.b16 %v990, %v958
    %v1343 = vpack.c.b16 %v991, %v959
    %v1344 = vpack.c.b16 %v992, %v960
    %v1345 = vpack.c.b16 %v993, %v961
    %v1346 = vpack.c.b16 %v994, %v962
    %v1347 = vpack.c.b16 %v995, %v963
    %v1348 = vpack.c.b16 %v996, %v964
    %v1349 = vpack.c.b16 %v997, %v965
    %v1350 = vpack.c.b16 %v998, %v966
    %v1351 = vpack.c.b16 %v1031, %v999
    %v1352 = vpack.c.b16 %v1032, %v1000
    %v1353 = vpack.c.b16 %v1033, %v1001
    %v1354 = vpack.c.b16 %v1034, %v1002
    %v1355 = vpack.c.b16 %v1035, %v1003
    %v1356 = vpack.c.b16 %v1036, %v1004
    %v1357 = vpack.c.b16 %v1037, %v1005
    %v1358 = vpack.c.b16 %v1038, %v1006
    %v1359 = vpack.c.b16 %v1039, %v1007
    %v1360 = vpack.c.b16 %v1040, %v1008
    %v1361 = vpack.c.b16 %v1041, %v1009
    %v1362 = vpack.c.b16 %v1042, %v1010
    %v1363 = vpack.c.b16 %v1043, %v1011
    %v1364 = vpack.c.b16 %v1044, %v1012
    %v1365 = vpack.c.b16 %v1045, %v1013
    %v1366 = vpack.c.b16 %v1046, %v1014
    %v1367 = vpack.c.b16 %v1047, %v1015
    %v1368 = vpack.c.b16 %v1048, %v1016
    %v1369 = vpack.c.b16 %v1049, %v1017
    %v1370 = vpack.c.b16 %v1050, %v1018
    %v1371 = vpack.c.b16 %v1051, %v1019
    %v1372 = vpack.c.b16 %v1052, %v1020
    %v1373 = vpack.c.b16 %v1053, %v1021
    %v1374 = vpack.c.b16 %v1054, %v1022
    %v1375 = vpack.c.b16 %v1055, %v1023
    %v1376 = vpack.c.b16 %v1056, %v1024
    %v1377 = vpack.c.b16 %v1057, %v1025
    %v1378 = vpack.c.b16 %v1058, %v1026
    %v1379 = vpack.c.b16 %v1059, %v1027
    %v1380 = vpack.c.b16 %v1060, %v1028
    %v1381 = vpack.c.b16 %v1061, %v1029
    %v1382 = vpack.c.b16 %v1062, %v1030
    %v1383 = vpack.c.b16 %v1095, %v1063
    %v1384 = vpack.c.b16 %v1096, %v1064
    %v1385 = vpack.c.b16 %v1097, %v1065
    %v1386 = vpack.c.b16 %v1098, %v1066
    %v1387 = vpack.c.b16 %v1099, %v1067
    %v1388 = vpack.c.b16 %v1100, %v1068
    %v1389 = vpack.c.b16 %v1101, %v1069
    %v1390 = vpack.c.b16 %v1102, %v1070
    %v1391 = vpack.c.b16 %v1103, %v1071
    %v1392 = vpack.c.b16 %v1104, %v1072
    %v1393 = vpack.c.b16 %v1105, %v1073
    %v1394 = vpack.c.b16 %v1106, %v1074
    %v1395 = vpack.c.b16 %v1107, %v1075
    %v1396 = vpack.c.b16 %v1108, %v1076
    %v1397 = vpack.c.b16 %v1109, %v1077
    %v1398 = vpack.c.b16 %v1110, %v1078
    %v1399 = vpack.c.b16 %v1111, %v1079
    %v1400 = vpack.c.b16 %v1112, %v1080
    %v1401 = vpack.c.b16 %v1113, %v1081
    %v1402 = vpack.c.b16 %v1114, %v1082
    %v1403 = vpack.c.b16 %v1115, %v1083
    %v1404 = vpack.c.b16 %v1116, %v1084
    %v1405 = vpack.c.b16 %v1117, %v1085
    %v1406 = vpack.c.b16 %v1118, %v1086
    %v1407 = vpack.c.b16 %v1119, %v1087
    %v1408 = vpack.c.b16 %v1120, %v1088
    %v1409 = vpack.c.b16 %v1121, %v1089
    %v1410 = vpack.c.b16 %v1122, %v1090
    %v1411 = vpack.c.b16 %v1123, %v1091
    %v1412 = vpack.c.b16 %v1124, %v1092
    %v1413 = vpack.c.b16 %v1125, %v1093
    %v1414 = vpack.c.b16 %v1126, %v1094
    %v1415 = vpack.c.b16 %v1159, %v1127
    %v1416 = vpack.c.b16 %v1160, %v1128
    %v1417 = vpack.c.b16 %v1161, %v1129
    %v1418 = vpack.c.b16 %v1162, %v1130
    %v1419 = vpack.c.b16 %v1163, %v1131
    %v1420 = vpack.c.b16 %v1164, %v1132
    %v1421 = vpack.c.b16 %v1165, %v1133
    %v1422 = vpack.c.b16 %v1166, %v1134
    %v1423 = vpack.c.b16 %v1167, %v1135
    %v1424 = vpack.c.b16 %v1168, %v1136
    %v1425 = vpack.c.b16 %v1169, %v1137
    %v1426 = vpack.c.b16 %v1170, %v1138
    %v1427 = vpack.c.b16 %v1171, %v1139
    %v1428 = vpack.c.b16 %v1172, %v1140
    %v1429 = vpack.c.b16 %v1173, %v1141
    %v1430 = vpack.c.b16 %v1174, %v1142
    %v1431 = vpack.c.b16 %v1175, %v1143
    %v1432 = vpack.c.b16 %v1176, %v1144
    %v1433 = vpack.c.b16 %v1177, %v1145
    %v1434 = vpack.c.b16 %v1178, %v1146
    %v1435 = vpack.c.b16 %v1179, %v1147
    %v1436 = vpack.c.b16 %v1180, %v1148
    %v1437 = vpack.c.b16 %v1181, %v1149
    %v1438 = vpack.c.b16 %v1182, %v1150
    %v1439 = vpack.c.b16 %v1183, %v1151
    %v1440 = vpack.c.b16 %v1184, %v1152
    %v1441 = vpack.c.b16 %v1185, %v1153
    %v1442 = vpack.c.b16 %v1186, %v1154
    %v1443 = vpack.c.b16 %v1187, %v1155
    %v1444 = vpack.c.b16 %v1188, %v1156
    %v1445 = vpack.c.b16 %v1189, %v1157
    %v1446 = vpack.c.b16 %v1190, %v1158
    %1703 = vmatpush.bf16.msra.mxu0 %v1415
    %1704 = vmatpush.bf16.msra.mxu0 %v1383
    %1705 = vmatpush.bf16.msra.mxu0 %v1351
    %1706 = vmatpush.bf16.msra.mxu0 %v1319
    %1707 = vmatpush.bf16.msra.mxu0 %v1287
    %1708 = vmatpush.bf16.msra.mxu0 %v1255
    %1709 = vmatpush.bf16.msra.mxu0 %v1223
    %1710 = vmatpush.bf16.msra.mxu0 %v1191
    %1711 = vmatmul.bf16.gmra.mxu0 %v94
    %v1712 = vpop.f32.mrf.mxu0
    %v1713 = vadd.f32 %v359, %v1712
    %v1714 = vpop.f32.mrf.mxu0
    %1715 = vdwg.mxu0
    %1716 = vmatpush.bf16.msra.mxu0 %v1416
    %1717 = vmatpush.bf16.msra.mxu0 %v1384
    %1718 = vmatpush.bf16.msra.mxu0 %v1352
    %1719 = vmatpush.bf16.msra.mxu0 %v1320
    %1720 = vmatpush.bf16.msra.mxu0 %v1288
    %1721 = vmatpush.bf16.msra.mxu0 %v1256
    %1722 = vmatpush.bf16.msra.mxu0 %v1224
    %1723 = vmatpush.bf16.msra.mxu0 %v1192
    %1724 = vmatmul.bf16.gmra.mxu0 %v94
    %v1725 = vpop.f32.mrf.mxu0
    %v1726 = vadd.f32 %v360, %v1725
    %v1727 = vpop.f32.mrf.mxu0
    %1728 = vdwg.mxu0
    %1729 = vmatpush.bf16.msra.mxu0 %v1417
    %1730 = vmatpush.bf16.msra.mxu0 %v1385
    %1731 = vmatpush.bf16.msra.mxu0 %v1353
    %1732 = vmatpush.bf16.msra.mxu0 %v1321
    %1733 = vmatpush.bf16.msra.mxu0 %v1289
    %1734 = vmatpush.bf16.msra.mxu0 %v1257
    %1735 = vmatpush.bf16.msra.mxu0 %v1225
    %1736 = vmatpush.bf16.msra.mxu0 %v1193
    %1737 = vmatmul.bf16.gmra.mxu0 %v94
    %v1738 = vpop.f32.mrf.mxu0
    %v1739 = vadd.f32 %v361, %v1738
    %v1740 = vpop.f32.mrf.mxu0
    %1741 = vdwg.mxu0
    %1742 = vmatpush.bf16.msra.mxu0 %v1418
    %1743 = vmatpush.bf16.msra.mxu0 %v1386
    %1744 = vmatpush.bf16.msra.mxu0 %v1354
    %1745 = vmatpush.bf16.msra.mxu0 %v1322
    %1746 = vmatpush.bf16.msra.mxu0 %v1290
    %1747 = vmatpush.bf16.msra.mxu0 %v1258
    %1748 = vmatpush.bf16.msra.mxu0 %v1226
    %1749 = vmatpush.bf16.msra.mxu0 %v1194
    %1750 = vmatmul.bf16.gmra.mxu0 %v94
    %v1751 = vpop.f32.mrf.mxu0
    %v1752 = vadd.f32 %v362, %v1751
    %v1753 = vpop.f32.mrf.mxu0
    %1754 = vdwg.mxu0
    %1755 = vmatpush.bf16.msra.mxu0 %v1419
    %1756 = vmatpush.bf16.msra.mxu0 %v1387
    %1757 = vmatpush.bf16.msra.mxu0 %v1355
    %1758 = vmatpush.bf16.msra.mxu0 %v1323
    %1759 = vmatpush.bf16.msra.mxu0 %v1291
    %1760 = vmatpush.bf16.msra.mxu0 %v1259
    %1761 = vmatpush.bf16.msra.mxu0 %v1227
    %1762 = vmatpush.bf16.msra.mxu0 %v1195
    %1763 = vmatmul.bf16.gmra.mxu0 %v94
    %v1764 = vpop.f32.mrf.mxu0
    %v1765 = vadd.f32 %v363, %v1764
    %v1766 = vpop.f32.mrf.mxu0
    %1767 = vdwg.mxu0
    %1768 = vmatpush.bf16.msra.mxu0 %v1420
    %1769 = vmatpush.bf16.msra.mxu0 %v1388
    %1770 = vmatpush.bf16.msra.mxu0 %v1356
    %1771 = vmatpush.bf16.msra.mxu0 %v1324
    %1772 = vmatpush.bf16.msra.mxu0 %v1292
    %1773 = vmatpush.bf16.msra.mxu0 %v1260
    %1774 = vmatpush.bf16.msra.mxu0 %v1228
    %1775 = vmatpush.bf16.msra.mxu0 %v1196
    %1776 = vmatmul.bf16.gmra.mxu0 %v94
    %v1777 = vpop.f32.mrf.mxu0
    %v1778 = vadd.f32 %v364, %v1777
    %v1779 = vpop.f32.mrf.mxu0
    %1780 = vdwg.mxu0
    %1781 = vmatpush.bf16.msra.mxu0 %v1421
    %1782 = vmatpush.bf16.msra.mxu0 %v1389
    %1783 = vmatpush.bf16.msra.mxu0 %v1357
    %1784 = vmatpush.bf16.msra.mxu0 %v1325
    %1785 = vmatpush.bf16.msra.mxu0 %v1293
    %1786 = vmatpush.bf16.msra.mxu0 %v1261
    %1787 = vmatpush.bf16.msra.mxu0 %v1229
    %1788 = vmatpush.bf16.msra.mxu0 %v1197
    %1789 = vmatmul.bf16.gmra.mxu0 %v94
    %v1790 = vpop.f32.mrf.mxu0
    %v1791 = vadd.f32 %v365, %v1790
    %v1792 = vpop.f32.mrf.mxu0
    %1793 = vdwg.mxu0
    %1794 = vmatpush.bf16.msra.mxu0 %v1422
    %1795 = vmatpush.bf16.msra.mxu0 %v1390
    %1796 = vmatpush.bf16.msra.mxu0 %v1358
    %1797 = vmatpush.bf16.msra.mxu0 %v1326
    %1798 = vmatpush.bf16.msra.mxu0 %v1294
    %1799 = vmatpush.bf16.msra.mxu0 %v1262
    %1800 = vmatpush.bf16.msra.mxu0 %v1230
    %1801 = vmatpush.bf16.msra.mxu0 %v1198
    %1802 = vmatmul.bf16.gmra.mxu0 %v94
    %v1803 = vpop.f32.mrf.mxu0
    %v1804 = vadd.f32 %v366, %v1803
    %v1805 = vpop.f32.mrf.mxu0
    %1806 = vdwg.mxu0
    %1807 = vmatpush.bf16.msra.mxu0 %v1423
    %1808 = vmatpush.bf16.msra.mxu0 %v1391
    %1809 = vmatpush.bf16.msra.mxu0 %v1359
    %1810 = vmatpush.bf16.msra.mxu0 %v1327
    %1811 = vmatpush.bf16.msra.mxu0 %v1295
    %1812 = vmatpush.bf16.msra.mxu0 %v1263
    %1813 = vmatpush.bf16.msra.mxu0 %v1231
    %1814 = vmatpush.bf16.msra.mxu0 %v1199
    %1815 = vmatmul.bf16.gmra.mxu0 %v94
    %v1816 = vpop.f32.mrf.mxu0
    %v1817 = vadd.f32 %v367, %v1816
    %v1818 = vpop.f32.mrf.mxu0
    %1819 = vdwg.mxu0
    %1820 = vmatpush.bf16.msra.mxu0 %v1424
    %1821 = vmatpush.bf16.msra.mxu0 %v1392
    %1822 = vmatpush.bf16.msra.mxu0 %v1360
    %1823 = vmatpush.bf16.msra.mxu0 %v1328
    %1824 = vmatpush.bf16.msra.mxu0 %v1296
    %1825 = vmatpush.bf16.msra.mxu0 %v1264
    %1826 = vmatpush.bf16.msra.mxu0 %v1232
    %1827 = vmatpush.bf16.msra.mxu0 %v1200
    %1828 = vmatmul.bf16.gmra.mxu0 %v94
    %v1829 = vpop.f32.mrf.mxu0
    %v1830 = vadd.f32 %v368, %v1829
    %v1831 = vpop.f32.mrf.mxu0
    %1832 = vdwg.mxu0
    %1833 = vmatpush.bf16.msra.mxu0 %v1425
    %1834 = vmatpush.bf16.msra.mxu0 %v1393
    %1835 = vmatpush.bf16.msra.mxu0 %v1361
    %1836 = vmatpush.bf16.msra.mxu0 %v1329
    %1837 = vmatpush.bf16.msra.mxu0 %v1297
    %1838 = vmatpush.bf16.msra.mxu0 %v1265
    %1839 = vmatpush.bf16.msra.mxu0 %v1233
    %1840 = vmatpush.bf16.msra.mxu0 %v1201
    %1841 = vmatmul.bf16.gmra.mxu0 %v94
    %v1842 = vpop.f32.mrf.mxu0
    %v1843 = vadd.f32 %v369, %v1842
    %v1844 = vpop.f32.mrf.mxu0
    %1845 = vdwg.mxu0
    %1846 = vmatpush.bf16.msra.mxu0 %v1426
    %1847 = vmatpush.bf16.msra.mxu0 %v1394
    %1848 = vmatpush.bf16.msra.mxu0 %v1362
    %1849 = vmatpush.bf16.msra.mxu0 %v1330
    %1850 = vmatpush.bf16.msra.mxu0 %v1298
    %1851 = vmatpush.bf16.msra.mxu0 %v1266
    %1852 = vmatpush.bf16.msra.mxu0 %v1234
    %1853 = vmatpush.bf16.msra.mxu0 %v1202
    %1854 = vmatmul.bf16.gmra.mxu0 %v94
    %v1855 = vpop.f32.mrf.mxu0
    %v1856 = vadd.f32 %v370, %v1855
    %v1857 = vpop.f32.mrf.mxu0
    %1858 = vdwg.mxu0
    %1859 = vmatpush.bf16.msra.mxu0 %v1427
    %1860 = vmatpush.bf16.msra.mxu0 %v1395
    %1861 = vmatpush.bf16.msra.mxu0 %v1363
    %1862 = vmatpush.bf16.msra.mxu0 %v1331
    %1863 = vmatpush.bf16.msra.mxu0 %v1299
    %1864 = vmatpush.bf16.msra.mxu0 %v1267
    %1865 = vmatpush.bf16.msra.mxu0 %v1235
    %1866 = vmatpush.bf16.msra.mxu0 %v1203
    %1867 = vmatmul.bf16.gmra.mxu0 %v94
    %v1868 = vpop.f32.mrf.mxu0
    %v1869 = vadd.f32 %v371, %v1868
    %v1870 = vpop.f32.mrf.mxu0
    %1871 = vdwg.mxu0
    %1872 = vmatpush.bf16.msra.mxu0 %v1428
    %1873 = vmatpush.bf16.msra.mxu0 %v1396
    %1874 = vmatpush.bf16.msra.mxu0 %v1364
    %1875 = vmatpush.bf16.msra.mxu0 %v1332
    %1876 = vmatpush.bf16.msra.mxu0 %v1300
    %1877 = vmatpush.bf16.msra.mxu0 %v1268
    %1878 = vmatpush.bf16.msra.mxu0 %v1236
    %1879 = vmatpush.bf16.msra.mxu0 %v1204
    %1880 = vmatmul.bf16.gmra.mxu0 %v94
    %v1881 = vpop.f32.mrf.mxu0
    %v1882 = vadd.f32 %v372, %v1881
    %v1883 = vpop.f32.mrf.mxu0
    %1884 = vdwg.mxu0
    %1885 = vmatpush.bf16.msra.mxu0 %v1429
    %1886 = vmatpush.bf16.msra.mxu0 %v1397
    %1887 = vmatpush.bf16.msra.mxu0 %v1365
    %1888 = vmatpush.bf16.msra.mxu0 %v1333
    %1889 = vmatpush.bf16.msra.mxu0 %v1301
    %1890 = vmatpush.bf16.msra.mxu0 %v1269
    %1891 = vmatpush.bf16.msra.mxu0 %v1237
    %1892 = vmatpush.bf16.msra.mxu0 %v1205
    %1893 = vmatmul.bf16.gmra.mxu0 %v94
    %v1894 = vpop.f32.mrf.mxu0
    %v1895 = vadd.f32 %v373, %v1894
    %v1896 = vpop.f32.mrf.mxu0
    %1897 = vdwg.mxu0
    %1898 = vmatpush.bf16.msra.mxu0 %v1430
    %1899 = vmatpush.bf16.msra.mxu0 %v1398
    %1900 = vmatpush.bf16.msra.mxu0 %v1366
    %1901 = vmatpush.bf16.msra.mxu0 %v1334
    %1902 = vmatpush.bf16.msra.mxu0 %v1302
    %1903 = vmatpush.bf16.msra.mxu0 %v1270
    %1904 = vmatpush.bf16.msra.mxu0 %v1238
    %1905 = vmatpush.bf16.msra.mxu0 %v1206
    %1906 = vmatmul.bf16.gmra.mxu0 %v94
    %v1907 = vpop.f32.mrf.mxu0
    %v1908 = vadd.f32 %v374, %v1907
    %v1909 = vpop.f32.mrf.mxu0
    %1910 = vdwg.mxu0
    %1911 = vmatpush.bf16.msra.mxu0 %v1431
    %1912 = vmatpush.bf16.msra.mxu0 %v1399
    %1913 = vmatpush.bf16.msra.mxu0 %v1367
    %1914 = vmatpush.bf16.msra.mxu0 %v1335
    %1915 = vmatpush.bf16.msra.mxu0 %v1303
    %1916 = vmatpush.bf16.msra.mxu0 %v1271
    %1917 = vmatpush.bf16.msra.mxu0 %v1239
    %1918 = vmatpush.bf16.msra.mxu0 %v1207
    %1919 = vmatmul.bf16.gmra.mxu0 %v94
    %v1920 = vpop.f32.mrf.mxu0
    %v1921 = vadd.f32 %v375, %v1920
    %v1922 = vpop.f32.mrf.mxu0
    %1923 = vdwg.mxu0
    %1924 = vmatpush.bf16.msra.mxu0 %v1432
    %1925 = vmatpush.bf16.msra.mxu0 %v1400
    %1926 = vmatpush.bf16.msra.mxu0 %v1368
    %1927 = vmatpush.bf16.msra.mxu0 %v1336
    %1928 = vmatpush.bf16.msra.mxu0 %v1304
    %1929 = vmatpush.bf16.msra.mxu0 %v1272
    %1930 = vmatpush.bf16.msra.mxu0 %v1240
    %1931 = vmatpush.bf16.msra.mxu0 %v1208
    %1932 = vmatmul.bf16.gmra.mxu0 %v94
    %v1933 = vpop.f32.mrf.mxu0
    %v1934 = vadd.f32 %v376, %v1933
    %v1935 = vpop.f32.mrf.mxu0
    %1936 = vdwg.mxu0
    %1937 = vmatpush.bf16.msra.mxu0 %v1433
    %1938 = vmatpush.bf16.msra.mxu0 %v1401
    %1939 = vmatpush.bf16.msra.mxu0 %v1369
    %1940 = vmatpush.bf16.msra.mxu0 %v1337
    %1941 = vmatpush.bf16.msra.mxu0 %v1305
    %1942 = vmatpush.bf16.msra.mxu0 %v1273
    %1943 = vmatpush.bf16.msra.mxu0 %v1241
    %1944 = vmatpush.bf16.msra.mxu0 %v1209
    %1945 = vmatmul.bf16.gmra.mxu0 %v94
    %v1946 = vpop.f32.mrf.mxu0
    %v1947 = vadd.f32 %v377, %v1946
    %v1948 = vpop.f32.mrf.mxu0
    %1949 = vdwg.mxu0
    %1950 = vmatpush.bf16.msra.mxu0 %v1434
    %1951 = vmatpush.bf16.msra.mxu0 %v1402
    %1952 = vmatpush.bf16.msra.mxu0 %v1370
    %1953 = vmatpush.bf16.msra.mxu0 %v1338
    %1954 = vmatpush.bf16.msra.mxu0 %v1306
    %1955 = vmatpush.bf16.msra.mxu0 %v1274
    %1956 = vmatpush.bf16.msra.mxu0 %v1242
    %1957 = vmatpush.bf16.msra.mxu0 %v1210
    %1958 = vmatmul.bf16.gmra.mxu0 %v94
    %v1959 = vpop.f32.mrf.mxu0
    %v1960 = vadd.f32 %v378, %v1959
    %v1961 = vpop.f32.mrf.mxu0
    %1962 = vdwg.mxu0
    %1963 = vmatpush.bf16.msra.mxu0 %v1435
    %1964 = vmatpush.bf16.msra.mxu0 %v1403
    %1965 = vmatpush.bf16.msra.mxu0 %v1371
    %1966 = vmatpush.bf16.msra.mxu0 %v1339
    %1967 = vmatpush.bf16.msra.mxu0 %v1307
    %1968 = vmatpush.bf16.msra.mxu0 %v1275
    %1969 = vmatpush.bf16.msra.mxu0 %v1243
    %1970 = vmatpush.bf16.msra.mxu0 %v1211
    %1971 = vmatmul.bf16.gmra.mxu0 %v94
    %v1972 = vpop.f32.mrf.mxu0
    %v1973 = vadd.f32 %v379, %v1972
    %v1974 = vpop.f32.mrf.mxu0
    %1975 = vdwg.mxu0
    %1976 = vmatpush.bf16.msra.mxu0 %v1436
    %1977 = vmatpush.bf16.msra.mxu0 %v1404
    %1978 = vmatpush.bf16.msra.mxu0 %v1372
    %1979 = vmatpush.bf16.msra.mxu0 %v1340
    %1980 = vmatpush.bf16.msra.mxu0 %v1308
    %1981 = vmatpush.bf16.msra.mxu0 %v1276
    %1982 = vmatpush.bf16.msra.mxu0 %v1244
    %1983 = vmatpush.bf16.msra.mxu0 %v1212
    %1984 = vmatmul.bf16.gmra.mxu0 %v94
    %v1985 = vpop.f32.mrf.mxu0
    %v1986 = vadd.f32 %v380, %v1985
    %v1987 = vpop.f32.mrf.mxu0
    %1988 = vdwg.mxu0
    %1989 = vmatpush.bf16.msra.mxu0 %v1437
    %1990 = vmatpush.bf16.msra.mxu0 %v1405
    %1991 = vmatpush.bf16.msra.mxu0 %v1373
    %1992 = vmatpush.bf16.msra.mxu0 %v1341
    %1993 = vmatpush.bf16.msra.mxu0 %v1309
    %1994 = vmatpush.bf16.msra.mxu0 %v1277
    %1995 = vmatpush.bf16.msra.mxu0 %v1245
    %1996 = vmatpush.bf16.msra.mxu0 %v1213
    %1997 = vmatmul.bf16.gmra.mxu0 %v94
    %v1998 = vpop.f32.mrf.mxu0
    %v1999 = vadd.f32 %v381, %v1998
    %v2000 = vpop.f32.mrf.mxu0
    %2001 = vdwg.mxu0
    %2002 = vmatpush.bf16.msra.mxu0 %v1438
    %2003 = vmatpush.bf16.msra.mxu0 %v1406
    %2004 = vmatpush.bf16.msra.mxu0 %v1374
    %2005 = vmatpush.bf16.msra.mxu0 %v1342
    %2006 = vmatpush.bf16.msra.mxu0 %v1310
    %2007 = vmatpush.bf16.msra.mxu0 %v1278
    %2008 = vmatpush.bf16.msra.mxu0 %v1246
    %2009 = vmatpush.bf16.msra.mxu0 %v1214
    %2010 = vmatmul.bf16.gmra.mxu0 %v94
    %v2011 = vpop.f32.mrf.mxu0
    %v2012 = vadd.f32 %v382, %v2011
    %v2013 = vpop.f32.mrf.mxu0
    %2014 = vdwg.mxu0
    %2015 = vmatpush.bf16.msra.mxu0 %v1439
    %2016 = vmatpush.bf16.msra.mxu0 %v1407
    %2017 = vmatpush.bf16.msra.mxu0 %v1375
    %2018 = vmatpush.bf16.msra.mxu0 %v1343
    %2019 = vmatpush.bf16.msra.mxu0 %v1311
    %2020 = vmatpush.bf16.msra.mxu0 %v1279
    %2021 = vmatpush.bf16.msra.mxu0 %v1247
    %2022 = vmatpush.bf16.msra.mxu0 %v1215
    %2023 = vmatmul.bf16.gmra.mxu0 %v94
    %v2024 = vpop.f32.mrf.mxu0
    %v2025 = vadd.f32 %v383, %v2024
    %v2026 = vpop.f32.mrf.mxu0
    %2027 = vdwg.mxu0
    %2028 = vmatpush.bf16.msra.mxu0 %v1440
    %2029 = vmatpush.bf16.msra.mxu0 %v1408
    %2030 = vmatpush.bf16.msra.mxu0 %v1376
    %2031 = vmatpush.bf16.msra.mxu0 %v1344
    %2032 = vmatpush.bf16.msra.mxu0 %v1312
    %2033 = vmatpush.bf16.msra.mxu0 %v1280
    %2034 = vmatpush.bf16.msra.mxu0 %v1248
    %2035 = vmatpush.bf16.msra.mxu0 %v1216
    %2036 = vmatmul.bf16.gmra.mxu0 %v94
    %v2037 = vpop.f32.mrf.mxu0
    %v2038 = vadd.f32 %v384, %v2037
    %v2039 = vpop.f32.mrf.mxu0
    %2040 = vdwg.mxu0
    %2041 = vmatpush.bf16.msra.mxu0 %v1441
    %2042 = vmatpush.bf16.msra.mxu0 %v1409
    %2043 = vmatpush.bf16.msra.mxu0 %v1377
    %2044 = vmatpush.bf16.msra.mxu0 %v1345
    %2045 = vmatpush.bf16.msra.mxu0 %v1313
    %2046 = vmatpush.bf16.msra.mxu0 %v1281
    %2047 = vmatpush.bf16.msra.mxu0 %v1249
    %2048 = vmatpush.bf16.msra.mxu0 %v1217
    %2049 = vmatmul.bf16.gmra.mxu0 %v94
    %v2050 = vpop.f32.mrf.mxu0
    %v2051 = vadd.f32 %v385, %v2050
    %v2052 = vpop.f32.mrf.mxu0
    %2053 = vdwg.mxu0
    %2054 = vmatpush.bf16.msra.mxu0 %v1442
    %2055 = vmatpush.bf16.msra.mxu0 %v1410
    %2056 = vmatpush.bf16.msra.mxu0 %v1378
    %2057 = vmatpush.bf16.msra.mxu0 %v1346
    %2058 = vmatpush.bf16.msra.mxu0 %v1314
    %2059 = vmatpush.bf16.msra.mxu0 %v1282
    %2060 = vmatpush.bf16.msra.mxu0 %v1250
    %2061 = vmatpush.bf16.msra.mxu0 %v1218
    %2062 = vmatmul.bf16.gmra.mxu0 %v94
    %v2063 = vpop.f32.mrf.mxu0
    %v2064 = vadd.f32 %v386, %v2063
    %v2065 = vpop.f32.mrf.mxu0
    %2066 = vdwg.mxu0
    %2067 = vmatpush.bf16.msra.mxu0 %v1443
    %2068 = vmatpush.bf16.msra.mxu0 %v1411
    %2069 = vmatpush.bf16.msra.mxu0 %v1379
    %2070 = vmatpush.bf16.msra.mxu0 %v1347
    %2071 = vmatpush.bf16.msra.mxu0 %v1315
    %2072 = vmatpush.bf16.msra.mxu0 %v1283
    %2073 = vmatpush.bf16.msra.mxu0 %v1251
    %2074 = vmatpush.bf16.msra.mxu0 %v1219
    %2075 = vmatmul.bf16.gmra.mxu0 %v94
    %v2076 = vpop.f32.mrf.mxu0
    %v2077 = vadd.f32 %v387, %v2076
    %v2078 = vpop.f32.mrf.mxu0
    %2079 = vdwg.mxu0
    %2080 = vmatpush.bf16.msra.mxu0 %v1444
    %2081 = vmatpush.bf16.msra.mxu0 %v1412
    %2082 = vmatpush.bf16.msra.mxu0 %v1380
    %2083 = vmatpush.bf16.msra.mxu0 %v1348
    %2084 = vmatpush.bf16.msra.mxu0 %v1316
    %2085 = vmatpush.bf16.msra.mxu0 %v1284
    %2086 = vmatpush.bf16.msra.mxu0 %v1252
    %2087 = vmatpush.bf16.msra.mxu0 %v1220
    %2088 = vmatmul.bf16.gmra.mxu0 %v94
    %v2089 = vpop.f32.mrf.mxu0
    %v2090 = vadd.f32 %v388, %v2089
    %v2091 = vpop.f32.mrf.mxu0
    %2092 = vdwg.mxu0
    %2093 = vmatpush.bf16.msra.mxu0 %v1445
    %2094 = vmatpush.bf16.msra.mxu0 %v1413
    %2095 = vmatpush.bf16.msra.mxu0 %v1381
    %2096 = vmatpush.bf16.msra.mxu0 %v1349
    %2097 = vmatpush.bf16.msra.mxu0 %v1317
    %2098 = vmatpush.bf16.msra.mxu0 %v1285
    %2099 = vmatpush.bf16.msra.mxu0 %v1253
    %2100 = vmatpush.bf16.msra.mxu0 %v1221
    %2101 = vmatmul.bf16.gmra.mxu0 %v94
    %v2102 = vpop.f32.mrf.mxu0
    %v2103 = vadd.f32 %v389, %v2102
    %v2104 = vpop.f32.mrf.mxu0
    %2105 = vdwg.mxu0
    %2106 = vmatpush.bf16.msra.mxu0 %v1446
    %2107 = vmatpush.bf16.msra.mxu0 %v1414
    %2108 = vmatpush.bf16.msra.mxu0 %v1382
    %2109 = vmatpush.bf16.msra.mxu0 %v1350
    %2110 = vmatpush.bf16.msra.mxu0 %v1318
    %2111 = vmatpush.bf16.msra.mxu0 %v1286
    %2112 = vmatpush.bf16.msra.mxu0 %v1254
    %2113 = vmatpush.bf16.msra.mxu0 %v1222
    %2114 = vmatmul.bf16.gmra.mxu0 %v94
    %v2115 = vpop.f32.mrf.mxu0
    %v2116 = vadd.f32 %v390, %v2115
    %v2117 = vpop.f32.mrf.mxu0
    %2118 = vdwg.mxu0
    %v2119 = vxor.u32 %v1817, 2147483648
    %v2120 = vxor.u32 %v1830, 2147483648
    %v2121 = vxor.u32 %v1843, 2147483648
    %v2122 = vxor.u32 %v1856, 2147483648
    %v2123 = vmul.f32 %v2119, 1.442695
    %v2124 = vpow.pop %v2123
    %v2125 = vmul.f32 %v2120, 1.442695
    %v2126 = vpow.pop %v2125
    %v2127 = vmul.f32 %v2121, 1.442695
    %v2128 = vpow.pop %v2127
    %v2129 = vmul.f32 %v2122, 1.442695
    %v2130 = vpow.pop %v2129
    %v2131 = vadd.f32 %v2124, 1.0
    %v2132 = vadd.f32 %v2126, 1.0
    %v2133 = vadd.f32 %v2128, 1.0
    %v2134 = vadd.f32 %v2130, 1.0
    %v2135 = vrcp.pop %v2131
    %v2136 = vmul.f32 %v2131, %v2135
    %v2137 = vsub.f32 1.0, %v2136
    %v2138 = vmul.f32 %v2135, %v2137
    %v2139 = vadd.f32 %v2135, %v2138
    %vm2140 = vweird.f32 %v2131
    %vm2141 = vweird.f32 %v2135
    %vm2142 = vmor %vm2140, %vm2141
    %v2143 = vsel %vm2142, %v2135, %v2139
    %v2144 = vand.u32 2147483647, %v2131
    %vm2145 = vcmp.eq.f32.partialorder %v2144, 8.507059e+37
    %v2146 = vand.u32 %v2131, 2147483648
    %v2147 = vor.u32 1.1754944e-38, %v2146
    %v2148 = vsel %vm2145, %v2147, %v2143
    %v2149 = vmul.f32 1.0, %v2148
    %v2150 = vrcp.pop %v2132
    %v2151 = vmul.f32 %v2132, %v2150
    %v2152 = vsub.f32 1.0, %v2151
    %v2153 = vmul.f32 %v2150, %v2152
    %v2154 = vadd.f32 %v2150, %v2153
    %vm2155 = vweird.f32 %v2132
    %vm2156 = vweird.f32 %v2150
    %vm2157 = vmor %vm2155, %vm2156
    %v2158 = vsel %vm2157, %v2150, %v2154
    %v2159 = vand.u32 2147483647, %v2132
    %vm2160 = vcmp.eq.f32.partialorder %v2159, 8.507059e+37
    %v2161 = vand.u32 %v2132, 2147483648
    %v2162 = vor.u32 1.1754944e-38, %v2161
    %v2163 = vsel %vm2160, %v2162, %v2158
    %v2164 = vmul.f32 1.0, %v2163
    %v2165 = vrcp.pop %v2133
    %v2166 = vmul.f32 %v2133, %v2165
    %v2167 = vsub.f32 1.0, %v2166
    %v2168 = vmul.f32 %v2165, %v2167
    %v2169 = vadd.f32 %v2165, %v2168
    %vm2170 = vweird.f32 %v2133
    %vm2171 = vweird.f32 %v2165
    %vm2172 = vmor %vm2170, %vm2171
    %v2173 = vsel %vm2172, %v2165, %v2169
    %v2174 = vand.u32 2147483647, %v2133
    %vm2175 = vcmp.eq.f32.partialorder %v2174, 8.507059e+37
    %v2176 = vand.u32 %v2133, 2147483648
    %v2177 = vor.u32 1.1754944e-38, %v2176
    %v2178 = vsel %vm2175, %v2177, %v2173
    %v2179 = vmul.f32 1.0, %v2178
    %v2180 = vrcp.pop %v2134
    %v2181 = vmul.f32 %v2134, %v2180
    %v2182 = vsub.f32 1.0, %v2181
    %v2183 = vmul.f32 %v2180, %v2182
    %v2184 = vadd.f32 %v2180, %v2183
    %vm2185 = vweird.f32 %v2134
    %vm2186 = vweird.f32 %v2180
    %vm2187 = vmor %vm2185, %vm2186
    %v2188 = vsel %vm2187, %v2180, %v2184
    %v2189 = vand.u32 2147483647, %v2134
    %vm2190 = vcmp.eq.f32.partialorder %v2189, 8.507059e+37
    %v2191 = vand.u32 %v2134, 2147483648
    %v2192 = vor.u32 1.1754944e-38, %v2191
    %v2193 = vsel %vm2190, %v2192, %v2188
    %v2194 = vmul.f32 1.0, %v2193
    %v2195 = vxor.u32 %v1713, 2147483648
    %v2196 = vxor.u32 %v1726, 2147483648
    %v2197 = vxor.u32 %v1739, 2147483648
    %v2198 = vxor.u32 %v1752, 2147483648
    %v2199 = vmul.f32 %v2195, 1.442695
    %v2200 = vpow.pop %v2199
    %v2201 = vmul.f32 %v2196, 1.442695
    %v2202 = vpow.pop %v2201
    %v2203 = vmul.f32 %v2197, 1.442695
    %v2204 = vpow.pop %v2203
    %v2205 = vmul.f32 %v2198, 1.442695
    %v2206 = vpow.pop %v2205
    %v2207 = vadd.f32 %v2200, 1.0
    %v2208 = vadd.f32 %v2202, 1.0
    %v2209 = vadd.f32 %v2204, 1.0
    %v2210 = vadd.f32 %v2206, 1.0
    %v2211 = vrcp.pop %v2207
    %v2212 = vmul.f32 %v2207, %v2211
    %v2213 = vsub.f32 1.0, %v2212
    %v2214 = vmul.f32 %v2211, %v2213
    %v2215 = vadd.f32 %v2211, %v2214
    %vm2216 = vweird.f32 %v2207
    %vm2217 = vweird.f32 %v2211
    %vm2218 = vmor %vm2216, %vm2217
    %v2219 = vsel %vm2218, %v2211, %v2215
    %v2220 = vand.u32 2147483647, %v2207
    %vm2221 = vcmp.eq.f32.partialorder %v2220, 8.507059e+37
    %v2222 = vand.u32 %v2207, 2147483648
    %v2223 = vor.u32 1.1754944e-38, %v2222
    %v2224 = vsel %vm2221, %v2223, %v2219
    %v2225 = vmul.f32 1.0, %v2224
    %v2226 = vrcp.pop %v2208
    %v2227 = vmul.f32 %v2208, %v2226
    %v2228 = vsub.f32 1.0, %v2227
    %v2229 = vmul.f32 %v2226, %v2228
    %v2230 = vadd.f32 %v2226, %v2229
    %vm2231 = vweird.f32 %v2208
    %vm2232 = vweird.f32 %v2226
    %vm2233 = vmor %vm2231, %vm2232
    %v2234 = vsel %vm2233, %v2226, %v2230
    %v2235 = vand.u32 2147483647, %v2208
    %vm2236 = vcmp.eq.f32.partialorder %v2235, 8.507059e+37
    %v2237 = vand.u32 %v2208, 2147483648
    %v2238 = vor.u32 1.1754944e-38, %v2237
    %v2239 = vsel %vm2236, %v2238, %v2234
    %v2240 = vmul.f32 1.0, %v2239
    %v2241 = vrcp.pop %v2209
    %v2242 = vmul.f32 %v2209, %v2241
    %v2243 = vsub.f32 1.0, %v2242
    %v2244 = vmul.f32 %v2241, %v2243
    %v2245 = vadd.f32 %v2241, %v2244
    %vm2246 = vweird.f32 %v2209
    %vm2247 = vweird.f32 %v2241
    %vm2248 = vmor %vm2246, %vm2247
    %v2249 = vsel %vm2248, %v2241, %v2245
    %v2250 = vand.u32 2147483647, %v2209
    %vm2251 = vcmp.eq.f32.partialorder %v2250, 8.507059e+37
    %v2252 = vand.u32 %v2209, 2147483648
    %v2253 = vor.u32 1.1754944e-38, %v2252
    %v2254 = vsel %vm2251, %v2253, %v2249
    %v2255 = vmul.f32 1.0, %v2254
    %v2256 = vrcp.pop %v2210
    %v2257 = vmul.f32 %v2210, %v2256
    %v2258 = vsub.f32 1.0, %v2257
    %v2259 = vmul.f32 %v2256, %v2258
    %v2260 = vadd.f32 %v2256, %v2259
    %vm2261 = vweird.f32 %v2210
    %vm2262 = vweird.f32 %v2256
    %vm2263 = vmor %vm2261, %vm2262
    %v2264 = vsel %vm2263, %v2256, %v2260
    %v2265 = vand.u32 2147483647, %v2210
    %vm2266 = vcmp.eq.f32.partialorder %v2265, 8.507059e+37
    %v2267 = vand.u32 %v2210, 2147483648
    %v2268 = vor.u32 1.1754944e-38, %v2267
    %v2269 = vsel %vm2266, %v2268, %v2264
    %v2270 = vmul.f32 1.0, %v2269
    %v2271 = vtanh.pop %v1765
    %v2272 = vtanh.pop %v1778
    %v2273 = vtanh.pop %v1791
    %v2274 = vtanh.pop %v1804
    %v2275 = vmul.f32 %v2225, %v2271
    %v2276 = vmul.f32 %v2240, %v2272
    %v2277 = vmul.f32 %v2255, %v2273
    %v2278 = vmul.f32 %v2270, %v2274
    %v2279 = vtanh.pop %v2275
    %v2280 = vtanh.pop %v2276
    %v2281 = vtanh.pop %v2277
    %v2282 = vtanh.pop %v2278
    %v2283 = vmul.f32 %v2149, %v2279
    %v2284 = vmul.f32 %v2164, %v2280
    %v2285 = vmul.f32 %v2179, %v2281
    %v2286 = vmul.f32 %v2194, %v2282
    %v2287 = vxor.u32 %v2025, 2147483648
    %v2288 = vxor.u32 %v2038, 2147483648
    %v2289 = vxor.u32 %v2051, 2147483648
    %v2290 = vxor.u32 %v2064, 2147483648
    %v2291 = vmul.f32 %v2287, 1.442695
    %v2292 = vpow.pop %v2291
    %v2293 = vmul.f32 %v2288, 1.442695
    %v2294 = vpow.pop %v2293
    %v2295 = vmul.f32 %v2289, 1.442695
    %v2296 = vpow.pop %v2295
    %v2297 = vmul.f32 %v2290, 1.442695
    %v2298 = vpow.pop %v2297
    %v2299 = vadd.f32 %v2292, 1.0
    %v2300 = vadd.f32 %v2294, 1.0
    %v2301 = vadd.f32 %v2296, 1.0
    %v2302 = vadd.f32 %v2298, 1.0
    %v2303 = vrcp.pop %v2299
    %v2304 = vmul.f32 %v2299, %v2303
    %v2305 = vsub.f32 1.0, %v2304
    %v2306 = vmul.f32 %v2303, %v2305
    %v2307 = vadd.f32 %v2303, %v2306
    %vm2308 = vweird.f32 %v2299
    %vm2309 = vweird.f32 %v2303
    %vm2310 = vmor %vm2308, %vm2309
    %v2311 = vsel %vm2310, %v2303, %v2307
    %v2312 = vand.u32 2147483647, %v2299
    %vm2313 = vcmp.eq.f32.partialorder %v2312, 8.507059e+37
    %v2314 = vand.u32 %v2299, 2147483648
    %v2315 = vor.u32 1.1754944e-38, %v2314
    %v2316 = vsel %vm2313, %v2315, %v2311
    %v2317 = vmul.f32 1.0, %v2316
    %v2318 = vrcp.pop %v2300
    %v2319 = vmul.f32 %v2300, %v2318
    %v2320 = vsub.f32 1.0, %v2319
    %v2321 = vmul.f32 %v2318, %v2320
    %v2322 = vadd.f32 %v2318, %v2321
    %vm2323 = vweird.f32 %v2300
    %vm2324 = vweird.f32 %v2318
    %vm2325 = vmor %vm2323, %vm2324
    %v2326 = vsel %vm2325, %v2318, %v2322
    %v2327 = vand.u32 2147483647, %v2300
    %vm2328 = vcmp.eq.f32.partialorder %v2327, 8.507059e+37
    %v2329 = vand.u32 %v2300, 2147483648
    %v2330 = vor.u32 1.1754944e-38, %v2329
    %v2331 = vsel %vm2328, %v2330, %v2326
    %v2332 = vmul.f32 1.0, %v2331
    %v2333 = vrcp.pop %v2301
    %v2334 = vmul.f32 %v2301, %v2333
    %v2335 = vsub.f32 1.0, %v2334
    %v2336 = vmul.f32 %v2333, %v2335
    %v2337 = vadd.f32 %v2333, %v2336
    %vm2338 = vweird.f32 %v2301
    %vm2339 = vweird.f32 %v2333
    %vm2340 = vmor %vm2338, %vm2339
    %v2341 = vsel %vm2340, %v2333, %v2337
    %v2342 = vand.u32 2147483647, %v2301
    %vm2343 = vcmp.eq.f32.partialorder %v2342, 8.507059e+37
    %v2344 = vand.u32 %v2301, 2147483648
    %v2345 = vor.u32 1.1754944e-38, %v2344
    %v2346 = vsel %vm2343, %v2345, %v2341
    %v2347 = vmul.f32 1.0, %v2346
    %v2348 = vrcp.pop %v2302
    %v2349 = vmul.f32 %v2302, %v2348
    %v2350 = vsub.f32 1.0, %v2349
    %v2351 = vmul.f32 %v2348, %v2350
    %v2352 = vadd.f32 %v2348, %v2351
    %vm2353 = vweird.f32 %v2302
    %vm2354 = vweird.f32 %v2348
    %vm2355 = vmor %vm2353, %vm2354
    %v2356 = vsel %vm2355, %v2348, %v2352
    %v2357 = vand.u32 2147483647, %v2302
    %vm2358 = vcmp.eq.f32.partialorder %v2357, 8.507059e+37
    %v2359 = vand.u32 %v2302, 2147483648
    %v2360 = vor.u32 1.1754944e-38, %v2359
    %v2361 = vsel %vm2358, %v2360, %v2356
    %v2362 = vmul.f32 1.0, %v2361
    %v2363 = vxor.u32 %v1921, 2147483648
    %v2364 = vxor.u32 %v1934, 2147483648
    %v2365 = vxor.u32 %v1947, 2147483648
    %v2366 = vxor.u32 %v1960, 2147483648
    %v2367 = vmul.f32 %v2363, 1.442695
    %v2368 = vpow.pop %v2367
    %v2369 = vmul.f32 %v2364, 1.442695
    %v2370 = vpow.pop %v2369
    %v2371 = vmul.f32 %v2365, 1.442695
    %v2372 = vpow.pop %v2371
    %v2373 = vmul.f32 %v2366, 1.442695
    %v2374 = vpow.pop %v2373
    %v2375 = vadd.f32 %v2368, 1.0
    %v2376 = vadd.f32 %v2370, 1.0
    %v2377 = vadd.f32 %v2372, 1.0
    %v2378 = vadd.f32 %v2374, 1.0
    %v2379 = vrcp.pop %v2375
    %v2380 = vmul.f32 %v2375, %v2379
    %v2381 = vsub.f32 1.0, %v2380
    %v2382 = vmul.f32 %v2379, %v2381
    %v2383 = vadd.f32 %v2379, %v2382
    %vm2384 = vweird.f32 %v2375
    %vm2385 = vweird.f32 %v2379
    %vm2386 = vmor %vm2384, %vm2385
    %v2387 = vsel %vm2386, %v2379, %v2383
    %v2388 = vand.u32 2147483647, %v2375
    %vm2389 = vcmp.eq.f32.partialorder %v2388, 8.507059e+37
    %v2390 = vand.u32 %v2375, 2147483648
    %v2391 = vor.u32 1.1754944e-38, %v2390
    %v2392 = vsel %vm2389, %v2391, %v2387
    %v2393 = vmul.f32 1.0, %v2392
    %v2394 = vrcp.pop %v2376
    %v2395 = vmul.f32 %v2376, %v2394
    %v2396 = vsub.f32 1.0, %v2395
    %v2397 = vmul.f32 %v2394, %v2396
    %v2398 = vadd.f32 %v2394, %v2397
    %vm2399 = vweird.f32 %v2376
    %vm2400 = vweird.f32 %v2394
    %vm2401 = vmor %vm2399, %vm2400
    %v2402 = vsel %vm2401, %v2394, %v2398
    %v2403 = vand.u32 2147483647, %v2376
    %vm2404 = vcmp.eq.f32.partialorder %v2403, 8.507059e+37
    %v2405 = vand.u32 %v2376, 2147483648
    %v2406 = vor.u32 1.1754944e-38, %v2405
    %v2407 = vsel %vm2404, %v2406, %v2402
    %v2408 = vmul.f32 1.0, %v2407
    %v2409 = vrcp.pop %v2377
    %v2410 = vmul.f32 %v2377, %v2409
    %v2411 = vsub.f32 1.0, %v2410
    %v2412 = vmul.f32 %v2409, %v2411
    %v2413 = vadd.f32 %v2409, %v2412
    %vm2414 = vweird.f32 %v2377
    %vm2415 = vweird.f32 %v2409
    %vm2416 = vmor %vm2414, %vm2415
    %v2417 = vsel %vm2416, %v2409, %v2413
    %v2418 = vand.u32 2147483647, %v2377
    %vm2419 = vcmp.eq.f32.partialorder %v2418, 8.507059e+37
    %v2420 = vand.u32 %v2377, 2147483648
    %v2421 = vor.u32 1.1754944e-38, %v2420
    %v2422 = vsel %vm2419, %v2421, %v2417
    %v2423 = vmul.f32 1.0, %v2422
    %v2424 = vrcp.pop %v2378
    %v2425 = vmul.f32 %v2378, %v2424
    %v2426 = vsub.f32 1.0, %v2425
    %v2427 = vmul.f32 %v2424, %v2426
    %v2428 = vadd.f32 %v2424, %v2427
    %vm2429 = vweird.f32 %v2378
    %vm2430 = vweird.f32 %v2424
    %vm2431 = vmor %vm2429, %vm2430
    %v2432 = vsel %vm2431, %v2424, %v2428
    %v2433 = vand.u32 2147483647, %v2378
    %vm2434 = vcmp.eq.f32.partialorder %v2433, 8.507059e+37
    %v2435 = vand.u32 %v2378, 2147483648
    %v2436 = vor.u32 1.1754944e-38, %v2435
    %v2437 = vsel %vm2434, %v2436, %v2432
    %v2438 = vmul.f32 1.0, %v2437
    %v2439 = vtanh.pop %v1973
    %v2440 = vtanh.pop %v1986
    %v2441 = vtanh.pop %v1999
    %v2442 = vtanh.pop %v2012
    %v2443 = vmul.f32 %v2393, %v2439
    %v2444 = vmul.f32 %v2408, %v2440
    %v2445 = vmul.f32 %v2423, %v2441
    %v2446 = vmul.f32 %v2438, %v2442
    %v2447 = vtanh.pop %v2443
    %v2448 = vtanh.pop %v2444
    %v2449 = vtanh.pop %v2445
    %v2450 = vtanh.pop %v2446
    %v2451 = vmul.f32 %v2317, %v2447
    %v2452 = vmul.f32 %v2332, %v2448
    %v2453 = vmul.f32 %v2347, %v2449
    %v2454 = vmul.f32 %v2362, %v2450
    %v2455 = vpack.c.bf16 %v2283, %v2283
    %v2456 = vpack.c.bf16 %v2284, %v2284
    %v2457 = vpack.c.bf16 %v2285, %v2285
    %v2458 = vpack.c.bf16 %v2286, %v2286
    %v2459 = vpack.c.bf16 %v2451, %v2451
    %v2460 = vpack.c.bf16 %v2452, %v2452
    %v2461 = vpack.c.bf16 %v2453, %v2453
    %v2462 = vpack.c.bf16 %v2454, %v2454
    %v2463 = vld [vmem:[#allocation8] sm:$0xff]
    %v2464 = vld [vmem:[#allocation8 + $0x8] sm:$0xff]
    %v2465 = vld [vmem:[#allocation8 + $0x10] sm:$0xff]
    %v2466 = vld [vmem:[#allocation8 + $0x18] sm:$0xff]
    %v2467 = vld [vmem:[#allocation8 + $0x20] sm:$0xff]
    %v2468 = vld [vmem:[#allocation8 + $0x28] sm:$0xff]
    %v2469 = vld [vmem:[#allocation8 + $0x30] sm:$0xff]
    %v2470 = vld [vmem:[#allocation8 + $0x38] sm:$0xff]
    %v2471 = vld [vmem:[#allocation8 + $0x40] sm:$0xff]
    %v2472 = vld [vmem:[#allocation8 + $0x48] sm:$0xff]
    %v2473 = vld [vmem:[#allocation8 + $0x50] sm:$0xff]
    %v2474 = vld [vmem:[#allocation8 + $0x58] sm:$0xff]
    %v2475 = vld [vmem:[#allocation8 + $0x60] sm:$0xff]
    %v2476 = vld [vmem:[#allocation8 + $0x68] sm:$0xff]
    %v2477 = vld [vmem:[#allocation8 + $0x70] sm:$0xff]
    %v2478 = vld [vmem:[#allocation8 + $0x78] sm:$0xff]
    %v2479 = vld [vmem:[#allocation8 + $0x80] sm:$0xff]
    %v2480 = vld [vmem:[#allocation8 + $0x88] sm:$0xff]
    %v2481 = vld [vmem:[#allocation8 + $0x90] sm:$0xff]
    %v2482 = vld [vmem:[#allocation8 + $0x98] sm:$0xff]
    %v2483 = vld [vmem:[#allocation8 + $0xa0] sm:$0xff]
    %v2484 = vld [vmem:[#allocation8 + $0xa8] sm:$0xff]
    %v2485 = vld [vmem:[#allocation8 + $0xb0] sm:$0xff]
    %v2486 = vld [vmem:[#allocation8 + $0xb8] sm:$0xff]
    %v2487 = vld [vmem:[#allocation8 + $0xc0] sm:$0xff]
    %v2488 = vld [vmem:[#allocation8 + $0xc8] sm:$0xff]
    %v2489 = vld [vmem:[#allocation8 + $0xd0] sm:$0xff]
    %v2490 = vld [vmem:[#allocation8 + $0xd8] sm:$0xff]
    %v2491 = vld [vmem:[#allocation8 + $0xe0] sm:$0xff]
    %v2492 = vld [vmem:[#allocation8 + $0xe8] sm:$0xff]
    %v2493 = vld [vmem:[#allocation8 + $0xf0] sm:$0xff]
    %v2494 = vld [vmem:[#allocation8 + $0xf8] sm:$0xff]
    %v2495 = vld [vmem:[#allocation8 + $0x100] sm:$0xff]
    %v2496 = vld [vmem:[#allocation8 + $0x108] sm:$0xff]
    %v2497 = vld [vmem:[#allocation8 + $0x110] sm:$0xff]
    %v2498 = vld [vmem:[#allocation8 + $0x118] sm:$0xff]
    %v2499 = vld [vmem:[#allocation8 + $0x120] sm:$0xff]
    %v2500 = vld [vmem:[#allocation8 + $0x128] sm:$0xff]
    %v2501 = vld [vmem:[#allocation8 + $0x130] sm:$0xff]
    %v2502 = vld [vmem:[#allocation8 + $0x138] sm:$0xff]
    %v2503 = vld [vmem:[#allocation8 + $0x140] sm:$0xff]
    %v2504 = vld [vmem:[#allocation8 + $0x148] sm:$0xff]
    %v2505 = vld [vmem:[#allocation8 + $0x150] sm:$0xff]
    %v2506 = vld [vmem:[#allocation8 + $0x158] sm:$0xff]
    %v2507 = vld [vmem:[#allocation8 + $0x160] sm:$0xff]
    %v2508 = vld [vmem:[#allocation8 + $0x168] sm:$0xff]
    %v2509 = vld [vmem:[#allocation8 + $0x170] sm:$0xff]
    %v2510 = vld [vmem:[#allocation8 + $0x178] sm:$0xff]
    %v2511 = vld [vmem:[#allocation8 + $0x180] sm:$0xff]
    %v2512 = vld [vmem:[#allocation8 + $0x188] sm:$0xff]
    %v2513 = vld [vmem:[#allocation8 + $0x190] sm:$0xff]
    %v2514 = vld [vmem:[#allocation8 + $0x198] sm:$0xff]
    %v2515 = vld [vmem:[#allocation8 + $0x1a0] sm:$0xff]
    %v2516 = vld [vmem:[#allocation8 + $0x1a8] sm:$0xff]
    %v2517 = vld [vmem:[#allocation8 + $0x1b0] sm:$0xff]
    %v2518 = vld [vmem:[#allocation8 + $0x1b8] sm:$0xff]
    %v2519 = vld [vmem:[#allocation8 + $0x1c0] sm:$0xff]
    %v2520 = vld [vmem:[#allocation8 + $0x1c8] sm:$0xff]
    %v2521 = vld [vmem:[#allocation8 + $0x1d0] sm:$0xff]
    %v2522 = vld [vmem:[#allocation8 + $0x1d8] sm:$0xff]
    %v2523 = vld [vmem:[#allocation8 + $0x1e0] sm:$0xff]
    %v2524 = vld [vmem:[#allocation8 + $0x1e8] sm:$0xff]
    %v2525 = vld [vmem:[#allocation8 + $0x1f0] sm:$0xff]
    %v2526 = vld [vmem:[#allocation8 + $0x1f8] sm:$0xff]
    %v2527 = vld [vmem:[#allocation8 + $0x200] sm:$0xff]
    %v2528 = vld [vmem:[#allocation8 + $0x208] sm:$0xff]
    %v2529 = vld [vmem:[#allocation8 + $0x210] sm:$0xff]
    %v2530 = vld [vmem:[#allocation8 + $0x218] sm:$0xff]
    %v2531 = vld [vmem:[#allocation8 + $0x220] sm:$0xff]
    %v2532 = vld [vmem:[#allocation8 + $0x228] sm:$0xff]
    %v2533 = vld [vmem:[#allocation8 + $0x230] sm:$0xff]
    %v2534 = vld [vmem:[#allocation8 + $0x238] sm:$0xff]
    %v2535 = vld [vmem:[#allocation8 + $0x240] sm:$0xff]
    %v2536 = vld [vmem:[#allocation8 + $0x248] sm:$0xff]
    %v2537 = vld [vmem:[#allocation8 + $0x250] sm:$0xff]
    %v2538 = vld [vmem:[#allocation8 + $0x258] sm:$0xff]
    %v2539 = vld [vmem:[#allocation8 + $0x260] sm:$0xff]
    %v2540 = vld [vmem:[#allocation8 + $0x268] sm:$0xff]
    %v2541 = vld [vmem:[#allocation8 + $0x270] sm:$0xff]
    %v2542 = vld [vmem:[#allocation8 + $0x278] sm:$0xff]
    %v2543 = vld [vmem:[#allocation8 + $0x280] sm:$0xff]
    %v2544 = vld [vmem:[#allocation8 + $0x288] sm:$0xff]
    %v2545 = vld [vmem:[#allocation8 + $0x290] sm:$0xff]
    %v2546 = vld [vmem:[#allocation8 + $0x298] sm:$0xff]
    %v2547 = vld [vmem:[#allocation8 + $0x2a0] sm:$0xff]
    %v2548 = vld [vmem:[#allocation8 + $0x2a8] sm:$0xff]
    %v2549 = vld [vmem:[#allocation8 + $0x2b0] sm:$0xff]
    %v2550 = vld [vmem:[#allocation8 + $0x2b8] sm:$0xff]
    %v2551 = vld [vmem:[#allocation8 + $0x2c0] sm:$0xff]
    %v2552 = vld [vmem:[#allocation8 + $0x2c8] sm:$0xff]
    %v2553 = vld [vmem:[#allocation8 + $0x2d0] sm:$0xff]
    %v2554 = vld [vmem:[#allocation8 + $0x2d8] sm:$0xff]
    %v2555 = vld [vmem:[#allocation8 + $0x2e0] sm:$0xff]
    %v2556 = vld [vmem:[#allocation8 + $0x2e8] sm:$0xff]
    %v2557 = vld [vmem:[#allocation8 + $0x2f0] sm:$0xff]
    %v2558 = vld [vmem:[#allocation8 + $0x2f8] sm:$0xff]
    %v2559 = vld [vmem:[#allocation8 + $0x300] sm:$0xff]
    %v2560 = vld [vmem:[#allocation8 + $0x308] sm:$0xff]
    %v2561 = vld [vmem:[#allocation8 + $0x310] sm:$0xff]
    %v2562 = vld [vmem:[#allocation8 + $0x318] sm:$0xff]
    %v2563 = vld [vmem:[#allocation8 + $0x320] sm:$0xff]
    %v2564 = vld [vmem:[#allocation8 + $0x328] sm:$0xff]
    %v2565 = vld [vmem:[#allocation8 + $0x330] sm:$0xff]
    %v2566 = vld [vmem:[#allocation8 + $0x338] sm:$0xff]
    %v2567 = vld [vmem:[#allocation8 + $0x340] sm:$0xff]
    %v2568 = vld [vmem:[#allocation8 + $0x348] sm:$0xff]
    %v2569 = vld [vmem:[#allocation8 + $0x350] sm:$0xff]
    %v2570 = vld [vmem:[#allocation8 + $0x358] sm:$0xff]
    %v2571 = vld [vmem:[#allocation8 + $0x360] sm:$0xff]
    %v2572 = vld [vmem:[#allocation8 + $0x368] sm:$0xff]
    %v2573 = vld [vmem:[#allocation8 + $0x370] sm:$0xff]
    %v2574 = vld [vmem:[#allocation8 + $0x378] sm:$0xff]
    %v2575 = vld [vmem:[#allocation8 + $0x380] sm:$0xff]
    %v2576 = vld [vmem:[#allocation8 + $0x388] sm:$0xff]
    %v2577 = vld [vmem:[#allocation8 + $0x390] sm:$0xff]
    %v2578 = vld [vmem:[#allocation8 + $0x398] sm:$0xff]
    %v2579 = vld [vmem:[#allocation8 + $0x3a0] sm:$0xff]
    %v2580 = vld [vmem:[#allocation8 + $0x3a8] sm:$0xff]
    %v2581 = vld [vmem:[#allocation8 + $0x3b0] sm:$0xff]
    %v2582 = vld [vmem:[#allocation8 + $0x3b8] sm:$0xff]
    %v2583 = vld [vmem:[#allocation8 + $0x3c0] sm:$0xff]
    %v2584 = vld [vmem:[#allocation8 + $0x3c8] sm:$0xff]
    %v2585 = vld [vmem:[#allocation8 + $0x3d0] sm:$0xff]
    %v2586 = vld [vmem:[#allocation8 + $0x3d8] sm:$0xff]
    %v2587 = vld [vmem:[#allocation8 + $0x3e0] sm:$0xff]
    %v2588 = vld [vmem:[#allocation8 + $0x3e8] sm:$0xff]
    %v2589 = vld [vmem:[#allocation8 + $0x3f0] sm:$0xff]
    %v2590 = vld [vmem:[#allocation8 + $0x3f8] sm:$0xff]
    %v2591 = vld [vmem:[#allocation8 + $0x400] sm:$0xff]
    %v2592 = vld [vmem:[#allocation8 + $0x408] sm:$0xff]
    %v2593 = vld [vmem:[#allocation8 + $0x410] sm:$0xff]
    %v2594 = vld [vmem:[#allocation8 + $0x418] sm:$0xff]
    %v2595 = vld [vmem:[#allocation8 + $0x420] sm:$0xff]
    %v2596 = vld [vmem:[#allocation8 + $0x428] sm:$0xff]
    %v2597 = vld [vmem:[#allocation8 + $0x430] sm:$0xff]
    %v2598 = vld [vmem:[#allocation8 + $0x438] sm:$0xff]
    %v2599 = vld [vmem:[#allocation8 + $0x440] sm:$0xff]
    %v2600 = vld [vmem:[#allocation8 + $0x448] sm:$0xff]
    %v2601 = vld [vmem:[#allocation8 + $0x450] sm:$0xff]
    %v2602 = vld [vmem:[#allocation8 + $0x458] sm:$0xff]
    %v2603 = vld [vmem:[#allocation8 + $0x460] sm:$0xff]
    %v2604 = vld [vmem:[#allocation8 + $0x468] sm:$0xff]
    %v2605 = vld [vmem:[#allocation8 + $0x470] sm:$0xff]
    %v2606 = vld [vmem:[#allocation8 + $0x478] sm:$0xff]
    %v2607 = vld [vmem:[#allocation8 + $0x480] sm:$0xff]
    %v2608 = vld [vmem:[#allocation8 + $0x488] sm:$0xff]
    %v2609 = vld [vmem:[#allocation8 + $0x490] sm:$0xff]
    %v2610 = vld [vmem:[#allocation8 + $0x498] sm:$0xff]
    %v2611 = vld [vmem:[#allocation8 + $0x4a0] sm:$0xff]
    %v2612 = vld [vmem:[#allocation8 + $0x4a8] sm:$0xff]
    %v2613 = vld [vmem:[#allocation8 + $0x4b0] sm:$0xff]
    %v2614 = vld [vmem:[#allocation8 + $0x4b8] sm:$0xff]
    %v2615 = vld [vmem:[#allocation8 + $0x4c0] sm:$0xff]
    %v2616 = vld [vmem:[#allocation8 + $0x4c8] sm:$0xff]
    %v2617 = vld [vmem:[#allocation8 + $0x4d0] sm:$0xff]
    %v2618 = vld [vmem:[#allocation8 + $0x4d8] sm:$0xff]
    %v2619 = vld [vmem:[#allocation8 + $0x4e0] sm:$0xff]
    %v2620 = vld [vmem:[#allocation8 + $0x4e8] sm:$0xff]
    %v2621 = vld [vmem:[#allocation8 + $0x4f0] sm:$0xff]
    %v2622 = vld [vmem:[#allocation8 + $0x4f8] sm:$0xff]
    %v2623 = vld [vmem:[#allocation8 + $0x500] sm:$0xff]
    %v2624 = vld [vmem:[#allocation8 + $0x508] sm:$0xff]
    %v2625 = vld [vmem:[#allocation8 + $0x510] sm:$0xff]
    %v2626 = vld [vmem:[#allocation8 + $0x518] sm:$0xff]
    %v2627 = vld [vmem:[#allocation8 + $0x520] sm:$0xff]
    %v2628 = vld [vmem:[#allocation8 + $0x528] sm:$0xff]
    %v2629 = vld [vmem:[#allocation8 + $0x530] sm:$0xff]
    %v2630 = vld [vmem:[#allocation8 + $0x538] sm:$0xff]
    %v2631 = vld [vmem:[#allocation8 + $0x540] sm:$0xff]
    %v2632 = vld [vmem:[#allocation8 + $0x548] sm:$0xff]
    %v2633 = vld [vmem:[#allocation8 + $0x550] sm:$0xff]
    %v2634 = vld [vmem:[#allocation8 + $0x558] sm:$0xff]
    %v2635 = vld [vmem:[#allocation8 + $0x560] sm:$0xff]
    %v2636 = vld [vmem:[#allocation8 + $0x568] sm:$0xff]
    %v2637 = vld [vmem:[#allocation8 + $0x570] sm:$0xff]
    %v2638 = vld [vmem:[#allocation8 + $0x578] sm:$0xff]
    %v2639 = vld [vmem:[#allocation8 + $0x580] sm:$0xff]
    %v2640 = vld [vmem:[#allocation8 + $0x588] sm:$0xff]
    %v2641 = vld [vmem:[#allocation8 + $0x590] sm:$0xff]
    %v2642 = vld [vmem:[#allocation8 + $0x598] sm:$0xff]
    %v2643 = vld [vmem:[#allocation8 + $0x5a0] sm:$0xff]
    %v2644 = vld [vmem:[#allocation8 + $0x5a8] sm:$0xff]
    %v2645 = vld [vmem:[#allocation8 + $0x5b0] sm:$0xff]
    %v2646 = vld [vmem:[#allocation8 + $0x5b8] sm:$0xff]
    %v2647 = vld [vmem:[#allocation8 + $0x5c0] sm:$0xff]
    %v2648 = vld [vmem:[#allocation8 + $0x5c8] sm:$0xff]
    %v2649 = vld [vmem:[#allocation8 + $0x5d0] sm:$0xff]
    %v2650 = vld [vmem:[#allocation8 + $0x5d8] sm:$0xff]
    %v2651 = vld [vmem:[#allocation8 + $0x5e0] sm:$0xff]
    %v2652 = vld [vmem:[#allocation8 + $0x5e8] sm:$0xff]
    %v2653 = vld [vmem:[#allocation8 + $0x5f0] sm:$0xff]
    %v2654 = vld [vmem:[#allocation8 + $0x5f8] sm:$0xff]
    %v2655 = vld [vmem:[#allocation8 + $0x600] sm:$0xff]
    %v2656 = vld [vmem:[#allocation8 + $0x608] sm:$0xff]
    %v2657 = vld [vmem:[#allocation8 + $0x610] sm:$0xff]
    %v2658 = vld [vmem:[#allocation8 + $0x618] sm:$0xff]
    %v2659 = vld [vmem:[#allocation8 + $0x620] sm:$0xff]
    %v2660 = vld [vmem:[#allocation8 + $0x628] sm:$0xff]
    %v2661 = vld [vmem:[#allocation8 + $0x630] sm:$0xff]
    %v2662 = vld [vmem:[#allocation8 + $0x638] sm:$0xff]
    %v2663 = vld [vmem:[#allocation8 + $0x640] sm:$0xff]
    %v2664 = vld [vmem:[#allocation8 + $0x648] sm:$0xff]
    %v2665 = vld [vmem:[#allocation8 + $0x650] sm:$0xff]
    %v2666 = vld [vmem:[#allocation8 + $0x658] sm:$0xff]
    %v2667 = vld [vmem:[#allocation8 + $0x660] sm:$0xff]
    %v2668 = vld [vmem:[#allocation8 + $0x668] sm:$0xff]
    %v2669 = vld [vmem:[#allocation8 + $0x670] sm:$0xff]
    %v2670 = vld [vmem:[#allocation8 + $0x678] sm:$0xff]
    %v2671 = vld [vmem:[#allocation8 + $0x680] sm:$0xff]
    %v2672 = vld [vmem:[#allocation8 + $0x688] sm:$0xff]
    %v2673 = vld [vmem:[#allocation8 + $0x690] sm:$0xff]
    %v2674 = vld [vmem:[#allocation8 + $0x698] sm:$0xff]
    %v2675 = vld [vmem:[#allocation8 + $0x6a0] sm:$0xff]
    %v2676 = vld [vmem:[#allocation8 + $0x6a8] sm:$0xff]
    %v2677 = vld [vmem:[#allocation8 + $0x6b0] sm:$0xff]
    %v2678 = vld [vmem:[#allocation8 + $0x6b8] sm:$0xff]
    %v2679 = vld [vmem:[#allocation8 + $0x6c0] sm:$0xff]
    %v2680 = vld [vmem:[#allocation8 + $0x6c8] sm:$0xff]
    %v2681 = vld [vmem:[#allocation8 + $0x6d0] sm:$0xff]
    %v2682 = vld [vmem:[#allocation8 + $0x6d8] sm:$0xff]
    %v2683 = vld [vmem:[#allocation8 + $0x6e0] sm:$0xff]
    %v2684 = vld [vmem:[#allocation8 + $0x6e8] sm:$0xff]
    %v2685 = vld [vmem:[#allocation8 + $0x6f0] sm:$0xff]
    %v2686 = vld [vmem:[#allocation8 + $0x6f8] sm:$0xff]
    %v2687 = vld [vmem:[#allocation8 + $0x700] sm:$0xff]
    %v2688 = vld [vmem:[#allocation8 + $0x708] sm:$0xff]
    %v2689 = vld [vmem:[#allocation8 + $0x710] sm:$0xff]
    %v2690 = vld [vmem:[#allocation8 + $0x718] sm:$0xff]
    %v2691 = vld [vmem:[#allocation8 + $0x720] sm:$0xff]
    %v2692 = vld [vmem:[#allocation8 + $0x728] sm:$0xff]
    %v2693 = vld [vmem:[#allocation8 + $0x730] sm:$0xff]
    %v2694 = vld [vmem:[#allocation8 + $0x738] sm:$0xff]
    %v2695 = vld [vmem:[#allocation8 + $0x740] sm:$0xff]
    %v2696 = vld [vmem:[#allocation8 + $0x748] sm:$0xff]
    %v2697 = vld [vmem:[#allocation8 + $0x750] sm:$0xff]
    %v2698 = vld [vmem:[#allocation8 + $0x758] sm:$0xff]
    %v2699 = vld [vmem:[#allocation8 + $0x760] sm:$0xff]
    %v2700 = vld [vmem:[#allocation8 + $0x768] sm:$0xff]
    %v2701 = vld [vmem:[#allocation8 + $0x770] sm:$0xff]
    %v2702 = vld [vmem:[#allocation8 + $0x778] sm:$0xff]
    %v2703 = vld [vmem:[#allocation8 + $0x780] sm:$0xff]
    %v2704 = vld [vmem:[#allocation8 + $0x788] sm:$0xff]
    %v2705 = vld [vmem:[#allocation8 + $0x790] sm:$0xff]
    %v2706 = vld [vmem:[#allocation8 + $0x798] sm:$0xff]
    %v2707 = vld [vmem:[#allocation8 + $0x7a0] sm:$0xff]
    %v2708 = vld [vmem:[#allocation8 + $0x7a8] sm:$0xff]
    %v2709 = vld [vmem:[#allocation8 + $0x7b0] sm:$0xff]
    %v2710 = vld [vmem:[#allocation8 + $0x7b8] sm:$0xff]
    %v2711 = vld [vmem:[#allocation8 + $0x7c0] sm:$0xff]
    %v2712 = vld [vmem:[#allocation8 + $0x7c8] sm:$0xff]
    %v2713 = vld [vmem:[#allocation8 + $0x7d0] sm:$0xff]
    %v2714 = vld [vmem:[#allocation8 + $0x7d8] sm:$0xff]
    %v2715 = vld [vmem:[#allocation8 + $0x7e0] sm:$0xff]
    %v2716 = vld [vmem:[#allocation8 + $0x7e8] sm:$0xff]
    %v2717 = vld [vmem:[#allocation8 + $0x7f0] sm:$0xff]
    %v2718 = vld [vmem:[#allocation8 + $0x7f8] sm:$0xff]
    %v2719 = vld [vmem:[#allocation8 + $0x800] sm:$0xff]
    %v2720 = vld [vmem:[#allocation8 + $0x808] sm:$0xff]
    %v2721 = vld [vmem:[#allocation8 + $0x810] sm:$0xff]
    %v2722 = vld [vmem:[#allocation8 + $0x818] sm:$0xff]
    %v2723 = vld [vmem:[#allocation8 + $0x820] sm:$0xff]
    %v2724 = vld [vmem:[#allocation8 + $0x828] sm:$0xff]
    %v2725 = vld [vmem:[#allocation8 + $0x830] sm:$0xff]
    %v2726 = vld [vmem:[#allocation8 + $0x838] sm:$0xff]
    %v2727 = vld [vmem:[#allocation8 + $0x840] sm:$0xff]
    %v2728 = vld [vmem:[#allocation8 + $0x848] sm:$0xff]
    %v2729 = vld [vmem:[#allocation8 + $0x850] sm:$0xff]
    %v2730 = vld [vmem:[#allocation8 + $0x858] sm:$0xff]
    %v2731 = vld [vmem:[#allocation8 + $0x860] sm:$0xff]
    %v2732 = vld [vmem:[#allocation8 + $0x868] sm:$0xff]
    %v2733 = vld [vmem:[#allocation8 + $0x870] sm:$0xff]
    %v2734 = vld [vmem:[#allocation8 + $0x878] sm:$0xff]
    %v2735 = vld [vmem:[#allocation8 + $0x880] sm:$0xff]
    %v2736 = vld [vmem:[#allocation8 + $0x888] sm:$0xff]
    %v2737 = vld [vmem:[#allocation8 + $0x890] sm:$0xff]
    %v2738 = vld [vmem:[#allocation8 + $0x898] sm:$0xff]
    %v2739 = vld [vmem:[#allocation8 + $0x8a0] sm:$0xff]
    %v2740 = vld [vmem:[#allocation8 + $0x8a8] sm:$0xff]
    %v2741 = vld [vmem:[#allocation8 + $0x8b0] sm:$0xff]
    %v2742 = vld [vmem:[#allocation8 + $0x8b8] sm:$0xff]
    %v2743 = vld [vmem:[#allocation8 + $0x8c0] sm:$0xff]
    %v2744 = vld [vmem:[#allocation8 + $0x8c8] sm:$0xff]
    %v2745 = vld [vmem:[#allocation8 + $0x8d0] sm:$0xff]
    %v2746 = vld [vmem:[#allocation8 + $0x8d8] sm:$0xff]
    %v2747 = vld [vmem:[#allocation8 + $0x8e0] sm:$0xff]
    %v2748 = vld [vmem:[#allocation8 + $0x8e8] sm:$0xff]
    %v2749 = vld [vmem:[#allocation8 + $0x8f0] sm:$0xff]
    %v2750 = vld [vmem:[#allocation8 + $0x8f8] sm:$0xff]
    %v2751 = vld [vmem:[#allocation8 + $0x900] sm:$0xff]
    %v2752 = vld [vmem:[#allocation8 + $0x908] sm:$0xff]
    %v2753 = vld [vmem:[#allocation8 + $0x910] sm:$0xff]
    %v2754 = vld [vmem:[#allocation8 + $0x918] sm:$0xff]
    %v2755 = vld [vmem:[#allocation8 + $0x920] sm:$0xff]
    %v2756 = vld [vmem:[#allocation8 + $0x928] sm:$0xff]
    %v2757 = vld [vmem:[#allocation8 + $0x930] sm:$0xff]
    %v2758 = vld [vmem:[#allocation8 + $0x938] sm:$0xff]
    %v2759 = vld [vmem:[#allocation8 + $0x940] sm:$0xff]
    %v2760 = vld [vmem:[#allocation8 + $0x948] sm:$0xff]
    %v2761 = vld [vmem:[#allocation8 + $0x950] sm:$0xff]
    %v2762 = vld [vmem:[#allocation8 + $0x958] sm:$0xff]
    %v2763 = vld [vmem:[#allocation8 + $0x960] sm:$0xff]
    %v2764 = vld [vmem:[#allocation8 + $0x968] sm:$0xff]
    %v2765 = vld [vmem:[#allocation8 + $0x970] sm:$0xff]
    %v2766 = vld [vmem:[#allocation8 + $0x978] sm:$0xff]
    %v2767 = vld [vmem:[#allocation8 + $0x980] sm:$0xff]
    %v2768 = vld [vmem:[#allocation8 + $0x988] sm:$0xff]
    %v2769 = vld [vmem:[#allocation8 + $0x990] sm:$0xff]
    %v2770 = vld [vmem:[#allocation8 + $0x998] sm:$0xff]
    %v2771 = vld [vmem:[#allocation8 + $0x9a0] sm:$0xff]
    %v2772 = vld [vmem:[#allocation8 + $0x9a8] sm:$0xff]
    %v2773 = vld [vmem:[#allocation8 + $0x9b0] sm:$0xff]
    %v2774 = vld [vmem:[#allocation8 + $0x9b8] sm:$0xff]
    %v2775 = vld [vmem:[#allocation8 + $0x9c0] sm:$0xff]
    %v2776 = vld [vmem:[#allocation8 + $0x9c8] sm:$0xff]
    %v2777 = vld [vmem:[#allocation8 + $0x9d0] sm:$0xff]
    %v2778 = vld [vmem:[#allocation8 + $0x9d8] sm:$0xff]
    %v2779 = vld [vmem:[#allocation8 + $0x9e0] sm:$0xff]
    %v2780 = vld [vmem:[#allocation8 + $0x9e8] sm:$0xff]
    %v2781 = vld [vmem:[#allocation8 + $0x9f0] sm:$0xff]
    %v2782 = vld [vmem:[#allocation8 + $0x9f8] sm:$0xff]
    %v2783 = vld [vmem:[#allocation8 + $0xa00] sm:$0xff]
    %v2784 = vld [vmem:[#allocation8 + $0xa08] sm:$0xff]
    %v2785 = vld [vmem:[#allocation8 + $0xa10] sm:$0xff]
    %v2786 = vld [vmem:[#allocation8 + $0xa18] sm:$0xff]
    %v2787 = vld [vmem:[#allocation8 + $0xa20] sm:$0xff]
    %v2788 = vld [vmem:[#allocation8 + $0xa28] sm:$0xff]
    %v2789 = vld [vmem:[#allocation8 + $0xa30] sm:$0xff]
    %v2790 = vld [vmem:[#allocation8 + $0xa38] sm:$0xff]
    %v2791 = vld [vmem:[#allocation8 + $0xa40] sm:$0xff]
    %v2792 = vld [vmem:[#allocation8 + $0xa48] sm:$0xff]
    %v2793 = vld [vmem:[#allocation8 + $0xa50] sm:$0xff]
    %v2794 = vld [vmem:[#allocation8 + $0xa58] sm:$0xff]
    %v2795 = vld [vmem:[#allocation8 + $0xa60] sm:$0xff]
    %v2796 = vld [vmem:[#allocation8 + $0xa68] sm:$0xff]
    %v2797 = vld [vmem:[#allocation8 + $0xa70] sm:$0xff]
    %v2798 = vld [vmem:[#allocation8 + $0xa78] sm:$0xff]
    %v2799 = vld [vmem:[#allocation8 + $0xa80] sm:$0xff]
    %v2800 = vld [vmem:[#allocation8 + $0xa88] sm:$0xff]
    %v2801 = vld [vmem:[#allocation8 + $0xa90] sm:$0xff]
    %v2802 = vld [vmem:[#allocation8 + $0xa98] sm:$0xff]
    %v2803 = vld [vmem:[#allocation8 + $0xaa0] sm:$0xff]
    %v2804 = vld [vmem:[#allocation8 + $0xaa8] sm:$0xff]
    %v2805 = vld [vmem:[#allocation8 + $0xab0] sm:$0xff]
    %v2806 = vld [vmem:[#allocation8 + $0xab8] sm:$0xff]
    %v2807 = vld [vmem:[#allocation8 + $0xac0] sm:$0xff]
    %v2808 = vld [vmem:[#allocation8 + $0xac8] sm:$0xff]
    %v2809 = vld [vmem:[#allocation8 + $0xad0] sm:$0xff]
    %v2810 = vld [vmem:[#allocation8 + $0xad8] sm:$0xff]
    %v2811 = vld [vmem:[#allocation8 + $0xae0] sm:$0xff]
    %v2812 = vld [vmem:[#allocation8 + $0xae8] sm:$0xff]
    %v2813 = vld [vmem:[#allocation8 + $0xaf0] sm:$0xff]
    %v2814 = vld [vmem:[#allocation8 + $0xaf8] sm:$0xff]
    %v2815 = vld [vmem:[#allocation8 + $0xb00] sm:$0xff]
    %v2816 = vld [vmem:[#allocation8 + $0xb08] sm:$0xff]
    %v2817 = vld [vmem:[#allocation8 + $0xb10] sm:$0xff]
    %v2818 = vld [vmem:[#allocation8 + $0xb18] sm:$0xff]
    %v2819 = vld [vmem:[#allocation8 + $0xb20] sm:$0xff]
    %v2820 = vld [vmem:[#allocation8 + $0xb28] sm:$0xff]
    %v2821 = vld [vmem:[#allocation8 + $0xb30] sm:$0xff]
    %v2822 = vld [vmem:[#allocation8 + $0xb38] sm:$0xff]
    %v2823 = vld [vmem:[#allocation8 + $0xb40] sm:$0xff]
    %v2824 = vld [vmem:[#allocation8 + $0xb48] sm:$0xff]
    %v2825 = vld [vmem:[#allocation8 + $0xb50] sm:$0xff]
    %v2826 = vld [vmem:[#allocation8 + $0xb58] sm:$0xff]
    %v2827 = vld [vmem:[#allocation8 + $0xb60] sm:$0xff]
    %v2828 = vld [vmem:[#allocation8 + $0xb68] sm:$0xff]
    %v2829 = vld [vmem:[#allocation8 + $0xb70] sm:$0xff]
    %v2830 = vld [vmem:[#allocation8 + $0xb78] sm:$0xff]
    %v2831 = vld [vmem:[#allocation8 + $0xb80] sm:$0xff]
    %v2832 = vld [vmem:[#allocation8 + $0xb88] sm:$0xff]
    %v2833 = vld [vmem:[#allocation8 + $0xb90] sm:$0xff]
    %v2834 = vld [vmem:[#allocation8 + $0xb98] sm:$0xff]
    %v2835 = vld [vmem:[#allocation8 + $0xba0] sm:$0xff]
    %v2836 = vld [vmem:[#allocation8 + $0xba8] sm:$0xff]
    %v2837 = vld [vmem:[#allocation8 + $0xbb0] sm:$0xff]
    %v2838 = vld [vmem:[#allocation8 + $0xbb8] sm:$0xff]
    %v2839 = vld [vmem:[#allocation8 + $0xbc0] sm:$0xff]
    %v2840 = vld [vmem:[#allocation8 + $0xbc8] sm:$0xff]
    %v2841 = vld [vmem:[#allocation8 + $0xbd0] sm:$0xff]
    %v2842 = vld [vmem:[#allocation8 + $0xbd8] sm:$0xff]
    %v2843 = vld [vmem:[#allocation8 + $0xbe0] sm:$0xff]
    %v2844 = vld [vmem:[#allocation8 + $0xbe8] sm:$0xff]
    %v2845 = vld [vmem:[#allocation8 + $0xbf0] sm:$0xff]
    %v2846 = vld [vmem:[#allocation8 + $0xbf8] sm:$0xff]
    %v2847 = vld [vmem:[#allocation8 + $0xc00] sm:$0xff]
    %v2848 = vld [vmem:[#allocation8 + $0xc08] sm:$0xff]
    %v2849 = vld [vmem:[#allocation8 + $0xc10] sm:$0xff]
    %v2850 = vld [vmem:[#allocation8 + $0xc18] sm:$0xff]
    %v2851 = vld [vmem:[#allocation8 + $0xc20] sm:$0xff]
    %v2852 = vld [vmem:[#allocation8 + $0xc28] sm:$0xff]
    %v2853 = vld [vmem:[#allocation8 + $0xc30] sm:$0xff]
    %v2854 = vld [vmem:[#allocation8 + $0xc38] sm:$0xff]
    %v2855 = vld [vmem:[#allocation8 + $0xc40] sm:$0xff]
    %v2856 = vld [vmem:[#allocation8 + $0xc48] sm:$0xff]
    %v2857 = vld [vmem:[#allocation8 + $0xc50] sm:$0xff]
    %v2858 = vld [vmem:[#allocation8 + $0xc58] sm:$0xff]
    %v2859 = vld [vmem:[#allocation8 + $0xc60] sm:$0xff]
    %v2860 = vld [vmem:[#allocation8 + $0xc68] sm:$0xff]
    %v2861 = vld [vmem:[#allocation8 + $0xc70] sm:$0xff]
    %v2862 = vld [vmem:[#allocation8 + $0xc78] sm:$0xff]
    %v2863 = vld [vmem:[#allocation8 + $0xc80] sm:$0xff]
    %v2864 = vld [vmem:[#allocation8 + $0xc88] sm:$0xff]
    %v2865 = vld [vmem:[#allocation8 + $0xc90] sm:$0xff]
    %v2866 = vld [vmem:[#allocation8 + $0xc98] sm:$0xff]
    %v2867 = vld [vmem:[#allocation8 + $0xca0] sm:$0xff]
    %v2868 = vld [vmem:[#allocation8 + $0xca8] sm:$0xff]
    %v2869 = vld [vmem:[#allocation8 + $0xcb0] sm:$0xff]
    %v2870 = vld [vmem:[#allocation8 + $0xcb8] sm:$0xff]
    %v2871 = vld [vmem:[#allocation8 + $0xcc0] sm:$0xff]
    %v2872 = vld [vmem:[#allocation8 + $0xcc8] sm:$0xff]
    %v2873 = vld [vmem:[#allocation8 + $0xcd0] sm:$0xff]
    %v2874 = vld [vmem:[#allocation8 + $0xcd8] sm:$0xff]
    %v2875 = vld [vmem:[#allocation8 + $0xce0] sm:$0xff]
    %v2876 = vld [vmem:[#allocation8 + $0xce8] sm:$0xff]
    %v2877 = vld [vmem:[#allocation8 + $0xcf0] sm:$0xff]
    %v2878 = vld [vmem:[#allocation8 + $0xcf8] sm:$0xff]
    %v2879 = vld [vmem:[#allocation8 + $0xd00] sm:$0xff]
    %v2880 = vld [vmem:[#allocation8 + $0xd08] sm:$0xff]
    %v2881 = vld [vmem:[#allocation8 + $0xd10] sm:$0xff]
    %v2882 = vld [vmem:[#allocation8 + $0xd18] sm:$0xff]
    %v2883 = vld [vmem:[#allocation8 + $0xd20] sm:$0xff]
    %v2884 = vld [vmem:[#allocation8 + $0xd28] sm:$0xff]
    %v2885 = vld [vmem:[#allocation8 + $0xd30] sm:$0xff]
    %v2886 = vld [vmem:[#allocation8 + $0xd38] sm:$0xff]
    %v2887 = vld [vmem:[#allocation8 + $0xd40] sm:$0xff]
    %v2888 = vld [vmem:[#allocation8 + $0xd48] sm:$0xff]
    %v2889 = vld [vmem:[#allocation8 + $0xd50] sm:$0xff]
    %v2890 = vld [vmem:[#allocation8 + $0xd58] sm:$0xff]
    %v2891 = vld [vmem:[#allocation8 + $0xd60] sm:$0xff]
    %v2892 = vld [vmem:[#allocation8 + $0xd68] sm:$0xff]
    %v2893 = vld [vmem:[#allocation8 + $0xd70] sm:$0xff]
    %v2894 = vld [vmem:[#allocation8 + $0xd78] sm:$0xff]
    %v2895 = vld [vmem:[#allocation8 + $0xd80] sm:$0xff]
    %v2896 = vld [vmem:[#allocation8 + $0xd88] sm:$0xff]
    %v2897 = vld [vmem:[#allocation8 + $0xd90] sm:$0xff]
    %v2898 = vld [vmem:[#allocation8 + $0xd98] sm:$0xff]
    %v2899 = vld [vmem:[#allocation8 + $0xda0] sm:$0xff]
    %v2900 = vld [vmem:[#allocation8 + $0xda8] sm:$0xff]
    %v2901 = vld [vmem:[#allocation8 + $0xdb0] sm:$0xff]
    %v2902 = vld [vmem:[#allocation8 + $0xdb8] sm:$0xff]
    %v2903 = vld [vmem:[#allocation8 + $0xdc0] sm:$0xff]
    %v2904 = vld [vmem:[#allocation8 + $0xdc8] sm:$0xff]
    %v2905 = vld [vmem:[#allocation8 + $0xdd0] sm:$0xff]
    %v2906 = vld [vmem:[#allocation8 + $0xdd8] sm:$0xff]
    %v2907 = vld [vmem:[#allocation8 + $0xde0] sm:$0xff]
    %v2908 = vld [vmem:[#allocation8 + $0xde8] sm:$0xff]
    %v2909 = vld [vmem:[#allocation8 + $0xdf0] sm:$0xff]
    %v2910 = vld [vmem:[#allocation8 + $0xdf8] sm:$0xff]
    %v2911 = vld [vmem:[#allocation8 + $0xe00] sm:$0xff]
    %v2912 = vld [vmem:[#allocation8 + $0xe08] sm:$0xff]
    %v2913 = vld [vmem:[#allocation8 + $0xe10] sm:$0xff]
    %v2914 = vld [vmem:[#allocation8 + $0xe18] sm:$0xff]
    %v2915 = vld [vmem:[#allocation8 + $0xe20] sm:$0xff]
    %v2916 = vld [vmem:[#allocation8 + $0xe28] sm:$0xff]
    %v2917 = vld [vmem:[#allocation8 + $0xe30] sm:$0xff]
    %v2918 = vld [vmem:[#allocation8 + $0xe38] sm:$0xff]
    %v2919 = vld [vmem:[#allocation8 + $0xe40] sm:$0xff]
    %v2920 = vld [vmem:[#allocation8 + $0xe48] sm:$0xff]
    %v2921 = vld [vmem:[#allocation8 + $0xe50] sm:$0xff]
    %v2922 = vld [vmem:[#allocation8 + $0xe58] sm:$0xff]
    %v2923 = vld [vmem:[#allocation8 + $0xe60] sm:$0xff]
    %v2924 = vld [vmem:[#allocation8 + $0xe68] sm:$0xff]
    %v2925 = vld [vmem:[#allocation8 + $0xe70] sm:$0xff]
    %v2926 = vld [vmem:[#allocation8 + $0xe78] sm:$0xff]
    %v2927 = vld [vmem:[#allocation8 + $0xe80] sm:$0xff]
    %v2928 = vld [vmem:[#allocation8 + $0xe88] sm:$0xff]
    %v2929 = vld [vmem:[#allocation8 + $0xe90] sm:$0xff]
    %v2930 = vld [vmem:[#allocation8 + $0xe98] sm:$0xff]
    %v2931 = vld [vmem:[#allocation8 + $0xea0] sm:$0xff]
    %v2932 = vld [vmem:[#allocation8 + $0xea8] sm:$0xff]
    %v2933 = vld [vmem:[#allocation8 + $0xeb0] sm:$0xff]
    %v2934 = vld [vmem:[#allocation8 + $0xeb8] sm:$0xff]
    %v2935 = vld [vmem:[#allocation8 + $0xec0] sm:$0xff]
    %v2936 = vld [vmem:[#allocation8 + $0xec8] sm:$0xff]
    %v2937 = vld [vmem:[#allocation8 + $0xed0] sm:$0xff]
    %v2938 = vld [vmem:[#allocation8 + $0xed8] sm:$0xff]
    %v2939 = vld [vmem:[#allocation8 + $0xee0] sm:$0xff]
    %v2940 = vld [vmem:[#allocation8 + $0xee8] sm:$0xff]
    %v2941 = vld [vmem:[#allocation8 + $0xef0] sm:$0xff]
    %v2942 = vld [vmem:[#allocation8 + $0xef8] sm:$0xff]
    %v2943 = vld [vmem:[#allocation8 + $0xf00] sm:$0xff]
    %v2944 = vld [vmem:[#allocation8 + $0xf08] sm:$0xff]
    %v2945 = vld [vmem:[#allocation8 + $0xf10] sm:$0xff]
    %v2946 = vld [vmem:[#allocation8 + $0xf18] sm:$0xff]
    %v2947 = vld [vmem:[#allocation8 + $0xf20] sm:$0xff]
    %v2948 = vld [vmem:[#allocation8 + $0xf28] sm:$0xff]
    %v2949 = vld [vmem:[#allocation8 + $0xf30] sm:$0xff]
    %v2950 = vld [vmem:[#allocation8 + $0xf38] sm:$0xff]
    %v2951 = vld [vmem:[#allocation8 + $0xf40] sm:$0xff]
    %v2952 = vld [vmem:[#allocation8 + $0xf48] sm:$0xff]
    %v2953 = vld [vmem:[#allocation8 + $0xf50] sm:$0xff]
    %v2954 = vld [vmem:[#allocation8 + $0xf58] sm:$0xff]
    %v2955 = vld [vmem:[#allocation8 + $0xf60] sm:$0xff]
    %v2956 = vld [vmem:[#allocation8 + $0xf68] sm:$0xff]
    %v2957 = vld [vmem:[#allocation8 + $0xf70] sm:$0xff]
    %v2958 = vld [vmem:[#allocation8 + $0xf78] sm:$0xff]
    %v2959 = vld [vmem:[#allocation8 + $0xf80] sm:$0xff]
    %v2960 = vld [vmem:[#allocation8 + $0xf88] sm:$0xff]
    %v2961 = vld [vmem:[#allocation8 + $0xf90] sm:$0xff]
    %v2962 = vld [vmem:[#allocation8 + $0xf98] sm:$0xff]
    %v2963 = vld [vmem:[#allocation8 + $0xfa0] sm:$0xff]
    %v2964 = vld [vmem:[#allocation8 + $0xfa8] sm:$0xff]
    %v2965 = vld [vmem:[#allocation8 + $0xfb0] sm:$0xff]
    %v2966 = vld [vmem:[#allocation8 + $0xfb8] sm:$0xff]
    %v2967 = vld [vmem:[#allocation8 + $0xfc0] sm:$0xff]
    %v2968 = vld [vmem:[#allocation8 + $0xfc8] sm:$0xff]
    %v2969 = vld [vmem:[#allocation8 + $0xfd0] sm:$0xff]
    %v2970 = vld [vmem:[#allocation8 + $0xfd8] sm:$0xff]
    %v2971 = vld [vmem:[#allocation8 + $0xfe0] sm:$0xff]
    %v2972 = vld [vmem:[#allocation8 + $0xfe8] sm:$0xff]
    %v2973 = vld [vmem:[#allocation8 + $0xff0] sm:$0xff]
    %v2974 = vld [vmem:[#allocation8 + $0xff8] sm:$0xff]
    %v2975 = vld [vmem:[#allocation8 + $0x1000] sm:$0xff]
    %v2976 = vld [vmem:[#allocation8 + $0x1008] sm:$0xff]
    %v2977 = vld [vmem:[#allocation8 + $0x1010] sm:$0xff]
    %v2978 = vld [vmem:[#allocation8 + $0x1018] sm:$0xff]
    %v2979 = vld [vmem:[#allocation8 + $0x1020] sm:$0xff]
    %v2980 = vld [vmem:[#allocation8 + $0x1028] sm:$0xff]
    %v2981 = vld [vmem:[#allocation8 + $0x1030] sm:$0xff]
    %v2982 = vld [vmem:[#allocation8 + $0x1038] sm:$0xff]
    %v2983 = vld [vmem:[#allocation8 + $0x1040] sm:$0xff]
    %v2984 = vld [vmem:[#allocation8 + $0x1048] sm:$0xff]
    %v2985 = vld [vmem:[#allocation8 + $0x1050] sm:$0xff]
    %v2986 = vld [vmem:[#allocation8 + $0x1058] sm:$0xff]
    %v2987 = vld [vmem:[#allocation8 + $0x1060] sm:$0xff]
    %v2988 = vld [vmem:[#allocation8 + $0x1068] sm:$0xff]
    %v2989 = vld [vmem:[#allocation8 + $0x1070] sm:$0xff]
    %v2990 = vld [vmem:[#allocation8 + $0x1078] sm:$0xff]
    %v2991 = vld [vmem:[#allocation8 + $0x1080] sm:$0xff]
    %v2992 = vld [vmem:[#allocation8 + $0x1088] sm:$0xff]
    %v2993 = vld [vmem:[#allocation8 + $0x1090] sm:$0xff]
    %v2994 = vld [vmem:[#allocation8 + $0x1098] sm:$0xff]
    %v2995 = vld [vmem:[#allocation8 + $0x10a0] sm:$0xff]
    %v2996 = vld [vmem:[#allocation8 + $0x10a8] sm:$0xff]
    %v2997 = vld [vmem:[#allocation8 + $0x10b0] sm:$0xff]
    %v2998 = vld [vmem:[#allocation8 + $0x10b8] sm:$0xff]
    %v2999 = vld [vmem:[#allocation8 + $0x10c0] sm:$0xff]
    %v3000 = vld [vmem:[#allocation8 + $0x10c8] sm:$0xff]
    %v3001 = vld [vmem:[#allocation8 + $0x10d0] sm:$0xff]
    %v3002 = vld [vmem:[#allocation8 + $0x10d8] sm:$0xff]
    %v3003 = vld [vmem:[#allocation8 + $0x10e0] sm:$0xff]
    %v3004 = vld [vmem:[#allocation8 + $0x10e8] sm:$0xff]
    %v3005 = vld [vmem:[#allocation8 + $0x10f0] sm:$0xff]
    %v3006 = vld [vmem:[#allocation8 + $0x10f8] sm:$0xff]
    %v3007 = vld [vmem:[#allocation8 + $0x1100] sm:$0xff]
    %v3008 = vld [vmem:[#allocation8 + $0x1108] sm:$0xff]
    %v3009 = vld [vmem:[#allocation8 + $0x1110] sm:$0xff]
    %v3010 = vld [vmem:[#allocation8 + $0x1118] sm:$0xff]
    %v3011 = vld [vmem:[#allocation8 + $0x1120] sm:$0xff]
    %v3012 = vld [vmem:[#allocation8 + $0x1128] sm:$0xff]
    %v3013 = vld [vmem:[#allocation8 + $0x1130] sm:$0xff]
    %v3014 = vld [vmem:[#allocation8 + $0x1138] sm:$0xff]
    %v3015 = vld [vmem:[#allocation8 + $0x1140] sm:$0xff]
    %v3016 = vld [vmem:[#allocation8 + $0x1148] sm:$0xff]
    %v3017 = vld [vmem:[#allocation8 + $0x1150] sm:$0xff]
    %v3018 = vld [vmem:[#allocation8 + $0x1158] sm:$0xff]
    %v3019 = vld [vmem:[#allocation8 + $0x1160] sm:$0xff]
    %v3020 = vld [vmem:[#allocation8 + $0x1168] sm:$0xff]
    %v3021 = vld [vmem:[#allocation8 + $0x1170] sm:$0xff]
    %v3022 = vld [vmem:[#allocation8 + $0x1178] sm:$0xff]
    %v3023 = vld [vmem:[#allocation8 + $0x1180] sm:$0xff]
    %v3024 = vld [vmem:[#allocation8 + $0x1188] sm:$0xff]
    %v3025 = vld [vmem:[#allocation8 + $0x1190] sm:$0xff]
    %v3026 = vld [vmem:[#allocation8 + $0x1198] sm:$0xff]
    %v3027 = vld [vmem:[#allocation8 + $0x11a0] sm:$0xff]
    %v3028 = vld [vmem:[#allocation8 + $0x11a8] sm:$0xff]
    %v3029 = vld [vmem:[#allocation8 + $0x11b0] sm:$0xff]
    %v3030 = vld [vmem:[#allocation8 + $0x11b8] sm:$0xff]
    %v3031 = vld [vmem:[#allocation8 + $0x11c0] sm:$0xff]
    %v3032 = vld [vmem:[#allocation8 + $0x11c8] sm:$0xff]
    %v3033 = vld [vmem:[#allocation8 + $0x11d0] sm:$0xff]
    %v3034 = vld [vmem:[#allocation8 + $0x11d8] sm:$0xff]
    %v3035 = vld [vmem:[#allocation8 + $0x11e0] sm:$0xff]
    %v3036 = vld [vmem:[#allocation8 + $0x11e8] sm:$0xff]
    %v3037 = vld [vmem:[#allocation8 + $0x11f0] sm:$0xff]
    %v3038 = vld [vmem:[#allocation8 + $0x11f8] sm:$0xff]
    %v3039 = vld [vmem:[#allocation8 + $0x1200] sm:$0xff]
    %v3040 = vld [vmem:[#allocation8 + $0x1208] sm:$0xff]
    %v3041 = vld [vmem:[#allocation8 + $0x1210] sm:$0xff]
    %v3042 = vld [vmem:[#allocation8 + $0x1218] sm:$0xff]
    %v3043 = vld [vmem:[#allocation8 + $0x1220] sm:$0xff]
    %v3044 = vld [vmem:[#allocation8 + $0x1228] sm:$0xff]
    %v3045 = vld [vmem:[#allocation8 + $0x1230] sm:$0xff]
    %v3046 = vld [vmem:[#allocation8 + $0x1238] sm:$0xff]
    %v3047 = vld [vmem:[#allocation8 + $0x1240] sm:$0xff]
    %v3048 = vld [vmem:[#allocation8 + $0x1248] sm:$0xff]
    %v3049 = vld [vmem:[#allocation8 + $0x1250] sm:$0xff]
    %v3050 = vld [vmem:[#allocation8 + $0x1258] sm:$0xff]
    %v3051 = vld [vmem:[#allocation8 + $0x1260] sm:$0xff]
    %v3052 = vld [vmem:[#allocation8 + $0x1268] sm:$0xff]
    %v3053 = vld [vmem:[#allocation8 + $0x1270] sm:$0xff]
    %v3054 = vld [vmem:[#allocation8 + $0x1278] sm:$0xff]
    %v3055 = vld [vmem:[#allocation8 + $0x1280] sm:$0xff]
    %v3056 = vld [vmem:[#allocation8 + $0x1288] sm:$0xff]
    %v3057 = vld [vmem:[#allocation8 + $0x1290] sm:$0xff]
    %v3058 = vld [vmem:[#allocation8 + $0x1298] sm:$0xff]
    %v3059 = vld [vmem:[#allocation8 + $0x12a0] sm:$0xff]
    %v3060 = vld [vmem:[#allocation8 + $0x12a8] sm:$0xff]
    %v3061 = vld [vmem:[#allocation8 + $0x12b0] sm:$0xff]
    %v3062 = vld [vmem:[#allocation8 + $0x12b8] sm:$0xff]
    %v3063 = vld [vmem:[#allocation8 + $0x12c0] sm:$0xff]
    %v3064 = vld [vmem:[#allocation8 + $0x12c8] sm:$0xff]
    %v3065 = vld [vmem:[#allocation8 + $0x12d0] sm:$0xff]
    %v3066 = vld [vmem:[#allocation8 + $0x12d8] sm:$0xff]
    %v3067 = vld [vmem:[#allocation8 + $0x12e0] sm:$0xff]
    %v3068 = vld [vmem:[#allocation8 + $0x12e8] sm:$0xff]
    %v3069 = vld [vmem:[#allocation8 + $0x12f0] sm:$0xff]
    %v3070 = vld [vmem:[#allocation8 + $0x12f8] sm:$0xff]
    %v3071 = vld [vmem:[#allocation8 + $0x1300] sm:$0xff]
    %v3072 = vld [vmem:[#allocation8 + $0x1308] sm:$0xff]
    %v3073 = vld [vmem:[#allocation8 + $0x1310] sm:$0xff]
    %v3074 = vld [vmem:[#allocation8 + $0x1318] sm:$0xff]
    %v3075 = vld [vmem:[#allocation8 + $0x1320] sm:$0xff]
    %v3076 = vld [vmem:[#allocation8 + $0x1328] sm:$0xff]
    %v3077 = vld [vmem:[#allocation8 + $0x1330] sm:$0xff]
    %v3078 = vld [vmem:[#allocation8 + $0x1338] sm:$0xff]
    %v3079 = vld [vmem:[#allocation8 + $0x1340] sm:$0xff]
    %v3080 = vld [vmem:[#allocation8 + $0x1348] sm:$0xff]
    %v3081 = vld [vmem:[#allocation8 + $0x1350] sm:$0xff]
    %v3082 = vld [vmem:[#allocation8 + $0x1358] sm:$0xff]
    %v3083 = vld [vmem:[#allocation8 + $0x1360] sm:$0xff]
    %v3084 = vld [vmem:[#allocation8 + $0x1368] sm:$0xff]
    %v3085 = vld [vmem:[#allocation8 + $0x1370] sm:$0xff]
    %v3086 = vld [vmem:[#allocation8 + $0x1378] sm:$0xff]
    %v3087 = vld [vmem:[#allocation8 + $0x1380] sm:$0xff]
    %v3088 = vld [vmem:[#allocation8 + $0x1388] sm:$0xff]
    %v3089 = vld [vmem:[#allocation8 + $0x1390] sm:$0xff]
    %v3090 = vld [vmem:[#allocation8 + $0x1398] sm:$0xff]
    %v3091 = vld [vmem:[#allocation8 + $0x13a0] sm:$0xff]
    %v3092 = vld [vmem:[#allocation8 + $0x13a8] sm:$0xff]
    %v3093 = vld [vmem:[#allocation8 + $0x13b0] sm:$0xff]
    %v3094 = vld [vmem:[#allocation8 + $0x13b8] sm:$0xff]
    %v3095 = vld [vmem:[#allocation8 + $0x13c0] sm:$0xff]
    %v3096 = vld [vmem:[#allocation8 + $0x13c8] sm:$0xff]
    %v3097 = vld [vmem:[#allocation8 + $0x13d0] sm:$0xff]
    %v3098 = vld [vmem:[#allocation8 + $0x13d8] sm:$0xff]
    %v3099 = vld [vmem:[#allocation8 + $0x13e0] sm:$0xff]
    %v3100 = vld [vmem:[#allocation8 + $0x13e8] sm:$0xff]
    %v3101 = vld [vmem:[#allocation8 + $0x13f0] sm:$0xff]
    %v3102 = vld [vmem:[#allocation8 + $0x13f8] sm:$0xff]
    %v3103 = vld [vmem:[#allocation8 + $0x1400] sm:$0xff]
    %v3104 = vld [vmem:[#allocation8 + $0x1408] sm:$0xff]
    %v3105 = vld [vmem:[#allocation8 + $0x1410] sm:$0xff]
    %v3106 = vld [vmem:[#allocation8 + $0x1418] sm:$0xff]
    %v3107 = vld [vmem:[#allocation8 + $0x1420] sm:$0xff]
    %v3108 = vld [vmem:[#allocation8 + $0x1428] sm:$0xff]
    %v3109 = vld [vmem:[#allocation8 + $0x1430] sm:$0xff]
    %v3110 = vld [vmem:[#allocation8 + $0x1438] sm:$0xff]
    %v3111 = vld [vmem:[#allocation8 + $0x1440] sm:$0xff]
    %v3112 = vld [vmem:[#allocation8 + $0x1448] sm:$0xff]
    %v3113 = vld [vmem:[#allocation8 + $0x1450] sm:$0xff]
    %v3114 = vld [vmem:[#allocation8 + $0x1458] sm:$0xff]
    %v3115 = vld [vmem:[#allocation8 + $0x1460] sm:$0xff]
    %v3116 = vld [vmem:[#allocation8 + $0x1468] sm:$0xff]
    %v3117 = vld [vmem:[#allocation8 + $0x1470] sm:$0xff]
    %v3118 = vld [vmem:[#allocation8 + $0x1478] sm:$0xff]
    %v3119 = vld [vmem:[#allocation8 + $0x1480] sm:$0xff]
    %v3120 = vld [vmem:[#allocation8 + $0x1488] sm:$0xff]
    %v3121 = vld [vmem:[#allocation8 + $0x1490] sm:$0xff]
    %v3122 = vld [vmem:[#allocation8 + $0x1498] sm:$0xff]
    %v3123 = vld [vmem:[#allocation8 + $0x14a0] sm:$0xff]
    %v3124 = vld [vmem:[#allocation8 + $0x14a8] sm:$0xff]
    %v3125 = vld [vmem:[#allocation8 + $0x14b0] sm:$0xff]
    %v3126 = vld [vmem:[#allocation8 + $0x14b8] sm:$0xff]
    %v3127 = vld [vmem:[#allocation8 + $0x14c0] sm:$0xff]
    %v3128 = vld [vmem:[#allocation8 + $0x14c8] sm:$0xff]
    %v3129 = vld [vmem:[#allocation8 + $0x14d0] sm:$0xff]
    %v3130 = vld [vmem:[#allocation8 + $0x14d8] sm:$0xff]
    %v3131 = vld [vmem:[#allocation8 + $0x14e0] sm:$0xff]
    %v3132 = vld [vmem:[#allocation8 + $0x14e8] sm:$0xff]
    %v3133 = vld [vmem:[#allocation8 + $0x14f0] sm:$0xff]
    %v3134 = vld [vmem:[#allocation8 + $0x14f8] sm:$0xff]
    %v3135 = vld [vmem:[#allocation8 + $0x1500] sm:$0xff]
    %v3136 = vld [vmem:[#allocation8 + $0x1508] sm:$0xff]
    %v3137 = vld [vmem:[#allocation8 + $0x1510] sm:$0xff]
    %v3138 = vld [vmem:[#allocation8 + $0x1518] sm:$0xff]
    %v3139 = vld [vmem:[#allocation8 + $0x1520] sm:$0xff]
    %v3140 = vld [vmem:[#allocation8 + $0x1528] sm:$0xff]
    %v3141 = vld [vmem:[#allocation8 + $0x1530] sm:$0xff]
    %v3142 = vld [vmem:[#allocation8 + $0x1538] sm:$0xff]
    %v3143 = vld [vmem:[#allocation8 + $0x1540] sm:$0xff]
    %v3144 = vld [vmem:[#allocation8 + $0x1548] sm:$0xff]
    %v3145 = vld [vmem:[#allocation8 + $0x1550] sm:$0xff]
    %v3146 = vld [vmem:[#allocation8 + $0x1558] sm:$0xff]
    %v3147 = vld [vmem:[#allocation8 + $0x1560] sm:$0xff]
    %v3148 = vld [vmem:[#allocation8 + $0x1568] sm:$0xff]
    %v3149 = vld [vmem:[#allocation8 + $0x1570] sm:$0xff]
    %v3150 = vld [vmem:[#allocation8 + $0x1578] sm:$0xff]
    %v3151 = vld [vmem:[#allocation8 + $0x1580] sm:$0xff]
    %v3152 = vld [vmem:[#allocation8 + $0x1588] sm:$0xff]
    %v3153 = vld [vmem:[#allocation8 + $0x1590] sm:$0xff]
    %v3154 = vld [vmem:[#allocation8 + $0x1598] sm:$0xff]
    %v3155 = vld [vmem:[#allocation8 + $0x15a0] sm:$0xff]
    %v3156 = vld [vmem:[#allocation8 + $0x15a8] sm:$0xff]
    %v3157 = vld [vmem:[#allocation8 + $0x15b0] sm:$0xff]
    %v3158 = vld [vmem:[#allocation8 + $0x15b8] sm:$0xff]
    %v3159 = vld [vmem:[#allocation8 + $0x15c0] sm:$0xff]
    %v3160 = vld [vmem:[#allocation8 + $0x15c8] sm:$0xff]
    %v3161 = vld [vmem:[#allocation8 + $0x15d0] sm:$0xff]
    %v3162 = vld [vmem:[#allocation8 + $0x15d8] sm:$0xff]
    %v3163 = vld [vmem:[#allocation8 + $0x15e0] sm:$0xff]
    %v3164 = vld [vmem:[#allocation8 + $0x15e8] sm:$0xff]
    %v3165 = vld [vmem:[#allocation8 + $0x15f0] sm:$0xff]
    %v3166 = vld [vmem:[#allocation8 + $0x15f8] sm:$0xff]
    %v3167 = vld [vmem:[#allocation8 + $0x1600] sm:$0xff]
    %v3168 = vld [vmem:[#allocation8 + $0x1608] sm:$0xff]
    %v3169 = vld [vmem:[#allocation8 + $0x1610] sm:$0xff]
    %v3170 = vld [vmem:[#allocation8 + $0x1618] sm:$0xff]
    %v3171 = vld [vmem:[#allocation8 + $0x1620] sm:$0xff]
    %v3172 = vld [vmem:[#allocation8 + $0x1628] sm:$0xff]
    %v3173 = vld [vmem:[#allocation8 + $0x1630] sm:$0xff]
    %v3174 = vld [vmem:[#allocation8 + $0x1638] sm:$0xff]
    %v3175 = vld [vmem:[#allocation8 + $0x1640] sm:$0xff]
    %v3176 = vld [vmem:[#allocation8 + $0x1648] sm:$0xff]
    %v3177 = vld [vmem:[#allocation8 + $0x1650] sm:$0xff]
    %v3178 = vld [vmem:[#allocation8 + $0x1658] sm:$0xff]
    %v3179 = vld [vmem:[#allocation8 + $0x1660] sm:$0xff]
    %v3180 = vld [vmem:[#allocation8 + $0x1668] sm:$0xff]
    %v3181 = vld [vmem:[#allocation8 + $0x1670] sm:$0xff]
    %v3182 = vld [vmem:[#allocation8 + $0x1678] sm:$0xff]
    %v3183 = vld [vmem:[#allocation8 + $0x1680] sm:$0xff]
    %v3184 = vld [vmem:[#allocation8 + $0x1688] sm:$0xff]
    %v3185 = vld [vmem:[#allocation8 + $0x1690] sm:$0xff]
    %v3186 = vld [vmem:[#allocation8 + $0x1698] sm:$0xff]
    %v3187 = vld [vmem:[#allocation8 + $0x16a0] sm:$0xff]
    %v3188 = vld [vmem:[#allocation8 + $0x16a8] sm:$0xff]
    %v3189 = vld [vmem:[#allocation8 + $0x16b0] sm:$0xff]
    %v3190 = vld [vmem:[#allocation8 + $0x16b8] sm:$0xff]
    %v3191 = vld [vmem:[#allocation8 + $0x16c0] sm:$0xff]
    %v3192 = vld [vmem:[#allocation8 + $0x16c8] sm:$0xff]
    %v3193 = vld [vmem:[#allocation8 + $0x16d0] sm:$0xff]
    %v3194 = vld [vmem:[#allocation8 + $0x16d8] sm:$0xff]
    %v3195 = vld [vmem:[#allocation8 + $0x16e0] sm:$0xff]
    %v3196 = vld [vmem:[#allocation8 + $0x16e8] sm:$0xff]
    %v3197 = vld [vmem:[#allocation8 + $0x16f0] sm:$0xff]
    %v3198 = vld [vmem:[#allocation8 + $0x16f8] sm:$0xff]
    %v3199 = vld [vmem:[#allocation8 + $0x1700] sm:$0xff]
    %v3200 = vld [vmem:[#allocation8 + $0x1708] sm:$0xff]
    %v3201 = vld [vmem:[#allocation8 + $0x1710] sm:$0xff]
    %v3202 = vld [vmem:[#allocation8 + $0x1718] sm:$0xff]
    %v3203 = vld [vmem:[#allocation8 + $0x1720] sm:$0xff]
    %v3204 = vld [vmem:[#allocation8 + $0x1728] sm:$0xff]
    %v3205 = vld [vmem:[#allocation8 + $0x1730] sm:$0xff]
    %v3206 = vld [vmem:[#allocation8 + $0x1738] sm:$0xff]
    %v3207 = vld [vmem:[#allocation8 + $0x1740] sm:$0xff]
    %v3208 = vld [vmem:[#allocation8 + $0x1748] sm:$0xff]
    %v3209 = vld [vmem:[#allocation8 + $0x1750] sm:$0xff]
    %v3210 = vld [vmem:[#allocation8 + $0x1758] sm:$0xff]
    %v3211 = vld [vmem:[#allocation8 + $0x1760] sm:$0xff]
    %v3212 = vld [vmem:[#allocation8 + $0x1768] sm:$0xff]
    %v3213 = vld [vmem:[#allocation8 + $0x1770] sm:$0xff]
    %v3214 = vld [vmem:[#allocation8 + $0x1778] sm:$0xff]
    %v3215 = vld [vmem:[#allocation8 + $0x1780] sm:$0xff]
    %v3216 = vld [vmem:[#allocation8 + $0x1788] sm:$0xff]
    %v3217 = vld [vmem:[#allocation8 + $0x1790] sm:$0xff]
    %v3218 = vld [vmem:[#allocation8 + $0x1798] sm:$0xff]
    %v3219 = vld [vmem:[#allocation8 + $0x17a0] sm:$0xff]
    %v3220 = vld [vmem:[#allocation8 + $0x17a8] sm:$0xff]
    %v3221 = vld [vmem:[#allocation8 + $0x17b0] sm:$0xff]
    %v3222 = vld [vmem:[#allocation8 + $0x17b8] sm:$0xff]
    %v3223 = vld [vmem:[#allocation8 + $0x17c0] sm:$0xff]
    %v3224 = vld [vmem:[#allocation8 + $0x17c8] sm:$0xff]
    %v3225 = vld [vmem:[#allocation8 + $0x17d0] sm:$0xff]
    %v3226 = vld [vmem:[#allocation8 + $0x17d8] sm:$0xff]
    %v3227 = vld [vmem:[#allocation8 + $0x17e0] sm:$0xff]
    %v3228 = vld [vmem:[#allocation8 + $0x17e8] sm:$0xff]
    %v3229 = vld [vmem:[#allocation8 + $0x17f0] sm:$0xff]
    %v3230 = vld [vmem:[#allocation8 + $0x17f8] sm:$0xff]
    %v3231 = vld [vmem:[#allocation8 + $0x1800] sm:$0xff]
    %v3232 = vld [vmem:[#allocation8 + $0x1808] sm:$0xff]
    %v3233 = vld [vmem:[#allocation8 + $0x1810] sm:$0xff]
    %v3234 = vld [vmem:[#allocation8 + $0x1818] sm:$0xff]
    %v3235 = vld [vmem:[#allocation8 + $0x1820] sm:$0xff]
    %v3236 = vld [vmem:[#allocation8 + $0x1828] sm:$0xff]
    %v3237 = vld [vmem:[#allocation8 + $0x1830] sm:$0xff]
    %v3238 = vld [vmem:[#allocation8 + $0x1838] sm:$0xff]
    %v3239 = vld [vmem:[#allocation8 + $0x1840] sm:$0xff]
    %v3240 = vld [vmem:[#allocation8 + $0x1848] sm:$0xff]
    %v3241 = vld [vmem:[#allocation8 + $0x1850] sm:$0xff]
    %v3242 = vld [vmem:[#allocation8 + $0x1858] sm:$0xff]
    %v3243 = vld [vmem:[#allocation8 + $0x1860] sm:$0xff]
    %v3244 = vld [vmem:[#allocation8 + $0x1868] sm:$0xff]
    %v3245 = vld [vmem:[#allocation8 + $0x1870] sm:$0xff]
    %v3246 = vld [vmem:[#allocation8 + $0x1878] sm:$0xff]
    %v3247 = vld [vmem:[#allocation8 + $0x1880] sm:$0xff]
    %v3248 = vld [vmem:[#allocation8 + $0x1888] sm:$0xff]
    %v3249 = vld [vmem:[#allocation8 + $0x1890] sm:$0xff]
    %v3250 = vld [vmem:[#allocation8 + $0x1898] sm:$0xff]
    %v3251 = vld [vmem:[#allocation8 + $0x18a0] sm:$0xff]
    %v3252 = vld [vmem:[#allocation8 + $0x18a8] sm:$0xff]
    %v3253 = vld [vmem:[#allocation8 + $0x18b0] sm:$0xff]
    %v3254 = vld [vmem:[#allocation8 + $0x18b8] sm:$0xff]
    %v3255 = vld [vmem:[#allocation8 + $0x18c0] sm:$0xff]
    %v3256 = vld [vmem:[#allocation8 + $0x18c8] sm:$0xff]
    %v3257 = vld [vmem:[#allocation8 + $0x18d0] sm:$0xff]
    %v3258 = vld [vmem:[#allocation8 + $0x18d8] sm:$0xff]
    %v3259 = vld [vmem:[#allocation8 + $0x18e0] sm:$0xff]
    %v3260 = vld [vmem:[#allocation8 + $0x18e8] sm:$0xff]
    %v3261 = vld [vmem:[#allocation8 + $0x18f0] sm:$0xff]
    %v3262 = vld [vmem:[#allocation8 + $0x18f8] sm:$0xff]
    %v3263 = vld [vmem:[#allocation8 + $0x1900] sm:$0xff]
    %v3264 = vld [vmem:[#allocation8 + $0x1908] sm:$0xff]
    %v3265 = vld [vmem:[#allocation8 + $0x1910] sm:$0xff]
    %v3266 = vld [vmem:[#allocation8 + $0x1918] sm:$0xff]
    %v3267 = vld [vmem:[#allocation8 + $0x1920] sm:$0xff]
    %v3268 = vld [vmem:[#allocation8 + $0x1928] sm:$0xff]
    %v3269 = vld [vmem:[#allocation8 + $0x1930] sm:$0xff]
    %v3270 = vld [vmem:[#allocation8 + $0x1938] sm:$0xff]
    %v3271 = vld [vmem:[#allocation8 + $0x1940] sm:$0xff]
    %v3272 = vld [vmem:[#allocation8 + $0x1948] sm:$0xff]
    %v3273 = vld [vmem:[#allocation8 + $0x1950] sm:$0xff]
    %v3274 = vld [vmem:[#allocation8 + $0x1958] sm:$0xff]
    %v3275 = vld [vmem:[#allocation8 + $0x1960] sm:$0xff]
    %v3276 = vld [vmem:[#allocation8 + $0x1968] sm:$0xff]
    %v3277 = vld [vmem:[#allocation8 + $0x1970] sm:$0xff]
    %v3278 = vld [vmem:[#allocation8 + $0x1978] sm:$0xff]
    %v3279 = vld [vmem:[#allocation8 + $0x1980] sm:$0xff]
    %v3280 = vld [vmem:[#allocation8 + $0x1988] sm:$0xff]
    %v3281 = vld [vmem:[#allocation8 + $0x1990] sm:$0xff]
    %v3282 = vld [vmem:[#allocation8 + $0x1998] sm:$0xff]
    %v3283 = vld [vmem:[#allocation8 + $0x19a0] sm:$0xff]
    %v3284 = vld [vmem:[#allocation8 + $0x19a8] sm:$0xff]
    %v3285 = vld [vmem:[#allocation8 + $0x19b0] sm:$0xff]
    %v3286 = vld [vmem:[#allocation8 + $0x19b8] sm:$0xff]
    %v3287 = vld [vmem:[#allocation8 + $0x19c0] sm:$0xff]
    %v3288 = vld [vmem:[#allocation8 + $0x19c8] sm:$0xff]
    %v3289 = vld [vmem:[#allocation8 + $0x19d0] sm:$0xff]
    %v3290 = vld [vmem:[#allocation8 + $0x19d8] sm:$0xff]
    %v3291 = vld [vmem:[#allocation8 + $0x19e0] sm:$0xff]
    %v3292 = vld [vmem:[#allocation8 + $0x19e8] sm:$0xff]
    %v3293 = vld [vmem:[#allocation8 + $0x19f0] sm:$0xff]
    %v3294 = vld [vmem:[#allocation8 + $0x19f8] sm:$0xff]
    %v3295 = vld [vmem:[#allocation8 + $0x1a00] sm:$0xff]
    %v3296 = vld [vmem:[#allocation8 + $0x1a08] sm:$0xff]
    %v3297 = vld [vmem:[#allocation8 + $0x1a10] sm:$0xff]
    %v3298 = vld [vmem:[#allocation8 + $0x1a18] sm:$0xff]
    %v3299 = vld [vmem:[#allocation8 + $0x1a20] sm:$0xff]
    %v3300 = vld [vmem:[#allocation8 + $0x1a28] sm:$0xff]
    %v3301 = vld [vmem:[#allocation8 + $0x1a30] sm:$0xff]
    %v3302 = vld [vmem:[#allocation8 + $0x1a38] sm:$0xff]
    %v3303 = vld [vmem:[#allocation8 + $0x1a40] sm:$0xff]
    %v3304 = vld [vmem:[#allocation8 + $0x1a48] sm:$0xff]
    %v3305 = vld [vmem:[#allocation8 + $0x1a50] sm:$0xff]
    %v3306 = vld [vmem:[#allocation8 + $0x1a58] sm:$0xff]
    %v3307 = vld [vmem:[#allocation8 + $0x1a60] sm:$0xff]
    %v3308 = vld [vmem:[#allocation8 + $0x1a68] sm:$0xff]
    %v3309 = vld [vmem:[#allocation8 + $0x1a70] sm:$0xff]
    %v3310 = vld [vmem:[#allocation8 + $0x1a78] sm:$0xff]
    %v3311 = vld [vmem:[#allocation8 + $0x1a80] sm:$0xff]
    %v3312 = vld [vmem:[#allocation8 + $0x1a88] sm:$0xff]
    %v3313 = vld [vmem:[#allocation8 + $0x1a90] sm:$0xff]
    %v3314 = vld [vmem:[#allocation8 + $0x1a98] sm:$0xff]
    %v3315 = vld [vmem:[#allocation8 + $0x1aa0] sm:$0xff]
    %v3316 = vld [vmem:[#allocation8 + $0x1aa8] sm:$0xff]
    %v3317 = vld [vmem:[#allocation8 + $0x1ab0] sm:$0xff]
    %v3318 = vld [vmem:[#allocation8 + $0x1ab8] sm:$0xff]
    %v3319 = vld [vmem:[#allocation8 + $0x1ac0] sm:$0xff]
    %v3320 = vld [vmem:[#allocation8 + $0x1ac8] sm:$0xff]
    %v3321 = vld [vmem:[#allocation8 + $0x1ad0] sm:$0xff]
    %v3322 = vld [vmem:[#allocation8 + $0x1ad8] sm:$0xff]
    %v3323 = vld [vmem:[#allocation8 + $0x1ae0] sm:$0xff]
    %v3324 = vld [vmem:[#allocation8 + $0x1ae8] sm:$0xff]
    %v3325 = vld [vmem:[#allocation8 + $0x1af0] sm:$0xff]
    %v3326 = vld [vmem:[#allocation8 + $0x1af8] sm:$0xff]
    %v3327 = vld [vmem:[#allocation8 + $0x1b00] sm:$0xff]
    %v3328 = vld [vmem:[#allocation8 + $0x1b08] sm:$0xff]
    %v3329 = vld [vmem:[#allocation8 + $0x1b10] sm:$0xff]
    %v3330 = vld [vmem:[#allocation8 + $0x1b18] sm:$0xff]
    %v3331 = vld [vmem:[#allocation8 + $0x1b20] sm:$0xff]
    %v3332 = vld [vmem:[#allocation8 + $0x1b28] sm:$0xff]
    %v3333 = vld [vmem:[#allocation8 + $0x1b30] sm:$0xff]
    %v3334 = vld [vmem:[#allocation8 + $0x1b38] sm:$0xff]
    %v3335 = vld [vmem:[#allocation8 + $0x1b40] sm:$0xff]
    %v3336 = vld [vmem:[#allocation8 + $0x1b48] sm:$0xff]
    %v3337 = vld [vmem:[#allocation8 + $0x1b50] sm:$0xff]
    %v3338 = vld [vmem:[#allocation8 + $0x1b58] sm:$0xff]
    %v3339 = vld [vmem:[#allocation8 + $0x1b60] sm:$0xff]
    %v3340 = vld [vmem:[#allocation8 + $0x1b68] sm:$0xff]
    %v3341 = vld [vmem:[#allocation8 + $0x1b70] sm:$0xff]
    %v3342 = vld [vmem:[#allocation8 + $0x1b78] sm:$0xff]
    %v3343 = vld [vmem:[#allocation8 + $0x1b80] sm:$0xff]
    %v3344 = vld [vmem:[#allocation8 + $0x1b88] sm:$0xff]
    %v3345 = vld [vmem:[#allocation8 + $0x1b90] sm:$0xff]
    %v3346 = vld [vmem:[#allocation8 + $0x1b98] sm:$0xff]
    %v3347 = vld [vmem:[#allocation8 + $0x1ba0] sm:$0xff]
    %v3348 = vld [vmem:[#allocation8 + $0x1ba8] sm:$0xff]
    %v3349 = vld [vmem:[#allocation8 + $0x1bb0] sm:$0xff]
    %v3350 = vld [vmem:[#allocation8 + $0x1bb8] sm:$0xff]
    %v3351 = vld [vmem:[#allocation8 + $0x1bc0] sm:$0xff]
    %v3352 = vld [vmem:[#allocation8 + $0x1bc8] sm:$0xff]
    %v3353 = vld [vmem:[#allocation8 + $0x1bd0] sm:$0xff]
    %v3354 = vld [vmem:[#allocation8 + $0x1bd8] sm:$0xff]
    %v3355 = vld [vmem:[#allocation8 + $0x1be0] sm:$0xff]
    %v3356 = vld [vmem:[#allocation8 + $0x1be8] sm:$0xff]
    %v3357 = vld [vmem:[#allocation8 + $0x1bf0] sm:$0xff]
    %v3358 = vld [vmem:[#allocation8 + $0x1bf8] sm:$0xff]
    %v3359 = vld [vmem:[#allocation8 + $0x1c00] sm:$0xff]
    %v3360 = vld [vmem:[#allocation8 + $0x1c08] sm:$0xff]
    %v3361 = vld [vmem:[#allocation8 + $0x1c10] sm:$0xff]
    %v3362 = vld [vmem:[#allocation8 + $0x1c18] sm:$0xff]
    %v3363 = vld [vmem:[#allocation8 + $0x1c20] sm:$0xff]
    %v3364 = vld [vmem:[#allocation8 + $0x1c28] sm:$0xff]
    %v3365 = vld [vmem:[#allocation8 + $0x1c30] sm:$0xff]
    %v3366 = vld [vmem:[#allocation8 + $0x1c38] sm:$0xff]
    %v3367 = vld [vmem:[#allocation8 + $0x1c40] sm:$0xff]
    %v3368 = vld [vmem:[#allocation8 + $0x1c48] sm:$0xff]
    %v3369 = vld [vmem:[#allocation8 + $0x1c50] sm:$0xff]
    %v3370 = vld [vmem:[#allocation8 + $0x1c58] sm:$0xff]
    %v3371 = vld [vmem:[#allocation8 + $0x1c60] sm:$0xff]
    %v3372 = vld [vmem:[#allocation8 + $0x1c68] sm:$0xff]
    %v3373 = vld [vmem:[#allocation8 + $0x1c70] sm:$0xff]
    %v3374 = vld [vmem:[#allocation8 + $0x1c78] sm:$0xff]
    %v3375 = vld [vmem:[#allocation8 + $0x1c80] sm:$0xff]
    %v3376 = vld [vmem:[#allocation8 + $0x1c88] sm:$0xff]
    %v3377 = vld [vmem:[#allocation8 + $0x1c90] sm:$0xff]
    %v3378 = vld [vmem:[#allocation8 + $0x1c98] sm:$0xff]
    %v3379 = vld [vmem:[#allocation8 + $0x1ca0] sm:$0xff]
    %v3380 = vld [vmem:[#allocation8 + $0x1ca8] sm:$0xff]
    %v3381 = vld [vmem:[#allocation8 + $0x1cb0] sm:$0xff]
    %v3382 = vld [vmem:[#allocation8 + $0x1cb8] sm:$0xff]
    %v3383 = vld [vmem:[#allocation8 + $0x1cc0] sm:$0xff]
    %v3384 = vld [vmem:[#allocation8 + $0x1cc8] sm:$0xff]
    %v3385 = vld [vmem:[#allocation8 + $0x1cd0] sm:$0xff]
    %v3386 = vld [vmem:[#allocation8 + $0x1cd8] sm:$0xff]
    %v3387 = vld [vmem:[#allocation8 + $0x1ce0] sm:$0xff]
    %v3388 = vld [vmem:[#allocation8 + $0x1ce8] sm:$0xff]
    %v3389 = vld [vmem:[#allocation8 + $0x1cf0] sm:$0xff]
    %v3390 = vld [vmem:[#allocation8 + $0x1cf8] sm:$0xff]
    %v3391 = vld [vmem:[#allocation8 + $0x1d00] sm:$0xff]
    %v3392 = vld [vmem:[#allocation8 + $0x1d08] sm:$0xff]
    %v3393 = vld [vmem:[#allocation8 + $0x1d10] sm:$0xff]
    %v3394 = vld [vmem:[#allocation8 + $0x1d18] sm:$0xff]
    %v3395 = vld [vmem:[#allocation8 + $0x1d20] sm:$0xff]
    %v3396 = vld [vmem:[#allocation8 + $0x1d28] sm:$0xff]
    %v3397 = vld [vmem:[#allocation8 + $0x1d30] sm:$0xff]
    %v3398 = vld [vmem:[#allocation8 + $0x1d38] sm:$0xff]
    %v3399 = vld [vmem:[#allocation8 + $0x1d40] sm:$0xff]
    %v3400 = vld [vmem:[#allocation8 + $0x1d48] sm:$0xff]
    %v3401 = vld [vmem:[#allocation8 + $0x1d50] sm:$0xff]
    %v3402 = vld [vmem:[#allocation8 + $0x1d58] sm:$0xff]
    %v3403 = vld [vmem:[#allocation8 + $0x1d60] sm:$0xff]
    %v3404 = vld [vmem:[#allocation8 + $0x1d68] sm:$0xff]
    %v3405 = vld [vmem:[#allocation8 + $0x1d70] sm:$0xff]
    %v3406 = vld [vmem:[#allocation8 + $0x1d78] sm:$0xff]
    %v3407 = vld [vmem:[#allocation8 + $0x1d80] sm:$0xff]
    %v3408 = vld [vmem:[#allocation8 + $0x1d88] sm:$0xff]
    %v3409 = vld [vmem:[#allocation8 + $0x1d90] sm:$0xff]
    %v3410 = vld [vmem:[#allocation8 + $0x1d98] sm:$0xff]
    %v3411 = vld [vmem:[#allocation8 + $0x1da0] sm:$0xff]
    %v3412 = vld [vmem:[#allocation8 + $0x1da8] sm:$0xff]
    %v3413 = vld [vmem:[#allocation8 + $0x1db0] sm:$0xff]
    %v3414 = vld [vmem:[#allocation8 + $0x1db8] sm:$0xff]
    %v3415 = vld [vmem:[#allocation8 + $0x1dc0] sm:$0xff]
    %v3416 = vld [vmem:[#allocation8 + $0x1dc8] sm:$0xff]
    %v3417 = vld [vmem:[#allocation8 + $0x1dd0] sm:$0xff]
    %v3418 = vld [vmem:[#allocation8 + $0x1dd8] sm:$0xff]
    %v3419 = vld [vmem:[#allocation8 + $0x1de0] sm:$0xff]
    %v3420 = vld [vmem:[#allocation8 + $0x1de8] sm:$0xff]
    %v3421 = vld [vmem:[#allocation8 + $0x1df0] sm:$0xff]
    %v3422 = vld [vmem:[#allocation8 + $0x1df8] sm:$0xff]
    %v3423 = vld [vmem:[#allocation8 + $0x1e00] sm:$0xff]
    %v3424 = vld [vmem:[#allocation8 + $0x1e08] sm:$0xff]
    %v3425 = vld [vmem:[#allocation8 + $0x1e10] sm:$0xff]
    %v3426 = vld [vmem:[#allocation8 + $0x1e18] sm:$0xff]
    %v3427 = vld [vmem:[#allocation8 + $0x1e20] sm:$0xff]
    %v3428 = vld [vmem:[#allocation8 + $0x1e28] sm:$0xff]
    %v3429 = vld [vmem:[#allocation8 + $0x1e30] sm:$0xff]
    %v3430 = vld [vmem:[#allocation8 + $0x1e38] sm:$0xff]
    %v3431 = vld [vmem:[#allocation8 + $0x1e40] sm:$0xff]
    %v3432 = vld [vmem:[#allocation8 + $0x1e48] sm:$0xff]
    %v3433 = vld [vmem:[#allocation8 + $0x1e50] sm:$0xff]
    %v3434 = vld [vmem:[#allocation8 + $0x1e58] sm:$0xff]
    %v3435 = vld [vmem:[#allocation8 + $0x1e60] sm:$0xff]
    %v3436 = vld [vmem:[#allocation8 + $0x1e68] sm:$0xff]
    %v3437 = vld [vmem:[#allocation8 + $0x1e70] sm:$0xff]
    %v3438 = vld [vmem:[#allocation8 + $0x1e78] sm:$0xff]
    %v3439 = vld [vmem:[#allocation8 + $0x1e80] sm:$0xff]
    %v3440 = vld [vmem:[#allocation8 + $0x1e88] sm:$0xff]
    %v3441 = vld [vmem:[#allocation8 + $0x1e90] sm:$0xff]
    %v3442 = vld [vmem:[#allocation8 + $0x1e98] sm:$0xff]
    %v3443 = vld [vmem:[#allocation8 + $0x1ea0] sm:$0xff]
    %v3444 = vld [vmem:[#allocation8 + $0x1ea8] sm:$0xff]
    %v3445 = vld [vmem:[#allocation8 + $0x1eb0] sm:$0xff]
    %v3446 = vld [vmem:[#allocation8 + $0x1eb8] sm:$0xff]
    %v3447 = vld [vmem:[#allocation8 + $0x1ec0] sm:$0xff]
    %v3448 = vld [vmem:[#allocation8 + $0x1ec8] sm:$0xff]
    %v3449 = vld [vmem:[#allocation8 + $0x1ed0] sm:$0xff]
    %v3450 = vld [vmem:[#allocation8 + $0x1ed8] sm:$0xff]
    %v3451 = vld [vmem:[#allocation8 + $0x1ee0] sm:$0xff]
    %v3452 = vld [vmem:[#allocation8 + $0x1ee8] sm:$0xff]
    %v3453 = vld [vmem:[#allocation8 + $0x1ef0] sm:$0xff]
    %v3454 = vld [vmem:[#allocation8 + $0x1ef8] sm:$0xff]
    %v3455 = vld [vmem:[#allocation8 + $0x1f00] sm:$0xff]
    %v3456 = vld [vmem:[#allocation8 + $0x1f08] sm:$0xff]
    %v3457 = vld [vmem:[#allocation8 + $0x1f10] sm:$0xff]
    %v3458 = vld [vmem:[#allocation8 + $0x1f18] sm:$0xff]
    %v3459 = vld [vmem:[#allocation8 + $0x1f20] sm:$0xff]
    %v3460 = vld [vmem:[#allocation8 + $0x1f28] sm:$0xff]
    %v3461 = vld [vmem:[#allocation8 + $0x1f30] sm:$0xff]
    %v3462 = vld [vmem:[#allocation8 + $0x1f38] sm:$0xff]
    %v3463 = vld [vmem:[#allocation8 + $0x1f40] sm:$0xff]
    %v3464 = vld [vmem:[#allocation8 + $0x1f48] sm:$0xff]
    %v3465 = vld [vmem:[#allocation8 + $0x1f50] sm:$0xff]
    %v3466 = vld [vmem:[#allocation8 + $0x1f58] sm:$0xff]
    %v3467 = vld [vmem:[#allocation8 + $0x1f60] sm:$0xff]
    %v3468 = vld [vmem:[#allocation8 + $0x1f68] sm:$0xff]
    %v3469 = vld [vmem:[#allocation8 + $0x1f70] sm:$0xff]
    %v3470 = vld [vmem:[#allocation8 + $0x1f78] sm:$0xff]
    %v3471 = vld [vmem:[#allocation8 + $0x1f80] sm:$0xff]
    %v3472 = vld [vmem:[#allocation8 + $0x1f88] sm:$0xff]
    %v3473 = vld [vmem:[#allocation8 + $0x1f90] sm:$0xff]
    %v3474 = vld [vmem:[#allocation8 + $0x1f98] sm:$0xff]
    %v3475 = vld [vmem:[#allocation8 + $0x1fa0] sm:$0xff]
    %v3476 = vld [vmem:[#allocation8 + $0x1fa8] sm:$0xff]
    %v3477 = vld [vmem:[#allocation8 + $0x1fb0] sm:$0xff]
    %v3478 = vld [vmem:[#allocation8 + $0x1fb8] sm:$0xff]
    %v3479 = vld [vmem:[#allocation8 + $0x1fc0] sm:$0xff]
    %v3480 = vld [vmem:[#allocation8 + $0x1fc8] sm:$0xff]
    %v3481 = vld [vmem:[#allocation8 + $0x1fd0] sm:$0xff]
    %v3482 = vld [vmem:[#allocation8 + $0x1fd8] sm:$0xff]
    %v3483 = vld [vmem:[#allocation8 + $0x1fe0] sm:$0xff]
    %v3484 = vld [vmem:[#allocation8 + $0x1fe8] sm:$0xff]
    %v3485 = vld [vmem:[#allocation8 + $0x1ff0] sm:$0xff]
    %v3486 = vld [vmem:[#allocation8 + $0x1ff8] sm:$0xff]
    %v3487 = vld [vmem:[#allocation8 + $0x2000] sm:$0xff]
    %v3488 = vld [vmem:[#allocation8 + $0x2008] sm:$0xff]
    %v3489 = vld [vmem:[#allocation8 + $0x2010] sm:$0xff]
    %v3490 = vld [vmem:[#allocation8 + $0x2018] sm:$0xff]
    %v3491 = vld [vmem:[#allocation8 + $0x2020] sm:$0xff]
    %v3492 = vld [vmem:[#allocation8 + $0x2028] sm:$0xff]
    %v3493 = vld [vmem:[#allocation8 + $0x2030] sm:$0xff]
    %v3494 = vld [vmem:[#allocation8 + $0x2038] sm:$0xff]
    %v3495 = vld [vmem:[#allocation8 + $0x2040] sm:$0xff]
    %v3496 = vld [vmem:[#allocation8 + $0x2048] sm:$0xff]
    %v3497 = vld [vmem:[#allocation8 + $0x2050] sm:$0xff]
    %v3498 = vld [vmem:[#allocation8 + $0x2058] sm:$0xff]
    %v3499 = vld [vmem:[#allocation8 + $0x2060] sm:$0xff]
    %v3500 = vld [vmem:[#allocation8 + $0x2068] sm:$0xff]
    %v3501 = vld [vmem:[#allocation8 + $0x2070] sm:$0xff]
    %v3502 = vld [vmem:[#allocation8 + $0x2078] sm:$0xff]
    %v3503 = vld [vmem:[#allocation8 + $0x2080] sm:$0xff]
    %v3504 = vld [vmem:[#allocation8 + $0x2088] sm:$0xff]
    %v3505 = vld [vmem:[#allocation8 + $0x2090] sm:$0xff]
    %v3506 = vld [vmem:[#allocation8 + $0x2098] sm:$0xff]
    %v3507 = vld [vmem:[#allocation8 + $0x20a0] sm:$0xff]
    %v3508 = vld [vmem:[#allocation8 + $0x20a8] sm:$0xff]
    %v3509 = vld [vmem:[#allocation8 + $0x20b0] sm:$0xff]
    %v3510 = vld [vmem:[#allocation8 + $0x20b8] sm:$0xff]
    %v3511 = vld [vmem:[#allocation8 + $0x20c0] sm:$0xff]
    %v3512 = vld [vmem:[#allocation8 + $0x20c8] sm:$0xff]
    %v3513 = vld [vmem:[#allocation8 + $0x20d0] sm:$0xff]
    %v3514 = vld [vmem:[#allocation8 + $0x20d8] sm:$0xff]
    %v3515 = vld [vmem:[#allocation8 + $0x20e0] sm:$0xff]
    %v3516 = vld [vmem:[#allocation8 + $0x20e8] sm:$0xff]
    %v3517 = vld [vmem:[#allocation8 + $0x20f0] sm:$0xff]
    %v3518 = vld [vmem:[#allocation8 + $0x20f8] sm:$0xff]
    %v3519 = vld [vmem:[#allocation8 + $0x2100] sm:$0xff]
    %v3520 = vld [vmem:[#allocation8 + $0x2108] sm:$0xff]
    %v3521 = vld [vmem:[#allocation8 + $0x2110] sm:$0xff]
    %v3522 = vld [vmem:[#allocation8 + $0x2118] sm:$0xff]
    %v3523 = vld [vmem:[#allocation8 + $0x2120] sm:$0xff]
    %v3524 = vld [vmem:[#allocation8 + $0x2128] sm:$0xff]
    %v3525 = vld [vmem:[#allocation8 + $0x2130] sm:$0xff]
    %v3526 = vld [vmem:[#allocation8 + $0x2138] sm:$0xff]
    %v3527 = vld [vmem:[#allocation8 + $0x2140] sm:$0xff]
    %v3528 = vld [vmem:[#allocation8 + $0x2148] sm:$0xff]
    %v3529 = vld [vmem:[#allocation8 + $0x2150] sm:$0xff]
    %v3530 = vld [vmem:[#allocation8 + $0x2158] sm:$0xff]
    %v3531 = vld [vmem:[#allocation8 + $0x2160] sm:$0xff]
    %v3532 = vld [vmem:[#allocation8 + $0x2168] sm:$0xff]
    %v3533 = vld [vmem:[#allocation8 + $0x2170] sm:$0xff]
    %v3534 = vld [vmem:[#allocation8 + $0x2178] sm:$0xff]
    %v3535 = vld [vmem:[#allocation8 + $0x2180] sm:$0xff]
    %v3536 = vld [vmem:[#allocation8 + $0x2188] sm:$0xff]
    %v3537 = vld [vmem:[#allocation8 + $0x2190] sm:$0xff]
    %v3538 = vld [vmem:[#allocation8 + $0x2198] sm:$0xff]
    %v3539 = vld [vmem:[#allocation8 + $0x21a0] sm:$0xff]
    %v3540 = vld [vmem:[#allocation8 + $0x21a8] sm:$0xff]
    %v3541 = vld [vmem:[#allocation8 + $0x21b0] sm:$0xff]
    %v3542 = vld [vmem:[#allocation8 + $0x21b8] sm:$0xff]
    %v3543 = vld [vmem:[#allocation8 + $0x21c0] sm:$0xff]
    %v3544 = vld [vmem:[#allocation8 + $0x21c8] sm:$0xff]
    %v3545 = vld [vmem:[#allocation8 + $0x21d0] sm:$0xff]
    %v3546 = vld [vmem:[#allocation8 + $0x21d8] sm:$0xff]
    %v3547 = vld [vmem:[#allocation8 + $0x21e0] sm:$0xff]
    %v3548 = vld [vmem:[#allocation8 + $0x21e8] sm:$0xff]
    %v3549 = vld [vmem:[#allocation8 + $0x21f0] sm:$0xff]
    %v3550 = vld [vmem:[#allocation8 + $0x21f8] sm:$0xff]
    %v3551 = vld [vmem:[#allocation8 + $0x2200] sm:$0xff]
    %v3552 = vld [vmem:[#allocation8 + $0x2208] sm:$0xff]
    %v3553 = vld [vmem:[#allocation8 + $0x2210] sm:$0xff]
    %v3554 = vld [vmem:[#allocation8 + $0x2218] sm:$0xff]
    %v3555 = vld [vmem:[#allocation8 + $0x2220] sm:$0xff]
    %v3556 = vld [vmem:[#allocation8 + $0x2228] sm:$0xff]
    %v3557 = vld [vmem:[#allocation8 + $0x2230] sm:$0xff]
    %v3558 = vld [vmem:[#allocation8 + $0x2238] sm:$0xff]
    %v3559 = vld [vmem:[#allocation8 + $0x2240] sm:$0xff]
    %v3560 = vld [vmem:[#allocation8 + $0x2248] sm:$0xff]
    %v3561 = vld [vmem:[#allocation8 + $0x2250] sm:$0xff]
    %v3562 = vld [vmem:[#allocation8 + $0x2258] sm:$0xff]
    %v3563 = vld [vmem:[#allocation8 + $0x2260] sm:$0xff]
    %v3564 = vld [vmem:[#allocation8 + $0x2268] sm:$0xff]
    %v3565 = vld [vmem:[#allocation8 + $0x2270] sm:$0xff]
    %v3566 = vld [vmem:[#allocation8 + $0x2278] sm:$0xff]
    %v3567 = vld [vmem:[#allocation8 + $0x2280] sm:$0xff]
    %v3568 = vld [vmem:[#allocation8 + $0x2288] sm:$0xff]
    %v3569 = vld [vmem:[#allocation8 + $0x2290] sm:$0xff]
    %v3570 = vld [vmem:[#allocation8 + $0x2298] sm:$0xff]
    %v3571 = vld [vmem:[#allocation8 + $0x22a0] sm:$0xff]
    %v3572 = vld [vmem:[#allocation8 + $0x22a8] sm:$0xff]
    %v3573 = vld [vmem:[#allocation8 + $0x22b0] sm:$0xff]
    %v3574 = vld [vmem:[#allocation8 + $0x22b8] sm:$0xff]
    %v3575 = vld [vmem:[#allocation8 + $0x22c0] sm:$0xff]
    %v3576 = vld [vmem:[#allocation8 + $0x22c8] sm:$0xff]
    %v3577 = vld [vmem:[#allocation8 + $0x22d0] sm:$0xff]
    %v3578 = vld [vmem:[#allocation8 + $0x22d8] sm:$0xff]
    %v3579 = vld [vmem:[#allocation8 + $0x22e0] sm:$0xff]
    %v3580 = vld [vmem:[#allocation8 + $0x22e8] sm:$0xff]
    %v3581 = vld [vmem:[#allocation8 + $0x22f0] sm:$0xff]
    %v3582 = vld [vmem:[#allocation8 + $0x22f8] sm:$0xff]
    %v3583 = vld [vmem:[#allocation8 + $0x2300] sm:$0xff]
    %v3584 = vld [vmem:[#allocation8 + $0x2308] sm:$0xff]
    %v3585 = vld [vmem:[#allocation8 + $0x2310] sm:$0xff]
    %v3586 = vld [vmem:[#allocation8 + $0x2318] sm:$0xff]
    %v3587 = vld [vmem:[#allocation8 + $0x2320] sm:$0xff]
    %v3588 = vld [vmem:[#allocation8 + $0x2328] sm:$0xff]
    %v3589 = vld [vmem:[#allocation8 + $0x2330] sm:$0xff]
    %v3590 = vld [vmem:[#allocation8 + $0x2338] sm:$0xff]
    %v3591 = vld [vmem:[#allocation8 + $0x2340] sm:$0xff]
    %v3592 = vld [vmem:[#allocation8 + $0x2348] sm:$0xff]
    %v3593 = vld [vmem:[#allocation8 + $0x2350] sm:$0xff]
    %v3594 = vld [vmem:[#allocation8 + $0x2358] sm:$0xff]
    %v3595 = vld [vmem:[#allocation8 + $0x2360] sm:$0xff]
    %v3596 = vld [vmem:[#allocation8 + $0x2368] sm:$0xff]
    %v3597 = vld [vmem:[#allocation8 + $0x2370] sm:$0xff]
    %v3598 = vld [vmem:[#allocation8 + $0x2378] sm:$0xff]
    %v3599 = vld [vmem:[#allocation8 + $0x2380] sm:$0xff]
    %v3600 = vld [vmem:[#allocation8 + $0x2388] sm:$0xff]
    %v3601 = vld [vmem:[#allocation8 + $0x2390] sm:$0xff]
    %v3602 = vld [vmem:[#allocation8 + $0x2398] sm:$0xff]
    %v3603 = vld [vmem:[#allocation8 + $0x23a0] sm:$0xff]
    %v3604 = vld [vmem:[#allocation8 + $0x23a8] sm:$0xff]
    %v3605 = vld [vmem:[#allocation8 + $0x23b0] sm:$0xff]
    %v3606 = vld [vmem:[#allocation8 + $0x23b8] sm:$0xff]
    %v3607 = vld [vmem:[#allocation8 + $0x23c0] sm:$0xff]
    %v3608 = vld [vmem:[#allocation8 + $0x23c8] sm:$0xff]
    %v3609 = vld [vmem:[#allocation8 + $0x23d0] sm:$0xff]
    %v3610 = vld [vmem:[#allocation8 + $0x23d8] sm:$0xff]
    %v3611 = vld [vmem:[#allocation8 + $0x23e0] sm:$0xff]
    %v3612 = vld [vmem:[#allocation8 + $0x23e8] sm:$0xff]
    %v3613 = vld [vmem:[#allocation8 + $0x23f0] sm:$0xff]
    %v3614 = vld [vmem:[#allocation8 + $0x23f8] sm:$0xff]
    %v3615 = vld [vmem:[#allocation8 + $0x2400] sm:$0xff]
    %v3616 = vld [vmem:[#allocation8 + $0x2408] sm:$0xff]
    %v3617 = vld [vmem:[#allocation8 + $0x2410] sm:$0xff]
    %v3618 = vld [vmem:[#allocation8 + $0x2418] sm:$0xff]
    %v3619 = vld [vmem:[#allocation8 + $0x2420] sm:$0xff]
    %v3620 = vld [vmem:[#allocation8 + $0x2428] sm:$0xff]
    %v3621 = vld [vmem:[#allocation8 + $0x2430] sm:$0xff]
    %v3622 = vld [vmem:[#allocation8 + $0x2438] sm:$0xff]
    %v3623 = vld [vmem:[#allocation8 + $0x2440] sm:$0xff]
    %v3624 = vld [vmem:[#allocation8 + $0x2448] sm:$0xff]
    %v3625 = vld [vmem:[#allocation8 + $0x2450] sm:$0xff]
    %v3626 = vld [vmem:[#allocation8 + $0x2458] sm:$0xff]
    %v3627 = vld [vmem:[#allocation8 + $0x2460] sm:$0xff]
    %v3628 = vld [vmem:[#allocation8 + $0x2468] sm:$0xff]
    %v3629 = vld [vmem:[#allocation8 + $0x2470] sm:$0xff]
    %v3630 = vld [vmem:[#allocation8 + $0x2478] sm:$0xff]
    %v3631 = vld [vmem:[#allocation8 + $0x2480] sm:$0xff]
    %v3632 = vld [vmem:[#allocation8 + $0x2488] sm:$0xff]
    %v3633 = vld [vmem:[#allocation8 + $0x2490] sm:$0xff]
    %v3634 = vld [vmem:[#allocation8 + $0x2498] sm:$0xff]
    %v3635 = vld [vmem:[#allocation8 + $0x24a0] sm:$0xff]
    %v3636 = vld [vmem:[#allocation8 + $0x24a8] sm:$0xff]
    %v3637 = vld [vmem:[#allocation8 + $0x24b0] sm:$0xff]
    %v3638 = vld [vmem:[#allocation8 + $0x24b8] sm:$0xff]
    %v3639 = vld [vmem:[#allocation8 + $0x24c0] sm:$0xff]
    %v3640 = vld [vmem:[#allocation8 + $0x24c8] sm:$0xff]
    %v3641 = vld [vmem:[#allocation8 + $0x24d0] sm:$0xff]
    %v3642 = vld [vmem:[#allocation8 + $0x24d8] sm:$0xff]
    %v3643 = vld [vmem:[#allocation8 + $0x24e0] sm:$0xff]
    %v3644 = vld [vmem:[#allocation8 + $0x24e8] sm:$0xff]
    %v3645 = vld [vmem:[#allocation8 + $0x24f0] sm:$0xff]
    %v3646 = vld [vmem:[#allocation8 + $0x24f8] sm:$0xff]
    %v3647 = vld [vmem:[#allocation8 + $0x2500] sm:$0xff]
    %v3648 = vld [vmem:[#allocation8 + $0x2508] sm:$0xff]
    %v3649 = vld [vmem:[#allocation8 + $0x2510] sm:$0xff]
    %v3650 = vld [vmem:[#allocation8 + $0x2518] sm:$0xff]
    %v3651 = vld [vmem:[#allocation8 + $0x2520] sm:$0xff]
    %v3652 = vld [vmem:[#allocation8 + $0x2528] sm:$0xff]
    %v3653 = vld [vmem:[#allocation8 + $0x2530] sm:$0xff]
    %v3654 = vld [vmem:[#allocation8 + $0x2538] sm:$0xff]
    %v3655 = vld [vmem:[#allocation8 + $0x2540] sm:$0xff]
    %v3656 = vld [vmem:[#allocation8 + $0x2548] sm:$0xff]
    %v3657 = vld [vmem:[#allocation8 + $0x2550] sm:$0xff]
    %v3658 = vld [vmem:[#allocation8 + $0x2558] sm:$0xff]
    %v3659 = vld [vmem:[#allocation8 + $0x2560] sm:$0xff]
    %v3660 = vld [vmem:[#allocation8 + $0x2568] sm:$0xff]
    %v3661 = vld [vmem:[#allocation8 + $0x2570] sm:$0xff]
    %v3662 = vld [vmem:[#allocation8 + $0x2578] sm:$0xff]
    %v3663 = vld [vmem:[#allocation8 + $0x2580] sm:$0xff]
    %v3664 = vld [vmem:[#allocation8 + $0x2588] sm:$0xff]
    %v3665 = vld [vmem:[#allocation8 + $0x2590] sm:$0xff]
    %v3666 = vld [vmem:[#allocation8 + $0x2598] sm:$0xff]
    %v3667 = vld [vmem:[#allocation8 + $0x25a0] sm:$0xff]
    %v3668 = vld [vmem:[#allocation8 + $0x25a8] sm:$0xff]
    %v3669 = vld [vmem:[#allocation8 + $0x25b0] sm:$0xff]
    %v3670 = vld [vmem:[#allocation8 + $0x25b8] sm:$0xff]
    %v3671 = vld [vmem:[#allocation8 + $0x25c0] sm:$0xff]
    %v3672 = vld [vmem:[#allocation8 + $0x25c8] sm:$0xff]
    %v3673 = vld [vmem:[#allocation8 + $0x25d0] sm:$0xff]
    %v3674 = vld [vmem:[#allocation8 + $0x25d8] sm:$0xff]
    %v3675 = vld [vmem:[#allocation8 + $0x25e0] sm:$0xff]
    %v3676 = vld [vmem:[#allocation8 + $0x25e8] sm:$0xff]
    %v3677 = vld [vmem:[#allocation8 + $0x25f0] sm:$0xff]
    %v3678 = vld [vmem:[#allocation8 + $0x25f8] sm:$0xff]
    %v3679 = vld [vmem:[#allocation8 + $0x2600] sm:$0xff]
    %v3680 = vld [vmem:[#allocation8 + $0x2608] sm:$0xff]
    %v3681 = vld [vmem:[#allocation8 + $0x2610] sm:$0xff]
    %v3682 = vld [vmem:[#allocation8 + $0x2618] sm:$0xff]
    %v3683 = vld [vmem:[#allocation8 + $0x2620] sm:$0xff]
    %v3684 = vld [vmem:[#allocation8 + $0x2628] sm:$0xff]
    %v3685 = vld [vmem:[#allocation8 + $0x2630] sm:$0xff]
    %v3686 = vld [vmem:[#allocation8 + $0x2638] sm:$0xff]
    %v3687 = vld [vmem:[#allocation8 + $0x2640] sm:$0xff]
    %v3688 = vld [vmem:[#allocation8 + $0x2648] sm:$0xff]
    %v3689 = vld [vmem:[#allocation8 + $0x2650] sm:$0xff]
    %v3690 = vld [vmem:[#allocation8 + $0x2658] sm:$0xff]
    %v3691 = vld [vmem:[#allocation8 + $0x2660] sm:$0xff]
    %v3692 = vld [vmem:[#allocation8 + $0x2668] sm:$0xff]
    %v3693 = vld [vmem:[#allocation8 + $0x2670] sm:$0xff]
    %v3694 = vld [vmem:[#allocation8 + $0x2678] sm:$0xff]
    %v3695 = vld [vmem:[#allocation8 + $0x2680] sm:$0xff]
    %v3696 = vld [vmem:[#allocation8 + $0x2688] sm:$0xff]
    %v3697 = vld [vmem:[#allocation8 + $0x2690] sm:$0xff]
    %v3698 = vld [vmem:[#allocation8 + $0x2698] sm:$0xff]
    %v3699 = vld [vmem:[#allocation8 + $0x26a0] sm:$0xff]
    %v3700 = vld [vmem:[#allocation8 + $0x26a8] sm:$0xff]
    %v3701 = vld [vmem:[#allocation8 + $0x26b0] sm:$0xff]
    %v3702 = vld [vmem:[#allocation8 + $0x26b8] sm:$0xff]
    %v3703 = vld [vmem:[#allocation8 + $0x26c0] sm:$0xff]
    %v3704 = vld [vmem:[#allocation8 + $0x26c8] sm:$0xff]
    %v3705 = vld [vmem:[#allocation8 + $0x26d0] sm:$0xff]
    %v3706 = vld [vmem:[#allocation8 + $0x26d8] sm:$0xff]
    %v3707 = vld [vmem:[#allocation8 + $0x26e0] sm:$0xff]
    %v3708 = vld [vmem:[#allocation8 + $0x26e8] sm:$0xff]
    %v3709 = vld [vmem:[#allocation8 + $0x26f0] sm:$0xff]
    %v3710 = vld [vmem:[#allocation8 + $0x26f8] sm:$0xff]
    %v3711 = vld [vmem:[#allocation8 + $0x2700] sm:$0xff]
    %v3712 = vld [vmem:[#allocation8 + $0x2708] sm:$0xff]
    %v3713 = vld [vmem:[#allocation8 + $0x2710] sm:$0xff]
    %v3714 = vld [vmem:[#allocation8 + $0x2718] sm:$0xff]
    %v3715 = vld [vmem:[#allocation8 + $0x2720] sm:$0xff]
    %v3716 = vld [vmem:[#allocation8 + $0x2728] sm:$0xff]
    %v3717 = vld [vmem:[#allocation8 + $0x2730] sm:$0xff]
    %v3718 = vld [vmem:[#allocation8 + $0x2738] sm:$0xff]
    %v3719 = vld [vmem:[#allocation8 + $0x2740] sm:$0xff]
    %v3720 = vld [vmem:[#allocation8 + $0x2748] sm:$0xff]
    %v3721 = vld [vmem:[#allocation8 + $0x2750] sm:$0xff]
    %v3722 = vld [vmem:[#allocation8 + $0x2758] sm:$0xff]
    %v3723 = vld [vmem:[#allocation8 + $0x2760] sm:$0xff]
    %v3724 = vld [vmem:[#allocation8 + $0x2768] sm:$0xff]
    %v3725 = vld [vmem:[#allocation8 + $0x2770] sm:$0xff]
    %v3726 = vld [vmem:[#allocation8 + $0x2778] sm:$0xff]
    %v3727 = vld [vmem:[#allocation8 + $0x2780] sm:$0xff]
    %v3728 = vld [vmem:[#allocation8 + $0x2788] sm:$0xff]
    %v3729 = vld [vmem:[#allocation8 + $0x2790] sm:$0xff]
    %v3730 = vld [vmem:[#allocation8 + $0x2798] sm:$0xff]
    %v3731 = vld [vmem:[#allocation8 + $0x27a0] sm:$0xff]
    %v3732 = vld [vmem:[#allocation8 + $0x27a8] sm:$0xff]
    %v3733 = vld [vmem:[#allocation8 + $0x27b0] sm:$0xff]
    %v3734 = vld [vmem:[#allocation8 + $0x27b8] sm:$0xff]
    %v3735 = vld [vmem:[#allocation8 + $0x27c0] sm:$0xff]
    %v3736 = vld [vmem:[#allocation8 + $0x27c8] sm:$0xff]
    %v3737 = vld [vmem:[#allocation8 + $0x27d0] sm:$0xff]
    %v3738 = vld [vmem:[#allocation8 + $0x27d8] sm:$0xff]
    %v3739 = vld [vmem:[#allocation8 + $0x27e0] sm:$0xff]
    %v3740 = vld [vmem:[#allocation8 + $0x27e8] sm:$0xff]
    %v3741 = vld [vmem:[#allocation8 + $0x27f0] sm:$0xff]
    %v3742 = vld [vmem:[#allocation8 + $0x27f8] sm:$0xff]
    %v3743 = vld [vmem:[#allocation8 + $0x2800] sm:$0xff]
    %v3744 = vld [vmem:[#allocation8 + $0x2808] sm:$0xff]
    %v3745 = vld [vmem:[#allocation8 + $0x2810] sm:$0xff]
    %v3746 = vld [vmem:[#allocation8 + $0x2818] sm:$0xff]
    %v3747 = vld [vmem:[#allocation8 + $0x2820] sm:$0xff]
    %v3748 = vld [vmem:[#allocation8 + $0x2828] sm:$0xff]
    %v3749 = vld [vmem:[#allocation8 + $0x2830] sm:$0xff]
    %v3750 = vld [vmem:[#allocation8 + $0x2838] sm:$0xff]
    %v3751 = vld [vmem:[#allocation8 + $0x2840] sm:$0xff]
    %v3752 = vld [vmem:[#allocation8 + $0x2848] sm:$0xff]
    %v3753 = vld [vmem:[#allocation8 + $0x2850] sm:$0xff]
    %v3754 = vld [vmem:[#allocation8 + $0x2858] sm:$0xff]
    %v3755 = vld [vmem:[#allocation8 + $0x2860] sm:$0xff]
    %v3756 = vld [vmem:[#allocation8 + $0x2868] sm:$0xff]
    %v3757 = vld [vmem:[#allocation8 + $0x2870] sm:$0xff]
    %v3758 = vld [vmem:[#allocation8 + $0x2878] sm:$0xff]
    %v3759 = vld [vmem:[#allocation8 + $0x2880] sm:$0xff]
    %v3760 = vld [vmem:[#allocation8 + $0x2888] sm:$0xff]
    %v3761 = vld [vmem:[#allocation8 + $0x2890] sm:$0xff]
    %v3762 = vld [vmem:[#allocation8 + $0x2898] sm:$0xff]
    %v3763 = vld [vmem:[#allocation8 + $0x28a0] sm:$0xff]
    %v3764 = vld [vmem:[#allocation8 + $0x28a8] sm:$0xff]
    %v3765 = vld [vmem:[#allocation8 + $0x28b0] sm:$0xff]
    %v3766 = vld [vmem:[#allocation8 + $0x28b8] sm:$0xff]
    %v3767 = vld [vmem:[#allocation8 + $0x28c0] sm:$0xff]
    %v3768 = vld [vmem:[#allocation8 + $0x28c8] sm:$0xff]
    %v3769 = vld [vmem:[#allocation8 + $0x28d0] sm:$0xff]
    %v3770 = vld [vmem:[#allocation8 + $0x28d8] sm:$0xff]
    %v3771 = vld [vmem:[#allocation8 + $0x28e0] sm:$0xff]
    %v3772 = vld [vmem:[#allocation8 + $0x28e8] sm:$0xff]
    %v3773 = vld [vmem:[#allocation8 + $0x28f0] sm:$0xff]
    %v3774 = vld [vmem:[#allocation8 + $0x28f8] sm:$0xff]
    %v3775 = vld [vmem:[#allocation8 + $0x2900] sm:$0xff]
    %v3776 = vld [vmem:[#allocation8 + $0x2908] sm:$0xff]
    %v3777 = vld [vmem:[#allocation8 + $0x2910] sm:$0xff]
    %v3778 = vld [vmem:[#allocation8 + $0x2918] sm:$0xff]
    %v3779 = vld [vmem:[#allocation8 + $0x2920] sm:$0xff]
    %v3780 = vld [vmem:[#allocation8 + $0x2928] sm:$0xff]
    %v3781 = vld [vmem:[#allocation8 + $0x2930] sm:$0xff]
    %v3782 = vld [vmem:[#allocation8 + $0x2938] sm:$0xff]
    %v3783 = vld [vmem:[#allocation8 + $0x2940] sm:$0xff]
    %v3784 = vld [vmem:[#allocation8 + $0x2948] sm:$0xff]
    %v3785 = vld [vmem:[#allocation8 + $0x2950] sm:$0xff]
    %v3786 = vld [vmem:[#allocation8 + $0x2958] sm:$0xff]
    %v3787 = vld [vmem:[#allocation8 + $0x2960] sm:$0xff]
    %v3788 = vld [vmem:[#allocation8 + $0x2968] sm:$0xff]
    %v3789 = vld [vmem:[#allocation8 + $0x2970] sm:$0xff]
    %v3790 = vld [vmem:[#allocation8 + $0x2978] sm:$0xff]
    %v3791 = vld [vmem:[#allocation8 + $0x2980] sm:$0xff]
    %v3792 = vld [vmem:[#allocation8 + $0x2988] sm:$0xff]
    %v3793 = vld [vmem:[#allocation8 + $0x2990] sm:$0xff]
    %v3794 = vld [vmem:[#allocation8 + $0x2998] sm:$0xff]
    %v3795 = vld [vmem:[#allocation8 + $0x29a0] sm:$0xff]
    %v3796 = vld [vmem:[#allocation8 + $0x29a8] sm:$0xff]
    %v3797 = vld [vmem:[#allocation8 + $0x29b0] sm:$0xff]
    %v3798 = vld [vmem:[#allocation8 + $0x29b8] sm:$0xff]
    %v3799 = vld [vmem:[#allocation8 + $0x29c0] sm:$0xff]
    %v3800 = vld [vmem:[#allocation8 + $0x29c8] sm:$0xff]
    %v3801 = vld [vmem:[#allocation8 + $0x29d0] sm:$0xff]
    %v3802 = vld [vmem:[#allocation8 + $0x29d8] sm:$0xff]
    %v3803 = vld [vmem:[#allocation8 + $0x29e0] sm:$0xff]
    %v3804 = vld [vmem:[#allocation8 + $0x29e8] sm:$0xff]
    %v3805 = vld [vmem:[#allocation8 + $0x29f0] sm:$0xff]
    %v3806 = vld [vmem:[#allocation8 + $0x29f8] sm:$0xff]
    %v3807 = vld [vmem:[#allocation8 + $0x2a00] sm:$0xff]
    %v3808 = vld [vmem:[#allocation8 + $0x2a08] sm:$0xff]
    %v3809 = vld [vmem:[#allocation8 + $0x2a10] sm:$0xff]
    %v3810 = vld [vmem:[#allocation8 + $0x2a18] sm:$0xff]
    %v3811 = vld [vmem:[#allocation8 + $0x2a20] sm:$0xff]
    %v3812 = vld [vmem:[#allocation8 + $0x2a28] sm:$0xff]
    %v3813 = vld [vmem:[#allocation8 + $0x2a30] sm:$0xff]
    %v3814 = vld [vmem:[#allocation8 + $0x2a38] sm:$0xff]
    %v3815 = vld [vmem:[#allocation8 + $0x2a40] sm:$0xff]
    %v3816 = vld [vmem:[#allocation8 + $0x2a48] sm:$0xff]
    %v3817 = vld [vmem:[#allocation8 + $0x2a50] sm:$0xff]
    %v3818 = vld [vmem:[#allocation8 + $0x2a58] sm:$0xff]
    %v3819 = vld [vmem:[#allocation8 + $0x2a60] sm:$0xff]
    %v3820 = vld [vmem:[#allocation8 + $0x2a68] sm:$0xff]
    %v3821 = vld [vmem:[#allocation8 + $0x2a70] sm:$0xff]
    %v3822 = vld [vmem:[#allocation8 + $0x2a78] sm:$0xff]
    %v3823 = vld [vmem:[#allocation8 + $0x2a80] sm:$0xff]
    %v3824 = vld [vmem:[#allocation8 + $0x2a88] sm:$0xff]
    %v3825 = vld [vmem:[#allocation8 + $0x2a90] sm:$0xff]
    %v3826 = vld [vmem:[#allocation8 + $0x2a98] sm:$0xff]
    %v3827 = vld [vmem:[#allocation8 + $0x2aa0] sm:$0xff]
    %v3828 = vld [vmem:[#allocation8 + $0x2aa8] sm:$0xff]
    %v3829 = vld [vmem:[#allocation8 + $0x2ab0] sm:$0xff]
    %v3830 = vld [vmem:[#allocation8 + $0x2ab8] sm:$0xff]
    %v3831 = vld [vmem:[#allocation8 + $0x2ac0] sm:$0xff]
    %v3832 = vld [vmem:[#allocation8 + $0x2ac8] sm:$0xff]
    %v3833 = vld [vmem:[#allocation8 + $0x2ad0] sm:$0xff]
    %v3834 = vld [vmem:[#allocation8 + $0x2ad8] sm:$0xff]
    %v3835 = vld [vmem:[#allocation8 + $0x2ae0] sm:$0xff]
    %v3836 = vld [vmem:[#allocation8 + $0x2ae8] sm:$0xff]
    %v3837 = vld [vmem:[#allocation8 + $0x2af0] sm:$0xff]
    %v3838 = vld [vmem:[#allocation8 + $0x2af8] sm:$0xff]
    %v3839 = vld [vmem:[#allocation8 + $0x2b00] sm:$0xff]
    %v3840 = vld [vmem:[#allocation8 + $0x2b08] sm:$0xff]
    %v3841 = vld [vmem:[#allocation8 + $0x2b10] sm:$0xff]
    %v3842 = vld [vmem:[#allocation8 + $0x2b18] sm:$0xff]
    %v3843 = vld [vmem:[#allocation8 + $0x2b20] sm:$0xff]
    %v3844 = vld [vmem:[#allocation8 + $0x2b28] sm:$0xff]
    %v3845 = vld [vmem:[#allocation8 + $0x2b30] sm:$0xff]
    %v3846 = vld [vmem:[#allocation8 + $0x2b38] sm:$0xff]
    %v3847 = vld [vmem:[#allocation8 + $0x2b40] sm:$0xff]
    %v3848 = vld [vmem:[#allocation8 + $0x2b48] sm:$0xff]
    %v3849 = vld [vmem:[#allocation8 + $0x2b50] sm:$0xff]
    %v3850 = vld [vmem:[#allocation8 + $0x2b58] sm:$0xff]
    %v3851 = vld [vmem:[#allocation8 + $0x2b60] sm:$0xff]
    %v3852 = vld [vmem:[#allocation8 + $0x2b68] sm:$0xff]
    %v3853 = vld [vmem:[#allocation8 + $0x2b70] sm:$0xff]
    %v3854 = vld [vmem:[#allocation8 + $0x2b78] sm:$0xff]
    %v3855 = vld [vmem:[#allocation8 + $0x2b80] sm:$0xff]
    %v3856 = vld [vmem:[#allocation8 + $0x2b88] sm:$0xff]
    %v3857 = vld [vmem:[#allocation8 + $0x2b90] sm:$0xff]
    %v3858 = vld [vmem:[#allocation8 + $0x2b98] sm:$0xff]
    %v3859 = vld [vmem:[#allocation8 + $0x2ba0] sm:$0xff]
    %v3860 = vld [vmem:[#allocation8 + $0x2ba8] sm:$0xff]
    %v3861 = vld [vmem:[#allocation8 + $0x2bb0] sm:$0xff]
    %v3862 = vld [vmem:[#allocation8 + $0x2bb8] sm:$0xff]
    %v3863 = vld [vmem:[#allocation8 + $0x2bc0] sm:$0xff]
    %v3864 = vld [vmem:[#allocation8 + $0x2bc8] sm:$0xff]
    %v3865 = vld [vmem:[#allocation8 + $0x2bd0] sm:$0xff]
    %v3866 = vld [vmem:[#allocation8 + $0x2bd8] sm:$0xff]
    %v3867 = vld [vmem:[#allocation8 + $0x2be0] sm:$0xff]
    %v3868 = vld [vmem:[#allocation8 + $0x2be8] sm:$0xff]
    %v3869 = vld [vmem:[#allocation8 + $0x2bf0] sm:$0xff]
    %v3870 = vld [vmem:[#allocation8 + $0x2bf8] sm:$0xff]
    %v3871 = vld [vmem:[#allocation8 + $0x2c00] sm:$0xff]
    %v3872 = vld [vmem:[#allocation8 + $0x2c08] sm:$0xff]
    %v3873 = vld [vmem:[#allocation8 + $0x2c10] sm:$0xff]
    %v3874 = vld [vmem:[#allocation8 + $0x2c18] sm:$0xff]
    %v3875 = vld [vmem:[#allocation8 + $0x2c20] sm:$0xff]
    %v3876 = vld [vmem:[#allocation8 + $0x2c28] sm:$0xff]
    %v3877 = vld [vmem:[#allocation8 + $0x2c30] sm:$0xff]
    %v3878 = vld [vmem:[#allocation8 + $0x2c38] sm:$0xff]
    %v3879 = vld [vmem:[#allocation8 + $0x2c40] sm:$0xff]
    %v3880 = vld [vmem:[#allocation8 + $0x2c48] sm:$0xff]
    %v3881 = vld [vmem:[#allocation8 + $0x2c50] sm:$0xff]
    %v3882 = vld [vmem:[#allocation8 + $0x2c58] sm:$0xff]
    %v3883 = vld [vmem:[#allocation8 + $0x2c60] sm:$0xff]
    %v3884 = vld [vmem:[#allocation8 + $0x2c68] sm:$0xff]
    %v3885 = vld [vmem:[#allocation8 + $0x2c70] sm:$0xff]
    %v3886 = vld [vmem:[#allocation8 + $0x2c78] sm:$0xff]
    %v3887 = vld [vmem:[#allocation8 + $0x2c80] sm:$0xff]
    %v3888 = vld [vmem:[#allocation8 + $0x2c88] sm:$0xff]
    %v3889 = vld [vmem:[#allocation8 + $0x2c90] sm:$0xff]
    %v3890 = vld [vmem:[#allocation8 + $0x2c98] sm:$0xff]
    %v3891 = vld [vmem:[#allocation8 + $0x2ca0] sm:$0xff]
    %v3892 = vld [vmem:[#allocation8 + $0x2ca8] sm:$0xff]
    %v3893 = vld [vmem:[#allocation8 + $0x2cb0] sm:$0xff]
    %v3894 = vld [vmem:[#allocation8 + $0x2cb8] sm:$0xff]
    %v3895 = vld [vmem:[#allocation8 + $0x2cc0] sm:$0xff]
    %v3896 = vld [vmem:[#allocation8 + $0x2cc8] sm:$0xff]
    %v3897 = vld [vmem:[#allocation8 + $0x2cd0] sm:$0xff]
    %v3898 = vld [vmem:[#allocation8 + $0x2cd8] sm:$0xff]
    %v3899 = vld [vmem:[#allocation8 + $0x2ce0] sm:$0xff]
    %v3900 = vld [vmem:[#allocation8 + $0x2ce8] sm:$0xff]
    %v3901 = vld [vmem:[#allocation8 + $0x2cf0] sm:$0xff]
    %v3902 = vld [vmem:[#allocation8 + $0x2cf8] sm:$0xff]
    %v3903 = vld [vmem:[#allocation8 + $0x2d00] sm:$0xff]
    %v3904 = vld [vmem:[#allocation8 + $0x2d08] sm:$0xff]
    %v3905 = vld [vmem:[#allocation8 + $0x2d10] sm:$0xff]
    %v3906 = vld [vmem:[#allocation8 + $0x2d18] sm:$0xff]
    %v3907 = vld [vmem:[#allocation8 + $0x2d20] sm:$0xff]
    %v3908 = vld [vmem:[#allocation8 + $0x2d28] sm:$0xff]
    %v3909 = vld [vmem:[#allocation8 + $0x2d30] sm:$0xff]
    %v3910 = vld [vmem:[#allocation8 + $0x2d38] sm:$0xff]
    %v3911 = vld [vmem:[#allocation8 + $0x2d40] sm:$0xff]
    %v3912 = vld [vmem:[#allocation8 + $0x2d48] sm:$0xff]
    %v3913 = vld [vmem:[#allocation8 + $0x2d50] sm:$0xff]
    %v3914 = vld [vmem:[#allocation8 + $0x2d58] sm:$0xff]
    %v3915 = vld [vmem:[#allocation8 + $0x2d60] sm:$0xff]
    %v3916 = vld [vmem:[#allocation8 + $0x2d68] sm:$0xff]
    %v3917 = vld [vmem:[#allocation8 + $0x2d70] sm:$0xff]
    %v3918 = vld [vmem:[#allocation8 + $0x2d78] sm:$0xff]
    %v3919 = vld [vmem:[#allocation8 + $0x2d80] sm:$0xff]
    %v3920 = vld [vmem:[#allocation8 + $0x2d88] sm:$0xff]
    %v3921 = vld [vmem:[#allocation8 + $0x2d90] sm:$0xff]
    %v3922 = vld [vmem:[#allocation8 + $0x2d98] sm:$0xff]
    %v3923 = vld [vmem:[#allocation8 + $0x2da0] sm:$0xff]
    %v3924 = vld [vmem:[#allocation8 + $0x2da8] sm:$0xff]
    %v3925 = vld [vmem:[#allocation8 + $0x2db0] sm:$0xff]
    %v3926 = vld [vmem:[#allocation8 + $0x2db8] sm:$0xff]
    %v3927 = vld [vmem:[#allocation8 + $0x2dc0] sm:$0xff]
    %v3928 = vld [vmem:[#allocation8 + $0x2dc8] sm:$0xff]
    %v3929 = vld [vmem:[#allocation8 + $0x2dd0] sm:$0xff]
    %v3930 = vld [vmem:[#allocation8 + $0x2dd8] sm:$0xff]
    %v3931 = vld [vmem:[#allocation8 + $0x2de0] sm:$0xff]
    %v3932 = vld [vmem:[#allocation8 + $0x2de8] sm:$0xff]
    %v3933 = vld [vmem:[#allocation8 + $0x2df0] sm:$0xff]
    %v3934 = vld [vmem:[#allocation8 + $0x2df8] sm:$0xff]
    %v3935 = vld [vmem:[#allocation8 + $0x2e00] sm:$0xff]
    %v3936 = vld [vmem:[#allocation8 + $0x2e08] sm:$0xff]
    %v3937 = vld [vmem:[#allocation8 + $0x2e10] sm:$0xff]
    %v3938 = vld [vmem:[#allocation8 + $0x2e18] sm:$0xff]
    %v3939 = vld [vmem:[#allocation8 + $0x2e20] sm:$0xff]
    %v3940 = vld [vmem:[#allocation8 + $0x2e28] sm:$0xff]
    %v3941 = vld [vmem:[#allocation8 + $0x2e30] sm:$0xff]
    %v3942 = vld [vmem:[#allocation8 + $0x2e38] sm:$0xff]
    %v3943 = vld [vmem:[#allocation8 + $0x2e40] sm:$0xff]
    %v3944 = vld [vmem:[#allocation8 + $0x2e48] sm:$0xff]
    %v3945 = vld [vmem:[#allocation8 + $0x2e50] sm:$0xff]
    %v3946 = vld [vmem:[#allocation8 + $0x2e58] sm:$0xff]
    %v3947 = vld [vmem:[#allocation8 + $0x2e60] sm:$0xff]
    %v3948 = vld [vmem:[#allocation8 + $0x2e68] sm:$0xff]
    %v3949 = vld [vmem:[#allocation8 + $0x2e70] sm:$0xff]
    %v3950 = vld [vmem:[#allocation8 + $0x2e78] sm:$0xff]
    %v3951 = vld [vmem:[#allocation8 + $0x2e80] sm:$0xff]
    %v3952 = vld [vmem:[#allocation8 + $0x2e88] sm:$0xff]
    %v3953 = vld [vmem:[#allocation8 + $0x2e90] sm:$0xff]
    %v3954 = vld [vmem:[#allocation8 + $0x2e98] sm:$0xff]
    %v3955 = vld [vmem:[#allocation8 + $0x2ea0] sm:$0xff]
    %v3956 = vld [vmem:[#allocation8 + $0x2ea8] sm:$0xff]
    %v3957 = vld [vmem:[#allocation8 + $0x2eb0] sm:$0xff]
    %v3958 = vld [vmem:[#allocation8 + $0x2eb8] sm:$0xff]
    %v3959 = vld [vmem:[#allocation8 + $0x2ec0] sm:$0xff]
    %v3960 = vld [vmem:[#allocation8 + $0x2ec8] sm:$0xff]
    %v3961 = vld [vmem:[#allocation8 + $0x2ed0] sm:$0xff]
    %v3962 = vld [vmem:[#allocation8 + $0x2ed8] sm:$0xff]
    %v3963 = vld [vmem:[#allocation8 + $0x2ee0] sm:$0xff]
    %v3964 = vld [vmem:[#allocation8 + $0x2ee8] sm:$0xff]
    %v3965 = vld [vmem:[#allocation8 + $0x2ef0] sm:$0xff]
    %v3966 = vld [vmem:[#allocation8 + $0x2ef8] sm:$0xff]
    %v3967 = vld [vmem:[#allocation8 + $0x2f00] sm:$0xff]
    %v3968 = vld [vmem:[#allocation8 + $0x2f08] sm:$0xff]
    %v3969 = vld [vmem:[#allocation8 + $0x2f10] sm:$0xff]
    %v3970 = vld [vmem:[#allocation8 + $0x2f18] sm:$0xff]
    %v3971 = vld [vmem:[#allocation8 + $0x2f20] sm:$0xff]
    %v3972 = vld [vmem:[#allocation8 + $0x2f28] sm:$0xff]
    %v3973 = vld [vmem:[#allocation8 + $0x2f30] sm:$0xff]
    %v3974 = vld [vmem:[#allocation8 + $0x2f38] sm:$0xff]
    %v3975 = vld [vmem:[#allocation8 + $0x2f40] sm:$0xff]
    %v3976 = vld [vmem:[#allocation8 + $0x2f48] sm:$0xff]
    %v3977 = vld [vmem:[#allocation8 + $0x2f50] sm:$0xff]
    %v3978 = vld [vmem:[#allocation8 + $0x2f58] sm:$0xff]
    %v3979 = vld [vmem:[#allocation8 + $0x2f60] sm:$0xff]
    %v3980 = vld [vmem:[#allocation8 + $0x2f68] sm:$0xff]
    %v3981 = vld [vmem:[#allocation8 + $0x2f70] sm:$0xff]
    %v3982 = vld [vmem:[#allocation8 + $0x2f78] sm:$0xff]
    %v3983 = vld [vmem:[#allocation8 + $0x2f80] sm:$0xff]
    %v3984 = vld [vmem:[#allocation8 + $0x2f88] sm:$0xff]
    %v3985 = vld [vmem:[#allocation8 + $0x2f90] sm:$0xff]
    %v3986 = vld [vmem:[#allocation8 + $0x2f98] sm:$0xff]
    %v3987 = vld [vmem:[#allocation8 + $0x2fa0] sm:$0xff]
    %v3988 = vld [vmem:[#allocation8 + $0x2fa8] sm:$0xff]
    %v3989 = vld [vmem:[#allocation8 + $0x2fb0] sm:$0xff]
    %v3990 = vld [vmem:[#allocation8 + $0x2fb8] sm:$0xff]
    %v3991 = vld [vmem:[#allocation8 + $0x2fc0] sm:$0xff]
    %v3992 = vld [vmem:[#allocation8 + $0x2fc8] sm:$0xff]
    %v3993 = vld [vmem:[#allocation8 + $0x2fd0] sm:$0xff]
    %v3994 = vld [vmem:[#allocation8 + $0x2fd8] sm:$0xff]
    %v3995 = vld [vmem:[#allocation8 + $0x2fe0] sm:$0xff]
    %v3996 = vld [vmem:[#allocation8 + $0x2fe8] sm:$0xff]
    %v3997 = vld [vmem:[#allocation8 + $0x2ff0] sm:$0xff]
    %v3998 = vld [vmem:[#allocation8 + $0x2ff8] sm:$0xff]
    %v3999 = vld [vmem:[#allocation10] sm:$0xff]
    %v4000 = vld [vmem:[#allocation10 + $0x8] sm:$0xff]
    %v4001 = vld [vmem:[#allocation10 + $0x10] sm:$0xff]
    %v4005 = vperm.slane %v3999, 0
    %v4006 = vperm.slane %v3999, 1
    %v4007 = vperm.slane %v3999, 2
    %v4008 = vperm.slane %v3999, 3
    %v4009 = vperm.slane %v3999, 4
    %v4010 = vperm.slane %v3999, 5
    %v4011 = vperm.slane %v3999, 6
    %v4012 = vperm.slane %v3999, 7
    %v4013 = vperm.slane %v4000, 0
    %v4014 = vperm.slane %v4000, 1
    %v4015 = vperm.slane %v4000, 2
    %v4016 = vperm.slane %v4000, 3
    %v4017 = vperm.slane %v4000, 4
    %v4018 = vperm.slane %v4000, 5
    %v4019 = vperm.slane %v4000, 6
    %v4020 = vperm.slane %v4000, 7
    %v4021 = vperm.slane %v4001, 0
    %v4022 = vperm.slane %v4001, 1
    %v4023 = vperm.slane %v4001, 2
    %v4024 = vperm.slane %v4001, 3
    %v4025 = vperm.slane %v4001, 4
    %v4026 = vperm.slane %v4001, 5
    %v4027 = vperm.slane %v4001, 6
    %v4028 = vperm.slane %v4001, 7
    %v5589 = vunpack.c.l.b16 %v2463
    %v5590 = vunpack.c.h.b16 %v2463
    %v5591 = vunpack.c.l.b16 %v2464
    %v5592 = vunpack.c.h.b16 %v2464
    %v5593 = vunpack.c.l.b16 %v2465
    %v5594 = vunpack.c.h.b16 %v2465
    %v5595 = vunpack.c.l.b16 %v2466
    %v5596 = vunpack.c.h.b16 %v2466
    %v5597 = vunpack.c.l.b16 %v2467
    %v5598 = vunpack.c.h.b16 %v2467
    %v5599 = vunpack.c.l.b16 %v2468
    %v5600 = vunpack.c.h.b16 %v2468
    %v5601 = vunpack.c.l.b16 %v2469
    %v5602 = vunpack.c.h.b16 %v2469
    %v5603 = vunpack.c.l.b16 %v2470
    %v5604 = vunpack.c.h.b16 %v2470
    %v5605 = vunpack.c.l.b16 %v2471
    %v5606 = vunpack.c.h.b16 %v2471
    %v5607 = vunpack.c.l.b16 %v2472
    %v5608 = vunpack.c.h.b16 %v2472
    %v5609 = vunpack.c.l.b16 %v2473
    %v5610 = vunpack.c.h.b16 %v2473
    %v5611 = vunpack.c.l.b16 %v2474
    %v5612 = vunpack.c.h.b16 %v2474
    %v5613 = vunpack.c.l.b16 %v2475
    %v5614 = vunpack.c.h.b16 %v2475
    %v5615 = vunpack.c.l.b16 %v2476
    %v5616 = vunpack.c.h.b16 %v2476
    %v5617 = vunpack.c.l.b16 %v2477
    %v5618 = vunpack.c.h.b16 %v2477
    %v5619 = vunpack.c.l.b16 %v2478
    %v5620 = vunpack.c.h.b16 %v2478
    %v5621 = vunpack.c.l.b16 %v2479
    %v5622 = vunpack.c.h.b16 %v2479
    %v5623 = vunpack.c.l.b16 %v2480
    %v5624 = vunpack.c.h.b16 %v2480
    %v5625 = vunpack.c.l.b16 %v2481
    %v5626 = vunpack.c.h.b16 %v2481
    %v5627 = vunpack.c.l.b16 %v2482
    %v5628 = vunpack.c.h.b16 %v2482
    %v5629 = vunpack.c.l.b16 %v2483
    %v5630 = vunpack.c.h.b16 %v2483
    %v5631 = vunpack.c.l.b16 %v2484
    %v5632 = vunpack.c.h.b16 %v2484
    %v5633 = vunpack.c.l.b16 %v2485
    %v5634 = vunpack.c.h.b16 %v2485
    %v5635 = vunpack.c.l.b16 %v2486
    %v5636 = vunpack.c.h.b16 %v2486
    %v5637 = vunpack.c.l.b16 %v2487
    %v5638 = vunpack.c.h.b16 %v2487
    %v5639 = vunpack.c.l.b16 %v2488
    %v5640 = vunpack.c.h.b16 %v2488
    %v5641 = vunpack.c.l.b16 %v2489
    %v5642 = vunpack.c.h.b16 %v2489
    %v5643 = vunpack.c.l.b16 %v2490
    %v5644 = vunpack.c.h.b16 %v2490
    %v5645 = vunpack.c.l.b16 %v2491
    %v5646 = vunpack.c.h.b16 %v2491
    %v5647 = vunpack.c.l.b16 %v2492
    %v5648 = vunpack.c.h.b16 %v2492
    %v5649 = vunpack.c.l.b16 %v2493
    %v5650 = vunpack.c.h.b16 %v2493
    %v5651 = vunpack.c.l.b16 %v2494
    %v5652 = vunpack.c.h.b16 %v2494
    %v5653 = vunpack.c.l.b16 %v2495
    %v5654 = vunpack.c.h.b16 %v2495
    %v5655 = vunpack.c.l.b16 %v2496
    %v5656 = vunpack.c.h.b16 %v2496
    %v5657 = vunpack.c.l.b16 %v2497
    %v5658 = vunpack.c.h.b16 %v2497
    %v5659 = vunpack.c.l.b16 %v2498
    %v5660 = vunpack.c.h.b16 %v2498
    %v5661 = vunpack.c.l.b16 %v2499
    %v5662 = vunpack.c.h.b16 %v2499
    %v5663 = vunpack.c.l.b16 %v2500
    %v5664 = vunpack.c.h.b16 %v2500
    %v5665 = vunpack.c.l.b16 %v2501
    %v5666 = vunpack.c.h.b16 %v2501
    %v5667 = vunpack.c.l.b16 %v2502
    %v5668 = vunpack.c.h.b16 %v2502
    %v5669 = vunpack.c.l.b16 %v2503
    %v5670 = vunpack.c.h.b16 %v2503
    %v5671 = vunpack.c.l.b16 %v2504
    %v5672 = vunpack.c.h.b16 %v2504
    %v5673 = vunpack.c.l.b16 %v2505
    %v5674 = vunpack.c.h.b16 %v2505
    %v5675 = vunpack.c.l.b16 %v2506
    %v5676 = vunpack.c.h.b16 %v2506
    %v5677 = vunpack.c.l.b16 %v2507
    %v5678 = vunpack.c.h.b16 %v2507
    %v5679 = vunpack.c.l.b16 %v2508
    %v5680 = vunpack.c.h.b16 %v2508
    %v5681 = vunpack.c.l.b16 %v2509
    %v5682 = vunpack.c.h.b16 %v2509
    %v5683 = vunpack.c.l.b16 %v2510
    %v5684 = vunpack.c.h.b16 %v2510
    %v5685 = vunpack.c.l.b16 %v2511
    %v5686 = vunpack.c.h.b16 %v2511
    %v5687 = vunpack.c.l.b16 %v2512
    %v5688 = vunpack.c.h.b16 %v2512
    %v5689 = vunpack.c.l.b16 %v2513
    %v5690 = vunpack.c.h.b16 %v2513
    %v5691 = vunpack.c.l.b16 %v2514
    %v5692 = vunpack.c.h.b16 %v2514
    %v5693 = vunpack.c.l.b16 %v2515
    %v5694 = vunpack.c.h.b16 %v2515
    %v5695 = vunpack.c.l.b16 %v2516
    %v5696 = vunpack.c.h.b16 %v2516
    %v5697 = vunpack.c.l.b16 %v2517
    %v5698 = vunpack.c.h.b16 %v2517
    %v5699 = vunpack.c.l.b16 %v2518
    %v5700 = vunpack.c.h.b16 %v2518
    %v5701 = vunpack.c.l.b16 %v2519
    %v5702 = vunpack.c.h.b16 %v2519
    %v5703 = vunpack.c.l.b16 %v2520
    %v5704 = vunpack.c.h.b16 %v2520
    %v5705 = vunpack.c.l.b16 %v2521
    %v5706 = vunpack.c.h.b16 %v2521
    %v5707 = vunpack.c.l.b16 %v2522
    %v5708 = vunpack.c.h.b16 %v2522
    %v5709 = vunpack.c.l.b16 %v2523
    %v5710 = vunpack.c.h.b16 %v2523
    %v5711 = vunpack.c.l.b16 %v2524
    %v5712 = vunpack.c.h.b16 %v2524
    %v5713 = vunpack.c.l.b16 %v2525
    %v5714 = vunpack.c.h.b16 %v2525
    %v5715 = vunpack.c.l.b16 %v2526
    %v5716 = vunpack.c.h.b16 %v2526
    %v5717 = vunpack.c.l.b16 %v2527
    %v5718 = vunpack.c.h.b16 %v2527
    %v5719 = vunpack.c.l.b16 %v2528
    %v5720 = vunpack.c.h.b16 %v2528
    %v5721 = vunpack.c.l.b16 %v2529
    %v5722 = vunpack.c.h.b16 %v2529
    %v5723 = vunpack.c.l.b16 %v2530
    %v5724 = vunpack.c.h.b16 %v2530
    %v5725 = vunpack.c.l.b16 %v2531
    %v5726 = vunpack.c.h.b16 %v2531
    %v5727 = vunpack.c.l.b16 %v2532
    %v5728 = vunpack.c.h.b16 %v2532
    %v5729 = vunpack.c.l.b16 %v2533
    %v5730 = vunpack.c.h.b16 %v2533
    %v5731 = vunpack.c.l.b16 %v2534
    %v5732 = vunpack.c.h.b16 %v2534
    %v5733 = vunpack.c.l.b16 %v2535
    %v5734 = vunpack.c.h.b16 %v2535
    %v5735 = vunpack.c.l.b16 %v2536
    %v5736 = vunpack.c.h.b16 %v2536
    %v5737 = vunpack.c.l.b16 %v2537
    %v5738 = vunpack.c.h.b16 %v2537
    %v5739 = vunpack.c.l.b16 %v2538
    %v5740 = vunpack.c.h.b16 %v2538
    %v5741 = vunpack.c.l.b16 %v2539
    %v5742 = vunpack.c.h.b16 %v2539
    %v5743 = vunpack.c.l.b16 %v2540
    %v5744 = vunpack.c.h.b16 %v2540
    %v5745 = vunpack.c.l.b16 %v2541
    %v5746 = vunpack.c.h.b16 %v2541
    %v5747 = vunpack.c.l.b16 %v2542
    %v5748 = vunpack.c.h.b16 %v2542
    %v5749 = vunpack.c.l.b16 %v2543
    %v5750 = vunpack.c.h.b16 %v2543
    %v5751 = vunpack.c.l.b16 %v2544
    %v5752 = vunpack.c.h.b16 %v2544
    %v5753 = vunpack.c.l.b16 %v2545
    %v5754 = vunpack.c.h.b16 %v2545
    %v5755 = vunpack.c.l.b16 %v2546
    %v5756 = vunpack.c.h.b16 %v2546
    %v5757 = vunpack.c.l.b16 %v2547
    %v5758 = vunpack.c.h.b16 %v2547
    %v5759 = vunpack.c.l.b16 %v2548
    %v5760 = vunpack.c.h.b16 %v2548
    %v5761 = vunpack.c.l.b16 %v2549
    %v5762 = vunpack.c.h.b16 %v2549
    %v5763 = vunpack.c.l.b16 %v2550
    %v5764 = vunpack.c.h.b16 %v2550
    %v5765 = vunpack.c.l.b16 %v2551
    %v5766 = vunpack.c.h.b16 %v2551
    %v5767 = vunpack.c.l.b16 %v2552
    %v5768 = vunpack.c.h.b16 %v2552
    %v5769 = vunpack.c.l.b16 %v2553
    %v5770 = vunpack.c.h.b16 %v2553
    %v5771 = vunpack.c.l.b16 %v2554
    %v5772 = vunpack.c.h.b16 %v2554
    %v5773 = vunpack.c.l.b16 %v2555
    %v5774 = vunpack.c.h.b16 %v2555
    %v5775 = vunpack.c.l.b16 %v2556
    %v5776 = vunpack.c.h.b16 %v2556
    %v5777 = vunpack.c.l.b16 %v2557
    %v5778 = vunpack.c.h.b16 %v2557
    %v5779 = vunpack.c.l.b16 %v2558
    %v5780 = vunpack.c.h.b16 %v2558
    %v5781 = vunpack.c.l.b16 %v2559
    %v5782 = vunpack.c.h.b16 %v2559
    %v5783 = vunpack.c.l.b16 %v2560
    %v5784 = vunpack.c.h.b16 %v2560
    %v5785 = vunpack.c.l.b16 %v2561
    %v5786 = vunpack.c.h.b16 %v2561
    %v5787 = vunpack.c.l.b16 %v2562
    %v5788 = vunpack.c.h.b16 %v2562
    %v5789 = vunpack.c.l.b16 %v2563
    %v5790 = vunpack.c.h.b16 %v2563
    %v5791 = vunpack.c.l.b16 %v2564
    %v5792 = vunpack.c.h.b16 %v2564
    %v5793 = vunpack.c.l.b16 %v2565
    %v5794 = vunpack.c.h.b16 %v2565
    %v5795 = vunpack.c.l.b16 %v2566
    %v5796 = vunpack.c.h.b16 %v2566
    %v5797 = vunpack.c.l.b16 %v2567
    %v5798 = vunpack.c.h.b16 %v2567
    %v5799 = vunpack.c.l.b16 %v2568
    %v5800 = vunpack.c.h.b16 %v2568
    %v5801 = vunpack.c.l.b16 %v2569
    %v5802 = vunpack.c.h.b16 %v2569
    %v5803 = vunpack.c.l.b16 %v2570
    %v5804 = vunpack.c.h.b16 %v2570
    %v5805 = vunpack.c.l.b16 %v2571
    %v5806 = vunpack.c.h.b16 %v2571
    %v5807 = vunpack.c.l.b16 %v2572
    %v5808 = vunpack.c.h.b16 %v2572
    %v5809 = vunpack.c.l.b16 %v2573
    %v5810 = vunpack.c.h.b16 %v2573
    %v5811 = vunpack.c.l.b16 %v2574
    %v5812 = vunpack.c.h.b16 %v2574
    %v5813 = vunpack.c.l.b16 %v2575
    %v5814 = vunpack.c.h.b16 %v2575
    %v5815 = vunpack.c.l.b16 %v2576
    %v5816 = vunpack.c.h.b16 %v2576
    %v5817 = vunpack.c.l.b16 %v2577
    %v5818 = vunpack.c.h.b16 %v2577
    %v5819 = vunpack.c.l.b16 %v2578
    %v5820 = vunpack.c.h.b16 %v2578
    %v5821 = vunpack.c.l.b16 %v2579
    %v5822 = vunpack.c.h.b16 %v2579
    %v5823 = vunpack.c.l.b16 %v2580
    %v5824 = vunpack.c.h.b16 %v2580
    %v5825 = vunpack.c.l.b16 %v2581
    %v5826 = vunpack.c.h.b16 %v2581
    %v5827 = vunpack.c.l.b16 %v2582
    %v5828 = vunpack.c.h.b16 %v2582
    %v5829 = vunpack.c.l.b16 %v2583
    %v5830 = vunpack.c.h.b16 %v2583
    %v5831 = vunpack.c.l.b16 %v2584
    %v5832 = vunpack.c.h.b16 %v2584
    %v5833 = vunpack.c.l.b16 %v2585
    %v5834 = vunpack.c.h.b16 %v2585
    %v5835 = vunpack.c.l.b16 %v2586
    %v5836 = vunpack.c.h.b16 %v2586
    %v5837 = vunpack.c.l.b16 %v2587
    %v5838 = vunpack.c.h.b16 %v2587
    %v5839 = vunpack.c.l.b16 %v2588
    %v5840 = vunpack.c.h.b16 %v2588
    %v5841 = vunpack.c.l.b16 %v2589
    %v5842 = vunpack.c.h.b16 %v2589
    %v5843 = vunpack.c.l.b16 %v2590
    %v5844 = vunpack.c.h.b16 %v2590
    %v5845 = vunpack.c.l.b16 %v2591
    %v5846 = vunpack.c.h.b16 %v2591
    %v5847 = vunpack.c.l.b16 %v2592
    %v5848 = vunpack.c.h.b16 %v2592
    %v5849 = vunpack.c.l.b16 %v2593
    %v5850 = vunpack.c.h.b16 %v2593
    %v5851 = vunpack.c.l.b16 %v2594
    %v5852 = vunpack.c.h.b16 %v2594
    %v5853 = vunpack.c.l.b16 %v2595
    %v5854 = vunpack.c.h.b16 %v2595
    %v5855 = vunpack.c.l.b16 %v2596
    %v5856 = vunpack.c.h.b16 %v2596
    %v5857 = vunpack.c.l.b16 %v2597
    %v5858 = vunpack.c.h.b16 %v2597
    %v5859 = vunpack.c.l.b16 %v2598
    %v5860 = vunpack.c.h.b16 %v2598
    %v5861 = vunpack.c.l.b16 %v2599
    %v5862 = vunpack.c.h.b16 %v2599
    %v5863 = vunpack.c.l.b16 %v2600
    %v5864 = vunpack.c.h.b16 %v2600
    %v5865 = vunpack.c.l.b16 %v2601
    %v5866 = vunpack.c.h.b16 %v2601
    %v5867 = vunpack.c.l.b16 %v2602
    %v5868 = vunpack.c.h.b16 %v2602
    %v5869 = vunpack.c.l.b16 %v2603
    %v5870 = vunpack.c.h.b16 %v2603
    %v5871 = vunpack.c.l.b16 %v2604
    %v5872 = vunpack.c.h.b16 %v2604
    %v5873 = vunpack.c.l.b16 %v2605
    %v5874 = vunpack.c.h.b16 %v2605
    %v5875 = vunpack.c.l.b16 %v2606
    %v5876 = vunpack.c.h.b16 %v2606
    %v5877 = vunpack.c.l.b16 %v2607
    %v5878 = vunpack.c.h.b16 %v2607
    %v5879 = vunpack.c.l.b16 %v2608
    %v5880 = vunpack.c.h.b16 %v2608
    %v5881 = vunpack.c.l.b16 %v2609
    %v5882 = vunpack.c.h.b16 %v2609
    %v5883 = vunpack.c.l.b16 %v2610
    %v5884 = vunpack.c.h.b16 %v2610
    %v5885 = vunpack.c.l.b16 %v2611
    %v5886 = vunpack.c.h.b16 %v2611
    %v5887 = vunpack.c.l.b16 %v2612
    %v5888 = vunpack.c.h.b16 %v2612
    %v5889 = vunpack.c.l.b16 %v2613
    %v5890 = vunpack.c.h.b16 %v2613
    %v5891 = vunpack.c.l.b16 %v2614
    %v5892 = vunpack.c.h.b16 %v2614
    %v5893 = vunpack.c.l.b16 %v2615
    %v5894 = vunpack.c.h.b16 %v2615
    %v5895 = vunpack.c.l.b16 %v2616
    %v5896 = vunpack.c.h.b16 %v2616
    %v5897 = vunpack.c.l.b16 %v2617
    %v5898 = vunpack.c.h.b16 %v2617
    %v5899 = vunpack.c.l.b16 %v2618
    %v5900 = vunpack.c.h.b16 %v2618
    %v5901 = vunpack.c.l.b16 %v2619
    %v5902 = vunpack.c.h.b16 %v2619
    %v5903 = vunpack.c.l.b16 %v2620
    %v5904 = vunpack.c.h.b16 %v2620
    %v5905 = vunpack.c.l.b16 %v2621
    %v5906 = vunpack.c.h.b16 %v2621
    %v5907 = vunpack.c.l.b16 %v2622
    %v5908 = vunpack.c.h.b16 %v2622
    %v5909 = vunpack.c.l.b16 %v2623
    %v5910 = vunpack.c.h.b16 %v2623
    %v5911 = vunpack.c.l.b16 %v2624
    %v5912 = vunpack.c.h.b16 %v2624
    %v5913 = vunpack.c.l.b16 %v2625
    %v5914 = vunpack.c.h.b16 %v2625
    %v5915 = vunpack.c.l.b16 %v2626
    %v5916 = vunpack.c.h.b16 %v2626
    %v5917 = vunpack.c.l.b16 %v2627
    %v5918 = vunpack.c.h.b16 %v2627
    %v5919 = vunpack.c.l.b16 %v2628
    %v5920 = vunpack.c.h.b16 %v2628
    %v5921 = vunpack.c.l.b16 %v2629
    %v5922 = vunpack.c.h.b16 %v2629
    %v5923 = vunpack.c.l.b16 %v2630
    %v5924 = vunpack.c.h.b16 %v2630
    %v5925 = vunpack.c.l.b16 %v2631
    %v5926 = vunpack.c.h.b16 %v2631
    %v5927 = vunpack.c.l.b16 %v2632
    %v5928 = vunpack.c.h.b16 %v2632
    %v5929 = vunpack.c.l.b16 %v2633
    %v5930 = vunpack.c.h.b16 %v2633
    %v5931 = vunpack.c.l.b16 %v2634
    %v5932 = vunpack.c.h.b16 %v2634
    %v5933 = vunpack.c.l.b16 %v2635
    %v5934 = vunpack.c.h.b16 %v2635
    %v5935 = vunpack.c.l.b16 %v2636
    %v5936 = vunpack.c.h.b16 %v2636
    %v5937 = vunpack.c.l.b16 %v2637
    %v5938 = vunpack.c.h.b16 %v2637
    %v5939 = vunpack.c.l.b16 %v2638
    %v5940 = vunpack.c.h.b16 %v2638
    %v5941 = vunpack.c.l.b16 %v2639
    %v5942 = vunpack.c.h.b16 %v2639
    %v5943 = vunpack.c.l.b16 %v2640
    %v5944 = vunpack.c.h.b16 %v2640
    %v5945 = vunpack.c.l.b16 %v2641
    %v5946 = vunpack.c.h.b16 %v2641
    %v5947 = vunpack.c.l.b16 %v2642
    %v5948 = vunpack.c.h.b16 %v2642
    %v5949 = vunpack.c.l.b16 %v2643
    %v5950 = vunpack.c.h.b16 %v2643
    %v5951 = vunpack.c.l.b16 %v2644
    %v5952 = vunpack.c.h.b16 %v2644
    %v5953 = vunpack.c.l.b16 %v2645
    %v5954 = vunpack.c.h.b16 %v2645
    %v5955 = vunpack.c.l.b16 %v2646
    %v5956 = vunpack.c.h.b16 %v2646
    %v5957 = vunpack.c.l.b16 %v2647
    %v5958 = vunpack.c.h.b16 %v2647
    %v5959 = vunpack.c.l.b16 %v2648
    %v5960 = vunpack.c.h.b16 %v2648
    %v5961 = vunpack.c.l.b16 %v2649
    %v5962 = vunpack.c.h.b16 %v2649
    %v5963 = vunpack.c.l.b16 %v2650
    %v5964 = vunpack.c.h.b16 %v2650
    %v5965 = vunpack.c.l.b16 %v2651
    %v5966 = vunpack.c.h.b16 %v2651
    %v5967 = vunpack.c.l.b16 %v2652
    %v5968 = vunpack.c.h.b16 %v2652
    %v5969 = vunpack.c.l.b16 %v2653
    %v5970 = vunpack.c.h.b16 %v2653
    %v5971 = vunpack.c.l.b16 %v2654
    %v5972 = vunpack.c.h.b16 %v2654
    %v5973 = vunpack.c.l.b16 %v2655
    %v5974 = vunpack.c.h.b16 %v2655
    %v5975 = vunpack.c.l.b16 %v2656
    %v5976 = vunpack.c.h.b16 %v2656
    %v5977 = vunpack.c.l.b16 %v2657
    %v5978 = vunpack.c.h.b16 %v2657
    %v5979 = vunpack.c.l.b16 %v2658
    %v5980 = vunpack.c.h.b16 %v2658
    %v5981 = vunpack.c.l.b16 %v2659
    %v5982 = vunpack.c.h.b16 %v2659
    %v5983 = vunpack.c.l.b16 %v2660
    %v5984 = vunpack.c.h.b16 %v2660
    %v5985 = vunpack.c.l.b16 %v2661
    %v5986 = vunpack.c.h.b16 %v2661
    %v5987 = vunpack.c.l.b16 %v2662
    %v5988 = vunpack.c.h.b16 %v2662
    %v5989 = vunpack.c.l.b16 %v2663
    %v5990 = vunpack.c.h.b16 %v2663
    %v5991 = vunpack.c.l.b16 %v2664
    %v5992 = vunpack.c.h.b16 %v2664
    %v5993 = vunpack.c.l.b16 %v2665
    %v5994 = vunpack.c.h.b16 %v2665
    %v5995 = vunpack.c.l.b16 %v2666
    %v5996 = vunpack.c.h.b16 %v2666
    %v5997 = vunpack.c.l.b16 %v2667
    %v5998 = vunpack.c.h.b16 %v2667
    %v5999 = vunpack.c.l.b16 %v2668
    %v6000 = vunpack.c.h.b16 %v2668
    %v6001 = vunpack.c.l.b16 %v2669
    %v6002 = vunpack.c.h.b16 %v2669
    %v6003 = vunpack.c.l.b16 %v2670
    %v6004 = vunpack.c.h.b16 %v2670
    %v6005 = vunpack.c.l.b16 %v2671
    %v6006 = vunpack.c.h.b16 %v2671
    %v6007 = vunpack.c.l.b16 %v2672
    %v6008 = vunpack.c.h.b16 %v2672
    %v6009 = vunpack.c.l.b16 %v2673
    %v6010 = vunpack.c.h.b16 %v2673
    %v6011 = vunpack.c.l.b16 %v2674
    %v6012 = vunpack.c.h.b16 %v2674
    %v6013 = vunpack.c.l.b16 %v2675
    %v6014 = vunpack.c.h.b16 %v2675
    %v6015 = vunpack.c.l.b16 %v2676
    %v6016 = vunpack.c.h.b16 %v2676
    %v6017 = vunpack.c.l.b16 %v2677
    %v6018 = vunpack.c.h.b16 %v2677
    %v6019 = vunpack.c.l.b16 %v2678
    %v6020 = vunpack.c.h.b16 %v2678
    %v6021 = vunpack.c.l.b16 %v2679
    %v6022 = vunpack.c.h.b16 %v2679
    %v6023 = vunpack.c.l.b16 %v2680
    %v6024 = vunpack.c.h.b16 %v2680
    %v6025 = vunpack.c.l.b16 %v2681
    %v6026 = vunpack.c.h.b16 %v2681
    %v6027 = vunpack.c.l.b16 %v2682
    %v6028 = vunpack.c.h.b16 %v2682
    %v6029 = vunpack.c.l.b16 %v2683
    %v6030 = vunpack.c.h.b16 %v2683
    %v6031 = vunpack.c.l.b16 %v2684
    %v6032 = vunpack.c.h.b16 %v2684
    %v6033 = vunpack.c.l.b16 %v2685
    %v6034 = vunpack.c.h.b16 %v2685
    %v6035 = vunpack.c.l.b16 %v2686
    %v6036 = vunpack.c.h.b16 %v2686
    %v6037 = vunpack.c.l.b16 %v2687
    %v6038 = vunpack.c.h.b16 %v2687
    %v6039 = vunpack.c.l.b16 %v2688
    %v6040 = vunpack.c.h.b16 %v2688
    %v6041 = vunpack.c.l.b16 %v2689
    %v6042 = vunpack.c.h.b16 %v2689
    %v6043 = vunpack.c.l.b16 %v2690
    %v6044 = vunpack.c.h.b16 %v2690
    %v6045 = vunpack.c.l.b16 %v2691
    %v6046 = vunpack.c.h.b16 %v2691
    %v6047 = vunpack.c.l.b16 %v2692
    %v6048 = vunpack.c.h.b16 %v2692
    %v6049 = vunpack.c.l.b16 %v2693
    %v6050 = vunpack.c.h.b16 %v2693
    %v6051 = vunpack.c.l.b16 %v2694
    %v6052 = vunpack.c.h.b16 %v2694
    %v6053 = vunpack.c.l.b16 %v2695
    %v6054 = vunpack.c.h.b16 %v2695
    %v6055 = vunpack.c.l.b16 %v2696
    %v6056 = vunpack.c.h.b16 %v2696
    %v6057 = vunpack.c.l.b16 %v2697
    %v6058 = vunpack.c.h.b16 %v2697
    %v6059 = vunpack.c.l.b16 %v2698
    %v6060 = vunpack.c.h.b16 %v2698
    %v6061 = vunpack.c.l.b16 %v2699
    %v6062 = vunpack.c.h.b16 %v2699
    %v6063 = vunpack.c.l.b16 %v2700
    %v6064 = vunpack.c.h.b16 %v2700
    %v6065 = vunpack.c.l.b16 %v2701
    %v6066 = vunpack.c.h.b16 %v2701
    %v6067 = vunpack.c.l.b16 %v2702
    %v6068 = vunpack.c.h.b16 %v2702
    %v6069 = vunpack.c.l.b16 %v2703
    %v6070 = vunpack.c.h.b16 %v2703
    %v6071 = vunpack.c.l.b16 %v2704
    %v6072 = vunpack.c.h.b16 %v2704
    %v6073 = vunpack.c.l.b16 %v2705
    %v6074 = vunpack.c.h.b16 %v2705
    %v6075 = vunpack.c.l.b16 %v2706
    %v6076 = vunpack.c.h.b16 %v2706
    %v6077 = vunpack.c.l.b16 %v2707
    %v6078 = vunpack.c.h.b16 %v2707
    %v6079 = vunpack.c.l.b16 %v2708
    %v6080 = vunpack.c.h.b16 %v2708
    %v6081 = vunpack.c.l.b16 %v2709
    %v6082 = vunpack.c.h.b16 %v2709
    %v6083 = vunpack.c.l.b16 %v2710
    %v6084 = vunpack.c.h.b16 %v2710
    %v6085 = vunpack.c.l.b16 %v2711
    %v6086 = vunpack.c.h.b16 %v2711
    %v6087 = vunpack.c.l.b16 %v2712
    %v6088 = vunpack.c.h.b16 %v2712
    %v6089 = vunpack.c.l.b16 %v2713
    %v6090 = vunpack.c.h.b16 %v2713
    %v6091 = vunpack.c.l.b16 %v2714
    %v6092 = vunpack.c.h.b16 %v2714
    %v6093 = vunpack.c.l.b16 %v2715
    %v6094 = vunpack.c.h.b16 %v2715
    %v6095 = vunpack.c.l.b16 %v2716
    %v6096 = vunpack.c.h.b16 %v2716
    %v6097 = vunpack.c.l.b16 %v2717
    %v6098 = vunpack.c.h.b16 %v2717
    %v6099 = vunpack.c.l.b16 %v2718
    %v6100 = vunpack.c.h.b16 %v2718
    %v6101 = vunpack.c.l.b16 %v2719
    %v6102 = vunpack.c.h.b16 %v2719
    %v6103 = vunpack.c.l.b16 %v2720
    %v6104 = vunpack.c.h.b16 %v2720
    %v6105 = vunpack.c.l.b16 %v2721
    %v6106 = vunpack.c.h.b16 %v2721
    %v6107 = vunpack.c.l.b16 %v2722
    %v6108 = vunpack.c.h.b16 %v2722
    %v6109 = vunpack.c.l.b16 %v2723
    %v6110 = vunpack.c.h.b16 %v2723
    %v6111 = vunpack.c.l.b16 %v2724
    %v6112 = vunpack.c.h.b16 %v2724
    %v6113 = vunpack.c.l.b16 %v2725
    %v6114 = vunpack.c.h.b16 %v2725
    %v6115 = vunpack.c.l.b16 %v2726
    %v6116 = vunpack.c.h.b16 %v2726
    %v6117 = vunpack.c.l.b16 %v2727
    %v6118 = vunpack.c.h.b16 %v2727
    %v6119 = vunpack.c.l.b16 %v2728
    %v6120 = vunpack.c.h.b16 %v2728
    %v6121 = vunpack.c.l.b16 %v2729
    %v6122 = vunpack.c.h.b16 %v2729
    %v6123 = vunpack.c.l.b16 %v2730
    %v6124 = vunpack.c.h.b16 %v2730
    %v6125 = vunpack.c.l.b16 %v2731
    %v6126 = vunpack.c.h.b16 %v2731
    %v6127 = vunpack.c.l.b16 %v2732
    %v6128 = vunpack.c.h.b16 %v2732
    %v6129 = vunpack.c.l.b16 %v2733
    %v6130 = vunpack.c.h.b16 %v2733
    %v6131 = vunpack.c.l.b16 %v2734
    %v6132 = vunpack.c.h.b16 %v2734
    %v6133 = vunpack.c.l.b16 %v2735
    %v6134 = vunpack.c.h.b16 %v2735
    %v6135 = vunpack.c.l.b16 %v2736
    %v6136 = vunpack.c.h.b16 %v2736
    %v6137 = vunpack.c.l.b16 %v2737
    %v6138 = vunpack.c.h.b16 %v2737
    %v6139 = vunpack.c.l.b16 %v2738
    %v6140 = vunpack.c.h.b16 %v2738
    %v6141 = vunpack.c.l.b16 %v2739
    %v6142 = vunpack.c.h.b16 %v2739
    %v6143 = vunpack.c.l.b16 %v2740
    %v6144 = vunpack.c.h.b16 %v2740
    %v6145 = vunpack.c.l.b16 %v2741
    %v6146 = vunpack.c.h.b16 %v2741
    %v6147 = vunpack.c.l.b16 %v2742
    %v6148 = vunpack.c.h.b16 %v2742
    %v6149 = vunpack.c.l.b16 %v2743
    %v6150 = vunpack.c.h.b16 %v2743
    %v6151 = vunpack.c.l.b16 %v2744
    %v6152 = vunpack.c.h.b16 %v2744
    %v6153 = vunpack.c.l.b16 %v2745
    %v6154 = vunpack.c.h.b16 %v2745
    %v6155 = vunpack.c.l.b16 %v2746
    %v6156 = vunpack.c.h.b16 %v2746
    %v6157 = vunpack.c.l.b16 %v2747
    %v6158 = vunpack.c.h.b16 %v2747
    %v6159 = vunpack.c.l.b16 %v2748
    %v6160 = vunpack.c.h.b16 %v2748
    %v6161 = vunpack.c.l.b16 %v2749
    %v6162 = vunpack.c.h.b16 %v2749
    %v6163 = vunpack.c.l.b16 %v2750
    %v6164 = vunpack.c.h.b16 %v2750
    %v6165 = vunpack.c.l.b16 %v2751
    %v6166 = vunpack.c.h.b16 %v2751
    %v6167 = vunpack.c.l.b16 %v2752
    %v6168 = vunpack.c.h.b16 %v2752
    %v6169 = vunpack.c.l.b16 %v2753
    %v6170 = vunpack.c.h.b16 %v2753
    %v6171 = vunpack.c.l.b16 %v2754
    %v6172 = vunpack.c.h.b16 %v2754
    %v6173 = vunpack.c.l.b16 %v2755
    %v6174 = vunpack.c.h.b16 %v2755
    %v6175 = vunpack.c.l.b16 %v2756
    %v6176 = vunpack.c.h.b16 %v2756
    %v6177 = vunpack.c.l.b16 %v2757
    %v6178 = vunpack.c.h.b16 %v2757
    %v6179 = vunpack.c.l.b16 %v2758
    %v6180 = vunpack.c.h.b16 %v2758
    %v6181 = vunpack.c.l.b16 %v2759
    %v6182 = vunpack.c.h.b16 %v2759
    %v6183 = vunpack.c.l.b16 %v2760
    %v6184 = vunpack.c.h.b16 %v2760
    %v6185 = vunpack.c.l.b16 %v2761
    %v6186 = vunpack.c.h.b16 %v2761
    %v6187 = vunpack.c.l.b16 %v2762
    %v6188 = vunpack.c.h.b16 %v2762
    %v6189 = vunpack.c.l.b16 %v2763
    %v6190 = vunpack.c.h.b16 %v2763
    %v6191 = vunpack.c.l.b16 %v2764
    %v6192 = vunpack.c.h.b16 %v2764
    %v6193 = vunpack.c.l.b16 %v2765
    %v6194 = vunpack.c.h.b16 %v2765
    %v6195 = vunpack.c.l.b16 %v2766
    %v6196 = vunpack.c.h.b16 %v2766
    %v6197 = vunpack.c.l.b16 %v2767
    %v6198 = vunpack.c.h.b16 %v2767
    %v6199 = vunpack.c.l.b16 %v2768
    %v6200 = vunpack.c.h.b16 %v2768
    %v6201 = vunpack.c.l.b16 %v2769
    %v6202 = vunpack.c.h.b16 %v2769
    %v6203 = vunpack.c.l.b16 %v2770
    %v6204 = vunpack.c.h.b16 %v2770
    %v6205 = vunpack.c.l.b16 %v2771
    %v6206 = vunpack.c.h.b16 %v2771
    %v6207 = vunpack.c.l.b16 %v2772
    %v6208 = vunpack.c.h.b16 %v2772
    %v6209 = vunpack.c.l.b16 %v2773
    %v6210 = vunpack.c.h.b16 %v2773
    %v6211 = vunpack.c.l.b16 %v2774
    %v6212 = vunpack.c.h.b16 %v2774
    %v6213 = vunpack.c.l.b16 %v2775
    %v6214 = vunpack.c.h.b16 %v2775
    %v6215 = vunpack.c.l.b16 %v2776
    %v6216 = vunpack.c.h.b16 %v2776
    %v6217 = vunpack.c.l.b16 %v2777
    %v6218 = vunpack.c.h.b16 %v2777
    %v6219 = vunpack.c.l.b16 %v2778
    %v6220 = vunpack.c.h.b16 %v2778
    %v6221 = vunpack.c.l.b16 %v2779
    %v6222 = vunpack.c.h.b16 %v2779
    %v6223 = vunpack.c.l.b16 %v2780
    %v6224 = vunpack.c.h.b16 %v2780
    %v6225 = vunpack.c.l.b16 %v2781
    %v6226 = vunpack.c.h.b16 %v2781
    %v6227 = vunpack.c.l.b16 %v2782
    %v6228 = vunpack.c.h.b16 %v2782
    %v6229 = vunpack.c.l.b16 %v2783
    %v6230 = vunpack.c.h.b16 %v2783
    %v6231 = vunpack.c.l.b16 %v2784
    %v6232 = vunpack.c.h.b16 %v2784
    %v6233 = vunpack.c.l.b16 %v2785
    %v6234 = vunpack.c.h.b16 %v2785
    %v6235 = vunpack.c.l.b16 %v2786
    %v6236 = vunpack.c.h.b16 %v2786
    %v6237 = vunpack.c.l.b16 %v2787
    %v6238 = vunpack.c.h.b16 %v2787
    %v6239 = vunpack.c.l.b16 %v2788
    %v6240 = vunpack.c.h.b16 %v2788
    %v6241 = vunpack.c.l.b16 %v2789
    %v6242 = vunpack.c.h.b16 %v2789
    %v6243 = vunpack.c.l.b16 %v2790
    %v6244 = vunpack.c.h.b16 %v2790
    %v6245 = vunpack.c.l.b16 %v2791
    %v6246 = vunpack.c.h.b16 %v2791
    %v6247 = vunpack.c.l.b16 %v2792
    %v6248 = vunpack.c.h.b16 %v2792
    %v6249 = vunpack.c.l.b16 %v2793
    %v6250 = vunpack.c.h.b16 %v2793
    %v6251 = vunpack.c.l.b16 %v2794
    %v6252 = vunpack.c.h.b16 %v2794
    %v6253 = vunpack.c.l.b16 %v2795
    %v6254 = vunpack.c.h.b16 %v2795
    %v6255 = vunpack.c.l.b16 %v2796
    %v6256 = vunpack.c.h.b16 %v2796
    %v6257 = vunpack.c.l.b16 %v2797
    %v6258 = vunpack.c.h.b16 %v2797
    %v6259 = vunpack.c.l.b16 %v2798
    %v6260 = vunpack.c.h.b16 %v2798
    %v6261 = vunpack.c.l.b16 %v2799
    %v6262 = vunpack.c.h.b16 %v2799
    %v6263 = vunpack.c.l.b16 %v2800
    %v6264 = vunpack.c.h.b16 %v2800
    %v6265 = vunpack.c.l.b16 %v2801
    %v6266 = vunpack.c.h.b16 %v2801
    %v6267 = vunpack.c.l.b16 %v2802
    %v6268 = vunpack.c.h.b16 %v2802
    %v6269 = vunpack.c.l.b16 %v2803
    %v6270 = vunpack.c.h.b16 %v2803
    %v6271 = vunpack.c.l.b16 %v2804
    %v6272 = vunpack.c.h.b16 %v2804
    %v6273 = vunpack.c.l.b16 %v2805
    %v6274 = vunpack.c.h.b16 %v2805
    %v6275 = vunpack.c.l.b16 %v2806
    %v6276 = vunpack.c.h.b16 %v2806
    %v6277 = vunpack.c.l.b16 %v2807
    %v6278 = vunpack.c.h.b16 %v2807
    %v6279 = vunpack.c.l.b16 %v2808
    %v6280 = vunpack.c.h.b16 %v2808
    %v6281 = vunpack.c.l.b16 %v2809
    %v6282 = vunpack.c.h.b16 %v2809
    %v6283 = vunpack.c.l.b16 %v2810
    %v6284 = vunpack.c.h.b16 %v2810
    %v6285 = vunpack.c.l.b16 %v2811
    %v6286 = vunpack.c.h.b16 %v2811
    %v6287 = vunpack.c.l.b16 %v2812
    %v6288 = vunpack.c.h.b16 %v2812
    %v6289 = vunpack.c.l.b16 %v2813
    %v6290 = vunpack.c.h.b16 %v2813
    %v6291 = vunpack.c.l.b16 %v2814
    %v6292 = vunpack.c.h.b16 %v2814
    %v6293 = vunpack.c.l.b16 %v2815
    %v6294 = vunpack.c.h.b16 %v2815
    %v6295 = vunpack.c.l.b16 %v2816
    %v6296 = vunpack.c.h.b16 %v2816
    %v6297 = vunpack.c.l.b16 %v2817
    %v6298 = vunpack.c.h.b16 %v2817
    %v6299 = vunpack.c.l.b16 %v2818
    %v6300 = vunpack.c.h.b16 %v2818
    %v6301 = vunpack.c.l.b16 %v2819
    %v6302 = vunpack.c.h.b16 %v2819
    %v6303 = vunpack.c.l.b16 %v2820
    %v6304 = vunpack.c.h.b16 %v2820
    %v6305 = vunpack.c.l.b16 %v2821
    %v6306 = vunpack.c.h.b16 %v2821
    %v6307 = vunpack.c.l.b16 %v2822
    %v6308 = vunpack.c.h.b16 %v2822
    %v6309 = vunpack.c.l.b16 %v2823
    %v6310 = vunpack.c.h.b16 %v2823
    %v6311 = vunpack.c.l.b16 %v2824
    %v6312 = vunpack.c.h.b16 %v2824
    %v6313 = vunpack.c.l.b16 %v2825
    %v6314 = vunpack.c.h.b16 %v2825
    %v6315 = vunpack.c.l.b16 %v2826
    %v6316 = vunpack.c.h.b16 %v2826
    %v6317 = vunpack.c.l.b16 %v2827
    %v6318 = vunpack.c.h.b16 %v2827
    %v6319 = vunpack.c.l.b16 %v2828
    %v6320 = vunpack.c.h.b16 %v2828
    %v6321 = vunpack.c.l.b16 %v2829
    %v6322 = vunpack.c.h.b16 %v2829
    %v6323 = vunpack.c.l.b16 %v2830
    %v6324 = vunpack.c.h.b16 %v2830
    %v6325 = vunpack.c.l.b16 %v2831
    %v6326 = vunpack.c.h.b16 %v2831
    %v6327 = vunpack.c.l.b16 %v2832
    %v6328 = vunpack.c.h.b16 %v2832
    %v6329 = vunpack.c.l.b16 %v2833
    %v6330 = vunpack.c.h.b16 %v2833
    %v6331 = vunpack.c.l.b16 %v2834
    %v6332 = vunpack.c.h.b16 %v2834
    %v6333 = vunpack.c.l.b16 %v2835
    %v6334 = vunpack.c.h.b16 %v2835
    %v6335 = vunpack.c.l.b16 %v2836
    %v6336 = vunpack.c.h.b16 %v2836
    %v6337 = vunpack.c.l.b16 %v2837
    %v6338 = vunpack.c.h.b16 %v2837
    %v6339 = vunpack.c.l.b16 %v2838
    %v6340 = vunpack.c.h.b16 %v2838
    %v6341 = vunpack.c.l.b16 %v2839
    %v6342 = vunpack.c.h.b16 %v2839
    %v6343 = vunpack.c.l.b16 %v2840
    %v6344 = vunpack.c.h.b16 %v2840
    %v6345 = vunpack.c.l.b16 %v2841
    %v6346 = vunpack.c.h.b16 %v2841
    %v6347 = vunpack.c.l.b16 %v2842
    %v6348 = vunpack.c.h.b16 %v2842
    %v6349 = vunpack.c.l.b16 %v2843
    %v6350 = vunpack.c.h.b16 %v2843
    %v6351 = vunpack.c.l.b16 %v2844
    %v6352 = vunpack.c.h.b16 %v2844
    %v6353 = vunpack.c.l.b16 %v2845
    %v6354 = vunpack.c.h.b16 %v2845
    %v6355 = vunpack.c.l.b16 %v2846
    %v6356 = vunpack.c.h.b16 %v2846
    %v6357 = vunpack.c.l.b16 %v2847
    %v6358 = vunpack.c.h.b16 %v2847
    %v6359 = vunpack.c.l.b16 %v2848
    %v6360 = vunpack.c.h.b16 %v2848
    %v6361 = vunpack.c.l.b16 %v2849
    %v6362 = vunpack.c.h.b16 %v2849
    %v6363 = vunpack.c.l.b16 %v2850
    %v6364 = vunpack.c.h.b16 %v2850
    %v6365 = vunpack.c.l.b16 %v2851
    %v6366 = vunpack.c.h.b16 %v2851
    %v6367 = vunpack.c.l.b16 %v2852
    %v6368 = vunpack.c.h.b16 %v2852
    %v6369 = vunpack.c.l.b16 %v2853
    %v6370 = vunpack.c.h.b16 %v2853
    %v6371 = vunpack.c.l.b16 %v2854
    %v6372 = vunpack.c.h.b16 %v2854
    %v6373 = vunpack.c.l.b16 %v2855
    %v6374 = vunpack.c.h.b16 %v2855
    %v6375 = vunpack.c.l.b16 %v2856
    %v6376 = vunpack.c.h.b16 %v2856
    %v6377 = vunpack.c.l.b16 %v2857
    %v6378 = vunpack.c.h.b16 %v2857
    %v6379 = vunpack.c.l.b16 %v2858
    %v6380 = vunpack.c.h.b16 %v2858
    %v6381 = vunpack.c.l.b16 %v2859
    %v6382 = vunpack.c.h.b16 %v2859
    %v6383 = vunpack.c.l.b16 %v2860
    %v6384 = vunpack.c.h.b16 %v2860
    %v6385 = vunpack.c.l.b16 %v2861
    %v6386 = vunpack.c.h.b16 %v2861
    %v6387 = vunpack.c.l.b16 %v2862
    %v6388 = vunpack.c.h.b16 %v2862
    %v6389 = vunpack.c.l.b16 %v2863
    %v6390 = vunpack.c.h.b16 %v2863
    %v6391 = vunpack.c.l.b16 %v2864
    %v6392 = vunpack.c.h.b16 %v2864
    %v6393 = vunpack.c.l.b16 %v2865
    %v6394 = vunpack.c.h.b16 %v2865
    %v6395 = vunpack.c.l.b16 %v2866
    %v6396 = vunpack.c.h.b16 %v2866
    %v6397 = vunpack.c.l.b16 %v2867
    %v6398 = vunpack.c.h.b16 %v2867
    %v6399 = vunpack.c.l.b16 %v2868
    %v6400 = vunpack.c.h.b16 %v2868
    %v6401 = vunpack.c.l.b16 %v2869
    %v6402 = vunpack.c.h.b16 %v2869
    %v6403 = vunpack.c.l.b16 %v2870
    %v6404 = vunpack.c.h.b16 %v2870
    %v6405 = vunpack.c.l.b16 %v2871
    %v6406 = vunpack.c.h.b16 %v2871
    %v6407 = vunpack.c.l.b16 %v2872
    %v6408 = vunpack.c.h.b16 %v2872
    %v6409 = vunpack.c.l.b16 %v2873
    %v6410 = vunpack.c.h.b16 %v2873
    %v6411 = vunpack.c.l.b16 %v2874
    %v6412 = vunpack.c.h.b16 %v2874
    %v6413 = vunpack.c.l.b16 %v2875
    %v6414 = vunpack.c.h.b16 %v2875
    %v6415 = vunpack.c.l.b16 %v2876
    %v6416 = vunpack.c.h.b16 %v2876
    %v6417 = vunpack.c.l.b16 %v2877
    %v6418 = vunpack.c.h.b16 %v2877
    %v6419 = vunpack.c.l.b16 %v2878
    %v6420 = vunpack.c.h.b16 %v2878
    %v6421 = vunpack.c.l.b16 %v2879
    %v6422 = vunpack.c.h.b16 %v2879
    %v6423 = vunpack.c.l.b16 %v2880
    %v6424 = vunpack.c.h.b16 %v2880
    %v6425 = vunpack.c.l.b16 %v2881
    %v6426 = vunpack.c.h.b16 %v2881
    %v6427 = vunpack.c.l.b16 %v2882
    %v6428 = vunpack.c.h.b16 %v2882
    %v6429 = vunpack.c.l.b16 %v2883
    %v6430 = vunpack.c.h.b16 %v2883
    %v6431 = vunpack.c.l.b16 %v2884
    %v6432 = vunpack.c.h.b16 %v2884
    %v6433 = vunpack.c.l.b16 %v2885
    %v6434 = vunpack.c.h.b16 %v2885
    %v6435 = vunpack.c.l.b16 %v2886
    %v6436 = vunpack.c.h.b16 %v2886
    %v6437 = vunpack.c.l.b16 %v2887
    %v6438 = vunpack.c.h.b16 %v2887
    %v6439 = vunpack.c.l.b16 %v2888
    %v6440 = vunpack.c.h.b16 %v2888
    %v6441 = vunpack.c.l.b16 %v2889
    %v6442 = vunpack.c.h.b16 %v2889
    %v6443 = vunpack.c.l.b16 %v2890
    %v6444 = vunpack.c.h.b16 %v2890
    %v6445 = vunpack.c.l.b16 %v2891
    %v6446 = vunpack.c.h.b16 %v2891
    %v6447 = vunpack.c.l.b16 %v2892
    %v6448 = vunpack.c.h.b16 %v2892
    %v6449 = vunpack.c.l.b16 %v2893
    %v6450 = vunpack.c.h.b16 %v2893
    %v6451 = vunpack.c.l.b16 %v2894
    %v6452 = vunpack.c.h.b16 %v2894
    %v6453 = vunpack.c.l.b16 %v2895
    %v6454 = vunpack.c.h.b16 %v2895
    %v6455 = vunpack.c.l.b16 %v2896
    %v6456 = vunpack.c.h.b16 %v2896
    %v6457 = vunpack.c.l.b16 %v2897
    %v6458 = vunpack.c.h.b16 %v2897
    %v6459 = vunpack.c.l.b16 %v2898
    %v6460 = vunpack.c.h.b16 %v2898
    %v6461 = vunpack.c.l.b16 %v2899
    %v6462 = vunpack.c.h.b16 %v2899
    %v6463 = vunpack.c.l.b16 %v2900
    %v6464 = vunpack.c.h.b16 %v2900
    %v6465 = vunpack.c.l.b16 %v2901
    %v6466 = vunpack.c.h.b16 %v2901
    %v6467 = vunpack.c.l.b16 %v2902
    %v6468 = vunpack.c.h.b16 %v2902
    %v6469 = vunpack.c.l.b16 %v2903
    %v6470 = vunpack.c.h.b16 %v2903
    %v6471 = vunpack.c.l.b16 %v2904
    %v6472 = vunpack.c.h.b16 %v2904
    %v6473 = vunpack.c.l.b16 %v2905
    %v6474 = vunpack.c.h.b16 %v2905
    %v6475 = vunpack.c.l.b16 %v2906
    %v6476 = vunpack.c.h.b16 %v2906
    %v6477 = vunpack.c.l.b16 %v2907
    %v6478 = vunpack.c.h.b16 %v2907
    %v6479 = vunpack.c.l.b16 %v2908
    %v6480 = vunpack.c.h.b16 %v2908
    %v6481 = vunpack.c.l.b16 %v2909
    %v6482 = vunpack.c.h.b16 %v2909
    %v6483 = vunpack.c.l.b16 %v2910
    %v6484 = vunpack.c.h.b16 %v2910
    %v6485 = vunpack.c.l.b16 %v2911
    %v6486 = vunpack.c.h.b16 %v2911
    %v6487 = vunpack.c.l.b16 %v2912
    %v6488 = vunpack.c.h.b16 %v2912
    %v6489 = vunpack.c.l.b16 %v2913
    %v6490 = vunpack.c.h.b16 %v2913
    %v6491 = vunpack.c.l.b16 %v2914
    %v6492 = vunpack.c.h.b16 %v2914
    %v6493 = vunpack.c.l.b16 %v2915
    %v6494 = vunpack.c.h.b16 %v2915
    %v6495 = vunpack.c.l.b16 %v2916
    %v6496 = vunpack.c.h.b16 %v2916
    %v6497 = vunpack.c.l.b16 %v2917
    %v6498 = vunpack.c.h.b16 %v2917
    %v6499 = vunpack.c.l.b16 %v2918
    %v6500 = vunpack.c.h.b16 %v2918
    %v6501 = vunpack.c.l.b16 %v2919
    %v6502 = vunpack.c.h.b16 %v2919
    %v6503 = vunpack.c.l.b16 %v2920
    %v6504 = vunpack.c.h.b16 %v2920
    %v6505 = vunpack.c.l.b16 %v2921
    %v6506 = vunpack.c.h.b16 %v2921
    %v6507 = vunpack.c.l.b16 %v2922
    %v6508 = vunpack.c.h.b16 %v2922
    %v6509 = vunpack.c.l.b16 %v2923
    %v6510 = vunpack.c.h.b16 %v2923
    %v6511 = vunpack.c.l.b16 %v2924
    %v6512 = vunpack.c.h.b16 %v2924
    %v6513 = vunpack.c.l.b16 %v2925
    %v6514 = vunpack.c.h.b16 %v2925
    %v6515 = vunpack.c.l.b16 %v2926
    %v6516 = vunpack.c.h.b16 %v2926
    %v6517 = vunpack.c.l.b16 %v2927
    %v6518 = vunpack.c.h.b16 %v2927
    %v6519 = vunpack.c.l.b16 %v2928
    %v6520 = vunpack.c.h.b16 %v2928
    %v6521 = vunpack.c.l.b16 %v2929
    %v6522 = vunpack.c.h.b16 %v2929
    %v6523 = vunpack.c.l.b16 %v2930
    %v6524 = vunpack.c.h.b16 %v2930
    %v6525 = vunpack.c.l.b16 %v2931
    %v6526 = vunpack.c.h.b16 %v2931
    %v6527 = vunpack.c.l.b16 %v2932
    %v6528 = vunpack.c.h.b16 %v2932
    %v6529 = vunpack.c.l.b16 %v2933
    %v6530 = vunpack.c.h.b16 %v2933
    %v6531 = vunpack.c.l.b16 %v2934
    %v6532 = vunpack.c.h.b16 %v2934
    %v6533 = vunpack.c.l.b16 %v2935
    %v6534 = vunpack.c.h.b16 %v2935
    %v6535 = vunpack.c.l.b16 %v2936
    %v6536 = vunpack.c.h.b16 %v2936
    %v6537 = vunpack.c.l.b16 %v2937
    %v6538 = vunpack.c.h.b16 %v2937
    %v6539 = vunpack.c.l.b16 %v2938
    %v6540 = vunpack.c.h.b16 %v2938
    %v6541 = vunpack.c.l.b16 %v2939
    %v6542 = vunpack.c.h.b16 %v2939
    %v6543 = vunpack.c.l.b16 %v2940
    %v6544 = vunpack.c.h.b16 %v2940
    %v6545 = vunpack.c.l.b16 %v2941
    %v6546 = vunpack.c.h.b16 %v2941
    %v6547 = vunpack.c.l.b16 %v2942
    %v6548 = vunpack.c.h.b16 %v2942
    %v6549 = vunpack.c.l.b16 %v2943
    %v6550 = vunpack.c.h.b16 %v2943
    %v6551 = vunpack.c.l.b16 %v2944
    %v6552 = vunpack.c.h.b16 %v2944
    %v6553 = vunpack.c.l.b16 %v2945
    %v6554 = vunpack.c.h.b16 %v2945
    %v6555 = vunpack.c.l.b16 %v2946
    %v6556 = vunpack.c.h.b16 %v2946
    %v6557 = vunpack.c.l.b16 %v2947
    %v6558 = vunpack.c.h.b16 %v2947
    %v6559 = vunpack.c.l.b16 %v2948
    %v6560 = vunpack.c.h.b16 %v2948
    %v6561 = vunpack.c.l.b16 %v2949
    %v6562 = vunpack.c.h.b16 %v2949
    %v6563 = vunpack.c.l.b16 %v2950
    %v6564 = vunpack.c.h.b16 %v2950
    %v6565 = vunpack.c.l.b16 %v2951
    %v6566 = vunpack.c.h.b16 %v2951
    %v6567 = vunpack.c.l.b16 %v2952
    %v6568 = vunpack.c.h.b16 %v2952
    %v6569 = vunpack.c.l.b16 %v2953
    %v6570 = vunpack.c.h.b16 %v2953
    %v6571 = vunpack.c.l.b16 %v2954
    %v6572 = vunpack.c.h.b16 %v2954
    %v6573 = vunpack.c.l.b16 %v2955
    %v6574 = vunpack.c.h.b16 %v2955
    %v6575 = vunpack.c.l.b16 %v2956
    %v6576 = vunpack.c.h.b16 %v2956
    %v6577 = vunpack.c.l.b16 %v2957
    %v6578 = vunpack.c.h.b16 %v2957
    %v6579 = vunpack.c.l.b16 %v2958
    %v6580 = vunpack.c.h.b16 %v2958
    %v6581 = vunpack.c.l.b16 %v2959
    %v6582 = vunpack.c.h.b16 %v2959
    %v6583 = vunpack.c.l.b16 %v2960
    %v6584 = vunpack.c.h.b16 %v2960
    %v6585 = vunpack.c.l.b16 %v2961
    %v6586 = vunpack.c.h.b16 %v2961
    %v6587 = vunpack.c.l.b16 %v2962
    %v6588 = vunpack.c.h.b16 %v2962
    %v6589 = vunpack.c.l.b16 %v2963
    %v6590 = vunpack.c.h.b16 %v2963
    %v6591 = vunpack.c.l.b16 %v2964
    %v6592 = vunpack.c.h.b16 %v2964
    %v6593 = vunpack.c.l.b16 %v2965
    %v6594 = vunpack.c.h.b16 %v2965
    %v6595 = vunpack.c.l.b16 %v2966
    %v6596 = vunpack.c.h.b16 %v2966
    %v6597 = vunpack.c.l.b16 %v2967
    %v6598 = vunpack.c.h.b16 %v2967
    %v6599 = vunpack.c.l.b16 %v2968
    %v6600 = vunpack.c.h.b16 %v2968
    %v6601 = vunpack.c.l.b16 %v2969
    %v6602 = vunpack.c.h.b16 %v2969
    %v6603 = vunpack.c.l.b16 %v2970
    %v6604 = vunpack.c.h.b16 %v2970
    %v6605 = vunpack.c.l.b16 %v2971
    %v6606 = vunpack.c.h.b16 %v2971
    %v6607 = vunpack.c.l.b16 %v2972
    %v6608 = vunpack.c.h.b16 %v2972
    %v6609 = vunpack.c.l.b16 %v2973
    %v6610 = vunpack.c.h.b16 %v2973
    %v6611 = vunpack.c.l.b16 %v2974
    %v6612 = vunpack.c.h.b16 %v2974
    %v6613 = vunpack.c.l.b16 %v2975
    %v6614 = vunpack.c.h.b16 %v2975
    %v6615 = vunpack.c.l.b16 %v2976
    %v6616 = vunpack.c.h.b16 %v2976
    %v6617 = vunpack.c.l.b16 %v2977
    %v6618 = vunpack.c.h.b16 %v2977
    %v6619 = vunpack.c.l.b16 %v2978
    %v6620 = vunpack.c.h.b16 %v2978
    %v6621 = vunpack.c.l.b16 %v2979
    %v6622 = vunpack.c.h.b16 %v2979
    %v6623 = vunpack.c.l.b16 %v2980
    %v6624 = vunpack.c.h.b16 %v2980
    %v6625 = vunpack.c.l.b16 %v2981
    %v6626 = vunpack.c.h.b16 %v2981
    %v6627 = vunpack.c.l.b16 %v2982
    %v6628 = vunpack.c.h.b16 %v2982
    %v6629 = vunpack.c.l.b16 %v2983
    %v6630 = vunpack.c.h.b16 %v2983
    %v6631 = vunpack.c.l.b16 %v2984
    %v6632 = vunpack.c.h.b16 %v2984
    %v6633 = vunpack.c.l.b16 %v2985
    %v6634 = vunpack.c.h.b16 %v2985
    %v6635 = vunpack.c.l.b16 %v2986
    %v6636 = vunpack.c.h.b16 %v2986
    %v6637 = vunpack.c.l.b16 %v2987
    %v6638 = vunpack.c.h.b16 %v2987
    %v6639 = vunpack.c.l.b16 %v2988
    %v6640 = vunpack.c.h.b16 %v2988
    %v6641 = vunpack.c.l.b16 %v2989
    %v6642 = vunpack.c.h.b16 %v2989
    %v6643 = vunpack.c.l.b16 %v2990
    %v6644 = vunpack.c.h.b16 %v2990
    %v6645 = vunpack.c.l.b16 %v2991
    %v6646 = vunpack.c.h.b16 %v2991
    %v6647 = vunpack.c.l.b16 %v2992
    %v6648 = vunpack.c.h.b16 %v2992
    %v6649 = vunpack.c.l.b16 %v2993
    %v6650 = vunpack.c.h.b16 %v2993
    %v6651 = vunpack.c.l.b16 %v2994
    %v6652 = vunpack.c.h.b16 %v2994
    %v6653 = vunpack.c.l.b16 %v2995
    %v6654 = vunpack.c.h.b16 %v2995
    %v6655 = vunpack.c.l.b16 %v2996
    %v6656 = vunpack.c.h.b16 %v2996
    %v6657 = vunpack.c.l.b16 %v2997
    %v6658 = vunpack.c.h.b16 %v2997
    %v6659 = vunpack.c.l.b16 %v2998
    %v6660 = vunpack.c.h.b16 %v2998
    %v6661 = vunpack.c.l.b16 %v2999
    %v6662 = vunpack.c.h.b16 %v2999
    %v6663 = vunpack.c.l.b16 %v3000
    %v6664 = vunpack.c.h.b16 %v3000
    %v6665 = vunpack.c.l.b16 %v3001
    %v6666 = vunpack.c.h.b16 %v3001
    %v6667 = vunpack.c.l.b16 %v3002
    %v6668 = vunpack.c.h.b16 %v3002
    %v6669 = vunpack.c.l.b16 %v3003
    %v6670 = vunpack.c.h.b16 %v3003
    %v6671 = vunpack.c.l.b16 %v3004
    %v6672 = vunpack.c.h.b16 %v3004
    %v6673 = vunpack.c.l.b16 %v3005
    %v6674 = vunpack.c.h.b16 %v3005
    %v6675 = vunpack.c.l.b16 %v3006
    %v6676 = vunpack.c.h.b16 %v3006
    %v6677 = vunpack.c.l.b16 %v3007
    %v6678 = vunpack.c.h.b16 %v3007
    %v6679 = vunpack.c.l.b16 %v3008
    %v6680 = vunpack.c.h.b16 %v3008
    %v6681 = vunpack.c.l.b16 %v3009
    %v6682 = vunpack.c.h.b16 %v3009
    %v6683 = vunpack.c.l.b16 %v3010
    %v6684 = vunpack.c.h.b16 %v3010
    %v6685 = vunpack.c.l.b16 %v3011
    %v6686 = vunpack.c.h.b16 %v3011
    %v6687 = vunpack.c.l.b16 %v3012
    %v6688 = vunpack.c.h.b16 %v3012
    %v6689 = vunpack.c.l.b16 %v3013
    %v6690 = vunpack.c.h.b16 %v3013
    %v6691 = vunpack.c.l.b16 %v3014
    %v6692 = vunpack.c.h.b16 %v3014
    %v6693 = vunpack.c.l.b16 %v3015
    %v6694 = vunpack.c.h.b16 %v3015
    %v6695 = vunpack.c.l.b16 %v3016
    %v6696 = vunpack.c.h.b16 %v3016
    %v6697 = vunpack.c.l.b16 %v3017
    %v6698 = vunpack.c.h.b16 %v3017
    %v6699 = vunpack.c.l.b16 %v3018
    %v6700 = vunpack.c.h.b16 %v3018
    %v6701 = vunpack.c.l.b16 %v3019
    %v6702 = vunpack.c.h.b16 %v3019
    %v6703 = vunpack.c.l.b16 %v3020
    %v6704 = vunpack.c.h.b16 %v3020
    %v6705 = vunpack.c.l.b16 %v3021
    %v6706 = vunpack.c.h.b16 %v3021
    %v6707 = vunpack.c.l.b16 %v3022
    %v6708 = vunpack.c.h.b16 %v3022
    %v6709 = vunpack.c.l.b16 %v3023
    %v6710 = vunpack.c.h.b16 %v3023
    %v6711 = vunpack.c.l.b16 %v3024
    %v6712 = vunpack.c.h.b16 %v3024
    %v6713 = vunpack.c.l.b16 %v3025
    %v6714 = vunpack.c.h.b16 %v3025
    %v6715 = vunpack.c.l.b16 %v3026
    %v6716 = vunpack.c.h.b16 %v3026
    %v6717 = vunpack.c.l.b16 %v3027
    %v6718 = vunpack.c.h.b16 %v3027
    %v6719 = vunpack.c.l.b16 %v3028
    %v6720 = vunpack.c.h.b16 %v3028
    %v6721 = vunpack.c.l.b16 %v3029
    %v6722 = vunpack.c.h.b16 %v3029
    %v6723 = vunpack.c.l.b16 %v3030
    %v6724 = vunpack.c.h.b16 %v3030
    %v6725 = vunpack.c.l.b16 %v3031
    %v6726 = vunpack.c.h.b16 %v3031
    %v6727 = vunpack.c.l.b16 %v3032
    %v6728 = vunpack.c.h.b16 %v3032
    %v6729 = vunpack.c.l.b16 %v3033
    %v6730 = vunpack.c.h.b16 %v3033
    %v6731 = vunpack.c.l.b16 %v3034
    %v6732 = vunpack.c.h.b16 %v3034
    %v6733 = vunpack.c.l.b16 %v3035
    %v6734 = vunpack.c.h.b16 %v3035
    %v6735 = vunpack.c.l.b16 %v3036
    %v6736 = vunpack.c.h.b16 %v3036
    %v6737 = vunpack.c.l.b16 %v3037
    %v6738 = vunpack.c.h.b16 %v3037
    %v6739 = vunpack.c.l.b16 %v3038
    %v6740 = vunpack.c.h.b16 %v3038
    %v6741 = vunpack.c.l.b16 %v3039
    %v6742 = vunpack.c.h.b16 %v3039
    %v6743 = vunpack.c.l.b16 %v3040
    %v6744 = vunpack.c.h.b16 %v3040
    %v6745 = vunpack.c.l.b16 %v3041
    %v6746 = vunpack.c.h.b16 %v3041
    %v6747 = vunpack.c.l.b16 %v3042
    %v6748 = vunpack.c.h.b16 %v3042
    %v6749 = vunpack.c.l.b16 %v3043
    %v6750 = vunpack.c.h.b16 %v3043
    %v6751 = vunpack.c.l.b16 %v3044
    %v6752 = vunpack.c.h.b16 %v3044
    %v6753 = vunpack.c.l.b16 %v3045
    %v6754 = vunpack.c.h.b16 %v3045
    %v6755 = vunpack.c.l.b16 %v3046
    %v6756 = vunpack.c.h.b16 %v3046
    %v6757 = vunpack.c.l.b16 %v3047
    %v6758 = vunpack.c.h.b16 %v3047
    %v6759 = vunpack.c.l.b16 %v3048
    %v6760 = vunpack.c.h.b16 %v3048
    %v6761 = vunpack.c.l.b16 %v3049
    %v6762 = vunpack.c.h.b16 %v3049
    %v6763 = vunpack.c.l.b16 %v3050
    %v6764 = vunpack.c.h.b16 %v3050
    %v6765 = vunpack.c.l.b16 %v3051
    %v6766 = vunpack.c.h.b16 %v3051
    %v6767 = vunpack.c.l.b16 %v3052
    %v6768 = vunpack.c.h.b16 %v3052
    %v6769 = vunpack.c.l.b16 %v3053
    %v6770 = vunpack.c.h.b16 %v3053
    %v6771 = vunpack.c.l.b16 %v3054
    %v6772 = vunpack.c.h.b16 %v3054
    %v6773 = vunpack.c.l.b16 %v3055
    %v6774 = vunpack.c.h.b16 %v3055
    %v6775 = vunpack.c.l.b16 %v3056
    %v6776 = vunpack.c.h.b16 %v3056
    %v6777 = vunpack.c.l.b16 %v3057
    %v6778 = vunpack.c.h.b16 %v3057
    %v6779 = vunpack.c.l.b16 %v3058
    %v6780 = vunpack.c.h.b16 %v3058
    %v6781 = vunpack.c.l.b16 %v3059
    %v6782 = vunpack.c.h.b16 %v3059
    %v6783 = vunpack.c.l.b16 %v3060
    %v6784 = vunpack.c.h.b16 %v3060
    %v6785 = vunpack.c.l.b16 %v3061
    %v6786 = vunpack.c.h.b16 %v3061
    %v6787 = vunpack.c.l.b16 %v3062
    %v6788 = vunpack.c.h.b16 %v3062
    %v6789 = vunpack.c.l.b16 %v3063
    %v6790 = vunpack.c.h.b16 %v3063
    %v6791 = vunpack.c.l.b16 %v3064
    %v6792 = vunpack.c.h.b16 %v3064
    %v6793 = vunpack.c.l.b16 %v3065
    %v6794 = vunpack.c.h.b16 %v3065
    %v6795 = vunpack.c.l.b16 %v3066
    %v6796 = vunpack.c.h.b16 %v3066
    %v6797 = vunpack.c.l.b16 %v3067
    %v6798 = vunpack.c.h.b16 %v3067
    %v6799 = vunpack.c.l.b16 %v3068
    %v6800 = vunpack.c.h.b16 %v3068
    %v6801 = vunpack.c.l.b16 %v3069
    %v6802 = vunpack.c.h.b16 %v3069
    %v6803 = vunpack.c.l.b16 %v3070
    %v6804 = vunpack.c.h.b16 %v3070
    %v6805 = vunpack.c.l.b16 %v3071
    %v6806 = vunpack.c.h.b16 %v3071
    %v6807 = vunpack.c.l.b16 %v3072
    %v6808 = vunpack.c.h.b16 %v3072
    %v6809 = vunpack.c.l.b16 %v3073
    %v6810 = vunpack.c.h.b16 %v3073
    %v6811 = vunpack.c.l.b16 %v3074
    %v6812 = vunpack.c.h.b16 %v3074
    %v6813 = vunpack.c.l.b16 %v3075
    %v6814 = vunpack.c.h.b16 %v3075
    %v6815 = vunpack.c.l.b16 %v3076
    %v6816 = vunpack.c.h.b16 %v3076
    %v6817 = vunpack.c.l.b16 %v3077
    %v6818 = vunpack.c.h.b16 %v3077
    %v6819 = vunpack.c.l.b16 %v3078
    %v6820 = vunpack.c.h.b16 %v3078
    %v6821 = vunpack.c.l.b16 %v3079
    %v6822 = vunpack.c.h.b16 %v3079
    %v6823 = vunpack.c.l.b16 %v3080
    %v6824 = vunpack.c.h.b16 %v3080
    %v6825 = vunpack.c.l.b16 %v3081
    %v6826 = vunpack.c.h.b16 %v3081
    %v6827 = vunpack.c.l.b16 %v3082
    %v6828 = vunpack.c.h.b16 %v3082
    %v6829 = vunpack.c.l.b16 %v3083
    %v6830 = vunpack.c.h.b16 %v3083
    %v6831 = vunpack.c.l.b16 %v3084
    %v6832 = vunpack.c.h.b16 %v3084
    %v6833 = vunpack.c.l.b16 %v3085
    %v6834 = vunpack.c.h.b16 %v3085
    %v6835 = vunpack.c.l.b16 %v3086
    %v6836 = vunpack.c.h.b16 %v3086
    %v6837 = vunpack.c.l.b16 %v3087
    %v6838 = vunpack.c.h.b16 %v3087
    %v6839 = vunpack.c.l.b16 %v3088
    %v6840 = vunpack.c.h.b16 %v3088
    %v6841 = vunpack.c.l.b16 %v3089
    %v6842 = vunpack.c.h.b16 %v3089
    %v6843 = vunpack.c.l.b16 %v3090
    %v6844 = vunpack.c.h.b16 %v3090
    %v6845 = vunpack.c.l.b16 %v3091
    %v6846 = vunpack.c.h.b16 %v3091
    %v6847 = vunpack.c.l.b16 %v3092
    %v6848 = vunpack.c.h.b16 %v3092
    %v6849 = vunpack.c.l.b16 %v3093
    %v6850 = vunpack.c.h.b16 %v3093
    %v6851 = vunpack.c.l.b16 %v3094
    %v6852 = vunpack.c.h.b16 %v3094
    %v6853 = vunpack.c.l.b16 %v3095
    %v6854 = vunpack.c.h.b16 %v3095
    %v6855 = vunpack.c.l.b16 %v3096
    %v6856 = vunpack.c.h.b16 %v3096
    %v6857 = vunpack.c.l.b16 %v3097
    %v6858 = vunpack.c.h.b16 %v3097
    %v6859 = vunpack.c.l.b16 %v3098
    %v6860 = vunpack.c.h.b16 %v3098
    %v6861 = vunpack.c.l.b16 %v3099
    %v6862 = vunpack.c.h.b16 %v3099
    %v6863 = vunpack.c.l.b16 %v3100
    %v6864 = vunpack.c.h.b16 %v3100
    %v6865 = vunpack.c.l.b16 %v3101
    %v6866 = vunpack.c.h.b16 %v3101
    %v6867 = vunpack.c.l.b16 %v3102
    %v6868 = vunpack.c.h.b16 %v3102
    %v6869 = vunpack.c.l.b16 %v3103
    %v6870 = vunpack.c.h.b16 %v3103
    %v6871 = vunpack.c.l.b16 %v3104
    %v6872 = vunpack.c.h.b16 %v3104
    %v6873 = vunpack.c.l.b16 %v3105
    %v6874 = vunpack.c.h.b16 %v3105
    %v6875 = vunpack.c.l.b16 %v3106
    %v6876 = vunpack.c.h.b16 %v3106
    %v6877 = vunpack.c.l.b16 %v3107
    %v6878 = vunpack.c.h.b16 %v3107
    %v6879 = vunpack.c.l.b16 %v3108
    %v6880 = vunpack.c.h.b16 %v3108
    %v6881 = vunpack.c.l.b16 %v3109
    %v6882 = vunpack.c.h.b16 %v3109
    %v6883 = vunpack.c.l.b16 %v3110
    %v6884 = vunpack.c.h.b16 %v3110
    %v6885 = vunpack.c.l.b16 %v3111
    %v6886 = vunpack.c.h.b16 %v3111
    %v6887 = vunpack.c.l.b16 %v3112
    %v6888 = vunpack.c.h.b16 %v3112
    %v6889 = vunpack.c.l.b16 %v3113
    %v6890 = vunpack.c.h.b16 %v3113
    %v6891 = vunpack.c.l.b16 %v3114
    %v6892 = vunpack.c.h.b16 %v3114
    %v6893 = vunpack.c.l.b16 %v3115
    %v6894 = vunpack.c.h.b16 %v3115
    %v6895 = vunpack.c.l.b16 %v3116
    %v6896 = vunpack.c.h.b16 %v3116
    %v6897 = vunpack.c.l.b16 %v3117
    %v6898 = vunpack.c.h.b16 %v3117
    %v6899 = vunpack.c.l.b16 %v3118
    %v6900 = vunpack.c.h.b16 %v3118
    %v6901 = vunpack.c.l.b16 %v3119
    %v6902 = vunpack.c.h.b16 %v3119
    %v6903 = vunpack.c.l.b16 %v3120
    %v6904 = vunpack.c.h.b16 %v3120
    %v6905 = vunpack.c.l.b16 %v3121
    %v6906 = vunpack.c.h.b16 %v3121
    %v6907 = vunpack.c.l.b16 %v3122
    %v6908 = vunpack.c.h.b16 %v3122
    %v6909 = vunpack.c.l.b16 %v3123
    %v6910 = vunpack.c.h.b16 %v3123
    %v6911 = vunpack.c.l.b16 %v3124
    %v6912 = vunpack.c.h.b16 %v3124
    %v6913 = vunpack.c.l.b16 %v3125
    %v6914 = vunpack.c.h.b16 %v3125
    %v6915 = vunpack.c.l.b16 %v3126
    %v6916 = vunpack.c.h.b16 %v3126
    %v6917 = vunpack.c.l.b16 %v3127
    %v6918 = vunpack.c.h.b16 %v3127
    %v6919 = vunpack.c.l.b16 %v3128
    %v6920 = vunpack.c.h.b16 %v3128
    %v6921 = vunpack.c.l.b16 %v3129
    %v6922 = vunpack.c.h.b16 %v3129
    %v6923 = vunpack.c.l.b16 %v3130
    %v6924 = vunpack.c.h.b16 %v3130
    %v6925 = vunpack.c.l.b16 %v3131
    %v6926 = vunpack.c.h.b16 %v3131
    %v6927 = vunpack.c.l.b16 %v3132
    %v6928 = vunpack.c.h.b16 %v3132
    %v6929 = vunpack.c.l.b16 %v3133
    %v6930 = vunpack.c.h.b16 %v3133
    %v6931 = vunpack.c.l.b16 %v3134
    %v6932 = vunpack.c.h.b16 %v3134
    %v6933 = vunpack.c.l.b16 %v3135
    %v6934 = vunpack.c.h.b16 %v3135
    %v6935 = vunpack.c.l.b16 %v3136
    %v6936 = vunpack.c.h.b16 %v3136
    %v6937 = vunpack.c.l.b16 %v3137
    %v6938 = vunpack.c.h.b16 %v3137
    %v6939 = vunpack.c.l.b16 %v3138
    %v6940 = vunpack.c.h.b16 %v3138
    %v6941 = vunpack.c.l.b16 %v3139
    %v6942 = vunpack.c.h.b16 %v3139
    %v6943 = vunpack.c.l.b16 %v3140
    %v6944 = vunpack.c.h.b16 %v3140
    %v6945 = vunpack.c.l.b16 %v3141
    %v6946 = vunpack.c.h.b16 %v3141
    %v6947 = vunpack.c.l.b16 %v3142
    %v6948 = vunpack.c.h.b16 %v3142
    %v6949 = vunpack.c.l.b16 %v3143
    %v6950 = vunpack.c.h.b16 %v3143
    %v6951 = vunpack.c.l.b16 %v3144
    %v6952 = vunpack.c.h.b16 %v3144
    %v6953 = vunpack.c.l.b16 %v3145
    %v6954 = vunpack.c.h.b16 %v3145
    %v6955 = vunpack.c.l.b16 %v3146
    %v6956 = vunpack.c.h.b16 %v3146
    %v6957 = vunpack.c.l.b16 %v3147
    %v6958 = vunpack.c.h.b16 %v3147
    %v6959 = vunpack.c.l.b16 %v3148
    %v6960 = vunpack.c.h.b16 %v3148
    %v6961 = vunpack.c.l.b16 %v3149
    %v6962 = vunpack.c.h.b16 %v3149
    %v6963 = vunpack.c.l.b16 %v3150
    %v6964 = vunpack.c.h.b16 %v3150
    %v6965 = vunpack.c.l.b16 %v3151
    %v6966 = vunpack.c.h.b16 %v3151
    %v6967 = vunpack.c.l.b16 %v3152
    %v6968 = vunpack.c.h.b16 %v3152
    %v6969 = vunpack.c.l.b16 %v3153
    %v6970 = vunpack.c.h.b16 %v3153
    %v6971 = vunpack.c.l.b16 %v3154
    %v6972 = vunpack.c.h.b16 %v3154
    %v6973 = vunpack.c.l.b16 %v3155
    %v6974 = vunpack.c.h.b16 %v3155
    %v6975 = vunpack.c.l.b16 %v3156
    %v6976 = vunpack.c.h.b16 %v3156
    %v6977 = vunpack.c.l.b16 %v3157
    %v6978 = vunpack.c.h.b16 %v3157
    %v6979 = vunpack.c.l.b16 %v3158
    %v6980 = vunpack.c.h.b16 %v3158
    %v6981 = vunpack.c.l.b16 %v3159
    %v6982 = vunpack.c.h.b16 %v3159
    %v6983 = vunpack.c.l.b16 %v3160
    %v6984 = vunpack.c.h.b16 %v3160
    %v6985 = vunpack.c.l.b16 %v3161
    %v6986 = vunpack.c.h.b16 %v3161
    %v6987 = vunpack.c.l.b16 %v3162
    %v6988 = vunpack.c.h.b16 %v3162
    %v6989 = vunpack.c.l.b16 %v3163
    %v6990 = vunpack.c.h.b16 %v3163
    %v6991 = vunpack.c.l.b16 %v3164
    %v6992 = vunpack.c.h.b16 %v3164
    %v6993 = vunpack.c.l.b16 %v3165
    %v6994 = vunpack.c.h.b16 %v3165
    %v6995 = vunpack.c.l.b16 %v3166
    %v6996 = vunpack.c.h.b16 %v3166
    %v6997 = vunpack.c.l.b16 %v3167
    %v6998 = vunpack.c.h.b16 %v3167
    %v6999 = vunpack.c.l.b16 %v3168
    %v7000 = vunpack.c.h.b16 %v3168
    %v7001 = vunpack.c.l.b16 %v3169
    %v7002 = vunpack.c.h.b16 %v3169
    %v7003 = vunpack.c.l.b16 %v3170
    %v7004 = vunpack.c.h.b16 %v3170
    %v7005 = vunpack.c.l.b16 %v3171
    %v7006 = vunpack.c.h.b16 %v3171
    %v7007 = vunpack.c.l.b16 %v3172
    %v7008 = vunpack.c.h.b16 %v3172
    %v7009 = vunpack.c.l.b16 %v3173
    %v7010 = vunpack.c.h.b16 %v3173
    %v7011 = vunpack.c.l.b16 %v3174
    %v7012 = vunpack.c.h.b16 %v3174
    %v7013 = vunpack.c.l.b16 %v3175
    %v7014 = vunpack.c.h.b16 %v3175
    %v7015 = vunpack.c.l.b16 %v3176
    %v7016 = vunpack.c.h.b16 %v3176
    %v7017 = vunpack.c.l.b16 %v3177
    %v7018 = vunpack.c.h.b16 %v3177
    %v7019 = vunpack.c.l.b16 %v3178
    %v7020 = vunpack.c.h.b16 %v3178
    %v7021 = vunpack.c.l.b16 %v3179
    %v7022 = vunpack.c.h.b16 %v3179
    %v7023 = vunpack.c.l.b16 %v3180
    %v7024 = vunpack.c.h.b16 %v3180
    %v7025 = vunpack.c.l.b16 %v3181
    %v7026 = vunpack.c.h.b16 %v3181
    %v7027 = vunpack.c.l.b16 %v3182
    %v7028 = vunpack.c.h.b16 %v3182
    %v7029 = vunpack.c.l.b16 %v3183
    %v7030 = vunpack.c.h.b16 %v3183
    %v7031 = vunpack.c.l.b16 %v3184
    %v7032 = vunpack.c.h.b16 %v3184
    %v7033 = vunpack.c.l.b16 %v3185
    %v7034 = vunpack.c.h.b16 %v3185
    %v7035 = vunpack.c.l.b16 %v3186
    %v7036 = vunpack.c.h.b16 %v3186
    %v7037 = vunpack.c.l.b16 %v3187
    %v7038 = vunpack.c.h.b16 %v3187
    %v7039 = vunpack.c.l.b16 %v3188
    %v7040 = vunpack.c.h.b16 %v3188
    %v7041 = vunpack.c.l.b16 %v3189
    %v7042 = vunpack.c.h.b16 %v3189
    %v7043 = vunpack.c.l.b16 %v3190
    %v7044 = vunpack.c.h.b16 %v3190
    %v7045 = vunpack.c.l.b16 %v3191
    %v7046 = vunpack.c.h.b16 %v3191
    %v7047 = vunpack.c.l.b16 %v3192
    %v7048 = vunpack.c.h.b16 %v3192
    %v7049 = vunpack.c.l.b16 %v3193
    %v7050 = vunpack.c.h.b16 %v3193
    %v7051 = vunpack.c.l.b16 %v3194
    %v7052 = vunpack.c.h.b16 %v3194
    %v7053 = vunpack.c.l.b16 %v3195
    %v7054 = vunpack.c.h.b16 %v3195
    %v7055 = vunpack.c.l.b16 %v3196
    %v7056 = vunpack.c.h.b16 %v3196
    %v7057 = vunpack.c.l.b16 %v3197
    %v7058 = vunpack.c.h.b16 %v3197
    %v7059 = vunpack.c.l.b16 %v3198
    %v7060 = vunpack.c.h.b16 %v3198
    %v7061 = vunpack.c.l.b16 %v3199
    %v7062 = vunpack.c.h.b16 %v3199
    %v7063 = vunpack.c.l.b16 %v3200
    %v7064 = vunpack.c.h.b16 %v3200
    %v7065 = vunpack.c.l.b16 %v3201
    %v7066 = vunpack.c.h.b16 %v3201
    %v7067 = vunpack.c.l.b16 %v3202
    %v7068 = vunpack.c.h.b16 %v3202
    %v7069 = vunpack.c.l.b16 %v3203
    %v7070 = vunpack.c.h.b16 %v3203
    %v7071 = vunpack.c.l.b16 %v3204
    %v7072 = vunpack.c.h.b16 %v3204
    %v7073 = vunpack.c.l.b16 %v3205
    %v7074 = vunpack.c.h.b16 %v3205
    %v7075 = vunpack.c.l.b16 %v3206
    %v7076 = vunpack.c.h.b16 %v3206
    %v7077 = vunpack.c.l.b16 %v3207
    %v7078 = vunpack.c.h.b16 %v3207
    %v7079 = vunpack.c.l.b16 %v3208
    %v7080 = vunpack.c.h.b16 %v3208
    %v7081 = vunpack.c.l.b16 %v3209
    %v7082 = vunpack.c.h.b16 %v3209
    %v7083 = vunpack.c.l.b16 %v3210
    %v7084 = vunpack.c.h.b16 %v3210
    %v7085 = vunpack.c.l.b16 %v3211
    %v7086 = vunpack.c.h.b16 %v3211
    %v7087 = vunpack.c.l.b16 %v3212
    %v7088 = vunpack.c.h.b16 %v3212
    %v7089 = vunpack.c.l.b16 %v3213
    %v7090 = vunpack.c.h.b16 %v3213
    %v7091 = vunpack.c.l.b16 %v3214
    %v7092 = vunpack.c.h.b16 %v3214
    %v7093 = vunpack.c.l.b16 %v3215
    %v7094 = vunpack.c.h.b16 %v3215
    %v7095 = vunpack.c.l.b16 %v3216
    %v7096 = vunpack.c.h.b16 %v3216
    %v7097 = vunpack.c.l.b16 %v3217
    %v7098 = vunpack.c.h.b16 %v3217
    %v7099 = vunpack.c.l.b16 %v3218
    %v7100 = vunpack.c.h.b16 %v3218
    %v7101 = vunpack.c.l.b16 %v3219
    %v7102 = vunpack.c.h.b16 %v3219
    %v7103 = vunpack.c.l.b16 %v3220
    %v7104 = vunpack.c.h.b16 %v3220
    %v7105 = vunpack.c.l.b16 %v3221
    %v7106 = vunpack.c.h.b16 %v3221
    %v7107 = vunpack.c.l.b16 %v3222
    %v7108 = vunpack.c.h.b16 %v3222
    %v7109 = vunpack.c.l.b16 %v3223
    %v7110 = vunpack.c.h.b16 %v3223
    %v7111 = vunpack.c.l.b16 %v3224
    %v7112 = vunpack.c.h.b16 %v3224
    %v7113 = vunpack.c.l.b16 %v3225
    %v7114 = vunpack.c.h.b16 %v3225
    %v7115 = vunpack.c.l.b16 %v3226
    %v7116 = vunpack.c.h.b16 %v3226
    %v7117 = vunpack.c.l.b16 %v3227
    %v7118 = vunpack.c.h.b16 %v3227
    %v7119 = vunpack.c.l.b16 %v3228
    %v7120 = vunpack.c.h.b16 %v3228
    %v7121 = vunpack.c.l.b16 %v3229
    %v7122 = vunpack.c.h.b16 %v3229
    %v7123 = vunpack.c.l.b16 %v3230
    %v7124 = vunpack.c.h.b16 %v3230
    %v7125 = vunpack.c.l.b16 %v3231
    %v7126 = vunpack.c.h.b16 %v3231
    %v7127 = vunpack.c.l.b16 %v3232
    %v7128 = vunpack.c.h.b16 %v3232
    %v7129 = vunpack.c.l.b16 %v3233
    %v7130 = vunpack.c.h.b16 %v3233
    %v7131 = vunpack.c.l.b16 %v3234
    %v7132 = vunpack.c.h.b16 %v3234
    %v7133 = vunpack.c.l.b16 %v3235
    %v7134 = vunpack.c.h.b16 %v3235
    %v7135 = vunpack.c.l.b16 %v3236
    %v7136 = vunpack.c.h.b16 %v3236
    %v7137 = vunpack.c.l.b16 %v3237
    %v7138 = vunpack.c.h.b16 %v3237
    %v7139 = vunpack.c.l.b16 %v3238
    %v7140 = vunpack.c.h.b16 %v3238
    %v7141 = vunpack.c.l.b16 %v3239
    %v7142 = vunpack.c.h.b16 %v3239
    %v7143 = vunpack.c.l.b16 %v3240
    %v7144 = vunpack.c.h.b16 %v3240
    %v7145 = vunpack.c.l.b16 %v3241
    %v7146 = vunpack.c.h.b16 %v3241
    %v7147 = vunpack.c.l.b16 %v3242
    %v7148 = vunpack.c.h.b16 %v3242
    %v7149 = vunpack.c.l.b16 %v3243
    %v7150 = vunpack.c.h.b16 %v3243
    %v7151 = vunpack.c.l.b16 %v3244
    %v7152 = vunpack.c.h.b16 %v3244
    %v7153 = vunpack.c.l.b16 %v3245
    %v7154 = vunpack.c.h.b16 %v3245
    %v7155 = vunpack.c.l.b16 %v3246
    %v7156 = vunpack.c.h.b16 %v3246
    %v7157 = vunpack.c.l.b16 %v3247
    %v7158 = vunpack.c.h.b16 %v3247
    %v7159 = vunpack.c.l.b16 %v3248
    %v7160 = vunpack.c.h.b16 %v3248
    %v7161 = vunpack.c.l.b16 %v3249
    %v7162 = vunpack.c.h.b16 %v3249
    %v7163 = vunpack.c.l.b16 %v3250
    %v7164 = vunpack.c.h.b16 %v3250
    %v7165 = vunpack.c.l.b16 %v3251
    %v7166 = vunpack.c.h.b16 %v3251
    %v7167 = vunpack.c.l.b16 %v3252
    %v7168 = vunpack.c.h.b16 %v3252
    %v7169 = vunpack.c.l.b16 %v3253
    %v7170 = vunpack.c.h.b16 %v3253
    %v7171 = vunpack.c.l.b16 %v3254
    %v7172 = vunpack.c.h.b16 %v3254
    %v7173 = vunpack.c.l.b16 %v3255
    %v7174 = vunpack.c.h.b16 %v3255
    %v7175 = vunpack.c.l.b16 %v3256
    %v7176 = vunpack.c.h.b16 %v3256
    %v7177 = vunpack.c.l.b16 %v3257
    %v7178 = vunpack.c.h.b16 %v3257
    %v7179 = vunpack.c.l.b16 %v3258
    %v7180 = vunpack.c.h.b16 %v3258
    %v7181 = vunpack.c.l.b16 %v3259
    %v7182 = vunpack.c.h.b16 %v3259
    %v7183 = vunpack.c.l.b16 %v3260
    %v7184 = vunpack.c.h.b16 %v3260
    %v7185 = vunpack.c.l.b16 %v3261
    %v7186 = vunpack.c.h.b16 %v3261
    %v7187 = vunpack.c.l.b16 %v3262
    %v7188 = vunpack.c.h.b16 %v3262
    %v7189 = vunpack.c.l.b16 %v3263
    %v7190 = vunpack.c.h.b16 %v3263
    %v7191 = vunpack.c.l.b16 %v3264
    %v7192 = vunpack.c.h.b16 %v3264
    %v7193 = vunpack.c.l.b16 %v3265
    %v7194 = vunpack.c.h.b16 %v3265
    %v7195 = vunpack.c.l.b16 %v3266
    %v7196 = vunpack.c.h.b16 %v3266
    %v7197 = vunpack.c.l.b16 %v3267
    %v7198 = vunpack.c.h.b16 %v3267
    %v7199 = vunpack.c.l.b16 %v3268
    %v7200 = vunpack.c.h.b16 %v3268
    %v7201 = vunpack.c.l.b16 %v3269
    %v7202 = vunpack.c.h.b16 %v3269
    %v7203 = vunpack.c.l.b16 %v3270
    %v7204 = vunpack.c.h.b16 %v3270
    %v7205 = vunpack.c.l.b16 %v3271
    %v7206 = vunpack.c.h.b16 %v3271
    %v7207 = vunpack.c.l.b16 %v3272
    %v7208 = vunpack.c.h.b16 %v3272
    %v7209 = vunpack.c.l.b16 %v3273
    %v7210 = vunpack.c.h.b16 %v3273
    %v7211 = vunpack.c.l.b16 %v3274
    %v7212 = vunpack.c.h.b16 %v3274
    %v7213 = vunpack.c.l.b16 %v3275
    %v7214 = vunpack.c.h.b16 %v3275
    %v7215 = vunpack.c.l.b16 %v3276
    %v7216 = vunpack.c.h.b16 %v3276
    %v7217 = vunpack.c.l.b16 %v3277
    %v7218 = vunpack.c.h.b16 %v3277
    %v7219 = vunpack.c.l.b16 %v3278
    %v7220 = vunpack.c.h.b16 %v3278
    %v7221 = vunpack.c.l.b16 %v3279
    %v7222 = vunpack.c.h.b16 %v3279
    %v7223 = vunpack.c.l.b16 %v3280
    %v7224 = vunpack.c.h.b16 %v3280
    %v7225 = vunpack.c.l.b16 %v3281
    %v7226 = vunpack.c.h.b16 %v3281
    %v7227 = vunpack.c.l.b16 %v3282
    %v7228 = vunpack.c.h.b16 %v3282
    %v7229 = vunpack.c.l.b16 %v3283
    %v7230 = vunpack.c.h.b16 %v3283
    %v7231 = vunpack.c.l.b16 %v3284
    %v7232 = vunpack.c.h.b16 %v3284
    %v7233 = vunpack.c.l.b16 %v3285
    %v7234 = vunpack.c.h.b16 %v3285
    %v7235 = vunpack.c.l.b16 %v3286
    %v7236 = vunpack.c.h.b16 %v3286
    %v7237 = vunpack.c.l.b16 %v3287
    %v7238 = vunpack.c.h.b16 %v3287
    %v7239 = vunpack.c.l.b16 %v3288
    %v7240 = vunpack.c.h.b16 %v3288
    %v7241 = vunpack.c.l.b16 %v3289
    %v7242 = vunpack.c.h.b16 %v3289
    %v7243 = vunpack.c.l.b16 %v3290
    %v7244 = vunpack.c.h.b16 %v3290
    %v7245 = vunpack.c.l.b16 %v3291
    %v7246 = vunpack.c.h.b16 %v3291
    %v7247 = vunpack.c.l.b16 %v3292
    %v7248 = vunpack.c.h.b16 %v3292
    %v7249 = vunpack.c.l.b16 %v3293
    %v7250 = vunpack.c.h.b16 %v3293
    %v7251 = vunpack.c.l.b16 %v3294
    %v7252 = vunpack.c.h.b16 %v3294
    %v7253 = vunpack.c.l.b16 %v3295
    %v7254 = vunpack.c.h.b16 %v3295
    %v7255 = vunpack.c.l.b16 %v3296
    %v7256 = vunpack.c.h.b16 %v3296
    %v7257 = vunpack.c.l.b16 %v3297
    %v7258 = vunpack.c.h.b16 %v3297
    %v7259 = vunpack.c.l.b16 %v3298
    %v7260 = vunpack.c.h.b16 %v3298
    %v7261 = vunpack.c.l.b16 %v3299
    %v7262 = vunpack.c.h.b16 %v3299
    %v7263 = vunpack.c.l.b16 %v3300
    %v7264 = vunpack.c.h.b16 %v3300
    %v7265 = vunpack.c.l.b16 %v3301
    %v7266 = vunpack.c.h.b16 %v3301
    %v7267 = vunpack.c.l.b16 %v3302
    %v7268 = vunpack.c.h.b16 %v3302
    %v7269 = vunpack.c.l.b16 %v3303
    %v7270 = vunpack.c.h.b16 %v3303
    %v7271 = vunpack.c.l.b16 %v3304
    %v7272 = vunpack.c.h.b16 %v3304
    %v7273 = vunpack.c.l.b16 %v3305
    %v7274 = vunpack.c.h.b16 %v3305
    %v7275 = vunpack.c.l.b16 %v3306
    %v7276 = vunpack.c.h.b16 %v3306
    %v7277 = vunpack.c.l.b16 %v3307
    %v7278 = vunpack.c.h.b16 %v3307
    %v7279 = vunpack.c.l.b16 %v3308
    %v7280 = vunpack.c.h.b16 %v3308
    %v7281 = vunpack.c.l.b16 %v3309
    %v7282 = vunpack.c.h.b16 %v3309
    %v7283 = vunpack.c.l.b16 %v3310
    %v7284 = vunpack.c.h.b16 %v3310
    %v7285 = vunpack.c.l.b16 %v3311
    %v7286 = vunpack.c.h.b16 %v3311
    %v7287 = vunpack.c.l.b16 %v3312
    %v7288 = vunpack.c.h.b16 %v3312
    %v7289 = vunpack.c.l.b16 %v3313
    %v7290 = vunpack.c.h.b16 %v3313
    %v7291 = vunpack.c.l.b16 %v3314
    %v7292 = vunpack.c.h.b16 %v3314
    %v7293 = vunpack.c.l.b16 %v3315
    %v7294 = vunpack.c.h.b16 %v3315
    %v7295 = vunpack.c.l.b16 %v3316
    %v7296 = vunpack.c.h.b16 %v3316
    %v7297 = vunpack.c.l.b16 %v3317
    %v7298 = vunpack.c.h.b16 %v3317
    %v7299 = vunpack.c.l.b16 %v3318
    %v7300 = vunpack.c.h.b16 %v3318
    %v7301 = vunpack.c.l.b16 %v3319
    %v7302 = vunpack.c.h.b16 %v3319
    %v7303 = vunpack.c.l.b16 %v3320
    %v7304 = vunpack.c.h.b16 %v3320
    %v7305 = vunpack.c.l.b16 %v3321
    %v7306 = vunpack.c.h.b16 %v3321
    %v7307 = vunpack.c.l.b16 %v3322
    %v7308 = vunpack.c.h.b16 %v3322
    %v7309 = vunpack.c.l.b16 %v3323
    %v7310 = vunpack.c.h.b16 %v3323
    %v7311 = vunpack.c.l.b16 %v3324
    %v7312 = vunpack.c.h.b16 %v3324
    %v7313 = vunpack.c.l.b16 %v3325
    %v7314 = vunpack.c.h.b16 %v3325
    %v7315 = vunpack.c.l.b16 %v3326
    %v7316 = vunpack.c.h.b16 %v3326
    %v7317 = vunpack.c.l.b16 %v3327
    %v7318 = vunpack.c.h.b16 %v3327
    %v7319 = vunpack.c.l.b16 %v3328
    %v7320 = vunpack.c.h.b16 %v3328
    %v7321 = vunpack.c.l.b16 %v3329
    %v7322 = vunpack.c.h.b16 %v3329
    %v7323 = vunpack.c.l.b16 %v3330
    %v7324 = vunpack.c.h.b16 %v3330
    %v7325 = vunpack.c.l.b16 %v3331
    %v7326 = vunpack.c.h.b16 %v3331
    %v7327 = vunpack.c.l.b16 %v3332
    %v7328 = vunpack.c.h.b16 %v3332
    %v7329 = vunpack.c.l.b16 %v3333
    %v7330 = vunpack.c.h.b16 %v3333
    %v7331 = vunpack.c.l.b16 %v3334
    %v7332 = vunpack.c.h.b16 %v3334
    %v7333 = vunpack.c.l.b16 %v3335
    %v7334 = vunpack.c.h.b16 %v3335
    %v7335 = vunpack.c.l.b16 %v3336
    %v7336 = vunpack.c.h.b16 %v3336
    %v7337 = vunpack.c.l.b16 %v3337
    %v7338 = vunpack.c.h.b16 %v3337
    %v7339 = vunpack.c.l.b16 %v3338
    %v7340 = vunpack.c.h.b16 %v3338
    %v7341 = vunpack.c.l.b16 %v3339
    %v7342 = vunpack.c.h.b16 %v3339
    %v7343 = vunpack.c.l.b16 %v3340
    %v7344 = vunpack.c.h.b16 %v3340
    %v7345 = vunpack.c.l.b16 %v3341
    %v7346 = vunpack.c.h.b16 %v3341
    %v7347 = vunpack.c.l.b16 %v3342
    %v7348 = vunpack.c.h.b16 %v3342
    %v7349 = vunpack.c.l.b16 %v3343
    %v7350 = vunpack.c.h.b16 %v3343
    %v7351 = vunpack.c.l.b16 %v3344
    %v7352 = vunpack.c.h.b16 %v3344
    %v7353 = vunpack.c.l.b16 %v3345
    %v7354 = vunpack.c.h.b16 %v3345
    %v7355 = vunpack.c.l.b16 %v3346
    %v7356 = vunpack.c.h.b16 %v3346
    %v7357 = vunpack.c.l.b16 %v3347
    %v7358 = vunpack.c.h.b16 %v3347
    %v7359 = vunpack.c.l.b16 %v3348
    %v7360 = vunpack.c.h.b16 %v3348
    %v7361 = vunpack.c.l.b16 %v3349
    %v7362 = vunpack.c.h.b16 %v3349
    %v7363 = vunpack.c.l.b16 %v3350
    %v7364 = vunpack.c.h.b16 %v3350
    %v7365 = vunpack.c.l.b16 %v3351
    %v7366 = vunpack.c.h.b16 %v3351
    %v7367 = vunpack.c.l.b16 %v3352
    %v7368 = vunpack.c.h.b16 %v3352
    %v7369 = vunpack.c.l.b16 %v3353
    %v7370 = vunpack.c.h.b16 %v3353
    %v7371 = vunpack.c.l.b16 %v3354
    %v7372 = vunpack.c.h.b16 %v3354
    %v7373 = vunpack.c.l.b16 %v3355
    %v7374 = vunpack.c.h.b16 %v3355
    %v7375 = vunpack.c.l.b16 %v3356
    %v7376 = vunpack.c.h.b16 %v3356
    %v7377 = vunpack.c.l.b16 %v3357
    %v7378 = vunpack.c.h.b16 %v3357
    %v7379 = vunpack.c.l.b16 %v3358
    %v7380 = vunpack.c.h.b16 %v3358
    %v7381 = vunpack.c.l.b16 %v3359
    %v7382 = vunpack.c.h.b16 %v3359
    %v7383 = vunpack.c.l.b16 %v3360
    %v7384 = vunpack.c.h.b16 %v3360
    %v7385 = vunpack.c.l.b16 %v3361
    %v7386 = vunpack.c.h.b16 %v3361
    %v7387 = vunpack.c.l.b16 %v3362
    %v7388 = vunpack.c.h.b16 %v3362
    %v7389 = vunpack.c.l.b16 %v3363
    %v7390 = vunpack.c.h.b16 %v3363
    %v7391 = vunpack.c.l.b16 %v3364
    %v7392 = vunpack.c.h.b16 %v3364
    %v7393 = vunpack.c.l.b16 %v3365
    %v7394 = vunpack.c.h.b16 %v3365
    %v7395 = vunpack.c.l.b16 %v3366
    %v7396 = vunpack.c.h.b16 %v3366
    %v7397 = vunpack.c.l.b16 %v3367
    %v7398 = vunpack.c.h.b16 %v3367
    %v7399 = vunpack.c.l.b16 %v3368
    %v7400 = vunpack.c.h.b16 %v3368
    %v7401 = vunpack.c.l.b16 %v3369
    %v7402 = vunpack.c.h.b16 %v3369
    %v7403 = vunpack.c.l.b16 %v3370
    %v7404 = vunpack.c.h.b16 %v3370
    %v7405 = vunpack.c.l.b16 %v3371
    %v7406 = vunpack.c.h.b16 %v3371
    %v7407 = vunpack.c.l.b16 %v3372
    %v7408 = vunpack.c.h.b16 %v3372
    %v7409 = vunpack.c.l.b16 %v3373
    %v7410 = vunpack.c.h.b16 %v3373
    %v7411 = vunpack.c.l.b16 %v3374
    %v7412 = vunpack.c.h.b16 %v3374
    %v7413 = vunpack.c.l.b16 %v3375
    %v7414 = vunpack.c.h.b16 %v3375
    %v7415 = vunpack.c.l.b16 %v3376
    %v7416 = vunpack.c.h.b16 %v3376
    %v7417 = vunpack.c.l.b16 %v3377
    %v7418 = vunpack.c.h.b16 %v3377
    %v7419 = vunpack.c.l.b16 %v3378
    %v7420 = vunpack.c.h.b16 %v3378
    %v7421 = vunpack.c.l.b16 %v3379
    %v7422 = vunpack.c.h.b16 %v3379
    %v7423 = vunpack.c.l.b16 %v3380
    %v7424 = vunpack.c.h.b16 %v3380
    %v7425 = vunpack.c.l.b16 %v3381
    %v7426 = vunpack.c.h.b16 %v3381
    %v7427 = vunpack.c.l.b16 %v3382
    %v7428 = vunpack.c.h.b16 %v3382
    %v7429 = vunpack.c.l.b16 %v3383
    %v7430 = vunpack.c.h.b16 %v3383
    %v7431 = vunpack.c.l.b16 %v3384
    %v7432 = vunpack.c.h.b16 %v3384
    %v7433 = vunpack.c.l.b16 %v3385
    %v7434 = vunpack.c.h.b16 %v3385
    %v7435 = vunpack.c.l.b16 %v3386
    %v7436 = vunpack.c.h.b16 %v3386
    %v7437 = vunpack.c.l.b16 %v3387
    %v7438 = vunpack.c.h.b16 %v3387
    %v7439 = vunpack.c.l.b16 %v3388
    %v7440 = vunpack.c.h.b16 %v3388
    %v7441 = vunpack.c.l.b16 %v3389
    %v7442 = vunpack.c.h.b16 %v3389
    %v7443 = vunpack.c.l.b16 %v3390
    %v7444 = vunpack.c.h.b16 %v3390
    %v7445 = vunpack.c.l.b16 %v3391
    %v7446 = vunpack.c.h.b16 %v3391
    %v7447 = vunpack.c.l.b16 %v3392
    %v7448 = vunpack.c.h.b16 %v3392
    %v7449 = vunpack.c.l.b16 %v3393
    %v7450 = vunpack.c.h.b16 %v3393
    %v7451 = vunpack.c.l.b16 %v3394
    %v7452 = vunpack.c.h.b16 %v3394
    %v7453 = vunpack.c.l.b16 %v3395
    %v7454 = vunpack.c.h.b16 %v3395
    %v7455 = vunpack.c.l.b16 %v3396
    %v7456 = vunpack.c.h.b16 %v3396
    %v7457 = vunpack.c.l.b16 %v3397
    %v7458 = vunpack.c.h.b16 %v3397
    %v7459 = vunpack.c.l.b16 %v3398
    %v7460 = vunpack.c.h.b16 %v3398
    %v7461 = vunpack.c.l.b16 %v3399
    %v7462 = vunpack.c.h.b16 %v3399
    %v7463 = vunpack.c.l.b16 %v3400
    %v7464 = vunpack.c.h.b16 %v3400
    %v7465 = vunpack.c.l.b16 %v3401
    %v7466 = vunpack.c.h.b16 %v3401
    %v7467 = vunpack.c.l.b16 %v3402
    %v7468 = vunpack.c.h.b16 %v3402
    %v7469 = vunpack.c.l.b16 %v3403
    %v7470 = vunpack.c.h.b16 %v3403
    %v7471 = vunpack.c.l.b16 %v3404
    %v7472 = vunpack.c.h.b16 %v3404
    %v7473 = vunpack.c.l.b16 %v3405
    %v7474 = vunpack.c.h.b16 %v3405
    %v7475 = vunpack.c.l.b16 %v3406
    %v7476 = vunpack.c.h.b16 %v3406
    %v7477 = vunpack.c.l.b16 %v3407
    %v7478 = vunpack.c.h.b16 %v3407
    %v7479 = vunpack.c.l.b16 %v3408
    %v7480 = vunpack.c.h.b16 %v3408
    %v7481 = vunpack.c.l.b16 %v3409
    %v7482 = vunpack.c.h.b16 %v3409
    %v7483 = vunpack.c.l.b16 %v3410
    %v7484 = vunpack.c.h.b16 %v3410
    %v7485 = vunpack.c.l.b16 %v3411
    %v7486 = vunpack.c.h.b16 %v3411
    %v7487 = vunpack.c.l.b16 %v3412
    %v7488 = vunpack.c.h.b16 %v3412
    %v7489 = vunpack.c.l.b16 %v3413
    %v7490 = vunpack.c.h.b16 %v3413
    %v7491 = vunpack.c.l.b16 %v3414
    %v7492 = vunpack.c.h.b16 %v3414
    %v7493 = vunpack.c.l.b16 %v3415
    %v7494 = vunpack.c.h.b16 %v3415
    %v7495 = vunpack.c.l.b16 %v3416
    %v7496 = vunpack.c.h.b16 %v3416
    %v7497 = vunpack.c.l.b16 %v3417
    %v7498 = vunpack.c.h.b16 %v3417
    %v7499 = vunpack.c.l.b16 %v3418
    %v7500 = vunpack.c.h.b16 %v3418
    %v7501 = vunpack.c.l.b16 %v3419
    %v7502 = vunpack.c.h.b16 %v3419
    %v7503 = vunpack.c.l.b16 %v3420
    %v7504 = vunpack.c.h.b16 %v3420
    %v7505 = vunpack.c.l.b16 %v3421
    %v7506 = vunpack.c.h.b16 %v3421
    %v7507 = vunpack.c.l.b16 %v3422
    %v7508 = vunpack.c.h.b16 %v3422
    %v7509 = vunpack.c.l.b16 %v3423
    %v7510 = vunpack.c.h.b16 %v3423
    %v7511 = vunpack.c.l.b16 %v3424
    %v7512 = vunpack.c.h.b16 %v3424
    %v7513 = vunpack.c.l.b16 %v3425
    %v7514 = vunpack.c.h.b16 %v3425
    %v7515 = vunpack.c.l.b16 %v3426
    %v7516 = vunpack.c.h.b16 %v3426
    %v7517 = vunpack.c.l.b16 %v3427
    %v7518 = vunpack.c.h.b16 %v3427
    %v7519 = vunpack.c.l.b16 %v3428
    %v7520 = vunpack.c.h.b16 %v3428
    %v7521 = vunpack.c.l.b16 %v3429
    %v7522 = vunpack.c.h.b16 %v3429
    %v7523 = vunpack.c.l.b16 %v3430
    %v7524 = vunpack.c.h.b16 %v3430
    %v7525 = vunpack.c.l.b16 %v3431
    %v7526 = vunpack.c.h.b16 %v3431
    %v7527 = vunpack.c.l.b16 %v3432
    %v7528 = vunpack.c.h.b16 %v3432
    %v7529 = vunpack.c.l.b16 %v3433
    %v7530 = vunpack.c.h.b16 %v3433
    %v7531 = vunpack.c.l.b16 %v3434
    %v7532 = vunpack.c.h.b16 %v3434
    %v7533 = vunpack.c.l.b16 %v3435
    %v7534 = vunpack.c.h.b16 %v3435
    %v7535 = vunpack.c.l.b16 %v3436
    %v7536 = vunpack.c.h.b16 %v3436
    %v7537 = vunpack.c.l.b16 %v3437
    %v7538 = vunpack.c.h.b16 %v3437
    %v7539 = vunpack.c.l.b16 %v3438
    %v7540 = vunpack.c.h.b16 %v3438
    %v7541 = vunpack.c.l.b16 %v3439
    %v7542 = vunpack.c.h.b16 %v3439
    %v7543 = vunpack.c.l.b16 %v3440
    %v7544 = vunpack.c.h.b16 %v3440
    %v7545 = vunpack.c.l.b16 %v3441
    %v7546 = vunpack.c.h.b16 %v3441
    %v7547 = vunpack.c.l.b16 %v3442
    %v7548 = vunpack.c.h.b16 %v3442
    %v7549 = vunpack.c.l.b16 %v3443
    %v7550 = vunpack.c.h.b16 %v3443
    %v7551 = vunpack.c.l.b16 %v3444
    %v7552 = vunpack.c.h.b16 %v3444
    %v7553 = vunpack.c.l.b16 %v3445
    %v7554 = vunpack.c.h.b16 %v3445
    %v7555 = vunpack.c.l.b16 %v3446
    %v7556 = vunpack.c.h.b16 %v3446
    %v7557 = vunpack.c.l.b16 %v3447
    %v7558 = vunpack.c.h.b16 %v3447
    %v7559 = vunpack.c.l.b16 %v3448
    %v7560 = vunpack.c.h.b16 %v3448
    %v7561 = vunpack.c.l.b16 %v3449
    %v7562 = vunpack.c.h.b16 %v3449
    %v7563 = vunpack.c.l.b16 %v3450
    %v7564 = vunpack.c.h.b16 %v3450
    %v7565 = vunpack.c.l.b16 %v3451
    %v7566 = vunpack.c.h.b16 %v3451
    %v7567 = vunpack.c.l.b16 %v3452
    %v7568 = vunpack.c.h.b16 %v3452
    %v7569 = vunpack.c.l.b16 %v3453
    %v7570 = vunpack.c.h.b16 %v3453
    %v7571 = vunpack.c.l.b16 %v3454
    %v7572 = vunpack.c.h.b16 %v3454
    %v7573 = vunpack.c.l.b16 %v3455
    %v7574 = vunpack.c.h.b16 %v3455
    %v7575 = vunpack.c.l.b16 %v3456
    %v7576 = vunpack.c.h.b16 %v3456
    %v7577 = vunpack.c.l.b16 %v3457
    %v7578 = vunpack.c.h.b16 %v3457
    %v7579 = vunpack.c.l.b16 %v3458
    %v7580 = vunpack.c.h.b16 %v3458
    %v7581 = vunpack.c.l.b16 %v3459
    %v7582 = vunpack.c.h.b16 %v3459
    %v7583 = vunpack.c.l.b16 %v3460
    %v7584 = vunpack.c.h.b16 %v3460
    %v7585 = vunpack.c.l.b16 %v3461
    %v7586 = vunpack.c.h.b16 %v3461
    %v7587 = vunpack.c.l.b16 %v3462
    %v7588 = vunpack.c.h.b16 %v3462
    %v7589 = vunpack.c.l.b16 %v3463
    %v7590 = vunpack.c.h.b16 %v3463
    %v7591 = vunpack.c.l.b16 %v3464
    %v7592 = vunpack.c.h.b16 %v3464
    %v7593 = vunpack.c.l.b16 %v3465
    %v7594 = vunpack.c.h.b16 %v3465
    %v7595 = vunpack.c.l.b16 %v3466
    %v7596 = vunpack.c.h.b16 %v3466
    %v7597 = vunpack.c.l.b16 %v3467
    %v7598 = vunpack.c.h.b16 %v3467
    %v7599 = vunpack.c.l.b16 %v3468
    %v7600 = vunpack.c.h.b16 %v3468
    %v7601 = vunpack.c.l.b16 %v3469
    %v7602 = vunpack.c.h.b16 %v3469
    %v7603 = vunpack.c.l.b16 %v3470
    %v7604 = vunpack.c.h.b16 %v3470
    %v7605 = vunpack.c.l.b16 %v3471
    %v7606 = vunpack.c.h.b16 %v3471
    %v7607 = vunpack.c.l.b16 %v3472
    %v7608 = vunpack.c.h.b16 %v3472
    %v7609 = vunpack.c.l.b16 %v3473
    %v7610 = vunpack.c.h.b16 %v3473
    %v7611 = vunpack.c.l.b16 %v3474
    %v7612 = vunpack.c.h.b16 %v3474
    %v7613 = vunpack.c.l.b16 %v3475
    %v7614 = vunpack.c.h.b16 %v3475
    %v7615 = vunpack.c.l.b16 %v3476
    %v7616 = vunpack.c.h.b16 %v3476
    %v7617 = vunpack.c.l.b16 %v3477
    %v7618 = vunpack.c.h.b16 %v3477
    %v7619 = vunpack.c.l.b16 %v3478
    %v7620 = vunpack.c.h.b16 %v3478
    %v7621 = vunpack.c.l.b16 %v3479
    %v7622 = vunpack.c.h.b16 %v3479
    %v7623 = vunpack.c.l.b16 %v3480
    %v7624 = vunpack.c.h.b16 %v3480
    %v7625 = vunpack.c.l.b16 %v3481
    %v7626 = vunpack.c.h.b16 %v3481
    %v7627 = vunpack.c.l.b16 %v3482
    %v7628 = vunpack.c.h.b16 %v3482
    %v7629 = vunpack.c.l.b16 %v3483
    %v7630 = vunpack.c.h.b16 %v3483
    %v7631 = vunpack.c.l.b16 %v3484
    %v7632 = vunpack.c.h.b16 %v3484
    %v7633 = vunpack.c.l.b16 %v3485
    %v7634 = vunpack.c.h.b16 %v3485
    %v7635 = vunpack.c.l.b16 %v3486
    %v7636 = vunpack.c.h.b16 %v3486
    %v7637 = vunpack.c.l.b16 %v3487
    %v7638 = vunpack.c.h.b16 %v3487
    %v7639 = vunpack.c.l.b16 %v3488
    %v7640 = vunpack.c.h.b16 %v3488
    %v7641 = vunpack.c.l.b16 %v3489
    %v7642 = vunpack.c.h.b16 %v3489
    %v7643 = vunpack.c.l.b16 %v3490
    %v7644 = vunpack.c.h.b16 %v3490
    %v7645 = vunpack.c.l.b16 %v3491
    %v7646 = vunpack.c.h.b16 %v3491
    %v7647 = vunpack.c.l.b16 %v3492
    %v7648 = vunpack.c.h.b16 %v3492
    %v7649 = vunpack.c.l.b16 %v3493
    %v7650 = vunpack.c.h.b16 %v3493
    %v7651 = vunpack.c.l.b16 %v3494
    %v7652 = vunpack.c.h.b16 %v3494
    %v7653 = vunpack.c.l.b16 %v3495
    %v7654 = vunpack.c.h.b16 %v3495
    %v7655 = vunpack.c.l.b16 %v3496
    %v7656 = vunpack.c.h.b16 %v3496
    %v7657 = vunpack.c.l.b16 %v3497
    %v7658 = vunpack.c.h.b16 %v3497
    %v7659 = vunpack.c.l.b16 %v3498
    %v7660 = vunpack.c.h.b16 %v3498
    %v7661 = vunpack.c.l.b16 %v3499
    %v7662 = vunpack.c.h.b16 %v3499
    %v7663 = vunpack.c.l.b16 %v3500
    %v7664 = vunpack.c.h.b16 %v3500
    %v7665 = vunpack.c.l.b16 %v3501
    %v7666 = vunpack.c.h.b16 %v3501
    %v7667 = vunpack.c.l.b16 %v3502
    %v7668 = vunpack.c.h.b16 %v3502
    %v7669 = vunpack.c.l.b16 %v3503
    %v7670 = vunpack.c.h.b16 %v3503
    %v7671 = vunpack.c.l.b16 %v3504
    %v7672 = vunpack.c.h.b16 %v3504
    %v7673 = vunpack.c.l.b16 %v3505
    %v7674 = vunpack.c.h.b16 %v3505
    %v7675 = vunpack.c.l.b16 %v3506
    %v7676 = vunpack.c.h.b16 %v3506
    %v7677 = vunpack.c.l.b16 %v3507
    %v7678 = vunpack.c.h.b16 %v3507
    %v7679 = vunpack.c.l.b16 %v3508
    %v7680 = vunpack.c.h.b16 %v3508
    %v7681 = vunpack.c.l.b16 %v3509
    %v7682 = vunpack.c.h.b16 %v3509
    %v7683 = vunpack.c.l.b16 %v3510
    %v7684 = vunpack.c.h.b16 %v3510
    %v7685 = vunpack.c.l.b16 %v3511
    %v7686 = vunpack.c.h.b16 %v3511
    %v7687 = vunpack.c.l.b16 %v3512
    %v7688 = vunpack.c.h.b16 %v3512
    %v7689 = vunpack.c.l.b16 %v3513
    %v7690 = vunpack.c.h.b16 %v3513
    %v7691 = vunpack.c.l.b16 %v3514
    %v7692 = vunpack.c.h.b16 %v3514
    %v7693 = vunpack.c.l.b16 %v3515
    %v7694 = vunpack.c.h.b16 %v3515
    %v7695 = vunpack.c.l.b16 %v3516
    %v7696 = vunpack.c.h.b16 %v3516
    %v7697 = vunpack.c.l.b16 %v3517
    %v7698 = vunpack.c.h.b16 %v3517
    %v7699 = vunpack.c.l.b16 %v3518
    %v7700 = vunpack.c.h.b16 %v3518
    %v7701 = vunpack.c.l.b16 %v3519
    %v7702 = vunpack.c.h.b16 %v3519
    %v7703 = vunpack.c.l.b16 %v3520
    %v7704 = vunpack.c.h.b16 %v3520
    %v7705 = vunpack.c.l.b16 %v3521
    %v7706 = vunpack.c.h.b16 %v3521
    %v7707 = vunpack.c.l.b16 %v3522
    %v7708 = vunpack.c.h.b16 %v3522
    %v7709 = vunpack.c.l.b16 %v3523
    %v7710 = vunpack.c.h.b16 %v3523
    %v7711 = vunpack.c.l.b16 %v3524
    %v7712 = vunpack.c.h.b16 %v3524
    %v7713 = vunpack.c.l.b16 %v3525
    %v7714 = vunpack.c.h.b16 %v3525
    %v7715 = vunpack.c.l.b16 %v3526
    %v7716 = vunpack.c.h.b16 %v3526
    %v7717 = vunpack.c.l.b16 %v3527
    %v7718 = vunpack.c.h.b16 %v3527
    %v7719 = vunpack.c.l.b16 %v3528
    %v7720 = vunpack.c.h.b16 %v3528
    %v7721 = vunpack.c.l.b16 %v3529
    %v7722 = vunpack.c.h.b16 %v3529
    %v7723 = vunpack.c.l.b16 %v3530
    %v7724 = vunpack.c.h.b16 %v3530
    %v7725 = vunpack.c.l.b16 %v3531
    %v7726 = vunpack.c.h.b16 %v3531
    %v7727 = vunpack.c.l.b16 %v3532
    %v7728 = vunpack.c.h.b16 %v3532
    %v7729 = vunpack.c.l.b16 %v3533
    %v7730 = vunpack.c.h.b16 %v3533
    %v7731 = vunpack.c.l.b16 %v3534
    %v7732 = vunpack.c.h.b16 %v3534
    %v7733 = vunpack.c.l.b16 %v3535
    %v7734 = vunpack.c.h.b16 %v3535
    %v7735 = vunpack.c.l.b16 %v3536
    %v7736 = vunpack.c.h.b16 %v3536
    %v7737 = vunpack.c.l.b16 %v3537
    %v7738 = vunpack.c.h.b16 %v3537
    %v7739 = vunpack.c.l.b16 %v3538
    %v7740 = vunpack.c.h.b16 %v3538
    %v7741 = vunpack.c.l.b16 %v3539
    %v7742 = vunpack.c.h.b16 %v3539
    %v7743 = vunpack.c.l.b16 %v3540
    %v7744 = vunpack.c.h.b16 %v3540
    %v7745 = vunpack.c.l.b16 %v3541
    %v7746 = vunpack.c.h.b16 %v3541
    %v7747 = vunpack.c.l.b16 %v3542
    %v7748 = vunpack.c.h.b16 %v3542
    %v7749 = vunpack.c.l.b16 %v3543
    %v7750 = vunpack.c.h.b16 %v3543
    %v7751 = vunpack.c.l.b16 %v3544
    %v7752 = vunpack.c.h.b16 %v3544
    %v7753 = vunpack.c.l.b16 %v3545
    %v7754 = vunpack.c.h.b16 %v3545
    %v7755 = vunpack.c.l.b16 %v3546
    %v7756 = vunpack.c.h.b16 %v3546
    %v7757 = vunpack.c.l.b16 %v3547
    %v7758 = vunpack.c.h.b16 %v3547
    %v7759 = vunpack.c.l.b16 %v3548
    %v7760 = vunpack.c.h.b16 %v3548
    %v7761 = vunpack.c.l.b16 %v3549
    %v7762 = vunpack.c.h.b16 %v3549
    %v7763 = vunpack.c.l.b16 %v3550
    %v7764 = vunpack.c.h.b16 %v3550
    %v7765 = vunpack.c.l.b16 %v3551
    %v7766 = vunpack.c.h.b16 %v3551
    %v7767 = vunpack.c.l.b16 %v3552
    %v7768 = vunpack.c.h.b16 %v3552
    %v7769 = vunpack.c.l.b16 %v3553
    %v7770 = vunpack.c.h.b16 %v3553
    %v7771 = vunpack.c.l.b16 %v3554
    %v7772 = vunpack.c.h.b16 %v3554
    %v7773 = vunpack.c.l.b16 %v3555
    %v7774 = vunpack.c.h.b16 %v3555
    %v7775 = vunpack.c.l.b16 %v3556
    %v7776 = vunpack.c.h.b16 %v3556
    %v7777 = vunpack.c.l.b16 %v3557
    %v7778 = vunpack.c.h.b16 %v3557
    %v7779 = vunpack.c.l.b16 %v3558
    %v7780 = vunpack.c.h.b16 %v3558
    %v7781 = vunpack.c.l.b16 %v3559
    %v7782 = vunpack.c.h.b16 %v3559
    %v7783 = vunpack.c.l.b16 %v3560
    %v7784 = vunpack.c.h.b16 %v3560
    %v7785 = vunpack.c.l.b16 %v3561
    %v7786 = vunpack.c.h.b16 %v3561
    %v7787 = vunpack.c.l.b16 %v3562
    %v7788 = vunpack.c.h.b16 %v3562
    %v7789 = vunpack.c.l.b16 %v3563
    %v7790 = vunpack.c.h.b16 %v3563
    %v7791 = vunpack.c.l.b16 %v3564
    %v7792 = vunpack.c.h.b16 %v3564
    %v7793 = vunpack.c.l.b16 %v3565
    %v7794 = vunpack.c.h.b16 %v3565
    %v7795 = vunpack.c.l.b16 %v3566
    %v7796 = vunpack.c.h.b16 %v3566
    %v7797 = vunpack.c.l.b16 %v3567
    %v7798 = vunpack.c.h.b16 %v3567
    %v7799 = vunpack.c.l.b16 %v3568
    %v7800 = vunpack.c.h.b16 %v3568
    %v7801 = vunpack.c.l.b16 %v3569
    %v7802 = vunpack.c.h.b16 %v3569
    %v7803 = vunpack.c.l.b16 %v3570
    %v7804 = vunpack.c.h.b16 %v3570
    %v7805 = vunpack.c.l.b16 %v3571
    %v7806 = vunpack.c.h.b16 %v3571
    %v7807 = vunpack.c.l.b16 %v3572
    %v7808 = vunpack.c.h.b16 %v3572
    %v7809 = vunpack.c.l.b16 %v3573
    %v7810 = vunpack.c.h.b16 %v3573
    %v7811 = vunpack.c.l.b16 %v3574
    %v7812 = vunpack.c.h.b16 %v3574
    %v7813 = vunpack.c.l.b16 %v3575
    %v7814 = vunpack.c.h.b16 %v3575
    %v7815 = vunpack.c.l.b16 %v3576
    %v7816 = vunpack.c.h.b16 %v3576
    %v7817 = vunpack.c.l.b16 %v3577
    %v7818 = vunpack.c.h.b16 %v3577
    %v7819 = vunpack.c.l.b16 %v3578
    %v7820 = vunpack.c.h.b16 %v3578
    %v7821 = vunpack.c.l.b16 %v3579
    %v7822 = vunpack.c.h.b16 %v3579
    %v7823 = vunpack.c.l.b16 %v3580
    %v7824 = vunpack.c.h.b16 %v3580
    %v7825 = vunpack.c.l.b16 %v3581
    %v7826 = vunpack.c.h.b16 %v3581
    %v7827 = vunpack.c.l.b16 %v3582
    %v7828 = vunpack.c.h.b16 %v3582
    %v7829 = vunpack.c.l.b16 %v3583
    %v7830 = vunpack.c.h.b16 %v3583
    %v7831 = vunpack.c.l.b16 %v3584
    %v7832 = vunpack.c.h.b16 %v3584
    %v7833 = vunpack.c.l.b16 %v3585
    %v7834 = vunpack.c.h.b16 %v3585
    %v7835 = vunpack.c.l.b16 %v3586
    %v7836 = vunpack.c.h.b16 %v3586
    %v7837 = vunpack.c.l.b16 %v3587
    %v7838 = vunpack.c.h.b16 %v3587
    %v7839 = vunpack.c.l.b16 %v3588
    %v7840 = vunpack.c.h.b16 %v3588
    %v7841 = vunpack.c.l.b16 %v3589
    %v7842 = vunpack.c.h.b16 %v3589
    %v7843 = vunpack.c.l.b16 %v3590
    %v7844 = vunpack.c.h.b16 %v3590
    %v7845 = vunpack.c.l.b16 %v3591
    %v7846 = vunpack.c.h.b16 %v3591
    %v7847 = vunpack.c.l.b16 %v3592
    %v7848 = vunpack.c.h.b16 %v3592
    %v7849 = vunpack.c.l.b16 %v3593
    %v7850 = vunpack.c.h.b16 %v3593
    %v7851 = vunpack.c.l.b16 %v3594
    %v7852 = vunpack.c.h.b16 %v3594
    %v7853 = vunpack.c.l.b16 %v3595
    %v7854 = vunpack.c.h.b16 %v3595
    %v7855 = vunpack.c.l.b16 %v3596
    %v7856 = vunpack.c.h.b16 %v3596
    %v7857 = vunpack.c.l.b16 %v3597
    %v7858 = vunpack.c.h.b16 %v3597
    %v7859 = vunpack.c.l.b16 %v3598
    %v7860 = vunpack.c.h.b16 %v3598
    %v7861 = vunpack.c.l.b16 %v3599
    %v7862 = vunpack.c.h.b16 %v3599
    %v7863 = vunpack.c.l.b16 %v3600
    %v7864 = vunpack.c.h.b16 %v3600
    %v7865 = vunpack.c.l.b16 %v3601
    %v7866 = vunpack.c.h.b16 %v3601
    %v7867 = vunpack.c.l.b16 %v3602
    %v7868 = vunpack.c.h.b16 %v3602
    %v7869 = vunpack.c.l.b16 %v3603
    %v7870 = vunpack.c.h.b16 %v3603
    %v7871 = vunpack.c.l.b16 %v3604
    %v7872 = vunpack.c.h.b16 %v3604
    %v7873 = vunpack.c.l.b16 %v3605
    %v7874 = vunpack.c.h.b16 %v3605
    %v7875 = vunpack.c.l.b16 %v3606
    %v7876 = vunpack.c.h.b16 %v3606
    %v7877 = vunpack.c.l.b16 %v3607
    %v7878 = vunpack.c.h.b16 %v3607
    %v7879 = vunpack.c.l.b16 %v3608
    %v7880 = vunpack.c.h.b16 %v3608
    %v7881 = vunpack.c.l.b16 %v3609
    %v7882 = vunpack.c.h.b16 %v3609
    %v7883 = vunpack.c.l.b16 %v3610
    %v7884 = vunpack.c.h.b16 %v3610
    %v7885 = vunpack.c.l.b16 %v3611
    %v7886 = vunpack.c.h.b16 %v3611
    %v7887 = vunpack.c.l.b16 %v3612
    %v7888 = vunpack.c.h.b16 %v3612
    %v7889 = vunpack.c.l.b16 %v3613
    %v7890 = vunpack.c.h.b16 %v3613
    %v7891 = vunpack.c.l.b16 %v3614
    %v7892 = vunpack.c.h.b16 %v3614
    %v7893 = vunpack.c.l.b16 %v3615
    %v7894 = vunpack.c.h.b16 %v3615
    %v7895 = vunpack.c.l.b16 %v3616
    %v7896 = vunpack.c.h.b16 %v3616
    %v7897 = vunpack.c.l.b16 %v3617
    %v7898 = vunpack.c.h.b16 %v3617
    %v7899 = vunpack.c.l.b16 %v3618
    %v7900 = vunpack.c.h.b16 %v3618
    %v7901 = vunpack.c.l.b16 %v3619
    %v7902 = vunpack.c.h.b16 %v3619
    %v7903 = vunpack.c.l.b16 %v3620
    %v7904 = vunpack.c.h.b16 %v3620
    %v7905 = vunpack.c.l.b16 %v3621
    %v7906 = vunpack.c.h.b16 %v3621
    %v7907 = vunpack.c.l.b16 %v3622
    %v7908 = vunpack.c.h.b16 %v3622
    %v7909 = vunpack.c.l.b16 %v3623
    %v7910 = vunpack.c.h.b16 %v3623
    %v7911 = vunpack.c.l.b16 %v3624
    %v7912 = vunpack.c.h.b16 %v3624
    %v7913 = vunpack.c.l.b16 %v3625
    %v7914 = vunpack.c.h.b16 %v3625
    %v7915 = vunpack.c.l.b16 %v3626
    %v7916 = vunpack.c.h.b16 %v3626
    %v7917 = vunpack.c.l.b16 %v3627
    %v7918 = vunpack.c.h.b16 %v3627
    %v7919 = vunpack.c.l.b16 %v3628
    %v7920 = vunpack.c.h.b16 %v3628
    %v7921 = vunpack.c.l.b16 %v3629
    %v7922 = vunpack.c.h.b16 %v3629
    %v7923 = vunpack.c.l.b16 %v3630
    %v7924 = vunpack.c.h.b16 %v3630
    %v7925 = vunpack.c.l.b16 %v3631
    %v7926 = vunpack.c.h.b16 %v3631
    %v7927 = vunpack.c.l.b16 %v3632
    %v7928 = vunpack.c.h.b16 %v3632
    %v7929 = vunpack.c.l.b16 %v3633
    %v7930 = vunpack.c.h.b16 %v3633
    %v7931 = vunpack.c.l.b16 %v3634
    %v7932 = vunpack.c.h.b16 %v3634
    %v7933 = vunpack.c.l.b16 %v3635
    %v7934 = vunpack.c.h.b16 %v3635
    %v7935 = vunpack.c.l.b16 %v3636
    %v7936 = vunpack.c.h.b16 %v3636
    %v7937 = vunpack.c.l.b16 %v3637
    %v7938 = vunpack.c.h.b16 %v3637
    %v7939 = vunpack.c.l.b16 %v3638
    %v7940 = vunpack.c.h.b16 %v3638
    %v7941 = vunpack.c.l.b16 %v3639
    %v7942 = vunpack.c.h.b16 %v3639
    %v7943 = vunpack.c.l.b16 %v3640
    %v7944 = vunpack.c.h.b16 %v3640
    %v7945 = vunpack.c.l.b16 %v3641
    %v7946 = vunpack.c.h.b16 %v3641
    %v7947 = vunpack.c.l.b16 %v3642
    %v7948 = vunpack.c.h.b16 %v3642
    %v7949 = vunpack.c.l.b16 %v3643
    %v7950 = vunpack.c.h.b16 %v3643
    %v7951 = vunpack.c.l.b16 %v3644
    %v7952 = vunpack.c.h.b16 %v3644
    %v7953 = vunpack.c.l.b16 %v3645
    %v7954 = vunpack.c.h.b16 %v3645
    %v7955 = vunpack.c.l.b16 %v3646
    %v7956 = vunpack.c.h.b16 %v3646
    %v7957 = vunpack.c.l.b16 %v3647
    %v7958 = vunpack.c.h.b16 %v3647
    %v7959 = vunpack.c.l.b16 %v3648
    %v7960 = vunpack.c.h.b16 %v3648
    %v7961 = vunpack.c.l.b16 %v3649
    %v7962 = vunpack.c.h.b16 %v3649
    %v7963 = vunpack.c.l.b16 %v3650
    %v7964 = vunpack.c.h.b16 %v3650
    %v7965 = vunpack.c.l.b16 %v3651
    %v7966 = vunpack.c.h.b16 %v3651
    %v7967 = vunpack.c.l.b16 %v3652
    %v7968 = vunpack.c.h.b16 %v3652
    %v7969 = vunpack.c.l.b16 %v3653
    %v7970 = vunpack.c.h.b16 %v3653
    %v7971 = vunpack.c.l.b16 %v3654
    %v7972 = vunpack.c.h.b16 %v3654
    %v7973 = vunpack.c.l.b16 %v3655
    %v7974 = vunpack.c.h.b16 %v3655
    %v7975 = vunpack.c.l.b16 %v3656
    %v7976 = vunpack.c.h.b16 %v3656
    %v7977 = vunpack.c.l.b16 %v3657
    %v7978 = vunpack.c.h.b16 %v3657
    %v7979 = vunpack.c.l.b16 %v3658
    %v7980 = vunpack.c.h.b16 %v3658
    %v7981 = vunpack.c.l.b16 %v3659
    %v7982 = vunpack.c.h.b16 %v3659
    %v7983 = vunpack.c.l.b16 %v3660
    %v7984 = vunpack.c.h.b16 %v3660
    %v7985 = vunpack.c.l.b16 %v3661
    %v7986 = vunpack.c.h.b16 %v3661
    %v7987 = vunpack.c.l.b16 %v3662
    %v7988 = vunpack.c.h.b16 %v3662
    %v7989 = vunpack.c.l.b16 %v3663
    %v7990 = vunpack.c.h.b16 %v3663
    %v7991 = vunpack.c.l.b16 %v3664
    %v7992 = vunpack.c.h.b16 %v3664
    %v7993 = vunpack.c.l.b16 %v3665
    %v7994 = vunpack.c.h.b16 %v3665
    %v7995 = vunpack.c.l.b16 %v3666
    %v7996 = vunpack.c.h.b16 %v3666
    %v7997 = vunpack.c.l.b16 %v3667
    %v7998 = vunpack.c.h.b16 %v3667
    %v7999 = vunpack.c.l.b16 %v3668
    %v8000 = vunpack.c.h.b16 %v3668
    %v8001 = vunpack.c.l.b16 %v3669
    %v8002 = vunpack.c.h.b16 %v3669
    %v8003 = vunpack.c.l.b16 %v3670
    %v8004 = vunpack.c.h.b16 %v3670
    %v8005 = vunpack.c.l.b16 %v3671
    %v8006 = vunpack.c.h.b16 %v3671
    %v8007 = vunpack.c.l.b16 %v3672
    %v8008 = vunpack.c.h.b16 %v3672
    %v8009 = vunpack.c.l.b16 %v3673
    %v8010 = vunpack.c.h.b16 %v3673
    %v8011 = vunpack.c.l.b16 %v3674
    %v8012 = vunpack.c.h.b16 %v3674
    %v8013 = vunpack.c.l.b16 %v3675
    %v8014 = vunpack.c.h.b16 %v3675
    %v8015 = vunpack.c.l.b16 %v3676
    %v8016 = vunpack.c.h.b16 %v3676
    %v8017 = vunpack.c.l.b16 %v3677
    %v8018 = vunpack.c.h.b16 %v3677
    %v8019 = vunpack.c.l.b16 %v3678
    %v8020 = vunpack.c.h.b16 %v3678
    %v8021 = vunpack.c.l.b16 %v3679
    %v8022 = vunpack.c.h.b16 %v3679
    %v8023 = vunpack.c.l.b16 %v3680
    %v8024 = vunpack.c.h.b16 %v3680
    %v8025 = vunpack.c.l.b16 %v3681
    %v8026 = vunpack.c.h.b16 %v3681
    %v8027 = vunpack.c.l.b16 %v3682
    %v8028 = vunpack.c.h.b16 %v3682
    %v8029 = vunpack.c.l.b16 %v3683
    %v8030 = vunpack.c.h.b16 %v3683
    %v8031 = vunpack.c.l.b16 %v3684
    %v8032 = vunpack.c.h.b16 %v3684
    %v8033 = vunpack.c.l.b16 %v3685
    %v8034 = vunpack.c.h.b16 %v3685
    %v8035 = vunpack.c.l.b16 %v3686
    %v8036 = vunpack.c.h.b16 %v3686
    %v8037 = vunpack.c.l.b16 %v3687
    %v8038 = vunpack.c.h.b16 %v3687
    %v8039 = vunpack.c.l.b16 %v3688
    %v8040 = vunpack.c.h.b16 %v3688
    %v8041 = vunpack.c.l.b16 %v3689
    %v8042 = vunpack.c.h.b16 %v3689
    %v8043 = vunpack.c.l.b16 %v3690
    %v8044 = vunpack.c.h.b16 %v3690
    %v8045 = vunpack.c.l.b16 %v3691
    %v8046 = vunpack.c.h.b16 %v3691
    %v8047 = vunpack.c.l.b16 %v3692
    %v8048 = vunpack.c.h.b16 %v3692
    %v8049 = vunpack.c.l.b16 %v3693
    %v8050 = vunpack.c.h.b16 %v3693
    %v8051 = vunpack.c.l.b16 %v3694
    %v8052 = vunpack.c.h.b16 %v3694
    %v8053 = vunpack.c.l.b16 %v3695
    %v8054 = vunpack.c.h.b16 %v3695
    %v8055 = vunpack.c.l.b16 %v3696
    %v8056 = vunpack.c.h.b16 %v3696
    %v8057 = vunpack.c.l.b16 %v3697
    %v8058 = vunpack.c.h.b16 %v3697
    %v8059 = vunpack.c.l.b16 %v3698
    %v8060 = vunpack.c.h.b16 %v3698
    %v8061 = vunpack.c.l.b16 %v3699
    %v8062 = vunpack.c.h.b16 %v3699
    %v8063 = vunpack.c.l.b16 %v3700
    %v8064 = vunpack.c.h.b16 %v3700
    %v8065 = vunpack.c.l.b16 %v3701
    %v8066 = vunpack.c.h.b16 %v3701
    %v8067 = vunpack.c.l.b16 %v3702
    %v8068 = vunpack.c.h.b16 %v3702
    %v8069 = vunpack.c.l.b16 %v3703
    %v8070 = vunpack.c.h.b16 %v3703
    %v8071 = vunpack.c.l.b16 %v3704
    %v8072 = vunpack.c.h.b16 %v3704
    %v8073 = vunpack.c.l.b16 %v3705
    %v8074 = vunpack.c.h.b16 %v3705
    %v8075 = vunpack.c.l.b16 %v3706
    %v8076 = vunpack.c.h.b16 %v3706
    %v8077 = vunpack.c.l.b16 %v3707
    %v8078 = vunpack.c.h.b16 %v3707
    %v8079 = vunpack.c.l.b16 %v3708
    %v8080 = vunpack.c.h.b16 %v3708
    %v8081 = vunpack.c.l.b16 %v3709
    %v8082 = vunpack.c.h.b16 %v3709
    %v8083 = vunpack.c.l.b16 %v3710
    %v8084 = vunpack.c.h.b16 %v3710
    %v8085 = vunpack.c.l.b16 %v3711
    %v8086 = vunpack.c.h.b16 %v3711
    %v8087 = vunpack.c.l.b16 %v3712
    %v8088 = vunpack.c.h.b16 %v3712
    %v8089 = vunpack.c.l.b16 %v3713
    %v8090 = vunpack.c.h.b16 %v3713
    %v8091 = vunpack.c.l.b16 %v3714
    %v8092 = vunpack.c.h.b16 %v3714
    %v8093 = vunpack.c.l.b16 %v3715
    %v8094 = vunpack.c.h.b16 %v3715
    %v8095 = vunpack.c.l.b16 %v3716
    %v8096 = vunpack.c.h.b16 %v3716
    %v8097 = vunpack.c.l.b16 %v3717
    %v8098 = vunpack.c.h.b16 %v3717
    %v8099 = vunpack.c.l.b16 %v3718
    %v8100 = vunpack.c.h.b16 %v3718
    %v8101 = vunpack.c.l.b16 %v3719
    %v8102 = vunpack.c.h.b16 %v3719
    %v8103 = vunpack.c.l.b16 %v3720
    %v8104 = vunpack.c.h.b16 %v3720
    %v8105 = vunpack.c.l.b16 %v3721
    %v8106 = vunpack.c.h.b16 %v3721
    %v8107 = vunpack.c.l.b16 %v3722
    %v8108 = vunpack.c.h.b16 %v3722
    %v8109 = vunpack.c.l.b16 %v3723
    %v8110 = vunpack.c.h.b16 %v3723
    %v8111 = vunpack.c.l.b16 %v3724
    %v8112 = vunpack.c.h.b16 %v3724
    %v8113 = vunpack.c.l.b16 %v3725
    %v8114 = vunpack.c.h.b16 %v3725
    %v8115 = vunpack.c.l.b16 %v3726
    %v8116 = vunpack.c.h.b16 %v3726
    %v8117 = vunpack.c.l.b16 %v3727
    %v8118 = vunpack.c.h.b16 %v3727
    %v8119 = vunpack.c.l.b16 %v3728
    %v8120 = vunpack.c.h.b16 %v3728
    %v8121 = vunpack.c.l.b16 %v3729
    %v8122 = vunpack.c.h.b16 %v3729
    %v8123 = vunpack.c.l.b16 %v3730
    %v8124 = vunpack.c.h.b16 %v3730
    %v8125 = vunpack.c.l.b16 %v3731
    %v8126 = vunpack.c.h.b16 %v3731
    %v8127 = vunpack.c.l.b16 %v3732
    %v8128 = vunpack.c.h.b16 %v3732
    %v8129 = vunpack.c.l.b16 %v3733
    %v8130 = vunpack.c.h.b16 %v3733
    %v8131 = vunpack.c.l.b16 %v3734
    %v8132 = vunpack.c.h.b16 %v3734
    %v8133 = vunpack.c.l.b16 %v3735
    %v8134 = vunpack.c.h.b16 %v3735
    %v8135 = vunpack.c.l.b16 %v3736
    %v8136 = vunpack.c.h.b16 %v3736
    %v8137 = vunpack.c.l.b16 %v3737
    %v8138 = vunpack.c.h.b16 %v3737
    %v8139 = vunpack.c.l.b16 %v3738
    %v8140 = vunpack.c.h.b16 %v3738
    %v8141 = vunpack.c.l.b16 %v3739
    %v8142 = vunpack.c.h.b16 %v3739
    %v8143 = vunpack.c.l.b16 %v3740
    %v8144 = vunpack.c.h.b16 %v3740
    %v8145 = vunpack.c.l.b16 %v3741
    %v8146 = vunpack.c.h.b16 %v3741
    %v8147 = vunpack.c.l.b16 %v3742
    %v8148 = vunpack.c.h.b16 %v3742
    %v8149 = vunpack.c.l.b16 %v3743
    %v8150 = vunpack.c.h.b16 %v3743
    %v8151 = vunpack.c.l.b16 %v3744
    %v8152 = vunpack.c.h.b16 %v3744
    %v8153 = vunpack.c.l.b16 %v3745
    %v8154 = vunpack.c.h.b16 %v3745
    %v8155 = vunpack.c.l.b16 %v3746
    %v8156 = vunpack.c.h.b16 %v3746
    %v8157 = vunpack.c.l.b16 %v3747
    %v8158 = vunpack.c.h.b16 %v3747
    %v8159 = vunpack.c.l.b16 %v3748
    %v8160 = vunpack.c.h.b16 %v3748
    %v8161 = vunpack.c.l.b16 %v3749
    %v8162 = vunpack.c.h.b16 %v3749
    %v8163 = vunpack.c.l.b16 %v3750
    %v8164 = vunpack.c.h.b16 %v3750
    %v8165 = vunpack.c.l.b16 %v3751
    %v8166 = vunpack.c.h.b16 %v3751
    %v8167 = vunpack.c.l.b16 %v3752
    %v8168 = vunpack.c.h.b16 %v3752
    %v8169 = vunpack.c.l.b16 %v3753
    %v8170 = vunpack.c.h.b16 %v3753
    %v8171 = vunpack.c.l.b16 %v3754
    %v8172 = vunpack.c.h.b16 %v3754
    %v8173 = vunpack.c.l.b16 %v3755
    %v8174 = vunpack.c.h.b16 %v3755
    %v8175 = vunpack.c.l.b16 %v3756
    %v8176 = vunpack.c.h.b16 %v3756
    %v8177 = vunpack.c.l.b16 %v3757
    %v8178 = vunpack.c.h.b16 %v3757
    %v8179 = vunpack.c.l.b16 %v3758
    %v8180 = vunpack.c.h.b16 %v3758
    %v8181 = vunpack.c.l.b16 %v3759
    %v8182 = vunpack.c.h.b16 %v3759
    %v8183 = vunpack.c.l.b16 %v3760
    %v8184 = vunpack.c.h.b16 %v3760
    %v8185 = vunpack.c.l.b16 %v3761
    %v8186 = vunpack.c.h.b16 %v3761
    %v8187 = vunpack.c.l.b16 %v3762
    %v8188 = vunpack.c.h.b16 %v3762
    %v8189 = vunpack.c.l.b16 %v3763
    %v8190 = vunpack.c.h.b16 %v3763
    %v8191 = vunpack.c.l.b16 %v3764
    %v8192 = vunpack.c.h.b16 %v3764
    %v8193 = vunpack.c.l.b16 %v3765
    %v8194 = vunpack.c.h.b16 %v3765
    %v8195 = vunpack.c.l.b16 %v3766
    %v8196 = vunpack.c.h.b16 %v3766
    %v8197 = vunpack.c.l.b16 %v3767
    %v8198 = vunpack.c.h.b16 %v3767
    %v8199 = vunpack.c.l.b16 %v3768
    %v8200 = vunpack.c.h.b16 %v3768
    %v8201 = vunpack.c.l.b16 %v3769
    %v8202 = vunpack.c.h.b16 %v3769
    %v8203 = vunpack.c.l.b16 %v3770
    %v8204 = vunpack.c.h.b16 %v3770
    %v8205 = vunpack.c.l.b16 %v3771
    %v8206 = vunpack.c.h.b16 %v3771
    %v8207 = vunpack.c.l.b16 %v3772
    %v8208 = vunpack.c.h.b16 %v3772
    %v8209 = vunpack.c.l.b16 %v3773
    %v8210 = vunpack.c.h.b16 %v3773
    %v8211 = vunpack.c.l.b16 %v3774
    %v8212 = vunpack.c.h.b16 %v3774
    %v8213 = vunpack.c.l.b16 %v3775
    %v8214 = vunpack.c.h.b16 %v3775
    %v8215 = vunpack.c.l.b16 %v3776
    %v8216 = vunpack.c.h.b16 %v3776
    %v8217 = vunpack.c.l.b16 %v3777
    %v8218 = vunpack.c.h.b16 %v3777
    %v8219 = vunpack.c.l.b16 %v3778
    %v8220 = vunpack.c.h.b16 %v3778
    %v8221 = vunpack.c.l.b16 %v3779
    %v8222 = vunpack.c.h.b16 %v3779
    %v8223 = vunpack.c.l.b16 %v3780
    %v8224 = vunpack.c.h.b16 %v3780
    %v8225 = vunpack.c.l.b16 %v3781
    %v8226 = vunpack.c.h.b16 %v3781
    %v8227 = vunpack.c.l.b16 %v3782
    %v8228 = vunpack.c.h.b16 %v3782
    %v8229 = vunpack.c.l.b16 %v3783
    %v8230 = vunpack.c.h.b16 %v3783
    %v8231 = vunpack.c.l.b16 %v3784
    %v8232 = vunpack.c.h.b16 %v3784
    %v8233 = vunpack.c.l.b16 %v3785
    %v8234 = vunpack.c.h.b16 %v3785
    %v8235 = vunpack.c.l.b16 %v3786
    %v8236 = vunpack.c.h.b16 %v3786
    %v8237 = vunpack.c.l.b16 %v3787
    %v8238 = vunpack.c.h.b16 %v3787
    %v8239 = vunpack.c.l.b16 %v3788
    %v8240 = vunpack.c.h.b16 %v3788
    %v8241 = vunpack.c.l.b16 %v3789
    %v8242 = vunpack.c.h.b16 %v3789
    %v8243 = vunpack.c.l.b16 %v3790
    %v8244 = vunpack.c.h.b16 %v3790
    %v8245 = vunpack.c.l.b16 %v3791
    %v8246 = vunpack.c.h.b16 %v3791
    %v8247 = vunpack.c.l.b16 %v3792
    %v8248 = vunpack.c.h.b16 %v3792
    %v8249 = vunpack.c.l.b16 %v3793
    %v8250 = vunpack.c.h.b16 %v3793
    %v8251 = vunpack.c.l.b16 %v3794
    %v8252 = vunpack.c.h.b16 %v3794
    %v8253 = vunpack.c.l.b16 %v3795
    %v8254 = vunpack.c.h.b16 %v3795
    %v8255 = vunpack.c.l.b16 %v3796
    %v8256 = vunpack.c.h.b16 %v3796
    %v8257 = vunpack.c.l.b16 %v3797
    %v8258 = vunpack.c.h.b16 %v3797
    %v8259 = vunpack.c.l.b16 %v3798
    %v8260 = vunpack.c.h.b16 %v3798
    %v8261 = vunpack.c.l.b16 %v3799
    %v8262 = vunpack.c.h.b16 %v3799
    %v8263 = vunpack.c.l.b16 %v3800
    %v8264 = vunpack.c.h.b16 %v3800
    %v8265 = vunpack.c.l.b16 %v3801
    %v8266 = vunpack.c.h.b16 %v3801
    %v8267 = vunpack.c.l.b16 %v3802
    %v8268 = vunpack.c.h.b16 %v3802
    %v8269 = vunpack.c.l.b16 %v3803
    %v8270 = vunpack.c.h.b16 %v3803
    %v8271 = vunpack.c.l.b16 %v3804
    %v8272 = vunpack.c.h.b16 %v3804
    %v8273 = vunpack.c.l.b16 %v3805
    %v8274 = vunpack.c.h.b16 %v3805
    %v8275 = vunpack.c.l.b16 %v3806
    %v8276 = vunpack.c.h.b16 %v3806
    %v8277 = vunpack.c.l.b16 %v3807
    %v8278 = vunpack.c.h.b16 %v3807
    %v8279 = vunpack.c.l.b16 %v3808
    %v8280 = vunpack.c.h.b16 %v3808
    %v8281 = vunpack.c.l.b16 %v3809
    %v8282 = vunpack.c.h.b16 %v3809
    %v8283 = vunpack.c.l.b16 %v3810
    %v8284 = vunpack.c.h.b16 %v3810
    %v8285 = vunpack.c.l.b16 %v3811
    %v8286 = vunpack.c.h.b16 %v3811
    %v8287 = vunpack.c.l.b16 %v3812
    %v8288 = vunpack.c.h.b16 %v3812
    %v8289 = vunpack.c.l.b16 %v3813
    %v8290 = vunpack.c.h.b16 %v3813
    %v8291 = vunpack.c.l.b16 %v3814
    %v8292 = vunpack.c.h.b16 %v3814
    %v8293 = vunpack.c.l.b16 %v3815
    %v8294 = vunpack.c.h.b16 %v3815
    %v8295 = vunpack.c.l.b16 %v3816
    %v8296 = vunpack.c.h.b16 %v3816
    %v8297 = vunpack.c.l.b16 %v3817
    %v8298 = vunpack.c.h.b16 %v3817
    %v8299 = vunpack.c.l.b16 %v3818
    %v8300 = vunpack.c.h.b16 %v3818
    %v8301 = vunpack.c.l.b16 %v3819
    %v8302 = vunpack.c.h.b16 %v3819
    %v8303 = vunpack.c.l.b16 %v3820
    %v8304 = vunpack.c.h.b16 %v3820
    %v8305 = vunpack.c.l.b16 %v3821
    %v8306 = vunpack.c.h.b16 %v3821
    %v8307 = vunpack.c.l.b16 %v3822
    %v8308 = vunpack.c.h.b16 %v3822
    %v8309 = vunpack.c.l.b16 %v3823
    %v8310 = vunpack.c.h.b16 %v3823
    %v8311 = vunpack.c.l.b16 %v3824
    %v8312 = vunpack.c.h.b16 %v3824
    %v8313 = vunpack.c.l.b16 %v3825
    %v8314 = vunpack.c.h.b16 %v3825
    %v8315 = vunpack.c.l.b16 %v3826
    %v8316 = vunpack.c.h.b16 %v3826
    %v8317 = vunpack.c.l.b16 %v3827
    %v8318 = vunpack.c.h.b16 %v3827
    %v8319 = vunpack.c.l.b16 %v3828
    %v8320 = vunpack.c.h.b16 %v3828
    %v8321 = vunpack.c.l.b16 %v3829
    %v8322 = vunpack.c.h.b16 %v3829
    %v8323 = vunpack.c.l.b16 %v3830
    %v8324 = vunpack.c.h.b16 %v3830
    %v8325 = vunpack.c.l.b16 %v3831
    %v8326 = vunpack.c.h.b16 %v3831
    %v8327 = vunpack.c.l.b16 %v3832
    %v8328 = vunpack.c.h.b16 %v3832
    %v8329 = vunpack.c.l.b16 %v3833
    %v8330 = vunpack.c.h.b16 %v3833
    %v8331 = vunpack.c.l.b16 %v3834
    %v8332 = vunpack.c.h.b16 %v3834
    %v8333 = vunpack.c.l.b16 %v3835
    %v8334 = vunpack.c.h.b16 %v3835
    %v8335 = vunpack.c.l.b16 %v3836
    %v8336 = vunpack.c.h.b16 %v3836
    %v8337 = vunpack.c.l.b16 %v3837
    %v8338 = vunpack.c.h.b16 %v3837
    %v8339 = vunpack.c.l.b16 %v3838
    %v8340 = vunpack.c.h.b16 %v3838
    %v8341 = vunpack.c.l.b16 %v3839
    %v8342 = vunpack.c.h.b16 %v3839
    %v8343 = vunpack.c.l.b16 %v3840
    %v8344 = vunpack.c.h.b16 %v3840
    %v8345 = vunpack.c.l.b16 %v3841
    %v8346 = vunpack.c.h.b16 %v3841
    %v8347 = vunpack.c.l.b16 %v3842
    %v8348 = vunpack.c.h.b16 %v3842
    %v8349 = vunpack.c.l.b16 %v3843
    %v8350 = vunpack.c.h.b16 %v3843
    %v8351 = vunpack.c.l.b16 %v3844
    %v8352 = vunpack.c.h.b16 %v3844
    %v8353 = vunpack.c.l.b16 %v3845
    %v8354 = vunpack.c.h.b16 %v3845
    %v8355 = vunpack.c.l.b16 %v3846
    %v8356 = vunpack.c.h.b16 %v3846
    %v8357 = vunpack.c.l.b16 %v3847
    %v8358 = vunpack.c.h.b16 %v3847
    %v8359 = vunpack.c.l.b16 %v3848
    %v8360 = vunpack.c.h.b16 %v3848
    %v8361 = vunpack.c.l.b16 %v3849
    %v8362 = vunpack.c.h.b16 %v3849
    %v8363 = vunpack.c.l.b16 %v3850
    %v8364 = vunpack.c.h.b16 %v3850
    %v8365 = vunpack.c.l.b16 %v3851
    %v8366 = vunpack.c.h.b16 %v3851
    %v8367 = vunpack.c.l.b16 %v3852
    %v8368 = vunpack.c.h.b16 %v3852
    %v8369 = vunpack.c.l.b16 %v3853
    %v8370 = vunpack.c.h.b16 %v3853
    %v8371 = vunpack.c.l.b16 %v3854
    %v8372 = vunpack.c.h.b16 %v3854
    %v8373 = vunpack.c.l.b16 %v3855
    %v8374 = vunpack.c.h.b16 %v3855
    %v8375 = vunpack.c.l.b16 %v3856
    %v8376 = vunpack.c.h.b16 %v3856
    %v8377 = vunpack.c.l.b16 %v3857
    %v8378 = vunpack.c.h.b16 %v3857
    %v8379 = vunpack.c.l.b16 %v3858
    %v8380 = vunpack.c.h.b16 %v3858
    %v8381 = vunpack.c.l.b16 %v3859
    %v8382 = vunpack.c.h.b16 %v3859
    %v8383 = vunpack.c.l.b16 %v3860
    %v8384 = vunpack.c.h.b16 %v3860
    %v8385 = vunpack.c.l.b16 %v3861
    %v8386 = vunpack.c.h.b16 %v3861
    %v8387 = vunpack.c.l.b16 %v3862
    %v8388 = vunpack.c.h.b16 %v3862
    %v8389 = vunpack.c.l.b16 %v3863
    %v8390 = vunpack.c.h.b16 %v3863
    %v8391 = vunpack.c.l.b16 %v3864
    %v8392 = vunpack.c.h.b16 %v3864
    %v8393 = vunpack.c.l.b16 %v3865
    %v8394 = vunpack.c.h.b16 %v3865
    %v8395 = vunpack.c.l.b16 %v3866
    %v8396 = vunpack.c.h.b16 %v3866
    %v8397 = vunpack.c.l.b16 %v3867
    %v8398 = vunpack.c.h.b16 %v3867
    %v8399 = vunpack.c.l.b16 %v3868
    %v8400 = vunpack.c.h.b16 %v3868
    %v8401 = vunpack.c.l.b16 %v3869
    %v8402 = vunpack.c.h.b16 %v3869
    %v8403 = vunpack.c.l.b16 %v3870
    %v8404 = vunpack.c.h.b16 %v3870
    %v8405 = vunpack.c.l.b16 %v3871
    %v8406 = vunpack.c.h.b16 %v3871
    %v8407 = vunpack.c.l.b16 %v3872
    %v8408 = vunpack.c.h.b16 %v3872
    %v8409 = vunpack.c.l.b16 %v3873
    %v8410 = vunpack.c.h.b16 %v3873
    %v8411 = vunpack.c.l.b16 %v3874
    %v8412 = vunpack.c.h.b16 %v3874
    %v8413 = vunpack.c.l.b16 %v3875
    %v8414 = vunpack.c.h.b16 %v3875
    %v8415 = vunpack.c.l.b16 %v3876
    %v8416 = vunpack.c.h.b16 %v3876
    %v8417 = vunpack.c.l.b16 %v3877
    %v8418 = vunpack.c.h.b16 %v3877
    %v8419 = vunpack.c.l.b16 %v3878
    %v8420 = vunpack.c.h.b16 %v3878
    %v8421 = vunpack.c.l.b16 %v3879
    %v8422 = vunpack.c.h.b16 %v3879
    %v8423 = vunpack.c.l.b16 %v3880
    %v8424 = vunpack.c.h.b16 %v3880
    %v8425 = vunpack.c.l.b16 %v3881
    %v8426 = vunpack.c.h.b16 %v3881
    %v8427 = vunpack.c.l.b16 %v3882
    %v8428 = vunpack.c.h.b16 %v3882
    %v8429 = vunpack.c.l.b16 %v3883
    %v8430 = vunpack.c.h.b16 %v3883
    %v8431 = vunpack.c.l.b16 %v3884
    %v8432 = vunpack.c.h.b16 %v3884
    %v8433 = vunpack.c.l.b16 %v3885
    %v8434 = vunpack.c.h.b16 %v3885
    %v8435 = vunpack.c.l.b16 %v3886
    %v8436 = vunpack.c.h.b16 %v3886
    %v8437 = vunpack.c.l.b16 %v3887
    %v8438 = vunpack.c.h.b16 %v3887
    %v8439 = vunpack.c.l.b16 %v3888
    %v8440 = vunpack.c.h.b16 %v3888
    %v8441 = vunpack.c.l.b16 %v3889
    %v8442 = vunpack.c.h.b16 %v3889
    %v8443 = vunpack.c.l.b16 %v3890
    %v8444 = vunpack.c.h.b16 %v3890
    %v8445 = vunpack.c.l.b16 %v3891
    %v8446 = vunpack.c.h.b16 %v3891
    %v8447 = vunpack.c.l.b16 %v3892
    %v8448 = vunpack.c.h.b16 %v3892
    %v8449 = vunpack.c.l.b16 %v3893
    %v8450 = vunpack.c.h.b16 %v3893
    %v8451 = vunpack.c.l.b16 %v3894
    %v8452 = vunpack.c.h.b16 %v3894
    %v8453 = vunpack.c.l.b16 %v3895
    %v8454 = vunpack.c.h.b16 %v3895
    %v8455 = vunpack.c.l.b16 %v3896
    %v8456 = vunpack.c.h.b16 %v3896
    %v8457 = vunpack.c.l.b16 %v3897
    %v8458 = vunpack.c.h.b16 %v3897
    %v8459 = vunpack.c.l.b16 %v3898
    %v8460 = vunpack.c.h.b16 %v3898
    %v8461 = vunpack.c.l.b16 %v3899
    %v8462 = vunpack.c.h.b16 %v3899
    %v8463 = vunpack.c.l.b16 %v3900
    %v8464 = vunpack.c.h.b16 %v3900
    %v8465 = vunpack.c.l.b16 %v3901
    %v8466 = vunpack.c.h.b16 %v3901
    %v8467 = vunpack.c.l.b16 %v3902
    %v8468 = vunpack.c.h.b16 %v3902
    %v8469 = vunpack.c.l.b16 %v3903
    %v8470 = vunpack.c.h.b16 %v3903
    %v8471 = vunpack.c.l.b16 %v3904
    %v8472 = vunpack.c.h.b16 %v3904
    %v8473 = vunpack.c.l.b16 %v3905
    %v8474 = vunpack.c.h.b16 %v3905
    %v8475 = vunpack.c.l.b16 %v3906
    %v8476 = vunpack.c.h.b16 %v3906
    %v8477 = vunpack.c.l.b16 %v3907
    %v8478 = vunpack.c.h.b16 %v3907
    %v8479 = vunpack.c.l.b16 %v3908
    %v8480 = vunpack.c.h.b16 %v3908
    %v8481 = vunpack.c.l.b16 %v3909
    %v8482 = vunpack.c.h.b16 %v3909
    %v8483 = vunpack.c.l.b16 %v3910
    %v8484 = vunpack.c.h.b16 %v3910
    %v8485 = vunpack.c.l.b16 %v3911
    %v8486 = vunpack.c.h.b16 %v3911
    %v8487 = vunpack.c.l.b16 %v3912
    %v8488 = vunpack.c.h.b16 %v3912
    %v8489 = vunpack.c.l.b16 %v3913
    %v8490 = vunpack.c.h.b16 %v3913
    %v8491 = vunpack.c.l.b16 %v3914
    %v8492 = vunpack.c.h.b16 %v3914
    %v8493 = vunpack.c.l.b16 %v3915
    %v8494 = vunpack.c.h.b16 %v3915
    %v8495 = vunpack.c.l.b16 %v3916
    %v8496 = vunpack.c.h.b16 %v3916
    %v8497 = vunpack.c.l.b16 %v3917
    %v8498 = vunpack.c.h.b16 %v3917
    %v8499 = vunpack.c.l.b16 %v3918
    %v8500 = vunpack.c.h.b16 %v3918
    %v8501 = vunpack.c.l.b16 %v3919
    %v8502 = vunpack.c.h.b16 %v3919
    %v8503 = vunpack.c.l.b16 %v3920
    %v8504 = vunpack.c.h.b16 %v3920
    %v8505 = vunpack.c.l.b16 %v3921
    %v8506 = vunpack.c.h.b16 %v3921
    %v8507 = vunpack.c.l.b16 %v3922
    %v8508 = vunpack.c.h.b16 %v3922
    %v8509 = vunpack.c.l.b16 %v3923
    %v8510 = vunpack.c.h.b16 %v3923
    %v8511 = vunpack.c.l.b16 %v3924
    %v8512 = vunpack.c.h.b16 %v3924
    %v8513 = vunpack.c.l.b16 %v3925
    %v8514 = vunpack.c.h.b16 %v3925
    %v8515 = vunpack.c.l.b16 %v3926
    %v8516 = vunpack.c.h.b16 %v3926
    %v8517 = vunpack.c.l.b16 %v3927
    %v8518 = vunpack.c.h.b16 %v3927
    %v8519 = vunpack.c.l.b16 %v3928
    %v8520 = vunpack.c.h.b16 %v3928
    %v8521 = vunpack.c.l.b16 %v3929
    %v8522 = vunpack.c.h.b16 %v3929
    %v8523 = vunpack.c.l.b16 %v3930
    %v8524 = vunpack.c.h.b16 %v3930
    %v8525 = vunpack.c.l.b16 %v3931
    %v8526 = vunpack.c.h.b16 %v3931
    %v8527 = vunpack.c.l.b16 %v3932
    %v8528 = vunpack.c.h.b16 %v3932
    %v8529 = vunpack.c.l.b16 %v3933
    %v8530 = vunpack.c.h.b16 %v3933
    %v8531 = vunpack.c.l.b16 %v3934
    %v8532 = vunpack.c.h.b16 %v3934
    %v8533 = vunpack.c.l.b16 %v3935
    %v8534 = vunpack.c.h.b16 %v3935
    %v8535 = vunpack.c.l.b16 %v3936
    %v8536 = vunpack.c.h.b16 %v3936
    %v8537 = vunpack.c.l.b16 %v3937
    %v8538 = vunpack.c.h.b16 %v3937
    %v8539 = vunpack.c.l.b16 %v3938
    %v8540 = vunpack.c.h.b16 %v3938
    %v8541 = vunpack.c.l.b16 %v3939
    %v8542 = vunpack.c.h.b16 %v3939
    %v8543 = vunpack.c.l.b16 %v3940
    %v8544 = vunpack.c.h.b16 %v3940
    %v8545 = vunpack.c.l.b16 %v3941
    %v8546 = vunpack.c.h.b16 %v3941
    %v8547 = vunpack.c.l.b16 %v3942
    %v8548 = vunpack.c.h.b16 %v3942
    %v8549 = vunpack.c.l.b16 %v3943
    %v8550 = vunpack.c.h.b16 %v3943
    %v8551 = vunpack.c.l.b16 %v3944
    %v8552 = vunpack.c.h.b16 %v3944
    %v8553 = vunpack.c.l.b16 %v3945
    %v8554 = vunpack.c.h.b16 %v3945
    %v8555 = vunpack.c.l.b16 %v3946
    %v8556 = vunpack.c.h.b16 %v3946
    %v8557 = vunpack.c.l.b16 %v3947
    %v8558 = vunpack.c.h.b16 %v3947
    %v8559 = vunpack.c.l.b16 %v3948
    %v8560 = vunpack.c.h.b16 %v3948
    %v8561 = vunpack.c.l.b16 %v3949
    %v8562 = vunpack.c.h.b16 %v3949
    %v8563 = vunpack.c.l.b16 %v3950
    %v8564 = vunpack.c.h.b16 %v3950
    %v8565 = vunpack.c.l.b16 %v3951
    %v8566 = vunpack.c.h.b16 %v3951
    %v8567 = vunpack.c.l.b16 %v3952
    %v8568 = vunpack.c.h.b16 %v3952
    %v8569 = vunpack.c.l.b16 %v3953
    %v8570 = vunpack.c.h.b16 %v3953
    %v8571 = vunpack.c.l.b16 %v3954
    %v8572 = vunpack.c.h.b16 %v3954
    %v8573 = vunpack.c.l.b16 %v3955
    %v8574 = vunpack.c.h.b16 %v3955
    %v8575 = vunpack.c.l.b16 %v3956
    %v8576 = vunpack.c.h.b16 %v3956
    %v8577 = vunpack.c.l.b16 %v3957
    %v8578 = vunpack.c.h.b16 %v3957
    %v8579 = vunpack.c.l.b16 %v3958
    %v8580 = vunpack.c.h.b16 %v3958
    %v8581 = vunpack.c.l.b16 %v3959
    %v8582 = vunpack.c.h.b16 %v3959
    %v8583 = vunpack.c.l.b16 %v3960
    %v8584 = vunpack.c.h.b16 %v3960
    %v8585 = vunpack.c.l.b16 %v3961
    %v8586 = vunpack.c.h.b16 %v3961
    %v8587 = vunpack.c.l.b16 %v3962
    %v8588 = vunpack.c.h.b16 %v3962
    %v8589 = vunpack.c.l.b16 %v3963
    %v8590 = vunpack.c.h.b16 %v3963
    %v8591 = vunpack.c.l.b16 %v3964
    %v8592 = vunpack.c.h.b16 %v3964
    %v8593 = vunpack.c.l.b16 %v3965
    %v8594 = vunpack.c.h.b16 %v3965
    %v8595 = vunpack.c.l.b16 %v3966
    %v8596 = vunpack.c.h.b16 %v3966
    %v8597 = vunpack.c.l.b16 %v3967
    %v8598 = vunpack.c.h.b16 %v3967
    %v8599 = vunpack.c.l.b16 %v3968
    %v8600 = vunpack.c.h.b16 %v3968
    %v8601 = vunpack.c.l.b16 %v3969
    %v8602 = vunpack.c.h.b16 %v3969
    %v8603 = vunpack.c.l.b16 %v3970
    %v8604 = vunpack.c.h.b16 %v3970
    %v8605 = vunpack.c.l.b16 %v3971
    %v8606 = vunpack.c.h.b16 %v3971
    %v8607 = vunpack.c.l.b16 %v3972
    %v8608 = vunpack.c.h.b16 %v3972
    %v8609 = vunpack.c.l.b16 %v3973
    %v8610 = vunpack.c.h.b16 %v3973
    %v8611 = vunpack.c.l.b16 %v3974
    %v8612 = vunpack.c.h.b16 %v3974
    %v8613 = vunpack.c.l.b16 %v3975
    %v8614 = vunpack.c.h.b16 %v3975
    %v8615 = vunpack.c.l.b16 %v3976
    %v8616 = vunpack.c.h.b16 %v3976
    %v8617 = vunpack.c.l.b16 %v3977
    %v8618 = vunpack.c.h.b16 %v3977
    %v8619 = vunpack.c.l.b16 %v3978
    %v8620 = vunpack.c.h.b16 %v3978
    %v8621 = vunpack.c.l.b16 %v3979
    %v8622 = vunpack.c.h.b16 %v3979
    %v8623 = vunpack.c.l.b16 %v3980
    %v8624 = vunpack.c.h.b16 %v3980
    %v8625 = vunpack.c.l.b16 %v3981
    %v8626 = vunpack.c.h.b16 %v3981
    %v8627 = vunpack.c.l.b16 %v3982
    %v8628 = vunpack.c.h.b16 %v3982
    %v8629 = vunpack.c.l.b16 %v3983
    %v8630 = vunpack.c.h.b16 %v3983
    %v8631 = vunpack.c.l.b16 %v3984
    %v8632 = vunpack.c.h.b16 %v3984
    %v8633 = vunpack.c.l.b16 %v3985
    %v8634 = vunpack.c.h.b16 %v3985
    %v8635 = vunpack.c.l.b16 %v3986
    %v8636 = vunpack.c.h.b16 %v3986
    %v8637 = vunpack.c.l.b16 %v3987
    %v8638 = vunpack.c.h.b16 %v3987
    %v8639 = vunpack.c.l.b16 %v3988
    %v8640 = vunpack.c.h.b16 %v3988
    %v8641 = vunpack.c.l.b16 %v3989
    %v8642 = vunpack.c.h.b16 %v3989
    %v8643 = vunpack.c.l.b16 %v3990
    %v8644 = vunpack.c.h.b16 %v3990
    %v8645 = vunpack.c.l.b16 %v3991
    %v8646 = vunpack.c.h.b16 %v3991
    %v8647 = vunpack.c.l.b16 %v3992
    %v8648 = vunpack.c.h.b16 %v3992
    %v8649 = vunpack.c.l.b16 %v3993
    %v8650 = vunpack.c.h.b16 %v3993
    %v8651 = vunpack.c.l.b16 %v3994
    %v8652 = vunpack.c.h.b16 %v3994
    %v8653 = vunpack.c.l.b16 %v3995
    %v8654 = vunpack.c.h.b16 %v3995
    %v8655 = vunpack.c.l.b16 %v3996
    %v8656 = vunpack.c.h.b16 %v3996
    %v8657 = vunpack.c.l.b16 %v3997
    %v8658 = vunpack.c.h.b16 %v3997
    %v8659 = vunpack.c.l.b16 %v3998
    %v8660 = vunpack.c.h.b16 %v3998
    %v8661 = vpack.c.b16 %v5613, %v5589
    %v8662 = vpack.c.b16 %v5614, %v5590
    %v8663 = vpack.c.b16 %v5615, %v5591
    %v8664 = vpack.c.b16 %v5616, %v5592
    %v8665 = vpack.c.b16 %v5617, %v5593
    %v8666 = vpack.c.b16 %v5618, %v5594
    %v8667 = vpack.c.b16 %v5619, %v5595
    %v8668 = vpack.c.b16 %v5620, %v5596
    %v8669 = vpack.c.b16 %v5621, %v5597
    %v8670 = vpack.c.b16 %v5622, %v5598
    %v8671 = vpack.c.b16 %v5623, %v5599
    %v8672 = vpack.c.b16 %v5624, %v5600
    %v8673 = vpack.c.b16 %v5625, %v5601
    %v8674 = vpack.c.b16 %v5626, %v5602
    %v8675 = vpack.c.b16 %v5627, %v5603
    %v8676 = vpack.c.b16 %v5628, %v5604
    %v8677 = vpack.c.b16 %v5629, %v5605
    %v8678 = vpack.c.b16 %v5630, %v5606
    %v8679 = vpack.c.b16 %v5631, %v5607
    %v8680 = vpack.c.b16 %v5632, %v5608
    %v8681 = vpack.c.b16 %v5633, %v5609
    %v8682 = vpack.c.b16 %v5634, %v5610
    %v8683 = vpack.c.b16 %v5635, %v5611
    %v8684 = vpack.c.b16 %v5636, %v5612
    %v8685 = vpack.c.b16 %v5661, %v5637
    %v8686 = vpack.c.b16 %v5662, %v5638
    %v8687 = vpack.c.b16 %v5663, %v5639
    %v8688 = vpack.c.b16 %v5664, %v5640
    %v8689 = vpack.c.b16 %v5665, %v5641
    %v8690 = vpack.c.b16 %v5666, %v5642
    %v8691 = vpack.c.b16 %v5667, %v5643
    %v8692 = vpack.c.b16 %v5668, %v5644
    %v8693 = vpack.c.b16 %v5669, %v5645
    %v8694 = vpack.c.b16 %v5670, %v5646
    %v8695 = vpack.c.b16 %v5671, %v5647
    %v8696 = vpack.c.b16 %v5672, %v5648
    %v8697 = vpack.c.b16 %v5673, %v5649
    %v8698 = vpack.c.b16 %v5674, %v5650
    %v8699 = vpack.c.b16 %v5675, %v5651
    %v8700 = vpack.c.b16 %v5676, %v5652
    %v8701 = vpack.c.b16 %v5677, %v5653
    %v8702 = vpack.c.b16 %v5678, %v5654
    %v8703 = vpack.c.b16 %v5679, %v5655
    %v8704 = vpack.c.b16 %v5680, %v5656
    %v8705 = vpack.c.b16 %v5681, %v5657
    %v8706 = vpack.c.b16 %v5682, %v5658
    %v8707 = vpack.c.b16 %v5683, %v5659
    %v8708 = vpack.c.b16 %v5684, %v5660
    %v8709 = vpack.c.b16 %v5709, %v5685
    %v8710 = vpack.c.b16 %v5710, %v5686
    %v8711 = vpack.c.b16 %v5711, %v5687
    %v8712 = vpack.c.b16 %v5712, %v5688
    %v8713 = vpack.c.b16 %v5713, %v5689
    %v8714 = vpack.c.b16 %v5714, %v5690
    %v8715 = vpack.c.b16 %v5715, %v5691
    %v8716 = vpack.c.b16 %v5716, %v5692
    %v8717 = vpack.c.b16 %v5717, %v5693
    %v8718 = vpack.c.b16 %v5718, %v5694
    %v8719 = vpack.c.b16 %v5719, %v5695
    %v8720 = vpack.c.b16 %v5720, %v5696
    %v8721 = vpack.c.b16 %v5721, %v5697
    %v8722 = vpack.c.b16 %v5722, %v5698
    %v8723 = vpack.c.b16 %v5723, %v5699
    %v8724 = vpack.c.b16 %v5724, %v5700
    %v8725 = vpack.c.b16 %v5725, %v5701
    %v8726 = vpack.c.b16 %v5726, %v5702
    %v8727 = vpack.c.b16 %v5727, %v5703
    %v8728 = vpack.c.b16 %v5728, %v5704
    %v8729 = vpack.c.b16 %v5729, %v5705
    %v8730 = vpack.c.b16 %v5730, %v5706
    %v8731 = vpack.c.b16 %v5731, %v5707
    %v8732 = vpack.c.b16 %v5732, %v5708
    %v8733 = vpack.c.b16 %v5757, %v5733
    %v8734 = vpack.c.b16 %v5758, %v5734
    %v8735 = vpack.c.b16 %v5759, %v5735
    %v8736 = vpack.c.b16 %v5760, %v5736
    %v8737 = vpack.c.b16 %v5761, %v5737
    %v8738 = vpack.c.b16 %v5762, %v5738
    %v8739 = vpack.c.b16 %v5763, %v5739
    %v8740 = vpack.c.b16 %v5764, %v5740
    %v8741 = vpack.c.b16 %v5765, %v5741
    %v8742 = vpack.c.b16 %v5766, %v5742
    %v8743 = vpack.c.b16 %v5767, %v5743
    %v8744 = vpack.c.b16 %v5768, %v5744
    %v8745 = vpack.c.b16 %v5769, %v5745
    %v8746 = vpack.c.b16 %v5770, %v5746
    %v8747 = vpack.c.b16 %v5771, %v5747
    %v8748 = vpack.c.b16 %v5772, %v5748
    %v8749 = vpack.c.b16 %v5773, %v5749
    %v8750 = vpack.c.b16 %v5774, %v5750
    %v8751 = vpack.c.b16 %v5775, %v5751
    %v8752 = vpack.c.b16 %v5776, %v5752
    %v8753 = vpack.c.b16 %v5777, %v5753
    %v8754 = vpack.c.b16 %v5778, %v5754
    %v8755 = vpack.c.b16 %v5779, %v5755
    %v8756 = vpack.c.b16 %v5780, %v5756
    %v8757 = vpack.c.b16 %v5805, %v5781
    %v8758 = vpack.c.b16 %v5806, %v5782
    %v8759 = vpack.c.b16 %v5807, %v5783
    %v8760 = vpack.c.b16 %v5808, %v5784
    %v8761 = vpack.c.b16 %v5809, %v5785
    %v8762 = vpack.c.b16 %v5810, %v5786
    %v8763 = vpack.c.b16 %v5811, %v5787
    %v8764 = vpack.c.b16 %v5812, %v5788
    %v8765 = vpack.c.b16 %v5813, %v5789
    %v8766 = vpack.c.b16 %v5814, %v5790
    %v8767 = vpack.c.b16 %v5815, %v5791
    %v8768 = vpack.c.b16 %v5816, %v5792
    %v8769 = vpack.c.b16 %v5817, %v5793
    %v8770 = vpack.c.b16 %v5818, %v5794
    %v8771 = vpack.c.b16 %v5819, %v5795
    %v8772 = vpack.c.b16 %v5820, %v5796
    %v8773 = vpack.c.b16 %v5821, %v5797
    %v8774 = vpack.c.b16 %v5822, %v5798
    %v8775 = vpack.c.b16 %v5823, %v5799
    %v8776 = vpack.c.b16 %v5824, %v5800
    %v8777 = vpack.c.b16 %v5825, %v5801
    %v8778 = vpack.c.b16 %v5826, %v5802
    %v8779 = vpack.c.b16 %v5827, %v5803
    %v8780 = vpack.c.b16 %v5828, %v5804
    %v8781 = vpack.c.b16 %v5853, %v5829
    %v8782 = vpack.c.b16 %v5854, %v5830
    %v8783 = vpack.c.b16 %v5855, %v5831
    %v8784 = vpack.c.b16 %v5856, %v5832
    %v8785 = vpack.c.b16 %v5857, %v5833
    %v8786 = vpack.c.b16 %v5858, %v5834
    %v8787 = vpack.c.b16 %v5859, %v5835
    %v8788 = vpack.c.b16 %v5860, %v5836
    %v8789 = vpack.c.b16 %v5861, %v5837
    %v8790 = vpack.c.b16 %v5862, %v5838
    %v8791 = vpack.c.b16 %v5863, %v5839
    %v8792 = vpack.c.b16 %v5864, %v5840
    %v8793 = vpack.c.b16 %v5865, %v5841
    %v8794 = vpack.c.b16 %v5866, %v5842
    %v8795 = vpack.c.b16 %v5867, %v5843
    %v8796 = vpack.c.b16 %v5868, %v5844
    %v8797 = vpack.c.b16 %v5869, %v5845
    %v8798 = vpack.c.b16 %v5870, %v5846
    %v8799 = vpack.c.b16 %v5871, %v5847
    %v8800 = vpack.c.b16 %v5872, %v5848
    %v8801 = vpack.c.b16 %v5873, %v5849
    %v8802 = vpack.c.b16 %v5874, %v5850
    %v8803 = vpack.c.b16 %v5875, %v5851
    %v8804 = vpack.c.b16 %v5876, %v5852
    %v8805 = vpack.c.b16 %v5901, %v5877
    %v8806 = vpack.c.b16 %v5902, %v5878
    %v8807 = vpack.c.b16 %v5903, %v5879
    %v8808 = vpack.c.b16 %v5904, %v5880
    %v8809 = vpack.c.b16 %v5905, %v5881
    %v8810 = vpack.c.b16 %v5906, %v5882
    %v8811 = vpack.c.b16 %v5907, %v5883
    %v8812 = vpack.c.b16 %v5908, %v5884
    %v8813 = vpack.c.b16 %v5909, %v5885
    %v8814 = vpack.c.b16 %v5910, %v5886
    %v8815 = vpack.c.b16 %v5911, %v5887
    %v8816 = vpack.c.b16 %v5912, %v5888
    %v8817 = vpack.c.b16 %v5913, %v5889
    %v8818 = vpack.c.b16 %v5914, %v5890
    %v8819 = vpack.c.b16 %v5915, %v5891
    %v8820 = vpack.c.b16 %v5916, %v5892
    %v8821 = vpack.c.b16 %v5917, %v5893
    %v8822 = vpack.c.b16 %v5918, %v5894
    %v8823 = vpack.c.b16 %v5919, %v5895
    %v8824 = vpack.c.b16 %v5920, %v5896
    %v8825 = vpack.c.b16 %v5921, %v5897
    %v8826 = vpack.c.b16 %v5922, %v5898
    %v8827 = vpack.c.b16 %v5923, %v5899
    %v8828 = vpack.c.b16 %v5924, %v5900
    %v8829 = vpack.c.b16 %v5949, %v5925
    %v8830 = vpack.c.b16 %v5950, %v5926
    %v8831 = vpack.c.b16 %v5951, %v5927
    %v8832 = vpack.c.b16 %v5952, %v5928
    %v8833 = vpack.c.b16 %v5953, %v5929
    %v8834 = vpack.c.b16 %v5954, %v5930
    %v8835 = vpack.c.b16 %v5955, %v5931
    %v8836 = vpack.c.b16 %v5956, %v5932
    %v8837 = vpack.c.b16 %v5957, %v5933
    %v8838 = vpack.c.b16 %v5958, %v5934
    %v8839 = vpack.c.b16 %v5959, %v5935
    %v8840 = vpack.c.b16 %v5960, %v5936
    %v8841 = vpack.c.b16 %v5961, %v5937
    %v8842 = vpack.c.b16 %v5962, %v5938
    %v8843 = vpack.c.b16 %v5963, %v5939
    %v8844 = vpack.c.b16 %v5964, %v5940
    %v8845 = vpack.c.b16 %v5965, %v5941
    %v8846 = vpack.c.b16 %v5966, %v5942
    %v8847 = vpack.c.b16 %v5967, %v5943
    %v8848 = vpack.c.b16 %v5968, %v5944
    %v8849 = vpack.c.b16 %v5969, %v5945
    %v8850 = vpack.c.b16 %v5970, %v5946
    %v8851 = vpack.c.b16 %v5971, %v5947
    %v8852 = vpack.c.b16 %v5972, %v5948
    %v8853 = vpack.c.b16 %v5997, %v5973
    %v8854 = vpack.c.b16 %v5998, %v5974
    %v8855 = vpack.c.b16 %v5999, %v5975
    %v8856 = vpack.c.b16 %v6000, %v5976
    %v8857 = vpack.c.b16 %v6001, %v5977
    %v8858 = vpack.c.b16 %v6002, %v5978
    %v8859 = vpack.c.b16 %v6003, %v5979
    %v8860 = vpack.c.b16 %v6004, %v5980
    %v8861 = vpack.c.b16 %v6005, %v5981
    %v8862 = vpack.c.b16 %v6006, %v5982
    %v8863 = vpack.c.b16 %v6007, %v5983
    %v8864 = vpack.c.b16 %v6008, %v5984
    %v8865 = vpack.c.b16 %v6009, %v5985
    %v8866 = vpack.c.b16 %v6010, %v5986
    %v8867 = vpack.c.b16 %v6011, %v5987
    %v8868 = vpack.c.b16 %v6012, %v5988
    %v8869 = vpack.c.b16 %v6013, %v5989
    %v8870 = vpack.c.b16 %v6014, %v5990
    %v8871 = vpack.c.b16 %v6015, %v5991
    %v8872 = vpack.c.b16 %v6016, %v5992
    %v8873 = vpack.c.b16 %v6017, %v5993
    %v8874 = vpack.c.b16 %v6018, %v5994
    %v8875 = vpack.c.b16 %v6019, %v5995
    %v8876 = vpack.c.b16 %v6020, %v5996
    %v8877 = vpack.c.b16 %v6045, %v6021
    %v8878 = vpack.c.b16 %v6046, %v6022
    %v8879 = vpack.c.b16 %v6047, %v6023
    %v8880 = vpack.c.b16 %v6048, %v6024
    %v8881 = vpack.c.b16 %v6049, %v6025
    %v8882 = vpack.c.b16 %v6050, %v6026
    %v8883 = vpack.c.b16 %v6051, %v6027
    %v8884 = vpack.c.b16 %v6052, %v6028
    %v8885 = vpack.c.b16 %v6053, %v6029
    %v8886 = vpack.c.b16 %v6054, %v6030
    %v8887 = vpack.c.b16 %v6055, %v6031
    %v8888 = vpack.c.b16 %v6056, %v6032
    %v8889 = vpack.c.b16 %v6057, %v6033
    %v8890 = vpack.c.b16 %v6058, %v6034
    %v8891 = vpack.c.b16 %v6059, %v6035
    %v8892 = vpack.c.b16 %v6060, %v6036
    %v8893 = vpack.c.b16 %v6061, %v6037
    %v8894 = vpack.c.b16 %v6062, %v6038
    %v8895 = vpack.c.b16 %v6063, %v6039
    %v8896 = vpack.c.b16 %v6064, %v6040
    %v8897 = vpack.c.b16 %v6065, %v6041
    %v8898 = vpack.c.b16 %v6066, %v6042
    %v8899 = vpack.c.b16 %v6067, %v6043
    %v8900 = vpack.c.b16 %v6068, %v6044
    %v8901 = vpack.c.b16 %v6093, %v6069
    %v8902 = vpack.c.b16 %v6094, %v6070
    %v8903 = vpack.c.b16 %v6095, %v6071
    %v8904 = vpack.c.b16 %v6096, %v6072
    %v8905 = vpack.c.b16 %v6097, %v6073
    %v8906 = vpack.c.b16 %v6098, %v6074
    %v8907 = vpack.c.b16 %v6099, %v6075
    %v8908 = vpack.c.b16 %v6100, %v6076
    %v8909 = vpack.c.b16 %v6101, %v6077
    %v8910 = vpack.c.b16 %v6102, %v6078
    %v8911 = vpack.c.b16 %v6103, %v6079
    %v8912 = vpack.c.b16 %v6104, %v6080
    %v8913 = vpack.c.b16 %v6105, %v6081
    %v8914 = vpack.c.b16 %v6106, %v6082
    %v8915 = vpack.c.b16 %v6107, %v6083
    %v8916 = vpack.c.b16 %v6108, %v6084
    %v8917 = vpack.c.b16 %v6109, %v6085
    %v8918 = vpack.c.b16 %v6110, %v6086
    %v8919 = vpack.c.b16 %v6111, %v6087
    %v8920 = vpack.c.b16 %v6112, %v6088
    %v8921 = vpack.c.b16 %v6113, %v6089
    %v8922 = vpack.c.b16 %v6114, %v6090
    %v8923 = vpack.c.b16 %v6115, %v6091
    %v8924 = vpack.c.b16 %v6116, %v6092
    %v8925 = vpack.c.b16 %v6141, %v6117
    %v8926 = vpack.c.b16 %v6142, %v6118
    %v8927 = vpack.c.b16 %v6143, %v6119
    %v8928 = vpack.c.b16 %v6144, %v6120
    %v8929 = vpack.c.b16 %v6145, %v6121
    %v8930 = vpack.c.b16 %v6146, %v6122
    %v8931 = vpack.c.b16 %v6147, %v6123
    %v8932 = vpack.c.b16 %v6148, %v6124
    %v8933 = vpack.c.b16 %v6149, %v6125
    %v8934 = vpack.c.b16 %v6150, %v6126
    %v8935 = vpack.c.b16 %v6151, %v6127
    %v8936 = vpack.c.b16 %v6152, %v6128
    %v8937 = vpack.c.b16 %v6153, %v6129
    %v8938 = vpack.c.b16 %v6154, %v6130
    %v8939 = vpack.c.b16 %v6155, %v6131
    %v8940 = vpack.c.b16 %v6156, %v6132
    %v8941 = vpack.c.b16 %v6157, %v6133
    %v8942 = vpack.c.b16 %v6158, %v6134
    %v8943 = vpack.c.b16 %v6159, %v6135
    %v8944 = vpack.c.b16 %v6160, %v6136
    %v8945 = vpack.c.b16 %v6161, %v6137
    %v8946 = vpack.c.b16 %v6162, %v6138
    %v8947 = vpack.c.b16 %v6163, %v6139
    %v8948 = vpack.c.b16 %v6164, %v6140
    %v8949 = vpack.c.b16 %v6189, %v6165
    %v8950 = vpack.c.b16 %v6190, %v6166
    %v8951 = vpack.c.b16 %v6191, %v6167
    %v8952 = vpack.c.b16 %v6192, %v6168
    %v8953 = vpack.c.b16 %v6193, %v6169
    %v8954 = vpack.c.b16 %v6194, %v6170
    %v8955 = vpack.c.b16 %v6195, %v6171
    %v8956 = vpack.c.b16 %v6196, %v6172
    %v8957 = vpack.c.b16 %v6197, %v6173
    %v8958 = vpack.c.b16 %v6198, %v6174
    %v8959 = vpack.c.b16 %v6199, %v6175
    %v8960 = vpack.c.b16 %v6200, %v6176
    %v8961 = vpack.c.b16 %v6201, %v6177
    %v8962 = vpack.c.b16 %v6202, %v6178
    %v8963 = vpack.c.b16 %v6203, %v6179
    %v8964 = vpack.c.b16 %v6204, %v6180
    %v8965 = vpack.c.b16 %v6205, %v6181
    %v8966 = vpack.c.b16 %v6206, %v6182
    %v8967 = vpack.c.b16 %v6207, %v6183
    %v8968 = vpack.c.b16 %v6208, %v6184
    %v8969 = vpack.c.b16 %v6209, %v6185
    %v8970 = vpack.c.b16 %v6210, %v6186
    %v8971 = vpack.c.b16 %v6211, %v6187
    %v8972 = vpack.c.b16 %v6212, %v6188
    %v8973 = vpack.c.b16 %v6237, %v6213
    %v8974 = vpack.c.b16 %v6238, %v6214
    %v8975 = vpack.c.b16 %v6239, %v6215
    %v8976 = vpack.c.b16 %v6240, %v6216
    %v8977 = vpack.c.b16 %v6241, %v6217
    %v8978 = vpack.c.b16 %v6242, %v6218
    %v8979 = vpack.c.b16 %v6243, %v6219
    %v8980 = vpack.c.b16 %v6244, %v6220
    %v8981 = vpack.c.b16 %v6245, %v6221
    %v8982 = vpack.c.b16 %v6246, %v6222
    %v8983 = vpack.c.b16 %v6247, %v6223
    %v8984 = vpack.c.b16 %v6248, %v6224
    %v8985 = vpack.c.b16 %v6249, %v6225
    %v8986 = vpack.c.b16 %v6250, %v6226
    %v8987 = vpack.c.b16 %v6251, %v6227
    %v8988 = vpack.c.b16 %v6252, %v6228
    %v8989 = vpack.c.b16 %v6253, %v6229
    %v8990 = vpack.c.b16 %v6254, %v6230
    %v8991 = vpack.c.b16 %v6255, %v6231
    %v8992 = vpack.c.b16 %v6256, %v6232
    %v8993 = vpack.c.b16 %v6257, %v6233
    %v8994 = vpack.c.b16 %v6258, %v6234
    %v8995 = vpack.c.b16 %v6259, %v6235
    %v8996 = vpack.c.b16 %v6260, %v6236
    %v8997 = vpack.c.b16 %v6285, %v6261
    %v8998 = vpack.c.b16 %v6286, %v6262
    %v8999 = vpack.c.b16 %v6287, %v6263
    %v9000 = vpack.c.b16 %v6288, %v6264
    %v9001 = vpack.c.b16 %v6289, %v6265
    %v9002 = vpack.c.b16 %v6290, %v6266
    %v9003 = vpack.c.b16 %v6291, %v6267
    %v9004 = vpack.c.b16 %v6292, %v6268
    %v9005 = vpack.c.b16 %v6293, %v6269
    %v9006 = vpack.c.b16 %v6294, %v6270
    %v9007 = vpack.c.b16 %v6295, %v6271
    %v9008 = vpack.c.b16 %v6296, %v6272
    %v9009 = vpack.c.b16 %v6297, %v6273
    %v9010 = vpack.c.b16 %v6298, %v6274
    %v9011 = vpack.c.b16 %v6299, %v6275
    %v9012 = vpack.c.b16 %v6300, %v6276
    %v9013 = vpack.c.b16 %v6301, %v6277
    %v9014 = vpack.c.b16 %v6302, %v6278
    %v9015 = vpack.c.b16 %v6303, %v6279
    %v9016 = vpack.c.b16 %v6304, %v6280
    %v9017 = vpack.c.b16 %v6305, %v6281
    %v9018 = vpack.c.b16 %v6306, %v6282
    %v9019 = vpack.c.b16 %v6307, %v6283
    %v9020 = vpack.c.b16 %v6308, %v6284
    %v9021 = vpack.c.b16 %v6333, %v6309
    %v9022 = vpack.c.b16 %v6334, %v6310
    %v9023 = vpack.c.b16 %v6335, %v6311
    %v9024 = vpack.c.b16 %v6336, %v6312
    %v9025 = vpack.c.b16 %v6337, %v6313
    %v9026 = vpack.c.b16 %v6338, %v6314
    %v9027 = vpack.c.b16 %v6339, %v6315
    %v9028 = vpack.c.b16 %v6340, %v6316
    %v9029 = vpack.c.b16 %v6341, %v6317
    %v9030 = vpack.c.b16 %v6342, %v6318
    %v9031 = vpack.c.b16 %v6343, %v6319
    %v9032 = vpack.c.b16 %v6344, %v6320
    %v9033 = vpack.c.b16 %v6345, %v6321
    %v9034 = vpack.c.b16 %v6346, %v6322
    %v9035 = vpack.c.b16 %v6347, %v6323
    %v9036 = vpack.c.b16 %v6348, %v6324
    %v9037 = vpack.c.b16 %v6349, %v6325
    %v9038 = vpack.c.b16 %v6350, %v6326
    %v9039 = vpack.c.b16 %v6351, %v6327
    %v9040 = vpack.c.b16 %v6352, %v6328
    %v9041 = vpack.c.b16 %v6353, %v6329
    %v9042 = vpack.c.b16 %v6354, %v6330
    %v9043 = vpack.c.b16 %v6355, %v6331
    %v9044 = vpack.c.b16 %v6356, %v6332
    %v9045 = vpack.c.b16 %v6381, %v6357
    %v9046 = vpack.c.b16 %v6382, %v6358
    %v9047 = vpack.c.b16 %v6383, %v6359
    %v9048 = vpack.c.b16 %v6384, %v6360
    %v9049 = vpack.c.b16 %v6385, %v6361
    %v9050 = vpack.c.b16 %v6386, %v6362
    %v9051 = vpack.c.b16 %v6387, %v6363
    %v9052 = vpack.c.b16 %v6388, %v6364
    %v9053 = vpack.c.b16 %v6389, %v6365
    %v9054 = vpack.c.b16 %v6390, %v6366
    %v9055 = vpack.c.b16 %v6391, %v6367
    %v9056 = vpack.c.b16 %v6392, %v6368
    %v9057 = vpack.c.b16 %v6393, %v6369
    %v9058 = vpack.c.b16 %v6394, %v6370
    %v9059 = vpack.c.b16 %v6395, %v6371
    %v9060 = vpack.c.b16 %v6396, %v6372
    %v9061 = vpack.c.b16 %v6397, %v6373
    %v9062 = vpack.c.b16 %v6398, %v6374
    %v9063 = vpack.c.b16 %v6399, %v6375
    %v9064 = vpack.c.b16 %v6400, %v6376
    %v9065 = vpack.c.b16 %v6401, %v6377
    %v9066 = vpack.c.b16 %v6402, %v6378
    %v9067 = vpack.c.b16 %v6403, %v6379
    %v9068 = vpack.c.b16 %v6404, %v6380
    %v9069 = vpack.c.b16 %v6429, %v6405
    %v9070 = vpack.c.b16 %v6430, %v6406
    %v9071 = vpack.c.b16 %v6431, %v6407
    %v9072 = vpack.c.b16 %v6432, %v6408
    %v9073 = vpack.c.b16 %v6433, %v6409
    %v9074 = vpack.c.b16 %v6434, %v6410
    %v9075 = vpack.c.b16 %v6435, %v6411
    %v9076 = vpack.c.b16 %v6436, %v6412
    %v9077 = vpack.c.b16 %v6437, %v6413
    %v9078 = vpack.c.b16 %v6438, %v6414
    %v9079 = vpack.c.b16 %v6439, %v6415
    %v9080 = vpack.c.b16 %v6440, %v6416
    %v9081 = vpack.c.b16 %v6441, %v6417
    %v9082 = vpack.c.b16 %v6442, %v6418
    %v9083 = vpack.c.b16 %v6443, %v6419
    %v9084 = vpack.c.b16 %v6444, %v6420
    %v9085 = vpack.c.b16 %v6445, %v6421
    %v9086 = vpack.c.b16 %v6446, %v6422
    %v9087 = vpack.c.b16 %v6447, %v6423
    %v9088 = vpack.c.b16 %v6448, %v6424
    %v9089 = vpack.c.b16 %v6449, %v6425
    %v9090 = vpack.c.b16 %v6450, %v6426
    %v9091 = vpack.c.b16 %v6451, %v6427
    %v9092 = vpack.c.b16 %v6452, %v6428
    %v9093 = vpack.c.b16 %v6477, %v6453
    %v9094 = vpack.c.b16 %v6478, %v6454
    %v9095 = vpack.c.b16 %v6479, %v6455
    %v9096 = vpack.c.b16 %v6480, %v6456
    %v9097 = vpack.c.b16 %v6481, %v6457
    %v9098 = vpack.c.b16 %v6482, %v6458
    %v9099 = vpack.c.b16 %v6483, %v6459
    %v9100 = vpack.c.b16 %v6484, %v6460
    %v9101 = vpack.c.b16 %v6485, %v6461
    %v9102 = vpack.c.b16 %v6486, %v6462
    %v9103 = vpack.c.b16 %v6487, %v6463
    %v9104 = vpack.c.b16 %v6488, %v6464
    %v9105 = vpack.c.b16 %v6489, %v6465
    %v9106 = vpack.c.b16 %v6490, %v6466
    %v9107 = vpack.c.b16 %v6491, %v6467
    %v9108 = vpack.c.b16 %v6492, %v6468
    %v9109 = vpack.c.b16 %v6493, %v6469
    %v9110 = vpack.c.b16 %v6494, %v6470
    %v9111 = vpack.c.b16 %v6495, %v6471
    %v9112 = vpack.c.b16 %v6496, %v6472
    %v9113 = vpack.c.b16 %v6497, %v6473
    %v9114 = vpack.c.b16 %v6498, %v6474
    %v9115 = vpack.c.b16 %v6499, %v6475
    %v9116 = vpack.c.b16 %v6500, %v6476
    %v9117 = vpack.c.b16 %v6525, %v6501
    %v9118 = vpack.c.b16 %v6526, %v6502
    %v9119 = vpack.c.b16 %v6527, %v6503
    %v9120 = vpack.c.b16 %v6528, %v6504
    %v9121 = vpack.c.b16 %v6529, %v6505
    %v9122 = vpack.c.b16 %v6530, %v6506
    %v9123 = vpack.c.b16 %v6531, %v6507
    %v9124 = vpack.c.b16 %v6532, %v6508
    %v9125 = vpack.c.b16 %v6533, %v6509
    %v9126 = vpack.c.b16 %v6534, %v6510
    %v9127 = vpack.c.b16 %v6535, %v6511
    %v9128 = vpack.c.b16 %v6536, %v6512
    %v9129 = vpack.c.b16 %v6537, %v6513
    %v9130 = vpack.c.b16 %v6538, %v6514
    %v9131 = vpack.c.b16 %v6539, %v6515
    %v9132 = vpack.c.b16 %v6540, %v6516
    %v9133 = vpack.c.b16 %v6541, %v6517
    %v9134 = vpack.c.b16 %v6542, %v6518
    %v9135 = vpack.c.b16 %v6543, %v6519
    %v9136 = vpack.c.b16 %v6544, %v6520
    %v9137 = vpack.c.b16 %v6545, %v6521
    %v9138 = vpack.c.b16 %v6546, %v6522
    %v9139 = vpack.c.b16 %v6547, %v6523
    %v9140 = vpack.c.b16 %v6548, %v6524
    %v9141 = vpack.c.b16 %v6573, %v6549
    %v9142 = vpack.c.b16 %v6574, %v6550
    %v9143 = vpack.c.b16 %v6575, %v6551
    %v9144 = vpack.c.b16 %v6576, %v6552
    %v9145 = vpack.c.b16 %v6577, %v6553
    %v9146 = vpack.c.b16 %v6578, %v6554
    %v9147 = vpack.c.b16 %v6579, %v6555
    %v9148 = vpack.c.b16 %v6580, %v6556
    %v9149 = vpack.c.b16 %v6581, %v6557
    %v9150 = vpack.c.b16 %v6582, %v6558
    %v9151 = vpack.c.b16 %v6583, %v6559
    %v9152 = vpack.c.b16 %v6584, %v6560
    %v9153 = vpack.c.b16 %v6585, %v6561
    %v9154 = vpack.c.b16 %v6586, %v6562
    %v9155 = vpack.c.b16 %v6587, %v6563
    %v9156 = vpack.c.b16 %v6588, %v6564
    %v9157 = vpack.c.b16 %v6589, %v6565
    %v9158 = vpack.c.b16 %v6590, %v6566
    %v9159 = vpack.c.b16 %v6591, %v6567
    %v9160 = vpack.c.b16 %v6592, %v6568
    %v9161 = vpack.c.b16 %v6593, %v6569
    %v9162 = vpack.c.b16 %v6594, %v6570
    %v9163 = vpack.c.b16 %v6595, %v6571
    %v9164 = vpack.c.b16 %v6596, %v6572
    %v9165 = vpack.c.b16 %v6621, %v6597
    %v9166 = vpack.c.b16 %v6622, %v6598
    %v9167 = vpack.c.b16 %v6623, %v6599
    %v9168 = vpack.c.b16 %v6624, %v6600
    %v9169 = vpack.c.b16 %v6625, %v6601
    %v9170 = vpack.c.b16 %v6626, %v6602
    %v9171 = vpack.c.b16 %v6627, %v6603
    %v9172 = vpack.c.b16 %v6628, %v6604
    %v9173 = vpack.c.b16 %v6629, %v6605
    %v9174 = vpack.c.b16 %v6630, %v6606
    %v9175 = vpack.c.b16 %v6631, %v6607
    %v9176 = vpack.c.b16 %v6632, %v6608
    %v9177 = vpack.c.b16 %v6633, %v6609
    %v9178 = vpack.c.b16 %v6634, %v6610
    %v9179 = vpack.c.b16 %v6635, %v6611
    %v9180 = vpack.c.b16 %v6636, %v6612
    %v9181 = vpack.c.b16 %v6637, %v6613
    %v9182 = vpack.c.b16 %v6638, %v6614
    %v9183 = vpack.c.b16 %v6639, %v6615
    %v9184 = vpack.c.b16 %v6640, %v6616
    %v9185 = vpack.c.b16 %v6641, %v6617
    %v9186 = vpack.c.b16 %v6642, %v6618
    %v9187 = vpack.c.b16 %v6643, %v6619
    %v9188 = vpack.c.b16 %v6644, %v6620
    %v9189 = vpack.c.b16 %v6669, %v6645
    %v9190 = vpack.c.b16 %v6670, %v6646
    %v9191 = vpack.c.b16 %v6671, %v6647
    %v9192 = vpack.c.b16 %v6672, %v6648
    %v9193 = vpack.c.b16 %v6673, %v6649
    %v9194 = vpack.c.b16 %v6674, %v6650
    %v9195 = vpack.c.b16 %v6675, %v6651
    %v9196 = vpack.c.b16 %v6676, %v6652
    %v9197 = vpack.c.b16 %v6677, %v6653
    %v9198 = vpack.c.b16 %v6678, %v6654
    %v9199 = vpack.c.b16 %v6679, %v6655
    %v9200 = vpack.c.b16 %v6680, %v6656
    %v9201 = vpack.c.b16 %v6681, %v6657
    %v9202 = vpack.c.b16 %v6682, %v6658
    %v9203 = vpack.c.b16 %v6683, %v6659
    %v9204 = vpack.c.b16 %v6684, %v6660
    %v9205 = vpack.c.b16 %v6685, %v6661
    %v9206 = vpack.c.b16 %v6686, %v6662
    %v9207 = vpack.c.b16 %v6687, %v6663
    %v9208 = vpack.c.b16 %v6688, %v6664
    %v9209 = vpack.c.b16 %v6689, %v6665
    %v9210 = vpack.c.b16 %v6690, %v6666
    %v9211 = vpack.c.b16 %v6691, %v6667
    %v9212 = vpack.c.b16 %v6692, %v6668
    %v9213 = vpack.c.b16 %v6717, %v6693
    %v9214 = vpack.c.b16 %v6718, %v6694
    %v9215 = vpack.c.b16 %v6719, %v6695
    %v9216 = vpack.c.b16 %v6720, %v6696
    %v9217 = vpack.c.b16 %v6721, %v6697
    %v9218 = vpack.c.b16 %v6722, %v6698
    %v9219 = vpack.c.b16 %v6723, %v6699
    %v9220 = vpack.c.b16 %v6724, %v6700
    %v9221 = vpack.c.b16 %v6725, %v6701
    %v9222 = vpack.c.b16 %v6726, %v6702
    %v9223 = vpack.c.b16 %v6727, %v6703
    %v9224 = vpack.c.b16 %v6728, %v6704
    %v9225 = vpack.c.b16 %v6729, %v6705
    %v9226 = vpack.c.b16 %v6730, %v6706
    %v9227 = vpack.c.b16 %v6731, %v6707
    %v9228 = vpack.c.b16 %v6732, %v6708
    %v9229 = vpack.c.b16 %v6733, %v6709
    %v9230 = vpack.c.b16 %v6734, %v6710
    %v9231 = vpack.c.b16 %v6735, %v6711
    %v9232 = vpack.c.b16 %v6736, %v6712
    %v9233 = vpack.c.b16 %v6737, %v6713
    %v9234 = vpack.c.b16 %v6738, %v6714
    %v9235 = vpack.c.b16 %v6739, %v6715
    %v9236 = vpack.c.b16 %v6740, %v6716
    %v9237 = vpack.c.b16 %v6765, %v6741
    %v9238 = vpack.c.b16 %v6766, %v6742
    %v9239 = vpack.c.b16 %v6767, %v6743
    %v9240 = vpack.c.b16 %v6768, %v6744
    %v9241 = vpack.c.b16 %v6769, %v6745
    %v9242 = vpack.c.b16 %v6770, %v6746
    %v9243 = vpack.c.b16 %v6771, %v6747
    %v9244 = vpack.c.b16 %v6772, %v6748
    %v9245 = vpack.c.b16 %v6773, %v6749
    %v9246 = vpack.c.b16 %v6774, %v6750
    %v9247 = vpack.c.b16 %v6775, %v6751
    %v9248 = vpack.c.b16 %v6776, %v6752
    %v9249 = vpack.c.b16 %v6777, %v6753
    %v9250 = vpack.c.b16 %v6778, %v6754
    %v9251 = vpack.c.b16 %v6779, %v6755
    %v9252 = vpack.c.b16 %v6780, %v6756
    %v9253 = vpack.c.b16 %v6781, %v6757
    %v9254 = vpack.c.b16 %v6782, %v6758
    %v9255 = vpack.c.b16 %v6783, %v6759
    %v9256 = vpack.c.b16 %v6784, %v6760
    %v9257 = vpack.c.b16 %v6785, %v6761
    %v9258 = vpack.c.b16 %v6786, %v6762
    %v9259 = vpack.c.b16 %v6787, %v6763
    %v9260 = vpack.c.b16 %v6788, %v6764
    %v9261 = vpack.c.b16 %v6813, %v6789
    %v9262 = vpack.c.b16 %v6814, %v6790
    %v9263 = vpack.c.b16 %v6815, %v6791
    %v9264 = vpack.c.b16 %v6816, %v6792
    %v9265 = vpack.c.b16 %v6817, %v6793
    %v9266 = vpack.c.b16 %v6818, %v6794
    %v9267 = vpack.c.b16 %v6819, %v6795
    %v9268 = vpack.c.b16 %v6820, %v6796
    %v9269 = vpack.c.b16 %v6821, %v6797
    %v9270 = vpack.c.b16 %v6822, %v6798
    %v9271 = vpack.c.b16 %v6823, %v6799
    %v9272 = vpack.c.b16 %v6824, %v6800
    %v9273 = vpack.c.b16 %v6825, %v6801
    %v9274 = vpack.c.b16 %v6826, %v6802
    %v9275 = vpack.c.b16 %v6827, %v6803
    %v9276 = vpack.c.b16 %v6828, %v6804
    %v9277 = vpack.c.b16 %v6829, %v6805
    %v9278 = vpack.c.b16 %v6830, %v6806
    %v9279 = vpack.c.b16 %v6831, %v6807
    %v9280 = vpack.c.b16 %v6832, %v6808
    %v9281 = vpack.c.b16 %v6833, %v6809
    %v9282 = vpack.c.b16 %v6834, %v6810
    %v9283 = vpack.c.b16 %v6835, %v6811
    %v9284 = vpack.c.b16 %v6836, %v6812
    %v9285 = vpack.c.b16 %v6861, %v6837
    %v9286 = vpack.c.b16 %v6862, %v6838
    %v9287 = vpack.c.b16 %v6863, %v6839
    %v9288 = vpack.c.b16 %v6864, %v6840
    %v9289 = vpack.c.b16 %v6865, %v6841
    %v9290 = vpack.c.b16 %v6866, %v6842
    %v9291 = vpack.c.b16 %v6867, %v6843
    %v9292 = vpack.c.b16 %v6868, %v6844
    %v9293 = vpack.c.b16 %v6869, %v6845
    %v9294 = vpack.c.b16 %v6870, %v6846
    %v9295 = vpack.c.b16 %v6871, %v6847
    %v9296 = vpack.c.b16 %v6872, %v6848
    %v9297 = vpack.c.b16 %v6873, %v6849
    %v9298 = vpack.c.b16 %v6874, %v6850
    %v9299 = vpack.c.b16 %v6875, %v6851
    %v9300 = vpack.c.b16 %v6876, %v6852
    %v9301 = vpack.c.b16 %v6877, %v6853
    %v9302 = vpack.c.b16 %v6878, %v6854
    %v9303 = vpack.c.b16 %v6879, %v6855
    %v9304 = vpack.c.b16 %v6880, %v6856
    %v9305 = vpack.c.b16 %v6881, %v6857
    %v9306 = vpack.c.b16 %v6882, %v6858
    %v9307 = vpack.c.b16 %v6883, %v6859
    %v9308 = vpack.c.b16 %v6884, %v6860
    %v9309 = vpack.c.b16 %v6909, %v6885
    %v9310 = vpack.c.b16 %v6910, %v6886
    %v9311 = vpack.c.b16 %v6911, %v6887
    %v9312 = vpack.c.b16 %v6912, %v6888
    %v9313 = vpack.c.b16 %v6913, %v6889
    %v9314 = vpack.c.b16 %v6914, %v6890
    %v9315 = vpack.c.b16 %v6915, %v6891
    %v9316 = vpack.c.b16 %v6916, %v6892
    %v9317 = vpack.c.b16 %v6917, %v6893
    %v9318 = vpack.c.b16 %v6918, %v6894
    %v9319 = vpack.c.b16 %v6919, %v6895
    %v9320 = vpack.c.b16 %v6920, %v6896
    %v9321 = vpack.c.b16 %v6921, %v6897
    %v9322 = vpack.c.b16 %v6922, %v6898
    %v9323 = vpack.c.b16 %v6923, %v6899
    %v9324 = vpack.c.b16 %v6924, %v6900
    %v9325 = vpack.c.b16 %v6925, %v6901
    %v9326 = vpack.c.b16 %v6926, %v6902
    %v9327 = vpack.c.b16 %v6927, %v6903
    %v9328 = vpack.c.b16 %v6928, %v6904
    %v9329 = vpack.c.b16 %v6929, %v6905
    %v9330 = vpack.c.b16 %v6930, %v6906
    %v9331 = vpack.c.b16 %v6931, %v6907
    %v9332 = vpack.c.b16 %v6932, %v6908
    %v9333 = vpack.c.b16 %v6957, %v6933
    %v9334 = vpack.c.b16 %v6958, %v6934
    %v9335 = vpack.c.b16 %v6959, %v6935
    %v9336 = vpack.c.b16 %v6960, %v6936
    %v9337 = vpack.c.b16 %v6961, %v6937
    %v9338 = vpack.c.b16 %v6962, %v6938
    %v9339 = vpack.c.b16 %v6963, %v6939
    %v9340 = vpack.c.b16 %v6964, %v6940
    %v9341 = vpack.c.b16 %v6965, %v6941
    %v9342 = vpack.c.b16 %v6966, %v6942
    %v9343 = vpack.c.b16 %v6967, %v6943
    %v9344 = vpack.c.b16 %v6968, %v6944
    %v9345 = vpack.c.b16 %v6969, %v6945
    %v9346 = vpack.c.b16 %v6970, %v6946
    %v9347 = vpack.c.b16 %v6971, %v6947
    %v9348 = vpack.c.b16 %v6972, %v6948
    %v9349 = vpack.c.b16 %v6973, %v6949
    %v9350 = vpack.c.b16 %v6974, %v6950
    %v9351 = vpack.c.b16 %v6975, %v6951
    %v9352 = vpack.c.b16 %v6976, %v6952
    %v9353 = vpack.c.b16 %v6977, %v6953
    %v9354 = vpack.c.b16 %v6978, %v6954
    %v9355 = vpack.c.b16 %v6979, %v6955
    %v9356 = vpack.c.b16 %v6980, %v6956
    %v9357 = vpack.c.b16 %v7005, %v6981
    %v9358 = vpack.c.b16 %v7006, %v6982
    %v9359 = vpack.c.b16 %v7007, %v6983
    %v9360 = vpack.c.b16 %v7008, %v6984
    %v9361 = vpack.c.b16 %v7009, %v6985
    %v9362 = vpack.c.b16 %v7010, %v6986
    %v9363 = vpack.c.b16 %v7011, %v6987
    %v9364 = vpack.c.b16 %v7012, %v6988
    %v9365 = vpack.c.b16 %v7013, %v6989
    %v9366 = vpack.c.b16 %v7014, %v6990
    %v9367 = vpack.c.b16 %v7015, %v6991
    %v9368 = vpack.c.b16 %v7016, %v6992
    %v9369 = vpack.c.b16 %v7017, %v6993
    %v9370 = vpack.c.b16 %v7018, %v6994
    %v9371 = vpack.c.b16 %v7019, %v6995
    %v9372 = vpack.c.b16 %v7020, %v6996
    %v9373 = vpack.c.b16 %v7021, %v6997
    %v9374 = vpack.c.b16 %v7022, %v6998
    %v9375 = vpack.c.b16 %v7023, %v6999
    %v9376 = vpack.c.b16 %v7024, %v7000
    %v9377 = vpack.c.b16 %v7025, %v7001
    %v9378 = vpack.c.b16 %v7026, %v7002
    %v9379 = vpack.c.b16 %v7027, %v7003
    %v9380 = vpack.c.b16 %v7028, %v7004
    %v9381 = vpack.c.b16 %v7053, %v7029
    %v9382 = vpack.c.b16 %v7054, %v7030
    %v9383 = vpack.c.b16 %v7055, %v7031
    %v9384 = vpack.c.b16 %v7056, %v7032
    %v9385 = vpack.c.b16 %v7057, %v7033
    %v9386 = vpack.c.b16 %v7058, %v7034
    %v9387 = vpack.c.b16 %v7059, %v7035
    %v9388 = vpack.c.b16 %v7060, %v7036
    %v9389 = vpack.c.b16 %v7061, %v7037
    %v9390 = vpack.c.b16 %v7062, %v7038
    %v9391 = vpack.c.b16 %v7063, %v7039
    %v9392 = vpack.c.b16 %v7064, %v7040
    %v9393 = vpack.c.b16 %v7065, %v7041
    %v9394 = vpack.c.b16 %v7066, %v7042
    %v9395 = vpack.c.b16 %v7067, %v7043
    %v9396 = vpack.c.b16 %v7068, %v7044
    %v9397 = vpack.c.b16 %v7069, %v7045
    %v9398 = vpack.c.b16 %v7070, %v7046
    %v9399 = vpack.c.b16 %v7071, %v7047
    %v9400 = vpack.c.b16 %v7072, %v7048
    %v9401 = vpack.c.b16 %v7073, %v7049
    %v9402 = vpack.c.b16 %v7074, %v7050
    %v9403 = vpack.c.b16 %v7075, %v7051
    %v9404 = vpack.c.b16 %v7076, %v7052
    %v9405 = vpack.c.b16 %v7101, %v7077
    %v9406 = vpack.c.b16 %v7102, %v7078
    %v9407 = vpack.c.b16 %v7103, %v7079
    %v9408 = vpack.c.b16 %v7104, %v7080
    %v9409 = vpack.c.b16 %v7105, %v7081
    %v9410 = vpack.c.b16 %v7106, %v7082
    %v9411 = vpack.c.b16 %v7107, %v7083
    %v9412 = vpack.c.b16 %v7108, %v7084
    %v9413 = vpack.c.b16 %v7109, %v7085
    %v9414 = vpack.c.b16 %v7110, %v7086
    %v9415 = vpack.c.b16 %v7111, %v7087
    %v9416 = vpack.c.b16 %v7112, %v7088
    %v9417 = vpack.c.b16 %v7113, %v7089
    %v9418 = vpack.c.b16 %v7114, %v7090
    %v9419 = vpack.c.b16 %v7115, %v7091
    %v9420 = vpack.c.b16 %v7116, %v7092
    %v9421 = vpack.c.b16 %v7117, %v7093
    %v9422 = vpack.c.b16 %v7118, %v7094
    %v9423 = vpack.c.b16 %v7119, %v7095
    %v9424 = vpack.c.b16 %v7120, %v7096
    %v9425 = vpack.c.b16 %v7121, %v7097
    %v9426 = vpack.c.b16 %v7122, %v7098
    %v9427 = vpack.c.b16 %v7123, %v7099
    %v9428 = vpack.c.b16 %v7124, %v7100
    %v9429 = vpack.c.b16 %v7149, %v7125
    %v9430 = vpack.c.b16 %v7150, %v7126
    %v9431 = vpack.c.b16 %v7151, %v7127
    %v9432 = vpack.c.b16 %v7152, %v7128
    %v9433 = vpack.c.b16 %v7153, %v7129
    %v9434 = vpack.c.b16 %v7154, %v7130
    %v9435 = vpack.c.b16 %v7155, %v7131
    %v9436 = vpack.c.b16 %v7156, %v7132
    %v9437 = vpack.c.b16 %v7157, %v7133
    %v9438 = vpack.c.b16 %v7158, %v7134
    %v9439 = vpack.c.b16 %v7159, %v7135
    %v9440 = vpack.c.b16 %v7160, %v7136
    %v9441 = vpack.c.b16 %v7161, %v7137
    %v9442 = vpack.c.b16 %v7162, %v7138
    %v9443 = vpack.c.b16 %v7163, %v7139
    %v9444 = vpack.c.b16 %v7164, %v7140
    %v9445 = vpack.c.b16 %v7165, %v7141
    %v9446 = vpack.c.b16 %v7166, %v7142
    %v9447 = vpack.c.b16 %v7167, %v7143
    %v9448 = vpack.c.b16 %v7168, %v7144
    %v9449 = vpack.c.b16 %v7169, %v7145
    %v9450 = vpack.c.b16 %v7170, %v7146
    %v9451 = vpack.c.b16 %v7171, %v7147
    %v9452 = vpack.c.b16 %v7172, %v7148
    %v9453 = vpack.c.b16 %v7197, %v7173
    %v9454 = vpack.c.b16 %v7198, %v7174
    %v9455 = vpack.c.b16 %v7199, %v7175
    %v9456 = vpack.c.b16 %v7200, %v7176
    %v9457 = vpack.c.b16 %v7201, %v7177
    %v9458 = vpack.c.b16 %v7202, %v7178
    %v9459 = vpack.c.b16 %v7203, %v7179
    %v9460 = vpack.c.b16 %v7204, %v7180
    %v9461 = vpack.c.b16 %v7205, %v7181
    %v9462 = vpack.c.b16 %v7206, %v7182
    %v9463 = vpack.c.b16 %v7207, %v7183
    %v9464 = vpack.c.b16 %v7208, %v7184
    %v9465 = vpack.c.b16 %v7209, %v7185
    %v9466 = vpack.c.b16 %v7210, %v7186
    %v9467 = vpack.c.b16 %v7211, %v7187
    %v9468 = vpack.c.b16 %v7212, %v7188
    %v9469 = vpack.c.b16 %v7213, %v7189
    %v9470 = vpack.c.b16 %v7214, %v7190
    %v9471 = vpack.c.b16 %v7215, %v7191
    %v9472 = vpack.c.b16 %v7216, %v7192
    %v9473 = vpack.c.b16 %v7217, %v7193
    %v9474 = vpack.c.b16 %v7218, %v7194
    %v9475 = vpack.c.b16 %v7219, %v7195
    %v9476 = vpack.c.b16 %v7220, %v7196
    %v9477 = vpack.c.b16 %v7245, %v7221
    %v9478 = vpack.c.b16 %v7246, %v7222
    %v9479 = vpack.c.b16 %v7247, %v7223
    %v9480 = vpack.c.b16 %v7248, %v7224
    %v9481 = vpack.c.b16 %v7249, %v7225
    %v9482 = vpack.c.b16 %v7250, %v7226
    %v9483 = vpack.c.b16 %v7251, %v7227
    %v9484 = vpack.c.b16 %v7252, %v7228
    %v9485 = vpack.c.b16 %v7253, %v7229
    %v9486 = vpack.c.b16 %v7254, %v7230
    %v9487 = vpack.c.b16 %v7255, %v7231
    %v9488 = vpack.c.b16 %v7256, %v7232
    %v9489 = vpack.c.b16 %v7257, %v7233
    %v9490 = vpack.c.b16 %v7258, %v7234
    %v9491 = vpack.c.b16 %v7259, %v7235
    %v9492 = vpack.c.b16 %v7260, %v7236
    %v9493 = vpack.c.b16 %v7261, %v7237
    %v9494 = vpack.c.b16 %v7262, %v7238
    %v9495 = vpack.c.b16 %v7263, %v7239
    %v9496 = vpack.c.b16 %v7264, %v7240
    %v9497 = vpack.c.b16 %v7265, %v7241
    %v9498 = vpack.c.b16 %v7266, %v7242
    %v9499 = vpack.c.b16 %v7267, %v7243
    %v9500 = vpack.c.b16 %v7268, %v7244
    %v9501 = vpack.c.b16 %v7293, %v7269
    %v9502 = vpack.c.b16 %v7294, %v7270
    %v9503 = vpack.c.b16 %v7295, %v7271
    %v9504 = vpack.c.b16 %v7296, %v7272
    %v9505 = vpack.c.b16 %v7297, %v7273
    %v9506 = vpack.c.b16 %v7298, %v7274
    %v9507 = vpack.c.b16 %v7299, %v7275
    %v9508 = vpack.c.b16 %v7300, %v7276
    %v9509 = vpack.c.b16 %v7301, %v7277
    %v9510 = vpack.c.b16 %v7302, %v7278
    %v9511 = vpack.c.b16 %v7303, %v7279
    %v9512 = vpack.c.b16 %v7304, %v7280
    %v9513 = vpack.c.b16 %v7305, %v7281
    %v9514 = vpack.c.b16 %v7306, %v7282
    %v9515 = vpack.c.b16 %v7307, %v7283
    %v9516 = vpack.c.b16 %v7308, %v7284
    %v9517 = vpack.c.b16 %v7309, %v7285
    %v9518 = vpack.c.b16 %v7310, %v7286
    %v9519 = vpack.c.b16 %v7311, %v7287
    %v9520 = vpack.c.b16 %v7312, %v7288
    %v9521 = vpack.c.b16 %v7313, %v7289
    %v9522 = vpack.c.b16 %v7314, %v7290
    %v9523 = vpack.c.b16 %v7315, %v7291
    %v9524 = vpack.c.b16 %v7316, %v7292
    %v9525 = vpack.c.b16 %v7341, %v7317
    %v9526 = vpack.c.b16 %v7342, %v7318
    %v9527 = vpack.c.b16 %v7343, %v7319
    %v9528 = vpack.c.b16 %v7344, %v7320
    %v9529 = vpack.c.b16 %v7345, %v7321
    %v9530 = vpack.c.b16 %v7346, %v7322
    %v9531 = vpack.c.b16 %v7347, %v7323
    %v9532 = vpack.c.b16 %v7348, %v7324
    %v9533 = vpack.c.b16 %v7349, %v7325
    %v9534 = vpack.c.b16 %v7350, %v7326
    %v9535 = vpack.c.b16 %v7351, %v7327
    %v9536 = vpack.c.b16 %v7352, %v7328
    %v9537 = vpack.c.b16 %v7353, %v7329
    %v9538 = vpack.c.b16 %v7354, %v7330
    %v9539 = vpack.c.b16 %v7355, %v7331
    %v9540 = vpack.c.b16 %v7356, %v7332
    %v9541 = vpack.c.b16 %v7357, %v7333
    %v9542 = vpack.c.b16 %v7358, %v7334
    %v9543 = vpack.c.b16 %v7359, %v7335
    %v9544 = vpack.c.b16 %v7360, %v7336
    %v9545 = vpack.c.b16 %v7361, %v7337
    %v9546 = vpack.c.b16 %v7362, %v7338
    %v9547 = vpack.c.b16 %v7363, %v7339
    %v9548 = vpack.c.b16 %v7364, %v7340
    %v9549 = vpack.c.b16 %v7389, %v7365
    %v9550 = vpack.c.b16 %v7390, %v7366
    %v9551 = vpack.c.b16 %v7391, %v7367
    %v9552 = vpack.c.b16 %v7392, %v7368
    %v9553 = vpack.c.b16 %v7393, %v7369
    %v9554 = vpack.c.b16 %v7394, %v7370
    %v9555 = vpack.c.b16 %v7395, %v7371
    %v9556 = vpack.c.b16 %v7396, %v7372
    %v9557 = vpack.c.b16 %v7397, %v7373
    %v9558 = vpack.c.b16 %v7398, %v7374
    %v9559 = vpack.c.b16 %v7399, %v7375
    %v9560 = vpack.c.b16 %v7400, %v7376
    %v9561 = vpack.c.b16 %v7401, %v7377
    %v9562 = vpack.c.b16 %v7402, %v7378
    %v9563 = vpack.c.b16 %v7403, %v7379
    %v9564 = vpack.c.b16 %v7404, %v7380
    %v9565 = vpack.c.b16 %v7405, %v7381
    %v9566 = vpack.c.b16 %v7406, %v7382
    %v9567 = vpack.c.b16 %v7407, %v7383
    %v9568 = vpack.c.b16 %v7408, %v7384
    %v9569 = vpack.c.b16 %v7409, %v7385
    %v9570 = vpack.c.b16 %v7410, %v7386
    %v9571 = vpack.c.b16 %v7411, %v7387
    %v9572 = vpack.c.b16 %v7412, %v7388
    %v9573 = vpack.c.b16 %v7437, %v7413
    %v9574 = vpack.c.b16 %v7438, %v7414
    %v9575 = vpack.c.b16 %v7439, %v7415
    %v9576 = vpack.c.b16 %v7440, %v7416
    %v9577 = vpack.c.b16 %v7441, %v7417
    %v9578 = vpack.c.b16 %v7442, %v7418
    %v9579 = vpack.c.b16 %v7443, %v7419
    %v9580 = vpack.c.b16 %v7444, %v7420
    %v9581 = vpack.c.b16 %v7445, %v7421
    %v9582 = vpack.c.b16 %v7446, %v7422
    %v9583 = vpack.c.b16 %v7447, %v7423
    %v9584 = vpack.c.b16 %v7448, %v7424
    %v9585 = vpack.c.b16 %v7449, %v7425
    %v9586 = vpack.c.b16 %v7450, %v7426
    %v9587 = vpack.c.b16 %v7451, %v7427
    %v9588 = vpack.c.b16 %v7452, %v7428
    %v9589 = vpack.c.b16 %v7453, %v7429
    %v9590 = vpack.c.b16 %v7454, %v7430
    %v9591 = vpack.c.b16 %v7455, %v7431
    %v9592 = vpack.c.b16 %v7456, %v7432
    %v9593 = vpack.c.b16 %v7457, %v7433
    %v9594 = vpack.c.b16 %v7458, %v7434
    %v9595 = vpack.c.b16 %v7459, %v7435
    %v9596 = vpack.c.b16 %v7460, %v7436
    %v9597 = vpack.c.b16 %v7485, %v7461
    %v9598 = vpack.c.b16 %v7486, %v7462
    %v9599 = vpack.c.b16 %v7487, %v7463
    %v9600 = vpack.c.b16 %v7488, %v7464
    %v9601 = vpack.c.b16 %v7489, %v7465
    %v9602 = vpack.c.b16 %v7490, %v7466
    %v9603 = vpack.c.b16 %v7491, %v7467
    %v9604 = vpack.c.b16 %v7492, %v7468
    %v9605 = vpack.c.b16 %v7493, %v7469
    %v9606 = vpack.c.b16 %v7494, %v7470
    %v9607 = vpack.c.b16 %v7495, %v7471
    %v9608 = vpack.c.b16 %v7496, %v7472
    %v9609 = vpack.c.b16 %v7497, %v7473
    %v9610 = vpack.c.b16 %v7498, %v7474
    %v9611 = vpack.c.b16 %v7499, %v7475
    %v9612 = vpack.c.b16 %v7500, %v7476
    %v9613 = vpack.c.b16 %v7501, %v7477
    %v9614 = vpack.c.b16 %v7502, %v7478
    %v9615 = vpack.c.b16 %v7503, %v7479
    %v9616 = vpack.c.b16 %v7504, %v7480
    %v9617 = vpack.c.b16 %v7505, %v7481
    %v9618 = vpack.c.b16 %v7506, %v7482
    %v9619 = vpack.c.b16 %v7507, %v7483
    %v9620 = vpack.c.b16 %v7508, %v7484
    %v9621 = vpack.c.b16 %v7533, %v7509
    %v9622 = vpack.c.b16 %v7534, %v7510
    %v9623 = vpack.c.b16 %v7535, %v7511
    %v9624 = vpack.c.b16 %v7536, %v7512
    %v9625 = vpack.c.b16 %v7537, %v7513
    %v9626 = vpack.c.b16 %v7538, %v7514
    %v9627 = vpack.c.b16 %v7539, %v7515
    %v9628 = vpack.c.b16 %v7540, %v7516
    %v9629 = vpack.c.b16 %v7541, %v7517
    %v9630 = vpack.c.b16 %v7542, %v7518
    %v9631 = vpack.c.b16 %v7543, %v7519
    %v9632 = vpack.c.b16 %v7544, %v7520
    %v9633 = vpack.c.b16 %v7545, %v7521
    %v9634 = vpack.c.b16 %v7546, %v7522
    %v9635 = vpack.c.b16 %v7547, %v7523
    %v9636 = vpack.c.b16 %v7548, %v7524
    %v9637 = vpack.c.b16 %v7549, %v7525
    %v9638 = vpack.c.b16 %v7550, %v7526
    %v9639 = vpack.c.b16 %v7551, %v7527
    %v9640 = vpack.c.b16 %v7552, %v7528
    %v9641 = vpack.c.b16 %v7553, %v7529
    %v9642 = vpack.c.b16 %v7554, %v7530
    %v9643 = vpack.c.b16 %v7555, %v7531
    %v9644 = vpack.c.b16 %v7556, %v7532
    %v9645 = vpack.c.b16 %v7581, %v7557
    %v9646 = vpack.c.b16 %v7582, %v7558
    %v9647 = vpack.c.b16 %v7583, %v7559
    %v9648 = vpack.c.b16 %v7584, %v7560
    %v9649 = vpack.c.b16 %v7585, %v7561
    %v9650 = vpack.c.b16 %v7586, %v7562
    %v9651 = vpack.c.b16 %v7587, %v7563
    %v9652 = vpack.c.b16 %v7588, %v7564
    %v9653 = vpack.c.b16 %v7589, %v7565
    %v9654 = vpack.c.b16 %v7590, %v7566
    %v9655 = vpack.c.b16 %v7591, %v7567
    %v9656 = vpack.c.b16 %v7592, %v7568
    %v9657 = vpack.c.b16 %v7593, %v7569
    %v9658 = vpack.c.b16 %v7594, %v7570
    %v9659 = vpack.c.b16 %v7595, %v7571
    %v9660 = vpack.c.b16 %v7596, %v7572
    %v9661 = vpack.c.b16 %v7597, %v7573
    %v9662 = vpack.c.b16 %v7598, %v7574
    %v9663 = vpack.c.b16 %v7599, %v7575
    %v9664 = vpack.c.b16 %v7600, %v7576
    %v9665 = vpack.c.b16 %v7601, %v7577
    %v9666 = vpack.c.b16 %v7602, %v7578
    %v9667 = vpack.c.b16 %v7603, %v7579
    %v9668 = vpack.c.b16 %v7604, %v7580
    %v9669 = vpack.c.b16 %v7629, %v7605
    %v9670 = vpack.c.b16 %v7630, %v7606
    %v9671 = vpack.c.b16 %v7631, %v7607
    %v9672 = vpack.c.b16 %v7632, %v7608
    %v9673 = vpack.c.b16 %v7633, %v7609
    %v9674 = vpack.c.b16 %v7634, %v7610
    %v9675 = vpack.c.b16 %v7635, %v7611
    %v9676 = vpack.c.b16 %v7636, %v7612
    %v9677 = vpack.c.b16 %v7637, %v7613
    %v9678 = vpack.c.b16 %v7638, %v7614
    %v9679 = vpack.c.b16 %v7639, %v7615
    %v9680 = vpack.c.b16 %v7640, %v7616
    %v9681 = vpack.c.b16 %v7641, %v7617
    %v9682 = vpack.c.b16 %v7642, %v7618
    %v9683 = vpack.c.b16 %v7643, %v7619
    %v9684 = vpack.c.b16 %v7644, %v7620
    %v9685 = vpack.c.b16 %v7645, %v7621
    %v9686 = vpack.c.b16 %v7646, %v7622
    %v9687 = vpack.c.b16 %v7647, %v7623
    %v9688 = vpack.c.b16 %v7648, %v7624
    %v9689 = vpack.c.b16 %v7649, %v7625
    %v9690 = vpack.c.b16 %v7650, %v7626
    %v9691 = vpack.c.b16 %v7651, %v7627
    %v9692 = vpack.c.b16 %v7652, %v7628
    %v9693 = vpack.c.b16 %v7677, %v7653
    %v9694 = vpack.c.b16 %v7678, %v7654
    %v9695 = vpack.c.b16 %v7679, %v7655
    %v9696 = vpack.c.b16 %v7680, %v7656
    %v9697 = vpack.c.b16 %v7681, %v7657
    %v9698 = vpack.c.b16 %v7682, %v7658
    %v9699 = vpack.c.b16 %v7683, %v7659
    %v9700 = vpack.c.b16 %v7684, %v7660
    %v9701 = vpack.c.b16 %v7685, %v7661
    %v9702 = vpack.c.b16 %v7686, %v7662
    %v9703 = vpack.c.b16 %v7687, %v7663
    %v9704 = vpack.c.b16 %v7688, %v7664
    %v9705 = vpack.c.b16 %v7689, %v7665
    %v9706 = vpack.c.b16 %v7690, %v7666
    %v9707 = vpack.c.b16 %v7691, %v7667
    %v9708 = vpack.c.b16 %v7692, %v7668
    %v9709 = vpack.c.b16 %v7693, %v7669
    %v9710 = vpack.c.b16 %v7694, %v7670
    %v9711 = vpack.c.b16 %v7695, %v7671
    %v9712 = vpack.c.b16 %v7696, %v7672
    %v9713 = vpack.c.b16 %v7697, %v7673
    %v9714 = vpack.c.b16 %v7698, %v7674
    %v9715 = vpack.c.b16 %v7699, %v7675
    %v9716 = vpack.c.b16 %v7700, %v7676
    %v9717 = vpack.c.b16 %v7725, %v7701
    %v9718 = vpack.c.b16 %v7726, %v7702
    %v9719 = vpack.c.b16 %v7727, %v7703
    %v9720 = vpack.c.b16 %v7728, %v7704
    %v9721 = vpack.c.b16 %v7729, %v7705
    %v9722 = vpack.c.b16 %v7730, %v7706
    %v9723 = vpack.c.b16 %v7731, %v7707
    %v9724 = vpack.c.b16 %v7732, %v7708
    %v9725 = vpack.c.b16 %v7733, %v7709
    %v9726 = vpack.c.b16 %v7734, %v7710
    %v9727 = vpack.c.b16 %v7735, %v7711
    %v9728 = vpack.c.b16 %v7736, %v7712
    %v9729 = vpack.c.b16 %v7737, %v7713
    %v9730 = vpack.c.b16 %v7738, %v7714
    %v9731 = vpack.c.b16 %v7739, %v7715
    %v9732 = vpack.c.b16 %v7740, %v7716
    %v9733 = vpack.c.b16 %v7741, %v7717
    %v9734 = vpack.c.b16 %v7742, %v7718
    %v9735 = vpack.c.b16 %v7743, %v7719
    %v9736 = vpack.c.b16 %v7744, %v7720
    %v9737 = vpack.c.b16 %v7745, %v7721
    %v9738 = vpack.c.b16 %v7746, %v7722
    %v9739 = vpack.c.b16 %v7747, %v7723
    %v9740 = vpack.c.b16 %v7748, %v7724
    %v9741 = vpack.c.b16 %v7773, %v7749
    %v9742 = vpack.c.b16 %v7774, %v7750
    %v9743 = vpack.c.b16 %v7775, %v7751
    %v9744 = vpack.c.b16 %v7776, %v7752
    %v9745 = vpack.c.b16 %v7777, %v7753
    %v9746 = vpack.c.b16 %v7778, %v7754
    %v9747 = vpack.c.b16 %v7779, %v7755
    %v9748 = vpack.c.b16 %v7780, %v7756
    %v9749 = vpack.c.b16 %v7781, %v7757
    %v9750 = vpack.c.b16 %v7782, %v7758
    %v9751 = vpack.c.b16 %v7783, %v7759
    %v9752 = vpack.c.b16 %v7784, %v7760
    %v9753 = vpack.c.b16 %v7785, %v7761
    %v9754 = vpack.c.b16 %v7786, %v7762
    %v9755 = vpack.c.b16 %v7787, %v7763
    %v9756 = vpack.c.b16 %v7788, %v7764
    %v9757 = vpack.c.b16 %v7789, %v7765
    %v9758 = vpack.c.b16 %v7790, %v7766
    %v9759 = vpack.c.b16 %v7791, %v7767
    %v9760 = vpack.c.b16 %v7792, %v7768
    %v9761 = vpack.c.b16 %v7793, %v7769
    %v9762 = vpack.c.b16 %v7794, %v7770
    %v9763 = vpack.c.b16 %v7795, %v7771
    %v9764 = vpack.c.b16 %v7796, %v7772
    %v9765 = vpack.c.b16 %v7821, %v7797
    %v9766 = vpack.c.b16 %v7822, %v7798
    %v9767 = vpack.c.b16 %v7823, %v7799
    %v9768 = vpack.c.b16 %v7824, %v7800
    %v9769 = vpack.c.b16 %v7825, %v7801
    %v9770 = vpack.c.b16 %v7826, %v7802
    %v9771 = vpack.c.b16 %v7827, %v7803
    %v9772 = vpack.c.b16 %v7828, %v7804
    %v9773 = vpack.c.b16 %v7829, %v7805
    %v9774 = vpack.c.b16 %v7830, %v7806
    %v9775 = vpack.c.b16 %v7831, %v7807
    %v9776 = vpack.c.b16 %v7832, %v7808
    %v9777 = vpack.c.b16 %v7833, %v7809
    %v9778 = vpack.c.b16 %v7834, %v7810
    %v9779 = vpack.c.b16 %v7835, %v7811
    %v9780 = vpack.c.b16 %v7836, %v7812
    %v9781 = vpack.c.b16 %v7837, %v7813
    %v9782 = vpack.c.b16 %v7838, %v7814
    %v9783 = vpack.c.b16 %v7839, %v7815
    %v9784 = vpack.c.b16 %v7840, %v7816
    %v9785 = vpack.c.b16 %v7841, %v7817
    %v9786 = vpack.c.b16 %v7842, %v7818
    %v9787 = vpack.c.b16 %v7843, %v7819
    %v9788 = vpack.c.b16 %v7844, %v7820
    %v9789 = vpack.c.b16 %v7869, %v7845
    %v9790 = vpack.c.b16 %v7870, %v7846
    %v9791 = vpack.c.b16 %v7871, %v7847
    %v9792 = vpack.c.b16 %v7872, %v7848
    %v9793 = vpack.c.b16 %v7873, %v7849
    %v9794 = vpack.c.b16 %v7874, %v7850
    %v9795 = vpack.c.b16 %v7875, %v7851
    %v9796 = vpack.c.b16 %v7876, %v7852
    %v9797 = vpack.c.b16 %v7877, %v7853
    %v9798 = vpack.c.b16 %v7878, %v7854
    %v9799 = vpack.c.b16 %v7879, %v7855
    %v9800 = vpack.c.b16 %v7880, %v7856
    %v9801 = vpack.c.b16 %v7881, %v7857
    %v9802 = vpack.c.b16 %v7882, %v7858
    %v9803 = vpack.c.b16 %v7883, %v7859
    %v9804 = vpack.c.b16 %v7884, %v7860
    %v9805 = vpack.c.b16 %v7885, %v7861
    %v9806 = vpack.c.b16 %v7886, %v7862
    %v9807 = vpack.c.b16 %v7887, %v7863
    %v9808 = vpack.c.b16 %v7888, %v7864
    %v9809 = vpack.c.b16 %v7889, %v7865
    %v9810 = vpack.c.b16 %v7890, %v7866
    %v9811 = vpack.c.b16 %v7891, %v7867
    %v9812 = vpack.c.b16 %v7892, %v7868
    %v9813 = vpack.c.b16 %v7917, %v7893
    %v9814 = vpack.c.b16 %v7918, %v7894
    %v9815 = vpack.c.b16 %v7919, %v7895
    %v9816 = vpack.c.b16 %v7920, %v7896
    %v9817 = vpack.c.b16 %v7921, %v7897
    %v9818 = vpack.c.b16 %v7922, %v7898
    %v9819 = vpack.c.b16 %v7923, %v7899
    %v9820 = vpack.c.b16 %v7924, %v7900
    %v9821 = vpack.c.b16 %v7925, %v7901
    %v9822 = vpack.c.b16 %v7926, %v7902
    %v9823 = vpack.c.b16 %v7927, %v7903
    %v9824 = vpack.c.b16 %v7928, %v7904
    %v9825 = vpack.c.b16 %v7929, %v7905
    %v9826 = vpack.c.b16 %v7930, %v7906
    %v9827 = vpack.c.b16 %v7931, %v7907
    %v9828 = vpack.c.b16 %v7932, %v7908
    %v9829 = vpack.c.b16 %v7933, %v7909
    %v9830 = vpack.c.b16 %v7934, %v7910
    %v9831 = vpack.c.b16 %v7935, %v7911
    %v9832 = vpack.c.b16 %v7936, %v7912
    %v9833 = vpack.c.b16 %v7937, %v7913
    %v9834 = vpack.c.b16 %v7938, %v7914
    %v9835 = vpack.c.b16 %v7939, %v7915
    %v9836 = vpack.c.b16 %v7940, %v7916
    %v9837 = vpack.c.b16 %v7965, %v7941
    %v9838 = vpack.c.b16 %v7966, %v7942
    %v9839 = vpack.c.b16 %v7967, %v7943
    %v9840 = vpack.c.b16 %v7968, %v7944
    %v9841 = vpack.c.b16 %v7969, %v7945
    %v9842 = vpack.c.b16 %v7970, %v7946
    %v9843 = vpack.c.b16 %v7971, %v7947
    %v9844 = vpack.c.b16 %v7972, %v7948
    %v9845 = vpack.c.b16 %v7973, %v7949
    %v9846 = vpack.c.b16 %v7974, %v7950
    %v9847 = vpack.c.b16 %v7975, %v7951
    %v9848 = vpack.c.b16 %v7976, %v7952
    %v9849 = vpack.c.b16 %v7977, %v7953
    %v9850 = vpack.c.b16 %v7978, %v7954
    %v9851 = vpack.c.b16 %v7979, %v7955
    %v9852 = vpack.c.b16 %v7980, %v7956
    %v9853 = vpack.c.b16 %v7981, %v7957
    %v9854 = vpack.c.b16 %v7982, %v7958
    %v9855 = vpack.c.b16 %v7983, %v7959
    %v9856 = vpack.c.b16 %v7984, %v7960
    %v9857 = vpack.c.b16 %v7985, %v7961
    %v9858 = vpack.c.b16 %v7986, %v7962
    %v9859 = vpack.c.b16 %v7987, %v7963
    %v9860 = vpack.c.b16 %v7988, %v7964
    %v9861 = vpack.c.b16 %v8013, %v7989
    %v9862 = vpack.c.b16 %v8014, %v7990
    %v9863 = vpack.c.b16 %v8015, %v7991
    %v9864 = vpack.c.b16 %v8016, %v7992
    %v9865 = vpack.c.b16 %v8017, %v7993
    %v9866 = vpack.c.b16 %v8018, %v7994
    %v9867 = vpack.c.b16 %v8019, %v7995
    %v9868 = vpack.c.b16 %v8020, %v7996
    %v9869 = vpack.c.b16 %v8021, %v7997
    %v9870 = vpack.c.b16 %v8022, %v7998
    %v9871 = vpack.c.b16 %v8023, %v7999
    %v9872 = vpack.c.b16 %v8024, %v8000
    %v9873 = vpack.c.b16 %v8025, %v8001
    %v9874 = vpack.c.b16 %v8026, %v8002
    %v9875 = vpack.c.b16 %v8027, %v8003
    %v9876 = vpack.c.b16 %v8028, %v8004
    %v9877 = vpack.c.b16 %v8029, %v8005
    %v9878 = vpack.c.b16 %v8030, %v8006
    %v9879 = vpack.c.b16 %v8031, %v8007
    %v9880 = vpack.c.b16 %v8032, %v8008
    %v9881 = vpack.c.b16 %v8033, %v8009
    %v9882 = vpack.c.b16 %v8034, %v8010
    %v9883 = vpack.c.b16 %v8035, %v8011
    %v9884 = vpack.c.b16 %v8036, %v8012
    %v9885 = vpack.c.b16 %v8061, %v8037
    %v9886 = vpack.c.b16 %v8062, %v8038
    %v9887 = vpack.c.b16 %v8063, %v8039
    %v9888 = vpack.c.b16 %v8064, %v8040
    %v9889 = vpack.c.b16 %v8065, %v8041
    %v9890 = vpack.c.b16 %v8066, %v8042
    %v9891 = vpack.c.b16 %v8067, %v8043
    %v9892 = vpack.c.b16 %v8068, %v8044
    %v9893 = vpack.c.b16 %v8069, %v8045
    %v9894 = vpack.c.b16 %v8070, %v8046
    %v9895 = vpack.c.b16 %v8071, %v8047
    %v9896 = vpack.c.b16 %v8072, %v8048
    %v9897 = vpack.c.b16 %v8073, %v8049
    %v9898 = vpack.c.b16 %v8074, %v8050
    %v9899 = vpack.c.b16 %v8075, %v8051
    %v9900 = vpack.c.b16 %v8076, %v8052
    %v9901 = vpack.c.b16 %v8077, %v8053
    %v9902 = vpack.c.b16 %v8078, %v8054
    %v9903 = vpack.c.b16 %v8079, %v8055
    %v9904 = vpack.c.b16 %v8080, %v8056
    %v9905 = vpack.c.b16 %v8081, %v8057
    %v9906 = vpack.c.b16 %v8082, %v8058
    %v9907 = vpack.c.b16 %v8083, %v8059
    %v9908 = vpack.c.b16 %v8084, %v8060
    %v9909 = vpack.c.b16 %v8109, %v8085
    %v9910 = vpack.c.b16 %v8110, %v8086
    %v9911 = vpack.c.b16 %v8111, %v8087
    %v9912 = vpack.c.b16 %v8112, %v8088
    %v9913 = vpack.c.b16 %v8113, %v8089
    %v9914 = vpack.c.b16 %v8114, %v8090
    %v9915 = vpack.c.b16 %v8115, %v8091
    %v9916 = vpack.c.b16 %v8116, %v8092
    %v9917 = vpack.c.b16 %v8117, %v8093
    %v9918 = vpack.c.b16 %v8118, %v8094
    %v9919 = vpack.c.b16 %v8119, %v8095
    %v9920 = vpack.c.b16 %v8120, %v8096
    %v9921 = vpack.c.b16 %v8121, %v8097
    %v9922 = vpack.c.b16 %v8122, %v8098
    %v9923 = vpack.c.b16 %v8123, %v8099
    %v9924 = vpack.c.b16 %v8124, %v8100
    %v9925 = vpack.c.b16 %v8125, %v8101
    %v9926 = vpack.c.b16 %v8126, %v8102
    %v9927 = vpack.c.b16 %v8127, %v8103
    %v9928 = vpack.c.b16 %v8128, %v8104
    %v9929 = vpack.c.b16 %v8129, %v8105
    %v9930 = vpack.c.b16 %v8130, %v8106
    %v9931 = vpack.c.b16 %v8131, %v8107
    %v9932 = vpack.c.b16 %v8132, %v8108
    %v9933 = vpack.c.b16 %v8157, %v8133
    %v9934 = vpack.c.b16 %v8158, %v8134
    %v9935 = vpack.c.b16 %v8159, %v8135
    %v9936 = vpack.c.b16 %v8160, %v8136
    %v9937 = vpack.c.b16 %v8161, %v8137
    %v9938 = vpack.c.b16 %v8162, %v8138
    %v9939 = vpack.c.b16 %v8163, %v8139
    %v9940 = vpack.c.b16 %v8164, %v8140
    %v9941 = vpack.c.b16 %v8165, %v8141
    %v9942 = vpack.c.b16 %v8166, %v8142
    %v9943 = vpack.c.b16 %v8167, %v8143
    %v9944 = vpack.c.b16 %v8168, %v8144
    %v9945 = vpack.c.b16 %v8169, %v8145
    %v9946 = vpack.c.b16 %v8170, %v8146
    %v9947 = vpack.c.b16 %v8171, %v8147
    %v9948 = vpack.c.b16 %v8172, %v8148
    %v9949 = vpack.c.b16 %v8173, %v8149
    %v9950 = vpack.c.b16 %v8174, %v8150
    %v9951 = vpack.c.b16 %v8175, %v8151
    %v9952 = vpack.c.b16 %v8176, %v8152
    %v9953 = vpack.c.b16 %v8177, %v8153
    %v9954 = vpack.c.b16 %v8178, %v8154
    %v9955 = vpack.c.b16 %v8179, %v8155
    %v9956 = vpack.c.b16 %v8180, %v8156
    %v9957 = vpack.c.b16 %v8205, %v8181
    %v9958 = vpack.c.b16 %v8206, %v8182
    %v9959 = vpack.c.b16 %v8207, %v8183
    %v9960 = vpack.c.b16 %v8208, %v8184
    %v9961 = vpack.c.b16 %v8209, %v8185
    %v9962 = vpack.c.b16 %v8210, %v8186
    %v9963 = vpack.c.b16 %v8211, %v8187
    %v9964 = vpack.c.b16 %v8212, %v8188
    %v9965 = vpack.c.b16 %v8213, %v8189
    %v9966 = vpack.c.b16 %v8214, %v8190
    %v9967 = vpack.c.b16 %v8215, %v8191
    %v9968 = vpack.c.b16 %v8216, %v8192
    %v9969 = vpack.c.b16 %v8217, %v8193
    %v9970 = vpack.c.b16 %v8218, %v8194
    %v9971 = vpack.c.b16 %v8219, %v8195
    %v9972 = vpack.c.b16 %v8220, %v8196
    %v9973 = vpack.c.b16 %v8221, %v8197
    %v9974 = vpack.c.b16 %v8222, %v8198
    %v9975 = vpack.c.b16 %v8223, %v8199
    %v9976 = vpack.c.b16 %v8224, %v8200
    %v9977 = vpack.c.b16 %v8225, %v8201
    %v9978 = vpack.c.b16 %v8226, %v8202
    %v9979 = vpack.c.b16 %v8227, %v8203
    %v9980 = vpack.c.b16 %v8228, %v8204
    %v9981 = vpack.c.b16 %v8253, %v8229
    %v9982 = vpack.c.b16 %v8254, %v8230
    %v9983 = vpack.c.b16 %v8255, %v8231
    %v9984 = vpack.c.b16 %v8256, %v8232
    %v9985 = vpack.c.b16 %v8257, %v8233
    %v9986 = vpack.c.b16 %v8258, %v8234
    %v9987 = vpack.c.b16 %v8259, %v8235
    %v9988 = vpack.c.b16 %v8260, %v8236
    %v9989 = vpack.c.b16 %v8261, %v8237
    %v9990 = vpack.c.b16 %v8262, %v8238
    %v9991 = vpack.c.b16 %v8263, %v8239
    %v9992 = vpack.c.b16 %v8264, %v8240
    %v9993 = vpack.c.b16 %v8265, %v8241
    %v9994 = vpack.c.b16 %v8266, %v8242
    %v9995 = vpack.c.b16 %v8267, %v8243
    %v9996 = vpack.c.b16 %v8268, %v8244
    %v9997 = vpack.c.b16 %v8269, %v8245
    %v9998 = vpack.c.b16 %v8270, %v8246
    %v9999 = vpack.c.b16 %v8271, %v8247
    %v10000 = vpack.c.b16 %v8272, %v8248
    %v10001 = vpack.c.b16 %v8273, %v8249
    %v10002 = vpack.c.b16 %v8274, %v8250
    %v10003 = vpack.c.b16 %v8275, %v8251
    %v10004 = vpack.c.b16 %v8276, %v8252
    %v10005 = vpack.c.b16 %v8301, %v8277
    %v10006 = vpack.c.b16 %v8302, %v8278
    %v10007 = vpack.c.b16 %v8303, %v8279
    %v10008 = vpack.c.b16 %v8304, %v8280
    %v10009 = vpack.c.b16 %v8305, %v8281
    %v10010 = vpack.c.b16 %v8306, %v8282
    %v10011 = vpack.c.b16 %v8307, %v8283
    %v10012 = vpack.c.b16 %v8308, %v8284
    %v10013 = vpack.c.b16 %v8309, %v8285
    %v10014 = vpack.c.b16 %v8310, %v8286
    %v10015 = vpack.c.b16 %v8311, %v8287
    %v10016 = vpack.c.b16 %v8312, %v8288
    %v10017 = vpack.c.b16 %v8313, %v8289
    %v10018 = vpack.c.b16 %v8314, %v8290
    %v10019 = vpack.c.b16 %v8315, %v8291
    %v10020 = vpack.c.b16 %v8316, %v8292
    %v10021 = vpack.c.b16 %v8317, %v8293
    %v10022 = vpack.c.b16 %v8318, %v8294
    %v10023 = vpack.c.b16 %v8319, %v8295
    %v10024 = vpack.c.b16 %v8320, %v8296
    %v10025 = vpack.c.b16 %v8321, %v8297
    %v10026 = vpack.c.b16 %v8322, %v8298
    %v10027 = vpack.c.b16 %v8323, %v8299
    %v10028 = vpack.c.b16 %v8324, %v8300
    %v10029 = vpack.c.b16 %v8349, %v8325
    %v10030 = vpack.c.b16 %v8350, %v8326
    %v10031 = vpack.c.b16 %v8351, %v8327
    %v10032 = vpack.c.b16 %v8352, %v8328
    %v10033 = vpack.c.b16 %v8353, %v8329
    %v10034 = vpack.c.b16 %v8354, %v8330
    %v10035 = vpack.c.b16 %v8355, %v8331
    %v10036 = vpack.c.b16 %v8356, %v8332
    %v10037 = vpack.c.b16 %v8357, %v8333
    %v10038 = vpack.c.b16 %v8358, %v8334
    %v10039 = vpack.c.b16 %v8359, %v8335
    %v10040 = vpack.c.b16 %v8360, %v8336
    %v10041 = vpack.c.b16 %v8361, %v8337
    %v10042 = vpack.c.b16 %v8362, %v8338
    %v10043 = vpack.c.b16 %v8363, %v8339
    %v10044 = vpack.c.b16 %v8364, %v8340
    %v10045 = vpack.c.b16 %v8365, %v8341
    %v10046 = vpack.c.b16 %v8366, %v8342
    %v10047 = vpack.c.b16 %v8367, %v8343
    %v10048 = vpack.c.b16 %v8368, %v8344
    %v10049 = vpack.c.b16 %v8369, %v8345
    %v10050 = vpack.c.b16 %v8370, %v8346
    %v10051 = vpack.c.b16 %v8371, %v8347
    %v10052 = vpack.c.b16 %v8372, %v8348
    %v10053 = vpack.c.b16 %v8397, %v8373
    %v10054 = vpack.c.b16 %v8398, %v8374
    %v10055 = vpack.c.b16 %v8399, %v8375
    %v10056 = vpack.c.b16 %v8400, %v8376
    %v10057 = vpack.c.b16 %v8401, %v8377
    %v10058 = vpack.c.b16 %v8402, %v8378
    %v10059 = vpack.c.b16 %v8403, %v8379
    %v10060 = vpack.c.b16 %v8404, %v8380
    %v10061 = vpack.c.b16 %v8405, %v8381
    %v10062 = vpack.c.b16 %v8406, %v8382
    %v10063 = vpack.c.b16 %v8407, %v8383
    %v10064 = vpack.c.b16 %v8408, %v8384
    %v10065 = vpack.c.b16 %v8409, %v8385
    %v10066 = vpack.c.b16 %v8410, %v8386
    %v10067 = vpack.c.b16 %v8411, %v8387
    %v10068 = vpack.c.b16 %v8412, %v8388
    %v10069 = vpack.c.b16 %v8413, %v8389
    %v10070 = vpack.c.b16 %v8414, %v8390
    %v10071 = vpack.c.b16 %v8415, %v8391
    %v10072 = vpack.c.b16 %v8416, %v8392
    %v10073 = vpack.c.b16 %v8417, %v8393
    %v10074 = vpack.c.b16 %v8418, %v8394
    %v10075 = vpack.c.b16 %v8419, %v8395
    %v10076 = vpack.c.b16 %v8420, %v8396
    %v10077 = vpack.c.b16 %v8445, %v8421
    %v10078 = vpack.c.b16 %v8446, %v8422
    %v10079 = vpack.c.b16 %v8447, %v8423
    %v10080 = vpack.c.b16 %v8448, %v8424
    %v10081 = vpack.c.b16 %v8449, %v8425
    %v10082 = vpack.c.b16 %v8450, %v8426
    %v10083 = vpack.c.b16 %v8451, %v8427
    %v10084 = vpack.c.b16 %v8452, %v8428
    %v10085 = vpack.c.b16 %v8453, %v8429
    %v10086 = vpack.c.b16 %v8454, %v8430
    %v10087 = vpack.c.b16 %v8455, %v8431
    %v10088 = vpack.c.b16 %v8456, %v8432
    %v10089 = vpack.c.b16 %v8457, %v8433
    %v10090 = vpack.c.b16 %v8458, %v8434
    %v10091 = vpack.c.b16 %v8459, %v8435
    %v10092 = vpack.c.b16 %v8460, %v8436
    %v10093 = vpack.c.b16 %v8461, %v8437
    %v10094 = vpack.c.b16 %v8462, %v8438
    %v10095 = vpack.c.b16 %v8463, %v8439
    %v10096 = vpack.c.b16 %v8464, %v8440
    %v10097 = vpack.c.b16 %v8465, %v8441
    %v10098 = vpack.c.b16 %v8466, %v8442
    %v10099 = vpack.c.b16 %v8467, %v8443
    %v10100 = vpack.c.b16 %v8468, %v8444
    %v10101 = vpack.c.b16 %v8493, %v8469
    %v10102 = vpack.c.b16 %v8494, %v8470
    %v10103 = vpack.c.b16 %v8495, %v8471
    %v10104 = vpack.c.b16 %v8496, %v8472
    %v10105 = vpack.c.b16 %v8497, %v8473
    %v10106 = vpack.c.b16 %v8498, %v8474
    %v10107 = vpack.c.b16 %v8499, %v8475
    %v10108 = vpack.c.b16 %v8500, %v8476
    %v10109 = vpack.c.b16 %v8501, %v8477
    %v10110 = vpack.c.b16 %v8502, %v8478
    %v10111 = vpack.c.b16 %v8503, %v8479
    %v10112 = vpack.c.b16 %v8504, %v8480
    %v10113 = vpack.c.b16 %v8505, %v8481
    %v10114 = vpack.c.b16 %v8506, %v8482
    %v10115 = vpack.c.b16 %v8507, %v8483
    %v10116 = vpack.c.b16 %v8508, %v8484
    %v10117 = vpack.c.b16 %v8509, %v8485
    %v10118 = vpack.c.b16 %v8510, %v8486
    %v10119 = vpack.c.b16 %v8511, %v8487
    %v10120 = vpack.c.b16 %v8512, %v8488
    %v10121 = vpack.c.b16 %v8513, %v8489
    %v10122 = vpack.c.b16 %v8514, %v8490
    %v10123 = vpack.c.b16 %v8515, %v8491
    %v10124 = vpack.c.b16 %v8516, %v8492
    %v10125 = vpack.c.b16 %v8541, %v8517
    %v10126 = vpack.c.b16 %v8542, %v8518
    %v10127 = vpack.c.b16 %v8543, %v8519
    %v10128 = vpack.c.b16 %v8544, %v8520
    %v10129 = vpack.c.b16 %v8545, %v8521
    %v10130 = vpack.c.b16 %v8546, %v8522
    %v10131 = vpack.c.b16 %v8547, %v8523
    %v10132 = vpack.c.b16 %v8548, %v8524
    %v10133 = vpack.c.b16 %v8549, %v8525
    %v10134 = vpack.c.b16 %v8550, %v8526
    %v10135 = vpack.c.b16 %v8551, %v8527
    %v10136 = vpack.c.b16 %v8552, %v8528
    %v10137 = vpack.c.b16 %v8553, %v8529
    %v10138 = vpack.c.b16 %v8554, %v8530
    %v10139 = vpack.c.b16 %v8555, %v8531
    %v10140 = vpack.c.b16 %v8556, %v8532
    %v10141 = vpack.c.b16 %v8557, %v8533
    %v10142 = vpack.c.b16 %v8558, %v8534
    %v10143 = vpack.c.b16 %v8559, %v8535
    %v10144 = vpack.c.b16 %v8560, %v8536
    %v10145 = vpack.c.b16 %v8561, %v8537
    %v10146 = vpack.c.b16 %v8562, %v8538
    %v10147 = vpack.c.b16 %v8563, %v8539
    %v10148 = vpack.c.b16 %v8564, %v8540
    %v10149 = vpack.c.b16 %v8589, %v8565
    %v10150 = vpack.c.b16 %v8590, %v8566
    %v10151 = vpack.c.b16 %v8591, %v8567
    %v10152 = vpack.c.b16 %v8592, %v8568
    %v10153 = vpack.c.b16 %v8593, %v8569
    %v10154 = vpack.c.b16 %v8594, %v8570
    %v10155 = vpack.c.b16 %v8595, %v8571
    %v10156 = vpack.c.b16 %v8596, %v8572
    %v10157 = vpack.c.b16 %v8597, %v8573
    %v10158 = vpack.c.b16 %v8598, %v8574
    %v10159 = vpack.c.b16 %v8599, %v8575
    %v10160 = vpack.c.b16 %v8600, %v8576
    %v10161 = vpack.c.b16 %v8601, %v8577
    %v10162 = vpack.c.b16 %v8602, %v8578
    %v10163 = vpack.c.b16 %v8603, %v8579
    %v10164 = vpack.c.b16 %v8604, %v8580
    %v10165 = vpack.c.b16 %v8605, %v8581
    %v10166 = vpack.c.b16 %v8606, %v8582
    %v10167 = vpack.c.b16 %v8607, %v8583
    %v10168 = vpack.c.b16 %v8608, %v8584
    %v10169 = vpack.c.b16 %v8609, %v8585
    %v10170 = vpack.c.b16 %v8610, %v8586
    %v10171 = vpack.c.b16 %v8611, %v8587
    %v10172 = vpack.c.b16 %v8612, %v8588
    %v10173 = vpack.c.b16 %v8637, %v8613
    %v10174 = vpack.c.b16 %v8638, %v8614
    %v10175 = vpack.c.b16 %v8639, %v8615
    %v10176 = vpack.c.b16 %v8640, %v8616
    %v10177 = vpack.c.b16 %v8641, %v8617
    %v10178 = vpack.c.b16 %v8642, %v8618
    %v10179 = vpack.c.b16 %v8643, %v8619
    %v10180 = vpack.c.b16 %v8644, %v8620
    %v10181 = vpack.c.b16 %v8645, %v8621
    %v10182 = vpack.c.b16 %v8646, %v8622
    %v10183 = vpack.c.b16 %v8647, %v8623
    %v10184 = vpack.c.b16 %v8648, %v8624
    %v10185 = vpack.c.b16 %v8649, %v8625
    %v10186 = vpack.c.b16 %v8650, %v8626
    %v10187 = vpack.c.b16 %v8651, %v8627
    %v10188 = vpack.c.b16 %v8652, %v8628
    %v10189 = vpack.c.b16 %v8653, %v8629
    %v10190 = vpack.c.b16 %v8654, %v8630
    %v10191 = vpack.c.b16 %v8655, %v8631
    %v10192 = vpack.c.b16 %v8656, %v8632
    %v10193 = vpack.c.b16 %v8657, %v8633
    %v10194 = vpack.c.b16 %v8658, %v8634
    %v10195 = vpack.c.b16 %v8659, %v8635
    %v10196 = vpack.c.b16 %v8660, %v8636
    %11733 = vmatpush.bf16.msra.mxu0 %v8829
    %11734 = vmatpush.bf16.msra.mxu0 %v8805
    %11735 = vmatpush.bf16.msra.mxu0 %v8781
    %11736 = vmatpush.bf16.msra.mxu0 %v8757
    %11737 = vmatpush.bf16.msra.mxu0 %v8733
    %11738 = vmatpush.bf16.msra.mxu0 %v8709
    %11739 = vmatpush.bf16.msra.mxu0 %v8685
    %11740 = vmatpush.bf16.msra.mxu0 %v8661
    %11741 = vmatmul.bf16.gmra.mxu0 %v2455
    %v11742 = vpop.f32.mrf.mxu0
    %v11743 = vadd.f32 %v4005, %v11742
    %v11744 = vpop.f32.mrf.mxu0
    %11745 = vdwg.mxu0
    %11746 = vmatpush.bf16.msra.mxu0 %v9021
    %11747 = vmatpush.bf16.msra.mxu0 %v8997
    %11748 = vmatpush.bf16.msra.mxu0 %v8973
    %11749 = vmatpush.bf16.msra.mxu0 %v8949
    %11750 = vmatpush.bf16.msra.mxu0 %v8925
    %11751 = vmatpush.bf16.msra.mxu0 %v8901
    %11752 = vmatpush.bf16.msra.mxu0 %v8877
    %11753 = vmatpush.bf16.msra.mxu0 %v8853
    %11754 = vmatmul.bf16.gmra.mxu0 %v2456
    %v11755 = vpop.f32.mrf.mxu0
    %v11756 = vadd.f32 %v11743, %v11755
    %v11757 = vpop.f32.mrf.mxu0
    %11758 = vdwg.mxu0
    %11759 = vmatpush.bf16.msra.mxu0 %v9213
    %11760 = vmatpush.bf16.msra.mxu0 %v9189
    %11761 = vmatpush.bf16.msra.mxu0 %v9165
    %11762 = vmatpush.bf16.msra.mxu0 %v9141
    %11763 = vmatpush.bf16.msra.mxu0 %v9117
    %11764 = vmatpush.bf16.msra.mxu0 %v9093
    %11765 = vmatpush.bf16.msra.mxu0 %v9069
    %11766 = vmatpush.bf16.msra.mxu0 %v9045
    %11767 = vmatmul.bf16.gmra.mxu0 %v2457
    %v11768 = vpop.f32.mrf.mxu0
    %v11769 = vadd.f32 %v11756, %v11768
    %v11770 = vpop.f32.mrf.mxu0
    %11771 = vdwg.mxu0
    %11772 = vmatpush.bf16.msra.mxu0 %v9405
    %11773 = vmatpush.bf16.msra.mxu0 %v9381
    %11774 = vmatpush.bf16.msra.mxu0 %v9357
    %11775 = vmatpush.bf16.msra.mxu0 %v9333
    %11776 = vmatpush.bf16.msra.mxu0 %v9309
    %11777 = vmatpush.bf16.msra.mxu0 %v9285
    %11778 = vmatpush.bf16.msra.mxu0 %v9261
    %11779 = vmatpush.bf16.msra.mxu0 %v9237
    %11780 = vmatmul.bf16.gmra.mxu0 %v2458
    %v11781 = vpop.f32.mrf.mxu0
    %v11782 = vadd.f32 %v11769, %v11781
    %v11783 = vpop.f32.mrf.mxu0
    %11784 = vdwg.mxu0
    %11785 = vmatpush.bf16.msra.mxu0 %v9597
    %11786 = vmatpush.bf16.msra.mxu0 %v9573
    %11787 = vmatpush.bf16.msra.mxu0 %v9549
    %11788 = vmatpush.bf16.msra.mxu0 %v9525
    %11789 = vmatpush.bf16.msra.mxu0 %v9501
    %11790 = vmatpush.bf16.msra.mxu0 %v9477
    %11791 = vmatpush.bf16.msra.mxu0 %v9453
    %11792 = vmatpush.bf16.msra.mxu0 %v9429
    %11793 = vmatmul.bf16.gmra.mxu0 %v2459
    %v11794 = vpop.f32.mrf.mxu0
    %v11795 = vadd.f32 %v11782, %v11794
    %v11796 = vpop.f32.mrf.mxu0
    %11797 = vdwg.mxu0
    %11798 = vmatpush.bf16.msra.mxu0 %v9789
    %11799 = vmatpush.bf16.msra.mxu0 %v9765
    %11800 = vmatpush.bf16.msra.mxu0 %v9741
    %11801 = vmatpush.bf16.msra.mxu0 %v9717
    %11802 = vmatpush.bf16.msra.mxu0 %v9693
    %11803 = vmatpush.bf16.msra.mxu0 %v9669
    %11804 = vmatpush.bf16.msra.mxu0 %v9645
    %11805 = vmatpush.bf16.msra.mxu0 %v9621
    %11806 = vmatmul.bf16.gmra.mxu0 %v2460
    %v11807 = vpop.f32.mrf.mxu0
    %v11808 = vadd.f32 %v11795, %v11807
    %v11809 = vpop.f32.mrf.mxu0
    %11810 = vdwg.mxu0
    %11811 = vmatpush.bf16.msra.mxu0 %v9981
    %11812 = vmatpush.bf16.msra.mxu0 %v9957
    %11813 = vmatpush.bf16.msra.mxu0 %v9933
    %11814 = vmatpush.bf16.msra.mxu0 %v9909
    %11815 = vmatpush.bf16.msra.mxu0 %v9885
    %11816 = vmatpush.bf16.msra.mxu0 %v9861
    %11817 = vmatpush.bf16.msra.mxu0 %v9837
    %11818 = vmatpush.bf16.msra.mxu0 %v9813
    %11819 = vmatmul.bf16.gmra.mxu0 %v2461
    %v11820 = vpop.f32.mrf.mxu0
    %v11821 = vadd.f32 %v11808, %v11820
    %v11822 = vpop.f32.mrf.mxu0
    %11823 = vdwg.mxu0
    %11824 = vmatpush.bf16.msra.mxu0 %v10173
    %11825 = vmatpush.bf16.msra.mxu0 %v10149
    %11826 = vmatpush.bf16.msra.mxu0 %v10125
    %11827 = vmatpush.bf16.msra.mxu0 %v10101
    %11828 = vmatpush.bf16.msra.mxu0 %v10077
    %11829 = vmatpush.bf16.msra.mxu0 %v10053
    %11830 = vmatpush.bf16.msra.mxu0 %v10029
    %11831 = vmatpush.bf16.msra.mxu0 %v10005
    %11832 = vmatmul.bf16.gmra.mxu0 %v2462
    %v11833 = vpop.f32.mrf.mxu0
    %v11834 = vadd.f32 %v11821, %v11833
    %v11835 = vpop.f32.mrf.mxu0
    %11836 = vdwg.mxu0
    %11837 = vmatpush.bf16.msra.mxu0 %v8830
    %11838 = vmatpush.bf16.msra.mxu0 %v8806
    %11839 = vmatpush.bf16.msra.mxu0 %v8782
    %11840 = vmatpush.bf16.msra.mxu0 %v8758
    %11841 = vmatpush.bf16.msra.mxu0 %v8734
    %11842 = vmatpush.bf16.msra.mxu0 %v8710
    %11843 = vmatpush.bf16.msra.mxu0 %v8686
    %11844 = vmatpush.bf16.msra.mxu0 %v8662
    %11845 = vmatmul.bf16.gmra.mxu0 %v2455
    %v11846 = vpop.f32.mrf.mxu0
    %v11847 = vadd.f32 %v4006, %v11846
    %v11848 = vpop.f32.mrf.mxu0
    %11849 = vdwg.mxu0
    %11850 = vmatpush.bf16.msra.mxu0 %v9022
    %11851 = vmatpush.bf16.msra.mxu0 %v8998
    %11852 = vmatpush.bf16.msra.mxu0 %v8974
    %11853 = vmatpush.bf16.msra.mxu0 %v8950
    %11854 = vmatpush.bf16.msra.mxu0 %v8926
    %11855 = vmatpush.bf16.msra.mxu0 %v8902
    %11856 = vmatpush.bf16.msra.mxu0 %v8878
    %11857 = vmatpush.bf16.msra.mxu0 %v8854
    %11858 = vmatmul.bf16.gmra.mxu0 %v2456
    %v11859 = vpop.f32.mrf.mxu0
    %v11860 = vadd.f32 %v11847, %v11859
    %v11861 = vpop.f32.mrf.mxu0
    %11862 = vdwg.mxu0
    %11863 = vmatpush.bf16.msra.mxu0 %v9214
    %11864 = vmatpush.bf16.msra.mxu0 %v9190
    %11865 = vmatpush.bf16.msra.mxu0 %v9166
    %11866 = vmatpush.bf16.msra.mxu0 %v9142
    %11867 = vmatpush.bf16.msra.mxu0 %v9118
    %11868 = vmatpush.bf16.msra.mxu0 %v9094
    %11869 = vmatpush.bf16.msra.mxu0 %v9070
    %11870 = vmatpush.bf16.msra.mxu0 %v9046
    %11871 = vmatmul.bf16.gmra.mxu0 %v2457
    %v11872 = vpop.f32.mrf.mxu0
    %v11873 = vadd.f32 %v11860, %v11872
    %v11874 = vpop.f32.mrf.mxu0
    %11875 = vdwg.mxu0
    %11876 = vmatpush.bf16.msra.mxu0 %v9406
    %11877 = vmatpush.bf16.msra.mxu0 %v9382
    %11878 = vmatpush.bf16.msra.mxu0 %v9358
    %11879 = vmatpush.bf16.msra.mxu0 %v9334
    %11880 = vmatpush.bf16.msra.mxu0 %v9310
    %11881 = vmatpush.bf16.msra.mxu0 %v9286
    %11882 = vmatpush.bf16.msra.mxu0 %v9262
    %11883 = vmatpush.bf16.msra.mxu0 %v9238
    %11884 = vmatmul.bf16.gmra.mxu0 %v2458
    %v11885 = vpop.f32.mrf.mxu0
    %v11886 = vadd.f32 %v11873, %v11885
    %v11887 = vpop.f32.mrf.mxu0
    %11888 = vdwg.mxu0
    %11889 = vmatpush.bf16.msra.mxu0 %v9598
    %11890 = vmatpush.bf16.msra.mxu0 %v9574
    %11891 = vmatpush.bf16.msra.mxu0 %v9550
    %11892 = vmatpush.bf16.msra.mxu0 %v9526
    %11893 = vmatpush.bf16.msra.mxu0 %v9502
    %11894 = vmatpush.bf16.msra.mxu0 %v9478
    %11895 = vmatpush.bf16.msra.mxu0 %v9454
    %11896 = vmatpush.bf16.msra.mxu0 %v9430
    %11897 = vmatmul.bf16.gmra.mxu0 %v2459
    %v11898 = vpop.f32.mrf.mxu0
    %v11899 = vadd.f32 %v11886, %v11898
    %v11900 = vpop.f32.mrf.mxu0
    %11901 = vdwg.mxu0
    %11902 = vmatpush.bf16.msra.mxu0 %v9790
    %11903 = vmatpush.bf16.msra.mxu0 %v9766
    %11904 = vmatpush.bf16.msra.mxu0 %v9742
    %11905 = vmatpush.bf16.msra.mxu0 %v9718
    %11906 = vmatpush.bf16.msra.mxu0 %v9694
    %11907 = vmatpush.bf16.msra.mxu0 %v9670
    %11908 = vmatpush.bf16.msra.mxu0 %v9646
    %11909 = vmatpush.bf16.msra.mxu0 %v9622
    %11910 = vmatmul.bf16.gmra.mxu0 %v2460
    %v11911 = vpop.f32.mrf.mxu0
    %v11912 = vadd.f32 %v11899, %v11911
    %v11913 = vpop.f32.mrf.mxu0
    %11914 = vdwg.mxu0
    %11915 = vmatpush.bf16.msra.mxu0 %v9982
    %11916 = vmatpush.bf16.msra.mxu0 %v9958
    %11917 = vmatpush.bf16.msra.mxu0 %v9934
    %11918 = vmatpush.bf16.msra.mxu0 %v9910
    %11919 = vmatpush.bf16.msra.mxu0 %v9886
    %11920 = vmatpush.bf16.msra.mxu0 %v9862
    %11921 = vmatpush.bf16.msra.mxu0 %v9838
    %11922 = vmatpush.bf16.msra.mxu0 %v9814
    %11923 = vmatmul.bf16.gmra.mxu0 %v2461
    %v11924 = vpop.f32.mrf.mxu0
    %v11925 = vadd.f32 %v11912, %v11924
    %v11926 = vpop.f32.mrf.mxu0
    %11927 = vdwg.mxu0
    %11928 = vmatpush.bf16.msra.mxu0 %v10174
    %11929 = vmatpush.bf16.msra.mxu0 %v10150
    %11930 = vmatpush.bf16.msra.mxu0 %v10126
    %11931 = vmatpush.bf16.msra.mxu0 %v10102
    %11932 = vmatpush.bf16.msra.mxu0 %v10078
    %11933 = vmatpush.bf16.msra.mxu0 %v10054
    %11934 = vmatpush.bf16.msra.mxu0 %v10030
    %11935 = vmatpush.bf16.msra.mxu0 %v10006
    %11936 = vmatmul.bf16.gmra.mxu0 %v2462
    %v11937 = vpop.f32.mrf.mxu0
    %v11938 = vadd.f32 %v11925, %v11937
    %v11939 = vpop.f32.mrf.mxu0
    %11940 = vdwg.mxu0
    %11941 = vmatpush.bf16.msra.mxu0 %v8831
    %11942 = vmatpush.bf16.msra.mxu0 %v8807
    %11943 = vmatpush.bf16.msra.mxu0 %v8783
    %11944 = vmatpush.bf16.msra.mxu0 %v8759
    %11945 = vmatpush.bf16.msra.mxu0 %v8735
    %11946 = vmatpush.bf16.msra.mxu0 %v8711
    %11947 = vmatpush.bf16.msra.mxu0 %v8687
    %11948 = vmatpush.bf16.msra.mxu0 %v8663
    %11949 = vmatmul.bf16.gmra.mxu0 %v2455
    %v11950 = vpop.f32.mrf.mxu0
    %v11951 = vadd.f32 %v4007, %v11950
    %v11952 = vpop.f32.mrf.mxu0
    %11953 = vdwg.mxu0
    %11954 = vmatpush.bf16.msra.mxu0 %v9023
    %11955 = vmatpush.bf16.msra.mxu0 %v8999
    %11956 = vmatpush.bf16.msra.mxu0 %v8975
    %11957 = vmatpush.bf16.msra.mxu0 %v8951
    %11958 = vmatpush.bf16.msra.mxu0 %v8927
    %11959 = vmatpush.bf16.msra.mxu0 %v8903
    %11960 = vmatpush.bf16.msra.mxu0 %v8879
    %11961 = vmatpush.bf16.msra.mxu0 %v8855
    %11962 = vmatmul.bf16.gmra.mxu0 %v2456
    %v11963 = vpop.f32.mrf.mxu0
    %v11964 = vadd.f32 %v11951, %v11963
    %v11965 = vpop.f32.mrf.mxu0
    %11966 = vdwg.mxu0
    %11967 = vmatpush.bf16.msra.mxu0 %v9215
    %11968 = vmatpush.bf16.msra.mxu0 %v9191
    %11969 = vmatpush.bf16.msra.mxu0 %v9167
    %11970 = vmatpush.bf16.msra.mxu0 %v9143
    %11971 = vmatpush.bf16.msra.mxu0 %v9119
    %11972 = vmatpush.bf16.msra.mxu0 %v9095
    %11973 = vmatpush.bf16.msra.mxu0 %v9071
    %11974 = vmatpush.bf16.msra.mxu0 %v9047
    %11975 = vmatmul.bf16.gmra.mxu0 %v2457
    %v11976 = vpop.f32.mrf.mxu0
    %v11977 = vadd.f32 %v11964, %v11976
    %v11978 = vpop.f32.mrf.mxu0
    %11979 = vdwg.mxu0
    %11980 = vmatpush.bf16.msra.mxu0 %v9407
    %11981 = vmatpush.bf16.msra.mxu0 %v9383
    %11982 = vmatpush.bf16.msra.mxu0 %v9359
    %11983 = vmatpush.bf16.msra.mxu0 %v9335
    %11984 = vmatpush.bf16.msra.mxu0 %v9311
    %11985 = vmatpush.bf16.msra.mxu0 %v9287
    %11986 = vmatpush.bf16.msra.mxu0 %v9263
    %11987 = vmatpush.bf16.msra.mxu0 %v9239
    %11988 = vmatmul.bf16.gmra.mxu0 %v2458
    %v11989 = vpop.f32.mrf.mxu0
    %v11990 = vadd.f32 %v11977, %v11989
    %v11991 = vpop.f32.mrf.mxu0
    %11992 = vdwg.mxu0
    %11993 = vmatpush.bf16.msra.mxu0 %v9599
    %11994 = vmatpush.bf16.msra.mxu0 %v9575
    %11995 = vmatpush.bf16.msra.mxu0 %v9551
    %11996 = vmatpush.bf16.msra.mxu0 %v9527
    %11997 = vmatpush.bf16.msra.mxu0 %v9503
    %11998 = vmatpush.bf16.msra.mxu0 %v9479
    %11999 = vmatpush.bf16.msra.mxu0 %v9455
    %12000 = vmatpush.bf16.msra.mxu0 %v9431
    %12001 = vmatmul.bf16.gmra.mxu0 %v2459
    %v12002 = vpop.f32.mrf.mxu0
    %v12003 = vadd.f32 %v11990, %v12002
    %v12004 = vpop.f32.mrf.mxu0
    %12005 = vdwg.mxu0
    %12006 = vmatpush.bf16.msra.mxu0 %v9791
    %12007 = vmatpush.bf16.msra.mxu0 %v9767
    %12008 = vmatpush.bf16.msra.mxu0 %v9743
    %12009 = vmatpush.bf16.msra.mxu0 %v9719
    %12010 = vmatpush.bf16.msra.mxu0 %v9695
    %12011 = vmatpush.bf16.msra.mxu0 %v9671
    %12012 = vmatpush.bf16.msra.mxu0 %v9647
    %12013 = vmatpush.bf16.msra.mxu0 %v9623
    %12014 = vmatmul.bf16.gmra.mxu0 %v2460
    %v12015 = vpop.f32.mrf.mxu0
    %v12016 = vadd.f32 %v12003, %v12015
    %v12017 = vpop.f32.mrf.mxu0
    %12018 = vdwg.mxu0
    %12019 = vmatpush.bf16.msra.mxu0 %v9983
    %12020 = vmatpush.bf16.msra.mxu0 %v9959
    %12021 = vmatpush.bf16.msra.mxu0 %v9935
    %12022 = vmatpush.bf16.msra.mxu0 %v9911
    %12023 = vmatpush.bf16.msra.mxu0 %v9887
    %12024 = vmatpush.bf16.msra.mxu0 %v9863
    %12025 = vmatpush.bf16.msra.mxu0 %v9839
    %12026 = vmatpush.bf16.msra.mxu0 %v9815
    %12027 = vmatmul.bf16.gmra.mxu0 %v2461
    %v12028 = vpop.f32.mrf.mxu0
    %v12029 = vadd.f32 %v12016, %v12028
    %v12030 = vpop.f32.mrf.mxu0
    %12031 = vdwg.mxu0
    %12032 = vmatpush.bf16.msra.mxu0 %v10175
    %12033 = vmatpush.bf16.msra.mxu0 %v10151
    %12034 = vmatpush.bf16.msra.mxu0 %v10127
    %12035 = vmatpush.bf16.msra.mxu0 %v10103
    %12036 = vmatpush.bf16.msra.mxu0 %v10079
    %12037 = vmatpush.bf16.msra.mxu0 %v10055
    %12038 = vmatpush.bf16.msra.mxu0 %v10031
    %12039 = vmatpush.bf16.msra.mxu0 %v10007
    %12040 = vmatmul.bf16.gmra.mxu0 %v2462
    %v12041 = vpop.f32.mrf.mxu0
    %v12042 = vadd.f32 %v12029, %v12041
    %v12043 = vpop.f32.mrf.mxu0
    %12044 = vdwg.mxu0
    %12045 = vmatpush.bf16.msra.mxu0 %v8832
    %12046 = vmatpush.bf16.msra.mxu0 %v8808
    %12047 = vmatpush.bf16.msra.mxu0 %v8784
    %12048 = vmatpush.bf16.msra.mxu0 %v8760
    %12049 = vmatpush.bf16.msra.mxu0 %v8736
    %12050 = vmatpush.bf16.msra.mxu0 %v8712
    %12051 = vmatpush.bf16.msra.mxu0 %v8688
    %12052 = vmatpush.bf16.msra.mxu0 %v8664
    %12053 = vmatmul.bf16.gmra.mxu0 %v2455
    %v12054 = vpop.f32.mrf.mxu0
    %v12055 = vadd.f32 %v4008, %v12054
    %v12056 = vpop.f32.mrf.mxu0
    %12057 = vdwg.mxu0
    %12058 = vmatpush.bf16.msra.mxu0 %v9024
    %12059 = vmatpush.bf16.msra.mxu0 %v9000
    %12060 = vmatpush.bf16.msra.mxu0 %v8976
    %12061 = vmatpush.bf16.msra.mxu0 %v8952
    %12062 = vmatpush.bf16.msra.mxu0 %v8928
    %12063 = vmatpush.bf16.msra.mxu0 %v8904
    %12064 = vmatpush.bf16.msra.mxu0 %v8880
    %12065 = vmatpush.bf16.msra.mxu0 %v8856
    %12066 = vmatmul.bf16.gmra.mxu0 %v2456
    %v12067 = vpop.f32.mrf.mxu0
    %v12068 = vadd.f32 %v12055, %v12067
    %v12069 = vpop.f32.mrf.mxu0
    %12070 = vdwg.mxu0
    %12071 = vmatpush.bf16.msra.mxu0 %v9216
    %12072 = vmatpush.bf16.msra.mxu0 %v9192
    %12073 = vmatpush.bf16.msra.mxu0 %v9168
    %12074 = vmatpush.bf16.msra.mxu0 %v9144
    %12075 = vmatpush.bf16.msra.mxu0 %v9120
    %12076 = vmatpush.bf16.msra.mxu0 %v9096
    %12077 = vmatpush.bf16.msra.mxu0 %v9072
    %12078 = vmatpush.bf16.msra.mxu0 %v9048
    %12079 = vmatmul.bf16.gmra.mxu0 %v2457
    %v12080 = vpop.f32.mrf.mxu0
    %v12081 = vadd.f32 %v12068, %v12080
    %v12082 = vpop.f32.mrf.mxu0
    %12083 = vdwg.mxu0
    %12084 = vmatpush.bf16.msra.mxu0 %v9408
    %12085 = vmatpush.bf16.msra.mxu0 %v9384
    %12086 = vmatpush.bf16.msra.mxu0 %v9360
    %12087 = vmatpush.bf16.msra.mxu0 %v9336
    %12088 = vmatpush.bf16.msra.mxu0 %v9312
    %12089 = vmatpush.bf16.msra.mxu0 %v9288
    %12090 = vmatpush.bf16.msra.mxu0 %v9264
    %12091 = vmatpush.bf16.msra.mxu0 %v9240
    %12092 = vmatmul.bf16.gmra.mxu0 %v2458
    %v12093 = vpop.f32.mrf.mxu0
    %v12094 = vadd.f32 %v12081, %v12093
    %v12095 = vpop.f32.mrf.mxu0
    %12096 = vdwg.mxu0
    %12097 = vmatpush.bf16.msra.mxu0 %v9600
    %12098 = vmatpush.bf16.msra.mxu0 %v9576
    %12099 = vmatpush.bf16.msra.mxu0 %v9552
    %12100 = vmatpush.bf16.msra.mxu0 %v9528
    %12101 = vmatpush.bf16.msra.mxu0 %v9504
    %12102 = vmatpush.bf16.msra.mxu0 %v9480
    %12103 = vmatpush.bf16.msra.mxu0 %v9456
    %12104 = vmatpush.bf16.msra.mxu0 %v9432
    %12105 = vmatmul.bf16.gmra.mxu0 %v2459
    %v12106 = vpop.f32.mrf.mxu0
    %v12107 = vadd.f32 %v12094, %v12106
    %v12108 = vpop.f32.mrf.mxu0
    %12109 = vdwg.mxu0
    %12110 = vmatpush.bf16.msra.mxu0 %v9792
    %12111 = vmatpush.bf16.msra.mxu0 %v9768
    %12112 = vmatpush.bf16.msra.mxu0 %v9744
    %12113 = vmatpush.bf16.msra.mxu0 %v9720
    %12114 = vmatpush.bf16.msra.mxu0 %v9696
    %12115 = vmatpush.bf16.msra.mxu0 %v9672
    %12116 = vmatpush.bf16.msra.mxu0 %v9648
    %12117 = vmatpush.bf16.msra.mxu0 %v9624
    %12118 = vmatmul.bf16.gmra.mxu0 %v2460
    %v12119 = vpop.f32.mrf.mxu0
    %v12120 = vadd.f32 %v12107, %v12119
    %v12121 = vpop.f32.mrf.mxu0
    %12122 = vdwg.mxu0
    %12123 = vmatpush.bf16.msra.mxu0 %v9984
    %12124 = vmatpush.bf16.msra.mxu0 %v9960
    %12125 = vmatpush.bf16.msra.mxu0 %v9936
    %12126 = vmatpush.bf16.msra.mxu0 %v9912
    %12127 = vmatpush.bf16.msra.mxu0 %v9888
    %12128 = vmatpush.bf16.msra.mxu0 %v9864
    %12129 = vmatpush.bf16.msra.mxu0 %v9840
    %12130 = vmatpush.bf16.msra.mxu0 %v9816
    %12131 = vmatmul.bf16.gmra.mxu0 %v2461
    %v12132 = vpop.f32.mrf.mxu0
    %v12133 = vadd.f32 %v12120, %v12132
    %v12134 = vpop.f32.mrf.mxu0
    %12135 = vdwg.mxu0
    %12136 = vmatpush.bf16.msra.mxu0 %v10176
    %12137 = vmatpush.bf16.msra.mxu0 %v10152
    %12138 = vmatpush.bf16.msra.mxu0 %v10128
    %12139 = vmatpush.bf16.msra.mxu0 %v10104
    %12140 = vmatpush.bf16.msra.mxu0 %v10080
    %12141 = vmatpush.bf16.msra.mxu0 %v10056
    %12142 = vmatpush.bf16.msra.mxu0 %v10032
    %12143 = vmatpush.bf16.msra.mxu0 %v10008
    %12144 = vmatmul.bf16.gmra.mxu0 %v2462
    %v12145 = vpop.f32.mrf.mxu0
    %v12146 = vadd.f32 %v12133, %v12145
    %v12147 = vpop.f32.mrf.mxu0
    %12148 = vdwg.mxu0
    %12149 = vmatpush.bf16.msra.mxu0 %v8833
    %12150 = vmatpush.bf16.msra.mxu0 %v8809
    %12151 = vmatpush.bf16.msra.mxu0 %v8785
    %12152 = vmatpush.bf16.msra.mxu0 %v8761
    %12153 = vmatpush.bf16.msra.mxu0 %v8737
    %12154 = vmatpush.bf16.msra.mxu0 %v8713
    %12155 = vmatpush.bf16.msra.mxu0 %v8689
    %12156 = vmatpush.bf16.msra.mxu0 %v8665
    %12157 = vmatmul.bf16.gmra.mxu0 %v2455
    %v12158 = vpop.f32.mrf.mxu0
    %v12159 = vadd.f32 %v4009, %v12158
    %v12160 = vpop.f32.mrf.mxu0
    %12161 = vdwg.mxu0
    %12162 = vmatpush.bf16.msra.mxu0 %v9025
    %12163 = vmatpush.bf16.msra.mxu0 %v9001
    %12164 = vmatpush.bf16.msra.mxu0 %v8977
    %12165 = vmatpush.bf16.msra.mxu0 %v8953
    %12166 = vmatpush.bf16.msra.mxu0 %v8929
    %12167 = vmatpush.bf16.msra.mxu0 %v8905
    %12168 = vmatpush.bf16.msra.mxu0 %v8881
    %12169 = vmatpush.bf16.msra.mxu0 %v8857
    %12170 = vmatmul.bf16.gmra.mxu0 %v2456
    %v12171 = vpop.f32.mrf.mxu0
    %v12172 = vadd.f32 %v12159, %v12171
    %v12173 = vpop.f32.mrf.mxu0
    %12174 = vdwg.mxu0
    %12175 = vmatpush.bf16.msra.mxu0 %v9217
    %12176 = vmatpush.bf16.msra.mxu0 %v9193
    %12177 = vmatpush.bf16.msra.mxu0 %v9169
    %12178 = vmatpush.bf16.msra.mxu0 %v9145
    %12179 = vmatpush.bf16.msra.mxu0 %v9121
    %12180 = vmatpush.bf16.msra.mxu0 %v9097
    %12181 = vmatpush.bf16.msra.mxu0 %v9073
    %12182 = vmatpush.bf16.msra.mxu0 %v9049
    %12183 = vmatmul.bf16.gmra.mxu0 %v2457
    %v12184 = vpop.f32.mrf.mxu0
    %v12185 = vadd.f32 %v12172, %v12184
    %v12186 = vpop.f32.mrf.mxu0
    %12187 = vdwg.mxu0
    %12188 = vmatpush.bf16.msra.mxu0 %v9409
    %12189 = vmatpush.bf16.msra.mxu0 %v9385
    %12190 = vmatpush.bf16.msra.mxu0 %v9361
    %12191 = vmatpush.bf16.msra.mxu0 %v9337
    %12192 = vmatpush.bf16.msra.mxu0 %v9313
    %12193 = vmatpush.bf16.msra.mxu0 %v9289
    %12194 = vmatpush.bf16.msra.mxu0 %v9265
    %12195 = vmatpush.bf16.msra.mxu0 %v9241
    %12196 = vmatmul.bf16.gmra.mxu0 %v2458
    %v12197 = vpop.f32.mrf.mxu0
    %v12198 = vadd.f32 %v12185, %v12197
    %v12199 = vpop.f32.mrf.mxu0
    %12200 = vdwg.mxu0
    %12201 = vmatpush.bf16.msra.mxu0 %v9601
    %12202 = vmatpush.bf16.msra.mxu0 %v9577
    %12203 = vmatpush.bf16.msra.mxu0 %v9553
    %12204 = vmatpush.bf16.msra.mxu0 %v9529
    %12205 = vmatpush.bf16.msra.mxu0 %v9505
    %12206 = vmatpush.bf16.msra.mxu0 %v9481
    %12207 = vmatpush.bf16.msra.mxu0 %v9457
    %12208 = vmatpush.bf16.msra.mxu0 %v9433
    %12209 = vmatmul.bf16.gmra.mxu0 %v2459
    %v12210 = vpop.f32.mrf.mxu0
    %v12211 = vadd.f32 %v12198, %v12210
    %v12212 = vpop.f32.mrf.mxu0
    %12213 = vdwg.mxu0
    %12214 = vmatpush.bf16.msra.mxu0 %v9793
    %12215 = vmatpush.bf16.msra.mxu0 %v9769
    %12216 = vmatpush.bf16.msra.mxu0 %v9745
    %12217 = vmatpush.bf16.msra.mxu0 %v9721
    %12218 = vmatpush.bf16.msra.mxu0 %v9697
    %12219 = vmatpush.bf16.msra.mxu0 %v9673
    %12220 = vmatpush.bf16.msra.mxu0 %v9649
    %12221 = vmatpush.bf16.msra.mxu0 %v9625
    %12222 = vmatmul.bf16.gmra.mxu0 %v2460
    %v12223 = vpop.f32.mrf.mxu0
    %v12224 = vadd.f32 %v12211, %v12223
    %v12225 = vpop.f32.mrf.mxu0
    %12226 = vdwg.mxu0
    %12227 = vmatpush.bf16.msra.mxu0 %v9985
    %12228 = vmatpush.bf16.msra.mxu0 %v9961
    %12229 = vmatpush.bf16.msra.mxu0 %v9937
    %12230 = vmatpush.bf16.msra.mxu0 %v9913
    %12231 = vmatpush.bf16.msra.mxu0 %v9889
    %12232 = vmatpush.bf16.msra.mxu0 %v9865
    %12233 = vmatpush.bf16.msra.mxu0 %v9841
    %12234 = vmatpush.bf16.msra.mxu0 %v9817
    %12235 = vmatmul.bf16.gmra.mxu0 %v2461
    %v12236 = vpop.f32.mrf.mxu0
    %v12237 = vadd.f32 %v12224, %v12236
    %v12238 = vpop.f32.mrf.mxu0
    %12239 = vdwg.mxu0
    %12240 = vmatpush.bf16.msra.mxu0 %v10177
    %12241 = vmatpush.bf16.msra.mxu0 %v10153
    %12242 = vmatpush.bf16.msra.mxu0 %v10129
    %12243 = vmatpush.bf16.msra.mxu0 %v10105
    %12244 = vmatpush.bf16.msra.mxu0 %v10081
    %12245 = vmatpush.bf16.msra.mxu0 %v10057
    %12246 = vmatpush.bf16.msra.mxu0 %v10033
    %12247 = vmatpush.bf16.msra.mxu0 %v10009
    %12248 = vmatmul.bf16.gmra.mxu0 %v2462
    %v12249 = vpop.f32.mrf.mxu0
    %v12250 = vadd.f32 %v12237, %v12249
    %v12251 = vpop.f32.mrf.mxu0
    %12252 = vdwg.mxu0
    %12253 = vmatpush.bf16.msra.mxu0 %v8834
    %12254 = vmatpush.bf16.msra.mxu0 %v8810
    %12255 = vmatpush.bf16.msra.mxu0 %v8786
    %12256 = vmatpush.bf16.msra.mxu0 %v8762
    %12257 = vmatpush.bf16.msra.mxu0 %v8738
    %12258 = vmatpush.bf16.msra.mxu0 %v8714
    %12259 = vmatpush.bf16.msra.mxu0 %v8690
    %12260 = vmatpush.bf16.msra.mxu0 %v8666
    %12261 = vmatmul.bf16.gmra.mxu0 %v2455
    %v12262 = vpop.f32.mrf.mxu0
    %v12263 = vadd.f32 %v4010, %v12262
    %v12264 = vpop.f32.mrf.mxu0
    %12265 = vdwg.mxu0
    %12266 = vmatpush.bf16.msra.mxu0 %v9026
    %12267 = vmatpush.bf16.msra.mxu0 %v9002
    %12268 = vmatpush.bf16.msra.mxu0 %v8978
    %12269 = vmatpush.bf16.msra.mxu0 %v8954
    %12270 = vmatpush.bf16.msra.mxu0 %v8930
    %12271 = vmatpush.bf16.msra.mxu0 %v8906
    %12272 = vmatpush.bf16.msra.mxu0 %v8882
    %12273 = vmatpush.bf16.msra.mxu0 %v8858
    %12274 = vmatmul.bf16.gmra.mxu0 %v2456
    %v12275 = vpop.f32.mrf.mxu0
    %v12276 = vadd.f32 %v12263, %v12275
    %v12277 = vpop.f32.mrf.mxu0
    %12278 = vdwg.mxu0
    %12279 = vmatpush.bf16.msra.mxu0 %v9218
    %12280 = vmatpush.bf16.msra.mxu0 %v9194
    %12281 = vmatpush.bf16.msra.mxu0 %v9170
    %12282 = vmatpush.bf16.msra.mxu0 %v9146
    %12283 = vmatpush.bf16.msra.mxu0 %v9122
    %12284 = vmatpush.bf16.msra.mxu0 %v9098
    %12285 = vmatpush.bf16.msra.mxu0 %v9074
    %12286 = vmatpush.bf16.msra.mxu0 %v9050
    %12287 = vmatmul.bf16.gmra.mxu0 %v2457
    %v12288 = vpop.f32.mrf.mxu0
    %v12289 = vadd.f32 %v12276, %v12288
    %v12290 = vpop.f32.mrf.mxu0
    %12291 = vdwg.mxu0
    %12292 = vmatpush.bf16.msra.mxu0 %v9410
    %12293 = vmatpush.bf16.msra.mxu0 %v9386
    %12294 = vmatpush.bf16.msra.mxu0 %v9362
    %12295 = vmatpush.bf16.msra.mxu0 %v9338
    %12296 = vmatpush.bf16.msra.mxu0 %v9314
    %12297 = vmatpush.bf16.msra.mxu0 %v9290
    %12298 = vmatpush.bf16.msra.mxu0 %v9266
    %12299 = vmatpush.bf16.msra.mxu0 %v9242
    %12300 = vmatmul.bf16.gmra.mxu0 %v2458
    %v12301 = vpop.f32.mrf.mxu0
    %v12302 = vadd.f32 %v12289, %v12301
    %v12303 = vpop.f32.mrf.mxu0
    %12304 = vdwg.mxu0
    %12305 = vmatpush.bf16.msra.mxu0 %v9602
    %12306 = vmatpush.bf16.msra.mxu0 %v9578
    %12307 = vmatpush.bf16.msra.mxu0 %v9554
    %12308 = vmatpush.bf16.msra.mxu0 %v9530
    %12309 = vmatpush.bf16.msra.mxu0 %v9506
    %12310 = vmatpush.bf16.msra.mxu0 %v9482
    %12311 = vmatpush.bf16.msra.mxu0 %v9458
    %12312 = vmatpush.bf16.msra.mxu0 %v9434
    %12313 = vmatmul.bf16.gmra.mxu0 %v2459
    %v12314 = vpop.f32.mrf.mxu0
    %v12315 = vadd.f32 %v12302, %v12314
    %v12316 = vpop.f32.mrf.mxu0
    %12317 = vdwg.mxu0
    %12318 = vmatpush.bf16.msra.mxu0 %v9794
    %12319 = vmatpush.bf16.msra.mxu0 %v9770
    %12320 = vmatpush.bf16.msra.mxu0 %v9746
    %12321 = vmatpush.bf16.msra.mxu0 %v9722
    %12322 = vmatpush.bf16.msra.mxu0 %v9698
    %12323 = vmatpush.bf16.msra.mxu0 %v9674
    %12324 = vmatpush.bf16.msra.mxu0 %v9650
    %12325 = vmatpush.bf16.msra.mxu0 %v9626
    %12326 = vmatmul.bf16.gmra.mxu0 %v2460
    %v12327 = vpop.f32.mrf.mxu0
    %v12328 = vadd.f32 %v12315, %v12327
    %v12329 = vpop.f32.mrf.mxu0
    %12330 = vdwg.mxu0
    %12331 = vmatpush.bf16.msra.mxu0 %v9986
    %12332 = vmatpush.bf16.msra.mxu0 %v9962
    %12333 = vmatpush.bf16.msra.mxu0 %v9938
    %12334 = vmatpush.bf16.msra.mxu0 %v9914
    %12335 = vmatpush.bf16.msra.mxu0 %v9890
    %12336 = vmatpush.bf16.msra.mxu0 %v9866
    %12337 = vmatpush.bf16.msra.mxu0 %v9842
    %12338 = vmatpush.bf16.msra.mxu0 %v9818
    %12339 = vmatmul.bf16.gmra.mxu0 %v2461
    %v12340 = vpop.f32.mrf.mxu0
    %v12341 = vadd.f32 %v12328, %v12340
    %v12342 = vpop.f32.mrf.mxu0
    %12343 = vdwg.mxu0
    %12344 = vmatpush.bf16.msra.mxu0 %v10178
    %12345 = vmatpush.bf16.msra.mxu0 %v10154
    %12346 = vmatpush.bf16.msra.mxu0 %v10130
    %12347 = vmatpush.bf16.msra.mxu0 %v10106
    %12348 = vmatpush.bf16.msra.mxu0 %v10082
    %12349 = vmatpush.bf16.msra.mxu0 %v10058
    %12350 = vmatpush.bf16.msra.mxu0 %v10034
    %12351 = vmatpush.bf16.msra.mxu0 %v10010
    %12352 = vmatmul.bf16.gmra.mxu0 %v2462
    %v12353 = vpop.f32.mrf.mxu0
    %v12354 = vadd.f32 %v12341, %v12353
    %v12355 = vpop.f32.mrf.mxu0
    %12356 = vdwg.mxu0
    %12357 = vmatpush.bf16.msra.mxu0 %v8835
    %12358 = vmatpush.bf16.msra.mxu0 %v8811
    %12359 = vmatpush.bf16.msra.mxu0 %v8787
    %12360 = vmatpush.bf16.msra.mxu0 %v8763
    %12361 = vmatpush.bf16.msra.mxu0 %v8739
    %12362 = vmatpush.bf16.msra.mxu0 %v8715
    %12363 = vmatpush.bf16.msra.mxu0 %v8691
    %12364 = vmatpush.bf16.msra.mxu0 %v8667
    %12365 = vmatmul.bf16.gmra.mxu0 %v2455
    %v12366 = vpop.f32.mrf.mxu0
    %v12367 = vadd.f32 %v4011, %v12366
    %v12368 = vpop.f32.mrf.mxu0
    %12369 = vdwg.mxu0
    %12370 = vmatpush.bf16.msra.mxu0 %v9027
    %12371 = vmatpush.bf16.msra.mxu0 %v9003
    %12372 = vmatpush.bf16.msra.mxu0 %v8979
    %12373 = vmatpush.bf16.msra.mxu0 %v8955
    %12374 = vmatpush.bf16.msra.mxu0 %v8931
    %12375 = vmatpush.bf16.msra.mxu0 %v8907
    %12376 = vmatpush.bf16.msra.mxu0 %v8883
    %12377 = vmatpush.bf16.msra.mxu0 %v8859
    %12378 = vmatmul.bf16.gmra.mxu0 %v2456
    %v12379 = vpop.f32.mrf.mxu0
    %v12380 = vadd.f32 %v12367, %v12379
    %v12381 = vpop.f32.mrf.mxu0
    %12382 = vdwg.mxu0
    %12383 = vmatpush.bf16.msra.mxu0 %v9219
    %12384 = vmatpush.bf16.msra.mxu0 %v9195
    %12385 = vmatpush.bf16.msra.mxu0 %v9171
    %12386 = vmatpush.bf16.msra.mxu0 %v9147
    %12387 = vmatpush.bf16.msra.mxu0 %v9123
    %12388 = vmatpush.bf16.msra.mxu0 %v9099
    %12389 = vmatpush.bf16.msra.mxu0 %v9075
    %12390 = vmatpush.bf16.msra.mxu0 %v9051
    %12391 = vmatmul.bf16.gmra.mxu0 %v2457
    %v12392 = vpop.f32.mrf.mxu0
    %v12393 = vadd.f32 %v12380, %v12392
    %v12394 = vpop.f32.mrf.mxu0
    %12395 = vdwg.mxu0
    %12396 = vmatpush.bf16.msra.mxu0 %v9411
    %12397 = vmatpush.bf16.msra.mxu0 %v9387
    %12398 = vmatpush.bf16.msra.mxu0 %v9363
    %12399 = vmatpush.bf16.msra.mxu0 %v9339
    %12400 = vmatpush.bf16.msra.mxu0 %v9315
    %12401 = vmatpush.bf16.msra.mxu0 %v9291
    %12402 = vmatpush.bf16.msra.mxu0 %v9267
    %12403 = vmatpush.bf16.msra.mxu0 %v9243
    %12404 = vmatmul.bf16.gmra.mxu0 %v2458
    %v12405 = vpop.f32.mrf.mxu0
    %v12406 = vadd.f32 %v12393, %v12405
    %v12407 = vpop.f32.mrf.mxu0
    %12408 = vdwg.mxu0
    %12409 = vmatpush.bf16.msra.mxu0 %v9603
    %12410 = vmatpush.bf16.msra.mxu0 %v9579
    %12411 = vmatpush.bf16.msra.mxu0 %v9555
    %12412 = vmatpush.bf16.msra.mxu0 %v9531
    %12413 = vmatpush.bf16.msra.mxu0 %v9507
    %12414 = vmatpush.bf16.msra.mxu0 %v9483
    %12415 = vmatpush.bf16.msra.mxu0 %v9459
    %12416 = vmatpush.bf16.msra.mxu0 %v9435
    %12417 = vmatmul.bf16.gmra.mxu0 %v2459
    %v12418 = vpop.f32.mrf.mxu0
    %v12419 = vadd.f32 %v12406, %v12418
    %v12420 = vpop.f32.mrf.mxu0
    %12421 = vdwg.mxu0
    %12422 = vmatpush.bf16.msra.mxu0 %v9795
    %12423 = vmatpush.bf16.msra.mxu0 %v9771
    %12424 = vmatpush.bf16.msra.mxu0 %v9747
    %12425 = vmatpush.bf16.msra.mxu0 %v9723
    %12426 = vmatpush.bf16.msra.mxu0 %v9699
    %12427 = vmatpush.bf16.msra.mxu0 %v9675
    %12428 = vmatpush.bf16.msra.mxu0 %v9651
    %12429 = vmatpush.bf16.msra.mxu0 %v9627
    %12430 = vmatmul.bf16.gmra.mxu0 %v2460
    %v12431 = vpop.f32.mrf.mxu0
    %v12432 = vadd.f32 %v12419, %v12431
    %v12433 = vpop.f32.mrf.mxu0
    %12434 = vdwg.mxu0
    %12435 = vmatpush.bf16.msra.mxu0 %v9987
    %12436 = vmatpush.bf16.msra.mxu0 %v9963
    %12437 = vmatpush.bf16.msra.mxu0 %v9939
    %12438 = vmatpush.bf16.msra.mxu0 %v9915
    %12439 = vmatpush.bf16.msra.mxu0 %v9891
    %12440 = vmatpush.bf16.msra.mxu0 %v9867
    %12441 = vmatpush.bf16.msra.mxu0 %v9843
    %12442 = vmatpush.bf16.msra.mxu0 %v9819
    %12443 = vmatmul.bf16.gmra.mxu0 %v2461
    %v12444 = vpop.f32.mrf.mxu0
    %v12445 = vadd.f32 %v12432, %v12444
    %v12446 = vpop.f32.mrf.mxu0
    %12447 = vdwg.mxu0
    %12448 = vmatpush.bf16.msra.mxu0 %v10179
    %12449 = vmatpush.bf16.msra.mxu0 %v10155
    %12450 = vmatpush.bf16.msra.mxu0 %v10131
    %12451 = vmatpush.bf16.msra.mxu0 %v10107
    %12452 = vmatpush.bf16.msra.mxu0 %v10083
    %12453 = vmatpush.bf16.msra.mxu0 %v10059
    %12454 = vmatpush.bf16.msra.mxu0 %v10035
    %12455 = vmatpush.bf16.msra.mxu0 %v10011
    %12456 = vmatmul.bf16.gmra.mxu0 %v2462
    %v12457 = vpop.f32.mrf.mxu0
    %v12458 = vadd.f32 %v12445, %v12457
    %v12459 = vpop.f32.mrf.mxu0
    %12460 = vdwg.mxu0
    %12461 = vmatpush.bf16.msra.mxu0 %v8836
    %12462 = vmatpush.bf16.msra.mxu0 %v8812
    %12463 = vmatpush.bf16.msra.mxu0 %v8788
    %12464 = vmatpush.bf16.msra.mxu0 %v8764
    %12465 = vmatpush.bf16.msra.mxu0 %v8740
    %12466 = vmatpush.bf16.msra.mxu0 %v8716
    %12467 = vmatpush.bf16.msra.mxu0 %v8692
    %12468 = vmatpush.bf16.msra.mxu0 %v8668
    %12469 = vmatmul.bf16.gmra.mxu0 %v2455
    %v12470 = vpop.f32.mrf.mxu0
    %v12471 = vadd.f32 %v4012, %v12470
    %v12472 = vpop.f32.mrf.mxu0
    %12473 = vdwg.mxu0
    %12474 = vmatpush.bf16.msra.mxu0 %v9028
    %12475 = vmatpush.bf16.msra.mxu0 %v9004
    %12476 = vmatpush.bf16.msra.mxu0 %v8980
    %12477 = vmatpush.bf16.msra.mxu0 %v8956
    %12478 = vmatpush.bf16.msra.mxu0 %v8932
    %12479 = vmatpush.bf16.msra.mxu0 %v8908
    %12480 = vmatpush.bf16.msra.mxu0 %v8884
    %12481 = vmatpush.bf16.msra.mxu0 %v8860
    %12482 = vmatmul.bf16.gmra.mxu0 %v2456
    %v12483 = vpop.f32.mrf.mxu0
    %v12484 = vadd.f32 %v12471, %v12483
    %v12485 = vpop.f32.mrf.mxu0
    %12486 = vdwg.mxu0
    %12487 = vmatpush.bf16.msra.mxu0 %v9220
    %12488 = vmatpush.bf16.msra.mxu0 %v9196
    %12489 = vmatpush.bf16.msra.mxu0 %v9172
    %12490 = vmatpush.bf16.msra.mxu0 %v9148
    %12491 = vmatpush.bf16.msra.mxu0 %v9124
    %12492 = vmatpush.bf16.msra.mxu0 %v9100
    %12493 = vmatpush.bf16.msra.mxu0 %v9076
    %12494 = vmatpush.bf16.msra.mxu0 %v9052
    %12495 = vmatmul.bf16.gmra.mxu0 %v2457
    %v12496 = vpop.f32.mrf.mxu0
    %v12497 = vadd.f32 %v12484, %v12496
    %v12498 = vpop.f32.mrf.mxu0
    %12499 = vdwg.mxu0
    %12500 = vmatpush.bf16.msra.mxu0 %v9412
    %12501 = vmatpush.bf16.msra.mxu0 %v9388
    %12502 = vmatpush.bf16.msra.mxu0 %v9364
    %12503 = vmatpush.bf16.msra.mxu0 %v9340
    %12504 = vmatpush.bf16.msra.mxu0 %v9316
    %12505 = vmatpush.bf16.msra.mxu0 %v9292
    %12506 = vmatpush.bf16.msra.mxu0 %v9268
    %12507 = vmatpush.bf16.msra.mxu0 %v9244
    %12508 = vmatmul.bf16.gmra.mxu0 %v2458
    %v12509 = vpop.f32.mrf.mxu0
    %v12510 = vadd.f32 %v12497, %v12509
    %v12511 = vpop.f32.mrf.mxu0
    %12512 = vdwg.mxu0
    %12513 = vmatpush.bf16.msra.mxu0 %v9604
    %12514 = vmatpush.bf16.msra.mxu0 %v9580
    %12515 = vmatpush.bf16.msra.mxu0 %v9556
    %12516 = vmatpush.bf16.msra.mxu0 %v9532
    %12517 = vmatpush.bf16.msra.mxu0 %v9508
    %12518 = vmatpush.bf16.msra.mxu0 %v9484
    %12519 = vmatpush.bf16.msra.mxu0 %v9460
    %12520 = vmatpush.bf16.msra.mxu0 %v9436
    %12521 = vmatmul.bf16.gmra.mxu0 %v2459
    %v12522 = vpop.f32.mrf.mxu0
    %v12523 = vadd.f32 %v12510, %v12522
    %v12524 = vpop.f32.mrf.mxu0
    %12525 = vdwg.mxu0
    %12526 = vmatpush.bf16.msra.mxu0 %v9796
    %12527 = vmatpush.bf16.msra.mxu0 %v9772
    %12528 = vmatpush.bf16.msra.mxu0 %v9748
    %12529 = vmatpush.bf16.msra.mxu0 %v9724
    %12530 = vmatpush.bf16.msra.mxu0 %v9700
    %12531 = vmatpush.bf16.msra.mxu0 %v9676
    %12532 = vmatpush.bf16.msra.mxu0 %v9652
    %12533 = vmatpush.bf16.msra.mxu0 %v9628
    %12534 = vmatmul.bf16.gmra.mxu0 %v2460
    %v12535 = vpop.f32.mrf.mxu0
    %v12536 = vadd.f32 %v12523, %v12535
    %v12537 = vpop.f32.mrf.mxu0
    %12538 = vdwg.mxu0
    %12539 = vmatpush.bf16.msra.mxu0 %v9988
    %12540 = vmatpush.bf16.msra.mxu0 %v9964
    %12541 = vmatpush.bf16.msra.mxu0 %v9940
    %12542 = vmatpush.bf16.msra.mxu0 %v9916
    %12543 = vmatpush.bf16.msra.mxu0 %v9892
    %12544 = vmatpush.bf16.msra.mxu0 %v9868
    %12545 = vmatpush.bf16.msra.mxu0 %v9844
    %12546 = vmatpush.bf16.msra.mxu0 %v9820
    %12547 = vmatmul.bf16.gmra.mxu0 %v2461
    %v12548 = vpop.f32.mrf.mxu0
    %v12549 = vadd.f32 %v12536, %v12548
    %v12550 = vpop.f32.mrf.mxu0
    %12551 = vdwg.mxu0
    %12552 = vmatpush.bf16.msra.mxu0 %v10180
    %12553 = vmatpush.bf16.msra.mxu0 %v10156
    %12554 = vmatpush.bf16.msra.mxu0 %v10132
    %12555 = vmatpush.bf16.msra.mxu0 %v10108
    %12556 = vmatpush.bf16.msra.mxu0 %v10084
    %12557 = vmatpush.bf16.msra.mxu0 %v10060
    %12558 = vmatpush.bf16.msra.mxu0 %v10036
    %12559 = vmatpush.bf16.msra.mxu0 %v10012
    %12560 = vmatmul.bf16.gmra.mxu0 %v2462
    %v12561 = vpop.f32.mrf.mxu0
    %v12562 = vadd.f32 %v12549, %v12561
    %v12563 = vpop.f32.mrf.mxu0
    %12564 = vdwg.mxu0
    %12565 = vmatpush.bf16.msra.mxu0 %v8837
    %12566 = vmatpush.bf16.msra.mxu0 %v8813
    %12567 = vmatpush.bf16.msra.mxu0 %v8789
    %12568 = vmatpush.bf16.msra.mxu0 %v8765
    %12569 = vmatpush.bf16.msra.mxu0 %v8741
    %12570 = vmatpush.bf16.msra.mxu0 %v8717
    %12571 = vmatpush.bf16.msra.mxu0 %v8693
    %12572 = vmatpush.bf16.msra.mxu0 %v8669
    %12573 = vmatmul.bf16.gmra.mxu0 %v2455
    %v12574 = vpop.f32.mrf.mxu0
    %v12575 = vadd.f32 %v4013, %v12574
    %v12576 = vpop.f32.mrf.mxu0
    %12577 = vdwg.mxu0
    %12578 = vmatpush.bf16.msra.mxu0 %v9029
    %12579 = vmatpush.bf16.msra.mxu0 %v9005
    %12580 = vmatpush.bf16.msra.mxu0 %v8981
    %12581 = vmatpush.bf16.msra.mxu0 %v8957
    %12582 = vmatpush.bf16.msra.mxu0 %v8933
    %12583 = vmatpush.bf16.msra.mxu0 %v8909
    %12584 = vmatpush.bf16.msra.mxu0 %v8885
    %12585 = vmatpush.bf16.msra.mxu0 %v8861
    %12586 = vmatmul.bf16.gmra.mxu0 %v2456
    %v12587 = vpop.f32.mrf.mxu0
    %v12588 = vadd.f32 %v12575, %v12587
    %v12589 = vpop.f32.mrf.mxu0
    %12590 = vdwg.mxu0
    %12591 = vmatpush.bf16.msra.mxu0 %v9221
    %12592 = vmatpush.bf16.msra.mxu0 %v9197
    %12593 = vmatpush.bf16.msra.mxu0 %v9173
    %12594 = vmatpush.bf16.msra.mxu0 %v9149
    %12595 = vmatpush.bf16.msra.mxu0 %v9125
    %12596 = vmatpush.bf16.msra.mxu0 %v9101
    %12597 = vmatpush.bf16.msra.mxu0 %v9077
    %12598 = vmatpush.bf16.msra.mxu0 %v9053
    %12599 = vmatmul.bf16.gmra.mxu0 %v2457
    %v12600 = vpop.f32.mrf.mxu0
    %v12601 = vadd.f32 %v12588, %v12600
    %v12602 = vpop.f32.mrf.mxu0
    %12603 = vdwg.mxu0
    %12604 = vmatpush.bf16.msra.mxu0 %v9413
    %12605 = vmatpush.bf16.msra.mxu0 %v9389
    %12606 = vmatpush.bf16.msra.mxu0 %v9365
    %12607 = vmatpush.bf16.msra.mxu0 %v9341
    %12608 = vmatpush.bf16.msra.mxu0 %v9317
    %12609 = vmatpush.bf16.msra.mxu0 %v9293
    %12610 = vmatpush.bf16.msra.mxu0 %v9269
    %12611 = vmatpush.bf16.msra.mxu0 %v9245
    %12612 = vmatmul.bf16.gmra.mxu0 %v2458
    %v12613 = vpop.f32.mrf.mxu0
    %v12614 = vadd.f32 %v12601, %v12613
    %v12615 = vpop.f32.mrf.mxu0
    %12616 = vdwg.mxu0
    %12617 = vmatpush.bf16.msra.mxu0 %v9605
    %12618 = vmatpush.bf16.msra.mxu0 %v9581
    %12619 = vmatpush.bf16.msra.mxu0 %v9557
    %12620 = vmatpush.bf16.msra.mxu0 %v9533
    %12621 = vmatpush.bf16.msra.mxu0 %v9509
    %12622 = vmatpush.bf16.msra.mxu0 %v9485
    %12623 = vmatpush.bf16.msra.mxu0 %v9461
    %12624 = vmatpush.bf16.msra.mxu0 %v9437
    %12625 = vmatmul.bf16.gmra.mxu0 %v2459
    %v12626 = vpop.f32.mrf.mxu0
    %v12627 = vadd.f32 %v12614, %v12626
    %v12628 = vpop.f32.mrf.mxu0
    %12629 = vdwg.mxu0
    %12630 = vmatpush.bf16.msra.mxu0 %v9797
    %12631 = vmatpush.bf16.msra.mxu0 %v9773
    %12632 = vmatpush.bf16.msra.mxu0 %v9749
    %12633 = vmatpush.bf16.msra.mxu0 %v9725
    %12634 = vmatpush.bf16.msra.mxu0 %v9701
    %12635 = vmatpush.bf16.msra.mxu0 %v9677
    %12636 = vmatpush.bf16.msra.mxu0 %v9653
    %12637 = vmatpush.bf16.msra.mxu0 %v9629
    %12638 = vmatmul.bf16.gmra.mxu0 %v2460
    %v12639 = vpop.f32.mrf.mxu0
    %v12640 = vadd.f32 %v12627, %v12639
    %v12641 = vpop.f32.mrf.mxu0
    %12642 = vdwg.mxu0
    %12643 = vmatpush.bf16.msra.mxu0 %v9989
    %12644 = vmatpush.bf16.msra.mxu0 %v9965
    %12645 = vmatpush.bf16.msra.mxu0 %v9941
    %12646 = vmatpush.bf16.msra.mxu0 %v9917
    %12647 = vmatpush.bf16.msra.mxu0 %v9893
    %12648 = vmatpush.bf16.msra.mxu0 %v9869
    %12649 = vmatpush.bf16.msra.mxu0 %v9845
    %12650 = vmatpush.bf16.msra.mxu0 %v9821
    %12651 = vmatmul.bf16.gmra.mxu0 %v2461
    %v12652 = vpop.f32.mrf.mxu0
    %v12653 = vadd.f32 %v12640, %v12652
    %v12654 = vpop.f32.mrf.mxu0
    %12655 = vdwg.mxu0
    %12656 = vmatpush.bf16.msra.mxu0 %v10181
    %12657 = vmatpush.bf16.msra.mxu0 %v10157
    %12658 = vmatpush.bf16.msra.mxu0 %v10133
    %12659 = vmatpush.bf16.msra.mxu0 %v10109
    %12660 = vmatpush.bf16.msra.mxu0 %v10085
    %12661 = vmatpush.bf16.msra.mxu0 %v10061
    %12662 = vmatpush.bf16.msra.mxu0 %v10037
    %12663 = vmatpush.bf16.msra.mxu0 %v10013
    %12664 = vmatmul.bf16.gmra.mxu0 %v2462
    %v12665 = vpop.f32.mrf.mxu0
    %v12666 = vadd.f32 %v12653, %v12665
    %v12667 = vpop.f32.mrf.mxu0
    %12668 = vdwg.mxu0
    %12669 = vmatpush.bf16.msra.mxu0 %v8838
    %12670 = vmatpush.bf16.msra.mxu0 %v8814
    %12671 = vmatpush.bf16.msra.mxu0 %v8790
    %12672 = vmatpush.bf16.msra.mxu0 %v8766
    %12673 = vmatpush.bf16.msra.mxu0 %v8742
    %12674 = vmatpush.bf16.msra.mxu0 %v8718
    %12675 = vmatpush.bf16.msra.mxu0 %v8694
    %12676 = vmatpush.bf16.msra.mxu0 %v8670
    %12677 = vmatmul.bf16.gmra.mxu0 %v2455
    %v12678 = vpop.f32.mrf.mxu0
    %v12679 = vadd.f32 %v4014, %v12678
    %v12680 = vpop.f32.mrf.mxu0
    %12681 = vdwg.mxu0
    %12682 = vmatpush.bf16.msra.mxu0 %v9030
    %12683 = vmatpush.bf16.msra.mxu0 %v9006
    %12684 = vmatpush.bf16.msra.mxu0 %v8982
    %12685 = vmatpush.bf16.msra.mxu0 %v8958
    %12686 = vmatpush.bf16.msra.mxu0 %v8934
    %12687 = vmatpush.bf16.msra.mxu0 %v8910
    %12688 = vmatpush.bf16.msra.mxu0 %v8886
    %12689 = vmatpush.bf16.msra.mxu0 %v8862
    %12690 = vmatmul.bf16.gmra.mxu0 %v2456
    %v12691 = vpop.f32.mrf.mxu0
    %v12692 = vadd.f32 %v12679, %v12691
    %v12693 = vpop.f32.mrf.mxu0
    %12694 = vdwg.mxu0
    %12695 = vmatpush.bf16.msra.mxu0 %v9222
    %12696 = vmatpush.bf16.msra.mxu0 %v9198
    %12697 = vmatpush.bf16.msra.mxu0 %v9174
    %12698 = vmatpush.bf16.msra.mxu0 %v9150
    %12699 = vmatpush.bf16.msra.mxu0 %v9126
    %12700 = vmatpush.bf16.msra.mxu0 %v9102
    %12701 = vmatpush.bf16.msra.mxu0 %v9078
    %12702 = vmatpush.bf16.msra.mxu0 %v9054
    %12703 = vmatmul.bf16.gmra.mxu0 %v2457
    %v12704 = vpop.f32.mrf.mxu0
    %v12705 = vadd.f32 %v12692, %v12704
    %v12706 = vpop.f32.mrf.mxu0
    %12707 = vdwg.mxu0
    %12708 = vmatpush.bf16.msra.mxu0 %v9414
    %12709 = vmatpush.bf16.msra.mxu0 %v9390
    %12710 = vmatpush.bf16.msra.mxu0 %v9366
    %12711 = vmatpush.bf16.msra.mxu0 %v9342
    %12712 = vmatpush.bf16.msra.mxu0 %v9318
    %12713 = vmatpush.bf16.msra.mxu0 %v9294
    %12714 = vmatpush.bf16.msra.mxu0 %v9270
    %12715 = vmatpush.bf16.msra.mxu0 %v9246
    %12716 = vmatmul.bf16.gmra.mxu0 %v2458
    %v12717 = vpop.f32.mrf.mxu0
    %v12718 = vadd.f32 %v12705, %v12717
    %v12719 = vpop.f32.mrf.mxu0
    %12720 = vdwg.mxu0
    %12721 = vmatpush.bf16.msra.mxu0 %v9606
    %12722 = vmatpush.bf16.msra.mxu0 %v9582
    %12723 = vmatpush.bf16.msra.mxu0 %v9558
    %12724 = vmatpush.bf16.msra.mxu0 %v9534
    %12725 = vmatpush.bf16.msra.mxu0 %v9510
    %12726 = vmatpush.bf16.msra.mxu0 %v9486
    %12727 = vmatpush.bf16.msra.mxu0 %v9462
    %12728 = vmatpush.bf16.msra.mxu0 %v9438
    %12729 = vmatmul.bf16.gmra.mxu0 %v2459
    %v12730 = vpop.f32.mrf.mxu0
    %v12731 = vadd.f32 %v12718, %v12730
    %v12732 = vpop.f32.mrf.mxu0
    %12733 = vdwg.mxu0
    %12734 = vmatpush.bf16.msra.mxu0 %v9798
    %12735 = vmatpush.bf16.msra.mxu0 %v9774
    %12736 = vmatpush.bf16.msra.mxu0 %v9750
    %12737 = vmatpush.bf16.msra.mxu0 %v9726
    %12738 = vmatpush.bf16.msra.mxu0 %v9702
    %12739 = vmatpush.bf16.msra.mxu0 %v9678
    %12740 = vmatpush.bf16.msra.mxu0 %v9654
    %12741 = vmatpush.bf16.msra.mxu0 %v9630
    %12742 = vmatmul.bf16.gmra.mxu0 %v2460
    %v12743 = vpop.f32.mrf.mxu0
    %v12744 = vadd.f32 %v12731, %v12743
    %v12745 = vpop.f32.mrf.mxu0
    %12746 = vdwg.mxu0
    %12747 = vmatpush.bf16.msra.mxu0 %v9990
    %12748 = vmatpush.bf16.msra.mxu0 %v9966
    %12749 = vmatpush.bf16.msra.mxu0 %v9942
    %12750 = vmatpush.bf16.msra.mxu0 %v9918
    %12751 = vmatpush.bf16.msra.mxu0 %v9894
    %12752 = vmatpush.bf16.msra.mxu0 %v9870
    %12753 = vmatpush.bf16.msra.mxu0 %v9846
    %12754 = vmatpush.bf16.msra.mxu0 %v9822
    %12755 = vmatmul.bf16.gmra.mxu0 %v2461
    %v12756 = vpop.f32.mrf.mxu0
    %v12757 = vadd.f32 %v12744, %v12756
    %v12758 = vpop.f32.mrf.mxu0
    %12759 = vdwg.mxu0
    %12760 = vmatpush.bf16.msra.mxu0 %v10182
    %12761 = vmatpush.bf16.msra.mxu0 %v10158
    %12762 = vmatpush.bf16.msra.mxu0 %v10134
    %12763 = vmatpush.bf16.msra.mxu0 %v10110
    %12764 = vmatpush.bf16.msra.mxu0 %v10086
    %12765 = vmatpush.bf16.msra.mxu0 %v10062
    %12766 = vmatpush.bf16.msra.mxu0 %v10038
    %12767 = vmatpush.bf16.msra.mxu0 %v10014
    %12768 = vmatmul.bf16.gmra.mxu0 %v2462
    %v12769 = vpop.f32.mrf.mxu0
    %v12770 = vadd.f32 %v12757, %v12769
    %v12771 = vpop.f32.mrf.mxu0
    %12772 = vdwg.mxu0
    %12773 = vmatpush.bf16.msra.mxu0 %v8839
    %12774 = vmatpush.bf16.msra.mxu0 %v8815
    %12775 = vmatpush.bf16.msra.mxu0 %v8791
    %12776 = vmatpush.bf16.msra.mxu0 %v8767
    %12777 = vmatpush.bf16.msra.mxu0 %v8743
    %12778 = vmatpush.bf16.msra.mxu0 %v8719
    %12779 = vmatpush.bf16.msra.mxu0 %v8695
    %12780 = vmatpush.bf16.msra.mxu0 %v8671
    %12781 = vmatmul.bf16.gmra.mxu0 %v2455
    %v12782 = vpop.f32.mrf.mxu0
    %v12783 = vadd.f32 %v4015, %v12782
    %v12784 = vpop.f32.mrf.mxu0
    %12785 = vdwg.mxu0
    %12786 = vmatpush.bf16.msra.mxu0 %v9031
    %12787 = vmatpush.bf16.msra.mxu0 %v9007
    %12788 = vmatpush.bf16.msra.mxu0 %v8983
    %12789 = vmatpush.bf16.msra.mxu0 %v8959
    %12790 = vmatpush.bf16.msra.mxu0 %v8935
    %12791 = vmatpush.bf16.msra.mxu0 %v8911
    %12792 = vmatpush.bf16.msra.mxu0 %v8887
    %12793 = vmatpush.bf16.msra.mxu0 %v8863
    %12794 = vmatmul.bf16.gmra.mxu0 %v2456
    %v12795 = vpop.f32.mrf.mxu0
    %v12796 = vadd.f32 %v12783, %v12795
    %v12797 = vpop.f32.mrf.mxu0
    %12798 = vdwg.mxu0
    %12799 = vmatpush.bf16.msra.mxu0 %v9223
    %12800 = vmatpush.bf16.msra.mxu0 %v9199
    %12801 = vmatpush.bf16.msra.mxu0 %v9175
    %12802 = vmatpush.bf16.msra.mxu0 %v9151
    %12803 = vmatpush.bf16.msra.mxu0 %v9127
    %12804 = vmatpush.bf16.msra.mxu0 %v9103
    %12805 = vmatpush.bf16.msra.mxu0 %v9079
    %12806 = vmatpush.bf16.msra.mxu0 %v9055
    %12807 = vmatmul.bf16.gmra.mxu0 %v2457
    %v12808 = vpop.f32.mrf.mxu0
    %v12809 = vadd.f32 %v12796, %v12808
    %v12810 = vpop.f32.mrf.mxu0
    %12811 = vdwg.mxu0
    %12812 = vmatpush.bf16.msra.mxu0 %v9415
    %12813 = vmatpush.bf16.msra.mxu0 %v9391
    %12814 = vmatpush.bf16.msra.mxu0 %v9367
    %12815 = vmatpush.bf16.msra.mxu0 %v9343
    %12816 = vmatpush.bf16.msra.mxu0 %v9319
    %12817 = vmatpush.bf16.msra.mxu0 %v9295
    %12818 = vmatpush.bf16.msra.mxu0 %v9271
    %12819 = vmatpush.bf16.msra.mxu0 %v9247
    %12820 = vmatmul.bf16.gmra.mxu0 %v2458
    %v12821 = vpop.f32.mrf.mxu0
    %v12822 = vadd.f32 %v12809, %v12821
    %v12823 = vpop.f32.mrf.mxu0
    %12824 = vdwg.mxu0
    %12825 = vmatpush.bf16.msra.mxu0 %v9607
    %12826 = vmatpush.bf16.msra.mxu0 %v9583
    %12827 = vmatpush.bf16.msra.mxu0 %v9559
    %12828 = vmatpush.bf16.msra.mxu0 %v9535
    %12829 = vmatpush.bf16.msra.mxu0 %v9511
    %12830 = vmatpush.bf16.msra.mxu0 %v9487
    %12831 = vmatpush.bf16.msra.mxu0 %v9463
    %12832 = vmatpush.bf16.msra.mxu0 %v9439
    %12833 = vmatmul.bf16.gmra.mxu0 %v2459
    %v12834 = vpop.f32.mrf.mxu0
    %v12835 = vadd.f32 %v12822, %v12834
    %v12836 = vpop.f32.mrf.mxu0
    %12837 = vdwg.mxu0
    %12838 = vmatpush.bf16.msra.mxu0 %v9799
    %12839 = vmatpush.bf16.msra.mxu0 %v9775
    %12840 = vmatpush.bf16.msra.mxu0 %v9751
    %12841 = vmatpush.bf16.msra.mxu0 %v9727
    %12842 = vmatpush.bf16.msra.mxu0 %v9703
    %12843 = vmatpush.bf16.msra.mxu0 %v9679
    %12844 = vmatpush.bf16.msra.mxu0 %v9655
    %12845 = vmatpush.bf16.msra.mxu0 %v9631
    %12846 = vmatmul.bf16.gmra.mxu0 %v2460
    %v12847 = vpop.f32.mrf.mxu0
    %v12848 = vadd.f32 %v12835, %v12847
    %v12849 = vpop.f32.mrf.mxu0
    %12850 = vdwg.mxu0
    %12851 = vmatpush.bf16.msra.mxu0 %v9991
    %12852 = vmatpush.bf16.msra.mxu0 %v9967
    %12853 = vmatpush.bf16.msra.mxu0 %v9943
    %12854 = vmatpush.bf16.msra.mxu0 %v9919
    %12855 = vmatpush.bf16.msra.mxu0 %v9895
    %12856 = vmatpush.bf16.msra.mxu0 %v9871
    %12857 = vmatpush.bf16.msra.mxu0 %v9847
    %12858 = vmatpush.bf16.msra.mxu0 %v9823
    %12859 = vmatmul.bf16.gmra.mxu0 %v2461
    %v12860 = vpop.f32.mrf.mxu0
    %v12861 = vadd.f32 %v12848, %v12860
    %v12862 = vpop.f32.mrf.mxu0
    %12863 = vdwg.mxu0
    %12864 = vmatpush.bf16.msra.mxu0 %v10183
    %12865 = vmatpush.bf16.msra.mxu0 %v10159
    %12866 = vmatpush.bf16.msra.mxu0 %v10135
    %12867 = vmatpush.bf16.msra.mxu0 %v10111
    %12868 = vmatpush.bf16.msra.mxu0 %v10087
    %12869 = vmatpush.bf16.msra.mxu0 %v10063
    %12870 = vmatpush.bf16.msra.mxu0 %v10039
    %12871 = vmatpush.bf16.msra.mxu0 %v10015
    %12872 = vmatmul.bf16.gmra.mxu0 %v2462
    %v12873 = vpop.f32.mrf.mxu0
    %v12874 = vadd.f32 %v12861, %v12873
    %v12875 = vpop.f32.mrf.mxu0
    %12876 = vdwg.mxu0
    %12877 = vmatpush.bf16.msra.mxu0 %v8840
    %12878 = vmatpush.bf16.msra.mxu0 %v8816
    %12879 = vmatpush.bf16.msra.mxu0 %v8792
    %12880 = vmatpush.bf16.msra.mxu0 %v8768
    %12881 = vmatpush.bf16.msra.mxu0 %v8744
    %12882 = vmatpush.bf16.msra.mxu0 %v8720
    %12883 = vmatpush.bf16.msra.mxu0 %v8696
    %12884 = vmatpush.bf16.msra.mxu0 %v8672
    %12885 = vmatmul.bf16.gmra.mxu0 %v2455
    %v12886 = vpop.f32.mrf.mxu0
    %v12887 = vadd.f32 %v4016, %v12886
    %v12888 = vpop.f32.mrf.mxu0
    %12889 = vdwg.mxu0
    %12890 = vmatpush.bf16.msra.mxu0 %v9032
    %12891 = vmatpush.bf16.msra.mxu0 %v9008
    %12892 = vmatpush.bf16.msra.mxu0 %v8984
    %12893 = vmatpush.bf16.msra.mxu0 %v8960
    %12894 = vmatpush.bf16.msra.mxu0 %v8936
    %12895 = vmatpush.bf16.msra.mxu0 %v8912
    %12896 = vmatpush.bf16.msra.mxu0 %v8888
    %12897 = vmatpush.bf16.msra.mxu0 %v8864
    %12898 = vmatmul.bf16.gmra.mxu0 %v2456
    %v12899 = vpop.f32.mrf.mxu0
    %v12900 = vadd.f32 %v12887, %v12899
    %v12901 = vpop.f32.mrf.mxu0
    %12902 = vdwg.mxu0
    %12903 = vmatpush.bf16.msra.mxu0 %v9224
    %12904 = vmatpush.bf16.msra.mxu0 %v9200
    %12905 = vmatpush.bf16.msra.mxu0 %v9176
    %12906 = vmatpush.bf16.msra.mxu0 %v9152
    %12907 = vmatpush.bf16.msra.mxu0 %v9128
    %12908 = vmatpush.bf16.msra.mxu0 %v9104
    %12909 = vmatpush.bf16.msra.mxu0 %v9080
    %12910 = vmatpush.bf16.msra.mxu0 %v9056
    %12911 = vmatmul.bf16.gmra.mxu0 %v2457
    %v12912 = vpop.f32.mrf.mxu0
    %v12913 = vadd.f32 %v12900, %v12912
    %v12914 = vpop.f32.mrf.mxu0
    %12915 = vdwg.mxu0
    %12916 = vmatpush.bf16.msra.mxu0 %v9416
    %12917 = vmatpush.bf16.msra.mxu0 %v9392
    %12918 = vmatpush.bf16.msra.mxu0 %v9368
    %12919 = vmatpush.bf16.msra.mxu0 %v9344
    %12920 = vmatpush.bf16.msra.mxu0 %v9320
    %12921 = vmatpush.bf16.msra.mxu0 %v9296
    %12922 = vmatpush.bf16.msra.mxu0 %v9272
    %12923 = vmatpush.bf16.msra.mxu0 %v9248
    %12924 = vmatmul.bf16.gmra.mxu0 %v2458
    %v12925 = vpop.f32.mrf.mxu0
    %v12926 = vadd.f32 %v12913, %v12925
    %v12927 = vpop.f32.mrf.mxu0
    %12928 = vdwg.mxu0
    %12929 = vmatpush.bf16.msra.mxu0 %v9608
    %12930 = vmatpush.bf16.msra.mxu0 %v9584
    %12931 = vmatpush.bf16.msra.mxu0 %v9560
    %12932 = vmatpush.bf16.msra.mxu0 %v9536
    %12933 = vmatpush.bf16.msra.mxu0 %v9512
    %12934 = vmatpush.bf16.msra.mxu0 %v9488
    %12935 = vmatpush.bf16.msra.mxu0 %v9464
    %12936 = vmatpush.bf16.msra.mxu0 %v9440
    %12937 = vmatmul.bf16.gmra.mxu0 %v2459
    %v12938 = vpop.f32.mrf.mxu0
    %v12939 = vadd.f32 %v12926, %v12938
    %v12940 = vpop.f32.mrf.mxu0
    %12941 = vdwg.mxu0
    %12942 = vmatpush.bf16.msra.mxu0 %v9800
    %12943 = vmatpush.bf16.msra.mxu0 %v9776
    %12944 = vmatpush.bf16.msra.mxu0 %v9752
    %12945 = vmatpush.bf16.msra.mxu0 %v9728
    %12946 = vmatpush.bf16.msra.mxu0 %v9704
    %12947 = vmatpush.bf16.msra.mxu0 %v9680
    %12948 = vmatpush.bf16.msra.mxu0 %v9656
    %12949 = vmatpush.bf16.msra.mxu0 %v9632
    %12950 = vmatmul.bf16.gmra.mxu0 %v2460
    %v12951 = vpop.f32.mrf.mxu0
    %v12952 = vadd.f32 %v12939, %v12951
    %v12953 = vpop.f32.mrf.mxu0
    %12954 = vdwg.mxu0
    %12955 = vmatpush.bf16.msra.mxu0 %v9992
    %12956 = vmatpush.bf16.msra.mxu0 %v9968
    %12957 = vmatpush.bf16.msra.mxu0 %v9944
    %12958 = vmatpush.bf16.msra.mxu0 %v9920
    %12959 = vmatpush.bf16.msra.mxu0 %v9896
    %12960 = vmatpush.bf16.msra.mxu0 %v9872
    %12961 = vmatpush.bf16.msra.mxu0 %v9848
    %12962 = vmatpush.bf16.msra.mxu0 %v9824
    %12963 = vmatmul.bf16.gmra.mxu0 %v2461
    %v12964 = vpop.f32.mrf.mxu0
    %v12965 = vadd.f32 %v12952, %v12964
    %v12966 = vpop.f32.mrf.mxu0
    %12967 = vdwg.mxu0
    %12968 = vmatpush.bf16.msra.mxu0 %v10184
    %12969 = vmatpush.bf16.msra.mxu0 %v10160
    %12970 = vmatpush.bf16.msra.mxu0 %v10136
    %12971 = vmatpush.bf16.msra.mxu0 %v10112
    %12972 = vmatpush.bf16.msra.mxu0 %v10088
    %12973 = vmatpush.bf16.msra.mxu0 %v10064
    %12974 = vmatpush.bf16.msra.mxu0 %v10040
    %12975 = vmatpush.bf16.msra.mxu0 %v10016
    %12976 = vmatmul.bf16.gmra.mxu0 %v2462
    %v12977 = vpop.f32.mrf.mxu0
    %v12978 = vadd.f32 %v12965, %v12977
    %v12979 = vpop.f32.mrf.mxu0
    %12980 = vdwg.mxu0
    %12981 = vmatpush.bf16.msra.mxu0 %v8841
    %12982 = vmatpush.bf16.msra.mxu0 %v8817
    %12983 = vmatpush.bf16.msra.mxu0 %v8793
    %12984 = vmatpush.bf16.msra.mxu0 %v8769
    %12985 = vmatpush.bf16.msra.mxu0 %v8745
    %12986 = vmatpush.bf16.msra.mxu0 %v8721
    %12987 = vmatpush.bf16.msra.mxu0 %v8697
    %12988 = vmatpush.bf16.msra.mxu0 %v8673
    %12989 = vmatmul.bf16.gmra.mxu0 %v2455
    %v12990 = vpop.f32.mrf.mxu0
    %v12991 = vadd.f32 %v4017, %v12990
    %v12992 = vpop.f32.mrf.mxu0
    %12993 = vdwg.mxu0
    %12994 = vmatpush.bf16.msra.mxu0 %v9033
    %12995 = vmatpush.bf16.msra.mxu0 %v9009
    %12996 = vmatpush.bf16.msra.mxu0 %v8985
    %12997 = vmatpush.bf16.msra.mxu0 %v8961
    %12998 = vmatpush.bf16.msra.mxu0 %v8937
    %12999 = vmatpush.bf16.msra.mxu0 %v8913
    %13000 = vmatpush.bf16.msra.mxu0 %v8889
    %13001 = vmatpush.bf16.msra.mxu0 %v8865
    %13002 = vmatmul.bf16.gmra.mxu0 %v2456
    %v13003 = vpop.f32.mrf.mxu0
    %v13004 = vadd.f32 %v12991, %v13003
    %v13005 = vpop.f32.mrf.mxu0
    %13006 = vdwg.mxu0
    %13007 = vmatpush.bf16.msra.mxu0 %v9225
    %13008 = vmatpush.bf16.msra.mxu0 %v9201
    %13009 = vmatpush.bf16.msra.mxu0 %v9177
    %13010 = vmatpush.bf16.msra.mxu0 %v9153
    %13011 = vmatpush.bf16.msra.mxu0 %v9129
    %13012 = vmatpush.bf16.msra.mxu0 %v9105
    %13013 = vmatpush.bf16.msra.mxu0 %v9081
    %13014 = vmatpush.bf16.msra.mxu0 %v9057
    %13015 = vmatmul.bf16.gmra.mxu0 %v2457
    %v13016 = vpop.f32.mrf.mxu0
    %v13017 = vadd.f32 %v13004, %v13016
    %v13018 = vpop.f32.mrf.mxu0
    %13019 = vdwg.mxu0
    %13020 = vmatpush.bf16.msra.mxu0 %v9417
    %13021 = vmatpush.bf16.msra.mxu0 %v9393
    %13022 = vmatpush.bf16.msra.mxu0 %v9369
    %13023 = vmatpush.bf16.msra.mxu0 %v9345
    %13024 = vmatpush.bf16.msra.mxu0 %v9321
    %13025 = vmatpush.bf16.msra.mxu0 %v9297
    %13026 = vmatpush.bf16.msra.mxu0 %v9273
    %13027 = vmatpush.bf16.msra.mxu0 %v9249
    %13028 = vmatmul.bf16.gmra.mxu0 %v2458
    %v13029 = vpop.f32.mrf.mxu0
    %v13030 = vadd.f32 %v13017, %v13029
    %v13031 = vpop.f32.mrf.mxu0
    %13032 = vdwg.mxu0
    %13033 = vmatpush.bf16.msra.mxu0 %v9609
    %13034 = vmatpush.bf16.msra.mxu0 %v9585
    %13035 = vmatpush.bf16.msra.mxu0 %v9561
    %13036 = vmatpush.bf16.msra.mxu0 %v9537
    %13037 = vmatpush.bf16.msra.mxu0 %v9513
    %13038 = vmatpush.bf16.msra.mxu0 %v9489
    %13039 = vmatpush.bf16.msra.mxu0 %v9465
    %13040 = vmatpush.bf16.msra.mxu0 %v9441
    %13041 = vmatmul.bf16.gmra.mxu0 %v2459
    %v13042 = vpop.f32.mrf.mxu0
    %v13043 = vadd.f32 %v13030, %v13042
    %v13044 = vpop.f32.mrf.mxu0
    %13045 = vdwg.mxu0
    %13046 = vmatpush.bf16.msra.mxu0 %v9801
    %13047 = vmatpush.bf16.msra.mxu0 %v9777
    %13048 = vmatpush.bf16.msra.mxu0 %v9753
    %13049 = vmatpush.bf16.msra.mxu0 %v9729
    %13050 = vmatpush.bf16.msra.mxu0 %v9705
    %13051 = vmatpush.bf16.msra.mxu0 %v9681
    %13052 = vmatpush.bf16.msra.mxu0 %v9657
    %13053 = vmatpush.bf16.msra.mxu0 %v9633
    %13054 = vmatmul.bf16.gmra.mxu0 %v2460
    %v13055 = vpop.f32.mrf.mxu0
    %v13056 = vadd.f32 %v13043, %v13055
    %v13057 = vpop.f32.mrf.mxu0
    %13058 = vdwg.mxu0
    %13059 = vmatpush.bf16.msra.mxu0 %v9993
    %13060 = vmatpush.bf16.msra.mxu0 %v9969
    %13061 = vmatpush.bf16.msra.mxu0 %v9945
    %13062 = vmatpush.bf16.msra.mxu0 %v9921
    %13063 = vmatpush.bf16.msra.mxu0 %v9897
    %13064 = vmatpush.bf16.msra.mxu0 %v9873
    %13065 = vmatpush.bf16.msra.mxu0 %v9849
    %13066 = vmatpush.bf16.msra.mxu0 %v9825
    %13067 = vmatmul.bf16.gmra.mxu0 %v2461
    %v13068 = vpop.f32.mrf.mxu0
    %v13069 = vadd.f32 %v13056, %v13068
    %v13070 = vpop.f32.mrf.mxu0
    %13071 = vdwg.mxu0
    %13072 = vmatpush.bf16.msra.mxu0 %v10185
    %13073 = vmatpush.bf16.msra.mxu0 %v10161
    %13074 = vmatpush.bf16.msra.mxu0 %v10137
    %13075 = vmatpush.bf16.msra.mxu0 %v10113
    %13076 = vmatpush.bf16.msra.mxu0 %v10089
    %13077 = vmatpush.bf16.msra.mxu0 %v10065
    %13078 = vmatpush.bf16.msra.mxu0 %v10041
    %13079 = vmatpush.bf16.msra.mxu0 %v10017
    %13080 = vmatmul.bf16.gmra.mxu0 %v2462
    %v13081 = vpop.f32.mrf.mxu0
    %v13082 = vadd.f32 %v13069, %v13081
    %v13083 = vpop.f32.mrf.mxu0
    %13084 = vdwg.mxu0
    %13085 = vmatpush.bf16.msra.mxu0 %v8842
    %13086 = vmatpush.bf16.msra.mxu0 %v8818
    %13087 = vmatpush.bf16.msra.mxu0 %v8794
    %13088 = vmatpush.bf16.msra.mxu0 %v8770
    %13089 = vmatpush.bf16.msra.mxu0 %v8746
    %13090 = vmatpush.bf16.msra.mxu0 %v8722
    %13091 = vmatpush.bf16.msra.mxu0 %v8698
    %13092 = vmatpush.bf16.msra.mxu0 %v8674
    %13093 = vmatmul.bf16.gmra.mxu0 %v2455
    %v13094 = vpop.f32.mrf.mxu0
    %v13095 = vadd.f32 %v4018, %v13094
    %v13096 = vpop.f32.mrf.mxu0
    %13097 = vdwg.mxu0
    %13098 = vmatpush.bf16.msra.mxu0 %v9034
    %13099 = vmatpush.bf16.msra.mxu0 %v9010
    %13100 = vmatpush.bf16.msra.mxu0 %v8986
    %13101 = vmatpush.bf16.msra.mxu0 %v8962
    %13102 = vmatpush.bf16.msra.mxu0 %v8938
    %13103 = vmatpush.bf16.msra.mxu0 %v8914
    %13104 = vmatpush.bf16.msra.mxu0 %v8890
    %13105 = vmatpush.bf16.msra.mxu0 %v8866
    %13106 = vmatmul.bf16.gmra.mxu0 %v2456
    %v13107 = vpop.f32.mrf.mxu0
    %v13108 = vadd.f32 %v13095, %v13107
    %v13109 = vpop.f32.mrf.mxu0
    %13110 = vdwg.mxu0
    %13111 = vmatpush.bf16.msra.mxu0 %v9226
    %13112 = vmatpush.bf16.msra.mxu0 %v9202
    %13113 = vmatpush.bf16.msra.mxu0 %v9178
    %13114 = vmatpush.bf16.msra.mxu0 %v9154
    %13115 = vmatpush.bf16.msra.mxu0 %v9130
    %13116 = vmatpush.bf16.msra.mxu0 %v9106
    %13117 = vmatpush.bf16.msra.mxu0 %v9082
    %13118 = vmatpush.bf16.msra.mxu0 %v9058
    %13119 = vmatmul.bf16.gmra.mxu0 %v2457
    %v13120 = vpop.f32.mrf.mxu0
    %v13121 = vadd.f32 %v13108, %v13120
    %v13122 = vpop.f32.mrf.mxu0
    %13123 = vdwg.mxu0
    %13124 = vmatpush.bf16.msra.mxu0 %v9418
    %13125 = vmatpush.bf16.msra.mxu0 %v9394
    %13126 = vmatpush.bf16.msra.mxu0 %v9370
    %13127 = vmatpush.bf16.msra.mxu0 %v9346
    %13128 = vmatpush.bf16.msra.mxu0 %v9322
    %13129 = vmatpush.bf16.msra.mxu0 %v9298
    %13130 = vmatpush.bf16.msra.mxu0 %v9274
    %13131 = vmatpush.bf16.msra.mxu0 %v9250
    %13132 = vmatmul.bf16.gmra.mxu0 %v2458
    %v13133 = vpop.f32.mrf.mxu0
    %v13134 = vadd.f32 %v13121, %v13133
    %v13135 = vpop.f32.mrf.mxu0
    %13136 = vdwg.mxu0
    %13137 = vmatpush.bf16.msra.mxu0 %v9610
    %13138 = vmatpush.bf16.msra.mxu0 %v9586
    %13139 = vmatpush.bf16.msra.mxu0 %v9562
    %13140 = vmatpush.bf16.msra.mxu0 %v9538
    %13141 = vmatpush.bf16.msra.mxu0 %v9514
    %13142 = vmatpush.bf16.msra.mxu0 %v9490
    %13143 = vmatpush.bf16.msra.mxu0 %v9466
    %13144 = vmatpush.bf16.msra.mxu0 %v9442
    %13145 = vmatmul.bf16.gmra.mxu0 %v2459
    %v13146 = vpop.f32.mrf.mxu0
    %v13147 = vadd.f32 %v13134, %v13146
    %v13148 = vpop.f32.mrf.mxu0
    %13149 = vdwg.mxu0
    %13150 = vmatpush.bf16.msra.mxu0 %v9802
    %13151 = vmatpush.bf16.msra.mxu0 %v9778
    %13152 = vmatpush.bf16.msra.mxu0 %v9754
    %13153 = vmatpush.bf16.msra.mxu0 %v9730
    %13154 = vmatpush.bf16.msra.mxu0 %v9706
    %13155 = vmatpush.bf16.msra.mxu0 %v9682
    %13156 = vmatpush.bf16.msra.mxu0 %v9658
    %13157 = vmatpush.bf16.msra.mxu0 %v9634
    %13158 = vmatmul.bf16.gmra.mxu0 %v2460
    %v13159 = vpop.f32.mrf.mxu0
    %v13160 = vadd.f32 %v13147, %v13159
    %v13161 = vpop.f32.mrf.mxu0
    %13162 = vdwg.mxu0
    %13163 = vmatpush.bf16.msra.mxu0 %v9994
    %13164 = vmatpush.bf16.msra.mxu0 %v9970
    %13165 = vmatpush.bf16.msra.mxu0 %v9946
    %13166 = vmatpush.bf16.msra.mxu0 %v9922
    %13167 = vmatpush.bf16.msra.mxu0 %v9898
    %13168 = vmatpush.bf16.msra.mxu0 %v9874
    %13169 = vmatpush.bf16.msra.mxu0 %v9850
    %13170 = vmatpush.bf16.msra.mxu0 %v9826
    %13171 = vmatmul.bf16.gmra.mxu0 %v2461
    %v13172 = vpop.f32.mrf.mxu0
    %v13173 = vadd.f32 %v13160, %v13172
    %v13174 = vpop.f32.mrf.mxu0
    %13175 = vdwg.mxu0
    %13176 = vmatpush.bf16.msra.mxu0 %v10186
    %13177 = vmatpush.bf16.msra.mxu0 %v10162
    %13178 = vmatpush.bf16.msra.mxu0 %v10138
    %13179 = vmatpush.bf16.msra.mxu0 %v10114
    %13180 = vmatpush.bf16.msra.mxu0 %v10090
    %13181 = vmatpush.bf16.msra.mxu0 %v10066
    %13182 = vmatpush.bf16.msra.mxu0 %v10042
    %13183 = vmatpush.bf16.msra.mxu0 %v10018
    %13184 = vmatmul.bf16.gmra.mxu0 %v2462
    %v13185 = vpop.f32.mrf.mxu0
    %v13186 = vadd.f32 %v13173, %v13185
    %v13187 = vpop.f32.mrf.mxu0
    %13188 = vdwg.mxu0
    %13189 = vmatpush.bf16.msra.mxu0 %v8843
    %13190 = vmatpush.bf16.msra.mxu0 %v8819
    %13191 = vmatpush.bf16.msra.mxu0 %v8795
    %13192 = vmatpush.bf16.msra.mxu0 %v8771
    %13193 = vmatpush.bf16.msra.mxu0 %v8747
    %13194 = vmatpush.bf16.msra.mxu0 %v8723
    %13195 = vmatpush.bf16.msra.mxu0 %v8699
    %13196 = vmatpush.bf16.msra.mxu0 %v8675
    %13197 = vmatmul.bf16.gmra.mxu0 %v2455
    %v13198 = vpop.f32.mrf.mxu0
    %v13199 = vadd.f32 %v4019, %v13198
    %v13200 = vpop.f32.mrf.mxu0
    %13201 = vdwg.mxu0
    %13202 = vmatpush.bf16.msra.mxu0 %v9035
    %13203 = vmatpush.bf16.msra.mxu0 %v9011
    %13204 = vmatpush.bf16.msra.mxu0 %v8987
    %13205 = vmatpush.bf16.msra.mxu0 %v8963
    %13206 = vmatpush.bf16.msra.mxu0 %v8939
    %13207 = vmatpush.bf16.msra.mxu0 %v8915
    %13208 = vmatpush.bf16.msra.mxu0 %v8891
    %13209 = vmatpush.bf16.msra.mxu0 %v8867
    %13210 = vmatmul.bf16.gmra.mxu0 %v2456
    %v13211 = vpop.f32.mrf.mxu0
    %v13212 = vadd.f32 %v13199, %v13211
    %v13213 = vpop.f32.mrf.mxu0
    %13214 = vdwg.mxu0
    %13215 = vmatpush.bf16.msra.mxu0 %v9227
    %13216 = vmatpush.bf16.msra.mxu0 %v9203
    %13217 = vmatpush.bf16.msra.mxu0 %v9179
    %13218 = vmatpush.bf16.msra.mxu0 %v9155
    %13219 = vmatpush.bf16.msra.mxu0 %v9131
    %13220 = vmatpush.bf16.msra.mxu0 %v9107
    %13221 = vmatpush.bf16.msra.mxu0 %v9083
    %13222 = vmatpush.bf16.msra.mxu0 %v9059
    %13223 = vmatmul.bf16.gmra.mxu0 %v2457
    %v13224 = vpop.f32.mrf.mxu0
    %v13225 = vadd.f32 %v13212, %v13224
    %v13226 = vpop.f32.mrf.mxu0
    %13227 = vdwg.mxu0
    %13228 = vmatpush.bf16.msra.mxu0 %v9419
    %13229 = vmatpush.bf16.msra.mxu0 %v9395
    %13230 = vmatpush.bf16.msra.mxu0 %v9371
    %13231 = vmatpush.bf16.msra.mxu0 %v9347
    %13232 = vmatpush.bf16.msra.mxu0 %v9323
    %13233 = vmatpush.bf16.msra.mxu0 %v9299
    %13234 = vmatpush.bf16.msra.mxu0 %v9275
    %13235 = vmatpush.bf16.msra.mxu0 %v9251
    %13236 = vmatmul.bf16.gmra.mxu0 %v2458
    %v13237 = vpop.f32.mrf.mxu0
    %v13238 = vadd.f32 %v13225, %v13237
    %v13239 = vpop.f32.mrf.mxu0
    %13240 = vdwg.mxu0
    %13241 = vmatpush.bf16.msra.mxu0 %v9611
    %13242 = vmatpush.bf16.msra.mxu0 %v9587
    %13243 = vmatpush.bf16.msra.mxu0 %v9563
    %13244 = vmatpush.bf16.msra.mxu0 %v9539
    %13245 = vmatpush.bf16.msra.mxu0 %v9515
    %13246 = vmatpush.bf16.msra.mxu0 %v9491
    %13247 = vmatpush.bf16.msra.mxu0 %v9467
    %13248 = vmatpush.bf16.msra.mxu0 %v9443
    %13249 = vmatmul.bf16.gmra.mxu0 %v2459
    %v13250 = vpop.f32.mrf.mxu0
    %v13251 = vadd.f32 %v13238, %v13250
    %v13252 = vpop.f32.mrf.mxu0
    %13253 = vdwg.mxu0
    %13254 = vmatpush.bf16.msra.mxu0 %v9803
    %13255 = vmatpush.bf16.msra.mxu0 %v9779
    %13256 = vmatpush.bf16.msra.mxu0 %v9755
    %13257 = vmatpush.bf16.msra.mxu0 %v9731
    %13258 = vmatpush.bf16.msra.mxu0 %v9707
    %13259 = vmatpush.bf16.msra.mxu0 %v9683
    %13260 = vmatpush.bf16.msra.mxu0 %v9659
    %13261 = vmatpush.bf16.msra.mxu0 %v9635
    %13262 = vmatmul.bf16.gmra.mxu0 %v2460
    %v13263 = vpop.f32.mrf.mxu0
    %v13264 = vadd.f32 %v13251, %v13263
    %v13265 = vpop.f32.mrf.mxu0
    %13266 = vdwg.mxu0
    %13267 = vmatpush.bf16.msra.mxu0 %v9995
    %13268 = vmatpush.bf16.msra.mxu0 %v9971
    %13269 = vmatpush.bf16.msra.mxu0 %v9947
    %13270 = vmatpush.bf16.msra.mxu0 %v9923
    %13271 = vmatpush.bf16.msra.mxu0 %v9899
    %13272 = vmatpush.bf16.msra.mxu0 %v9875
    %13273 = vmatpush.bf16.msra.mxu0 %v9851
    %13274 = vmatpush.bf16.msra.mxu0 %v9827
    %13275 = vmatmul.bf16.gmra.mxu0 %v2461
    %v13276 = vpop.f32.mrf.mxu0
    %v13277 = vadd.f32 %v13264, %v13276
    %v13278 = vpop.f32.mrf.mxu0
    %13279 = vdwg.mxu0
    %13280 = vmatpush.bf16.msra.mxu0 %v10187
    %13281 = vmatpush.bf16.msra.mxu0 %v10163
    %13282 = vmatpush.bf16.msra.mxu0 %v10139
    %13283 = vmatpush.bf16.msra.mxu0 %v10115
    %13284 = vmatpush.bf16.msra.mxu0 %v10091
    %13285 = vmatpush.bf16.msra.mxu0 %v10067
    %13286 = vmatpush.bf16.msra.mxu0 %v10043
    %13287 = vmatpush.bf16.msra.mxu0 %v10019
    %13288 = vmatmul.bf16.gmra.mxu0 %v2462
    %v13289 = vpop.f32.mrf.mxu0
    %v13290 = vadd.f32 %v13277, %v13289
    %v13291 = vpop.f32.mrf.mxu0
    %13292 = vdwg.mxu0
    %13293 = vmatpush.bf16.msra.mxu0 %v8844
    %13294 = vmatpush.bf16.msra.mxu0 %v8820
    %13295 = vmatpush.bf16.msra.mxu0 %v8796
    %13296 = vmatpush.bf16.msra.mxu0 %v8772
    %13297 = vmatpush.bf16.msra.mxu0 %v8748
    %13298 = vmatpush.bf16.msra.mxu0 %v8724
    %13299 = vmatpush.bf16.msra.mxu0 %v8700
    %13300 = vmatpush.bf16.msra.mxu0 %v8676
    %13301 = vmatmul.bf16.gmra.mxu0 %v2455
    %v13302 = vpop.f32.mrf.mxu0
    %v13303 = vadd.f32 %v4020, %v13302
    %v13304 = vpop.f32.mrf.mxu0
    %13305 = vdwg.mxu0
    %13306 = vmatpush.bf16.msra.mxu0 %v9036
    %13307 = vmatpush.bf16.msra.mxu0 %v9012
    %13308 = vmatpush.bf16.msra.mxu0 %v8988
    %13309 = vmatpush.bf16.msra.mxu0 %v8964
    %13310 = vmatpush.bf16.msra.mxu0 %v8940
    %13311 = vmatpush.bf16.msra.mxu0 %v8916
    %13312 = vmatpush.bf16.msra.mxu0 %v8892
    %13313 = vmatpush.bf16.msra.mxu0 %v8868
    %13314 = vmatmul.bf16.gmra.mxu0 %v2456
    %v13315 = vpop.f32.mrf.mxu0
    %v13316 = vadd.f32 %v13303, %v13315
    %v13317 = vpop.f32.mrf.mxu0
    %13318 = vdwg.mxu0
    %13319 = vmatpush.bf16.msra.mxu0 %v9228
    %13320 = vmatpush.bf16.msra.mxu0 %v9204
    %13321 = vmatpush.bf16.msra.mxu0 %v9180
    %13322 = vmatpush.bf16.msra.mxu0 %v9156
    %13323 = vmatpush.bf16.msra.mxu0 %v9132
    %13324 = vmatpush.bf16.msra.mxu0 %v9108
    %13325 = vmatpush.bf16.msra.mxu0 %v9084
    %13326 = vmatpush.bf16.msra.mxu0 %v9060
    %13327 = vmatmul.bf16.gmra.mxu0 %v2457
    %v13328 = vpop.f32.mrf.mxu0
    %v13329 = vadd.f32 %v13316, %v13328
    %v13330 = vpop.f32.mrf.mxu0
    %13331 = vdwg.mxu0
    %13332 = vmatpush.bf16.msra.mxu0 %v9420
    %13333 = vmatpush.bf16.msra.mxu0 %v9396
    %13334 = vmatpush.bf16.msra.mxu0 %v9372
    %13335 = vmatpush.bf16.msra.mxu0 %v9348
    %13336 = vmatpush.bf16.msra.mxu0 %v9324
    %13337 = vmatpush.bf16.msra.mxu0 %v9300
    %13338 = vmatpush.bf16.msra.mxu0 %v9276
    %13339 = vmatpush.bf16.msra.mxu0 %v9252
    %13340 = vmatmul.bf16.gmra.mxu0 %v2458
    %v13341 = vpop.f32.mrf.mxu0
    %v13342 = vadd.f32 %v13329, %v13341
    %v13343 = vpop.f32.mrf.mxu0
    %13344 = vdwg.mxu0
    %13345 = vmatpush.bf16.msra.mxu0 %v9612
    %13346 = vmatpush.bf16.msra.mxu0 %v9588
    %13347 = vmatpush.bf16.msra.mxu0 %v9564
    %13348 = vmatpush.bf16.msra.mxu0 %v9540
    %13349 = vmatpush.bf16.msra.mxu0 %v9516
    %13350 = vmatpush.bf16.msra.mxu0 %v9492
    %13351 = vmatpush.bf16.msra.mxu0 %v9468
    %13352 = vmatpush.bf16.msra.mxu0 %v9444
    %13353 = vmatmul.bf16.gmra.mxu0 %v2459
    %v13354 = vpop.f32.mrf.mxu0
    %v13355 = vadd.f32 %v13342, %v13354
    %v13356 = vpop.f32.mrf.mxu0
    %13357 = vdwg.mxu0
    %13358 = vmatpush.bf16.msra.mxu0 %v9804
    %13359 = vmatpush.bf16.msra.mxu0 %v9780
    %13360 = vmatpush.bf16.msra.mxu0 %v9756
    %13361 = vmatpush.bf16.msra.mxu0 %v9732
    %13362 = vmatpush.bf16.msra.mxu0 %v9708
    %13363 = vmatpush.bf16.msra.mxu0 %v9684
    %13364 = vmatpush.bf16.msra.mxu0 %v9660
    %13365 = vmatpush.bf16.msra.mxu0 %v9636
    %13366 = vmatmul.bf16.gmra.mxu0 %v2460
    %v13367 = vpop.f32.mrf.mxu0
    %v13368 = vadd.f32 %v13355, %v13367
    %v13369 = vpop.f32.mrf.mxu0
    %13370 = vdwg.mxu0
    %13371 = vmatpush.bf16.msra.mxu0 %v9996
    %13372 = vmatpush.bf16.msra.mxu0 %v9972
    %13373 = vmatpush.bf16.msra.mxu0 %v9948
    %13374 = vmatpush.bf16.msra.mxu0 %v9924
    %13375 = vmatpush.bf16.msra.mxu0 %v9900
    %13376 = vmatpush.bf16.msra.mxu0 %v9876
    %13377 = vmatpush.bf16.msra.mxu0 %v9852
    %13378 = vmatpush.bf16.msra.mxu0 %v9828
    %13379 = vmatmul.bf16.gmra.mxu0 %v2461
    %v13380 = vpop.f32.mrf.mxu0
    %v13381 = vadd.f32 %v13368, %v13380
    %v13382 = vpop.f32.mrf.mxu0
    %13383 = vdwg.mxu0
    %13384 = vmatpush.bf16.msra.mxu0 %v10188
    %13385 = vmatpush.bf16.msra.mxu0 %v10164
    %13386 = vmatpush.bf16.msra.mxu0 %v10140
    %13387 = vmatpush.bf16.msra.mxu0 %v10116
    %13388 = vmatpush.bf16.msra.mxu0 %v10092
    %13389 = vmatpush.bf16.msra.mxu0 %v10068
    %13390 = vmatpush.bf16.msra.mxu0 %v10044
    %13391 = vmatpush.bf16.msra.mxu0 %v10020
    %13392 = vmatmul.bf16.gmra.mxu0 %v2462
    %v13393 = vpop.f32.mrf.mxu0
    %v13394 = vadd.f32 %v13381, %v13393
    %v13395 = vpop.f32.mrf.mxu0
    %13396 = vdwg.mxu0
    %13397 = vmatpush.bf16.msra.mxu0 %v8845
    %13398 = vmatpush.bf16.msra.mxu0 %v8821
    %13399 = vmatpush.bf16.msra.mxu0 %v8797
    %13400 = vmatpush.bf16.msra.mxu0 %v8773
    %13401 = vmatpush.bf16.msra.mxu0 %v8749
    %13402 = vmatpush.bf16.msra.mxu0 %v8725
    %13403 = vmatpush.bf16.msra.mxu0 %v8701
    %13404 = vmatpush.bf16.msra.mxu0 %v8677
    %13405 = vmatmul.bf16.gmra.mxu0 %v2455
    %v13406 = vpop.f32.mrf.mxu0
    %v13407 = vadd.f32 %v4021, %v13406
    %v13408 = vpop.f32.mrf.mxu0
    %13409 = vdwg.mxu0
    %13410 = vmatpush.bf16.msra.mxu0 %v9037
    %13411 = vmatpush.bf16.msra.mxu0 %v9013
    %13412 = vmatpush.bf16.msra.mxu0 %v8989
    %13413 = vmatpush.bf16.msra.mxu0 %v8965
    %13414 = vmatpush.bf16.msra.mxu0 %v8941
    %13415 = vmatpush.bf16.msra.mxu0 %v8917
    %13416 = vmatpush.bf16.msra.mxu0 %v8893
    %13417 = vmatpush.bf16.msra.mxu0 %v8869
    %13418 = vmatmul.bf16.gmra.mxu0 %v2456
    %v13419 = vpop.f32.mrf.mxu0
    %v13420 = vadd.f32 %v13407, %v13419
    %v13421 = vpop.f32.mrf.mxu0
    %13422 = vdwg.mxu0
    %13423 = vmatpush.bf16.msra.mxu0 %v9229
    %13424 = vmatpush.bf16.msra.mxu0 %v9205
    %13425 = vmatpush.bf16.msra.mxu0 %v9181
    %13426 = vmatpush.bf16.msra.mxu0 %v9157
    %13427 = vmatpush.bf16.msra.mxu0 %v9133
    %13428 = vmatpush.bf16.msra.mxu0 %v9109
    %13429 = vmatpush.bf16.msra.mxu0 %v9085
    %13430 = vmatpush.bf16.msra.mxu0 %v9061
    %13431 = vmatmul.bf16.gmra.mxu0 %v2457
    %v13432 = vpop.f32.mrf.mxu0
    %v13433 = vadd.f32 %v13420, %v13432
    %v13434 = vpop.f32.mrf.mxu0
    %13435 = vdwg.mxu0
    %13436 = vmatpush.bf16.msra.mxu0 %v9421
    %13437 = vmatpush.bf16.msra.mxu0 %v9397
    %13438 = vmatpush.bf16.msra.mxu0 %v9373
    %13439 = vmatpush.bf16.msra.mxu0 %v9349
    %13440 = vmatpush.bf16.msra.mxu0 %v9325
    %13441 = vmatpush.bf16.msra.mxu0 %v9301
    %13442 = vmatpush.bf16.msra.mxu0 %v9277
    %13443 = vmatpush.bf16.msra.mxu0 %v9253
    %13444 = vmatmul.bf16.gmra.mxu0 %v2458
    %v13445 = vpop.f32.mrf.mxu0
    %v13446 = vadd.f32 %v13433, %v13445
    %v13447 = vpop.f32.mrf.mxu0
    %13448 = vdwg.mxu0
    %13449 = vmatpush.bf16.msra.mxu0 %v9613
    %13450 = vmatpush.bf16.msra.mxu0 %v9589
    %13451 = vmatpush.bf16.msra.mxu0 %v9565
    %13452 = vmatpush.bf16.msra.mxu0 %v9541
    %13453 = vmatpush.bf16.msra.mxu0 %v9517
    %13454 = vmatpush.bf16.msra.mxu0 %v9493
    %13455 = vmatpush.bf16.msra.mxu0 %v9469
    %13456 = vmatpush.bf16.msra.mxu0 %v9445
    %13457 = vmatmul.bf16.gmra.mxu0 %v2459
    %v13458 = vpop.f32.mrf.mxu0
    %v13459 = vadd.f32 %v13446, %v13458
    %v13460 = vpop.f32.mrf.mxu0
    %13461 = vdwg.mxu0
    %13462 = vmatpush.bf16.msra.mxu0 %v9805
    %13463 = vmatpush.bf16.msra.mxu0 %v9781
    %13464 = vmatpush.bf16.msra.mxu0 %v9757
    %13465 = vmatpush.bf16.msra.mxu0 %v9733
    %13466 = vmatpush.bf16.msra.mxu0 %v9709
    %13467 = vmatpush.bf16.msra.mxu0 %v9685
    %13468 = vmatpush.bf16.msra.mxu0 %v9661
    %13469 = vmatpush.bf16.msra.mxu0 %v9637
    %13470 = vmatmul.bf16.gmra.mxu0 %v2460
    %v13471 = vpop.f32.mrf.mxu0
    %v13472 = vadd.f32 %v13459, %v13471
    %v13473 = vpop.f32.mrf.mxu0
    %13474 = vdwg.mxu0
    %13475 = vmatpush.bf16.msra.mxu0 %v9997
    %13476 = vmatpush.bf16.msra.mxu0 %v9973
    %13477 = vmatpush.bf16.msra.mxu0 %v9949
    %13478 = vmatpush.bf16.msra.mxu0 %v9925
    %13479 = vmatpush.bf16.msra.mxu0 %v9901
    %13480 = vmatpush.bf16.msra.mxu0 %v9877
    %13481 = vmatpush.bf16.msra.mxu0 %v9853
    %13482 = vmatpush.bf16.msra.mxu0 %v9829
    %13483 = vmatmul.bf16.gmra.mxu0 %v2461
    %v13484 = vpop.f32.mrf.mxu0
    %v13485 = vadd.f32 %v13472, %v13484
    %v13486 = vpop.f32.mrf.mxu0
    %13487 = vdwg.mxu0
    %13488 = vmatpush.bf16.msra.mxu0 %v10189
    %13489 = vmatpush.bf16.msra.mxu0 %v10165
    %13490 = vmatpush.bf16.msra.mxu0 %v10141
    %13491 = vmatpush.bf16.msra.mxu0 %v10117
    %13492 = vmatpush.bf16.msra.mxu0 %v10093
    %13493 = vmatpush.bf16.msra.mxu0 %v10069
    %13494 = vmatpush.bf16.msra.mxu0 %v10045
    %13495 = vmatpush.bf16.msra.mxu0 %v10021
    %13496 = vmatmul.bf16.gmra.mxu0 %v2462
    %v13497 = vpop.f32.mrf.mxu0
    %v13498 = vadd.f32 %v13485, %v13497
    %v13499 = vpop.f32.mrf.mxu0
    %13500 = vdwg.mxu0
    %13501 = vmatpush.bf16.msra.mxu0 %v8846
    %13502 = vmatpush.bf16.msra.mxu0 %v8822
    %13503 = vmatpush.bf16.msra.mxu0 %v8798
    %13504 = vmatpush.bf16.msra.mxu0 %v8774
    %13505 = vmatpush.bf16.msra.mxu0 %v8750
    %13506 = vmatpush.bf16.msra.mxu0 %v8726
    %13507 = vmatpush.bf16.msra.mxu0 %v8702
    %13508 = vmatpush.bf16.msra.mxu0 %v8678
    %13509 = vmatmul.bf16.gmra.mxu0 %v2455
    %v13510 = vpop.f32.mrf.mxu0
    %v13511 = vadd.f32 %v4022, %v13510
    %v13512 = vpop.f32.mrf.mxu0
    %13513 = vdwg.mxu0
    %13514 = vmatpush.bf16.msra.mxu0 %v9038
    %13515 = vmatpush.bf16.msra.mxu0 %v9014
    %13516 = vmatpush.bf16.msra.mxu0 %v8990
    %13517 = vmatpush.bf16.msra.mxu0 %v8966
    %13518 = vmatpush.bf16.msra.mxu0 %v8942
    %13519 = vmatpush.bf16.msra.mxu0 %v8918
    %13520 = vmatpush.bf16.msra.mxu0 %v8894
    %13521 = vmatpush.bf16.msra.mxu0 %v8870
    %13522 = vmatmul.bf16.gmra.mxu0 %v2456
    %v13523 = vpop.f32.mrf.mxu0
    %v13524 = vadd.f32 %v13511, %v13523
    %v13525 = vpop.f32.mrf.mxu0
    %13526 = vdwg.mxu0
    %13527 = vmatpush.bf16.msra.mxu0 %v9230
    %13528 = vmatpush.bf16.msra.mxu0 %v9206
    %13529 = vmatpush.bf16.msra.mxu0 %v9182
    %13530 = vmatpush.bf16.msra.mxu0 %v9158
    %13531 = vmatpush.bf16.msra.mxu0 %v9134
    %13532 = vmatpush.bf16.msra.mxu0 %v9110
    %13533 = vmatpush.bf16.msra.mxu0 %v9086
    %13534 = vmatpush.bf16.msra.mxu0 %v9062
    %13535 = vmatmul.bf16.gmra.mxu0 %v2457
    %v13536 = vpop.f32.mrf.mxu0
    %v13537 = vadd.f32 %v13524, %v13536
    %v13538 = vpop.f32.mrf.mxu0
    %13539 = vdwg.mxu0
    %13540 = vmatpush.bf16.msra.mxu0 %v9422
    %13541 = vmatpush.bf16.msra.mxu0 %v9398
    %13542 = vmatpush.bf16.msra.mxu0 %v9374
    %13543 = vmatpush.bf16.msra.mxu0 %v9350
    %13544 = vmatpush.bf16.msra.mxu0 %v9326
    %13545 = vmatpush.bf16.msra.mxu0 %v9302
    %13546 = vmatpush.bf16.msra.mxu0 %v9278
    %13547 = vmatpush.bf16.msra.mxu0 %v9254
    %13548 = vmatmul.bf16.gmra.mxu0 %v2458
    %v13549 = vpop.f32.mrf.mxu0
    %v13550 = vadd.f32 %v13537, %v13549
    %v13551 = vpop.f32.mrf.mxu0
    %13552 = vdwg.mxu0
    %13553 = vmatpush.bf16.msra.mxu0 %v9614
    %13554 = vmatpush.bf16.msra.mxu0 %v9590
    %13555 = vmatpush.bf16.msra.mxu0 %v9566
    %13556 = vmatpush.bf16.msra.mxu0 %v9542
    %13557 = vmatpush.bf16.msra.mxu0 %v9518
    %13558 = vmatpush.bf16.msra.mxu0 %v9494
    %13559 = vmatpush.bf16.msra.mxu0 %v9470
    %13560 = vmatpush.bf16.msra.mxu0 %v9446
    %13561 = vmatmul.bf16.gmra.mxu0 %v2459
    %v13562 = vpop.f32.mrf.mxu0
    %v13563 = vadd.f32 %v13550, %v13562
    %v13564 = vpop.f32.mrf.mxu0
    %13565 = vdwg.mxu0
    %13566 = vmatpush.bf16.msra.mxu0 %v9806
    %13567 = vmatpush.bf16.msra.mxu0 %v9782
    %13568 = vmatpush.bf16.msra.mxu0 %v9758
    %13569 = vmatpush.bf16.msra.mxu0 %v9734
    %13570 = vmatpush.bf16.msra.mxu0 %v9710
    %13571 = vmatpush.bf16.msra.mxu0 %v9686
    %13572 = vmatpush.bf16.msra.mxu0 %v9662
    %13573 = vmatpush.bf16.msra.mxu0 %v9638
    %13574 = vmatmul.bf16.gmra.mxu0 %v2460
    %v13575 = vpop.f32.mrf.mxu0
    %v13576 = vadd.f32 %v13563, %v13575
    %v13577 = vpop.f32.mrf.mxu0
    %13578 = vdwg.mxu0
    %13579 = vmatpush.bf16.msra.mxu0 %v9998
    %13580 = vmatpush.bf16.msra.mxu0 %v9974
    %13581 = vmatpush.bf16.msra.mxu0 %v9950
    %13582 = vmatpush.bf16.msra.mxu0 %v9926
    %13583 = vmatpush.bf16.msra.mxu0 %v9902
    %13584 = vmatpush.bf16.msra.mxu0 %v9878
    %13585 = vmatpush.bf16.msra.mxu0 %v9854
    %13586 = vmatpush.bf16.msra.mxu0 %v9830
    %13587 = vmatmul.bf16.gmra.mxu0 %v2461
    %v13588 = vpop.f32.mrf.mxu0
    %v13589 = vadd.f32 %v13576, %v13588
    %v13590 = vpop.f32.mrf.mxu0
    %13591 = vdwg.mxu0
    %13592 = vmatpush.bf16.msra.mxu0 %v10190
    %13593 = vmatpush.bf16.msra.mxu0 %v10166
    %13594 = vmatpush.bf16.msra.mxu0 %v10142
    %13595 = vmatpush.bf16.msra.mxu0 %v10118
    %13596 = vmatpush.bf16.msra.mxu0 %v10094
    %13597 = vmatpush.bf16.msra.mxu0 %v10070
    %13598 = vmatpush.bf16.msra.mxu0 %v10046
    %13599 = vmatpush.bf16.msra.mxu0 %v10022
    %13600 = vmatmul.bf16.gmra.mxu0 %v2462
    %v13601 = vpop.f32.mrf.mxu0
    %v13602 = vadd.f32 %v13589, %v13601
    %v13603 = vpop.f32.mrf.mxu0
    %13604 = vdwg.mxu0
    %13605 = vmatpush.bf16.msra.mxu0 %v8847
    %13606 = vmatpush.bf16.msra.mxu0 %v8823
    %13607 = vmatpush.bf16.msra.mxu0 %v8799
    %13608 = vmatpush.bf16.msra.mxu0 %v8775
    %13609 = vmatpush.bf16.msra.mxu0 %v8751
    %13610 = vmatpush.bf16.msra.mxu0 %v8727
    %13611 = vmatpush.bf16.msra.mxu0 %v8703
    %13612 = vmatpush.bf16.msra.mxu0 %v8679
    %13613 = vmatmul.bf16.gmra.mxu0 %v2455
    %v13614 = vpop.f32.mrf.mxu0
    %v13615 = vadd.f32 %v4023, %v13614
    %v13616 = vpop.f32.mrf.mxu0
    %13617 = vdwg.mxu0
    %13618 = vmatpush.bf16.msra.mxu0 %v9039
    %13619 = vmatpush.bf16.msra.mxu0 %v9015
    %13620 = vmatpush.bf16.msra.mxu0 %v8991
    %13621 = vmatpush.bf16.msra.mxu0 %v8967
    %13622 = vmatpush.bf16.msra.mxu0 %v8943
    %13623 = vmatpush.bf16.msra.mxu0 %v8919
    %13624 = vmatpush.bf16.msra.mxu0 %v8895
    %13625 = vmatpush.bf16.msra.mxu0 %v8871
    %13626 = vmatmul.bf16.gmra.mxu0 %v2456
    %v13627 = vpop.f32.mrf.mxu0
    %v13628 = vadd.f32 %v13615, %v13627
    %v13629 = vpop.f32.mrf.mxu0
    %13630 = vdwg.mxu0
    %13631 = vmatpush.bf16.msra.mxu0 %v9231
    %13632 = vmatpush.bf16.msra.mxu0 %v9207
    %13633 = vmatpush.bf16.msra.mxu0 %v9183
    %13634 = vmatpush.bf16.msra.mxu0 %v9159
    %13635 = vmatpush.bf16.msra.mxu0 %v9135
    %13636 = vmatpush.bf16.msra.mxu0 %v9111
    %13637 = vmatpush.bf16.msra.mxu0 %v9087
    %13638 = vmatpush.bf16.msra.mxu0 %v9063
    %13639 = vmatmul.bf16.gmra.mxu0 %v2457
    %v13640 = vpop.f32.mrf.mxu0
    %v13641 = vadd.f32 %v13628, %v13640
    %v13642 = vpop.f32.mrf.mxu0
    %13643 = vdwg.mxu0
    %13644 = vmatpush.bf16.msra.mxu0 %v9423
    %13645 = vmatpush.bf16.msra.mxu0 %v9399
    %13646 = vmatpush.bf16.msra.mxu0 %v9375
    %13647 = vmatpush.bf16.msra.mxu0 %v9351
    %13648 = vmatpush.bf16.msra.mxu0 %v9327
    %13649 = vmatpush.bf16.msra.mxu0 %v9303
    %13650 = vmatpush.bf16.msra.mxu0 %v9279
    %13651 = vmatpush.bf16.msra.mxu0 %v9255
    %13652 = vmatmul.bf16.gmra.mxu0 %v2458
    %v13653 = vpop.f32.mrf.mxu0
    %v13654 = vadd.f32 %v13641, %v13653
    %v13655 = vpop.f32.mrf.mxu0
    %13656 = vdwg.mxu0
    %13657 = vmatpush.bf16.msra.mxu0 %v9615
    %13658 = vmatpush.bf16.msra.mxu0 %v9591
    %13659 = vmatpush.bf16.msra.mxu0 %v9567
    %13660 = vmatpush.bf16.msra.mxu0 %v9543
    %13661 = vmatpush.bf16.msra.mxu0 %v9519
    %13662 = vmatpush.bf16.msra.mxu0 %v9495
    %13663 = vmatpush.bf16.msra.mxu0 %v9471
    %13664 = vmatpush.bf16.msra.mxu0 %v9447
    %13665 = vmatmul.bf16.gmra.mxu0 %v2459
    %v13666 = vpop.f32.mrf.mxu0
    %v13667 = vadd.f32 %v13654, %v13666
    %v13668 = vpop.f32.mrf.mxu0
    %13669 = vdwg.mxu0
    %13670 = vmatpush.bf16.msra.mxu0 %v9807
    %13671 = vmatpush.bf16.msra.mxu0 %v9783
    %13672 = vmatpush.bf16.msra.mxu0 %v9759
    %13673 = vmatpush.bf16.msra.mxu0 %v9735
    %13674 = vmatpush.bf16.msra.mxu0 %v9711
    %13675 = vmatpush.bf16.msra.mxu0 %v9687
    %13676 = vmatpush.bf16.msra.mxu0 %v9663
    %13677 = vmatpush.bf16.msra.mxu0 %v9639
    %13678 = vmatmul.bf16.gmra.mxu0 %v2460
    %v13679 = vpop.f32.mrf.mxu0
    %v13680 = vadd.f32 %v13667, %v13679
    %v13681 = vpop.f32.mrf.mxu0
    %13682 = vdwg.mxu0
    %13683 = vmatpush.bf16.msra.mxu0 %v9999
    %13684 = vmatpush.bf16.msra.mxu0 %v9975
    %13685 = vmatpush.bf16.msra.mxu0 %v9951
    %13686 = vmatpush.bf16.msra.mxu0 %v9927
    %13687 = vmatpush.bf16.msra.mxu0 %v9903
    %13688 = vmatpush.bf16.msra.mxu0 %v9879
    %13689 = vmatpush.bf16.msra.mxu0 %v9855
    %13690 = vmatpush.bf16.msra.mxu0 %v9831
    %13691 = vmatmul.bf16.gmra.mxu0 %v2461
    %v13692 = vpop.f32.mrf.mxu0
    %v13693 = vadd.f32 %v13680, %v13692
    %v13694 = vpop.f32.mrf.mxu0
    %13695 = vdwg.mxu0
    %13696 = vmatpush.bf16.msra.mxu0 %v10191
    %13697 = vmatpush.bf16.msra.mxu0 %v10167
    %13698 = vmatpush.bf16.msra.mxu0 %v10143
    %13699 = vmatpush.bf16.msra.mxu0 %v10119
    %13700 = vmatpush.bf16.msra.mxu0 %v10095
    %13701 = vmatpush.bf16.msra.mxu0 %v10071
    %13702 = vmatpush.bf16.msra.mxu0 %v10047
    %13703 = vmatpush.bf16.msra.mxu0 %v10023
    %13704 = vmatmul.bf16.gmra.mxu0 %v2462
    %v13705 = vpop.f32.mrf.mxu0
    %v13706 = vadd.f32 %v13693, %v13705
    %v13707 = vpop.f32.mrf.mxu0
    %13708 = vdwg.mxu0
    %13709 = vmatpush.bf16.msra.mxu0 %v8848
    %13710 = vmatpush.bf16.msra.mxu0 %v8824
    %13711 = vmatpush.bf16.msra.mxu0 %v8800
    %13712 = vmatpush.bf16.msra.mxu0 %v8776
    %13713 = vmatpush.bf16.msra.mxu0 %v8752
    %13714 = vmatpush.bf16.msra.mxu0 %v8728
    %13715 = vmatpush.bf16.msra.mxu0 %v8704
    %13716 = vmatpush.bf16.msra.mxu0 %v8680
    %13717 = vmatmul.bf16.gmra.mxu0 %v2455
    %v13718 = vpop.f32.mrf.mxu0
    %v13719 = vadd.f32 %v4024, %v13718
    %v13720 = vpop.f32.mrf.mxu0
    %13721 = vdwg.mxu0
    %13722 = vmatpush.bf16.msra.mxu0 %v9040
    %13723 = vmatpush.bf16.msra.mxu0 %v9016
    %13724 = vmatpush.bf16.msra.mxu0 %v8992
    %13725 = vmatpush.bf16.msra.mxu0 %v8968
    %13726 = vmatpush.bf16.msra.mxu0 %v8944
    %13727 = vmatpush.bf16.msra.mxu0 %v8920
    %13728 = vmatpush.bf16.msra.mxu0 %v8896
    %13729 = vmatpush.bf16.msra.mxu0 %v8872
    %13730 = vmatmul.bf16.gmra.mxu0 %v2456
    %v13731 = vpop.f32.mrf.mxu0
    %v13732 = vadd.f32 %v13719, %v13731
    %v13733 = vpop.f32.mrf.mxu0
    %13734 = vdwg.mxu0
    %13735 = vmatpush.bf16.msra.mxu0 %v9232
    %13736 = vmatpush.bf16.msra.mxu0 %v9208
    %13737 = vmatpush.bf16.msra.mxu0 %v9184
    %13738 = vmatpush.bf16.msra.mxu0 %v9160
    %13739 = vmatpush.bf16.msra.mxu0 %v9136
    %13740 = vmatpush.bf16.msra.mxu0 %v9112
    %13741 = vmatpush.bf16.msra.mxu0 %v9088
    %13742 = vmatpush.bf16.msra.mxu0 %v9064
    %13743 = vmatmul.bf16.gmra.mxu0 %v2457
    %v13744 = vpop.f32.mrf.mxu0
    %v13745 = vadd.f32 %v13732, %v13744
    %v13746 = vpop.f32.mrf.mxu0
    %13747 = vdwg.mxu0
    %13748 = vmatpush.bf16.msra.mxu0 %v9424
    %13749 = vmatpush.bf16.msra.mxu0 %v9400
    %13750 = vmatpush.bf16.msra.mxu0 %v9376
    %13751 = vmatpush.bf16.msra.mxu0 %v9352
    %13752 = vmatpush.bf16.msra.mxu0 %v9328
    %13753 = vmatpush.bf16.msra.mxu0 %v9304
    %13754 = vmatpush.bf16.msra.mxu0 %v9280
    %13755 = vmatpush.bf16.msra.mxu0 %v9256
    %13756 = vmatmul.bf16.gmra.mxu0 %v2458
    %v13757 = vpop.f32.mrf.mxu0
    %v13758 = vadd.f32 %v13745, %v13757
    %v13759 = vpop.f32.mrf.mxu0
    %13760 = vdwg.mxu0
    %13761 = vmatpush.bf16.msra.mxu0 %v9616
    %13762 = vmatpush.bf16.msra.mxu0 %v9592
    %13763 = vmatpush.bf16.msra.mxu0 %v9568
    %13764 = vmatpush.bf16.msra.mxu0 %v9544
    %13765 = vmatpush.bf16.msra.mxu0 %v9520
    %13766 = vmatpush.bf16.msra.mxu0 %v9496
    %13767 = vmatpush.bf16.msra.mxu0 %v9472
    %13768 = vmatpush.bf16.msra.mxu0 %v9448
    %13769 = vmatmul.bf16.gmra.mxu0 %v2459
    %v13770 = vpop.f32.mrf.mxu0
    %v13771 = vadd.f32 %v13758, %v13770
    %v13772 = vpop.f32.mrf.mxu0
    %13773 = vdwg.mxu0
    %13774 = vmatpush.bf16.msra.mxu0 %v9808
    %13775 = vmatpush.bf16.msra.mxu0 %v9784
    %13776 = vmatpush.bf16.msra.mxu0 %v9760
    %13777 = vmatpush.bf16.msra.mxu0 %v9736
    %13778 = vmatpush.bf16.msra.mxu0 %v9712
    %13779 = vmatpush.bf16.msra.mxu0 %v9688
    %13780 = vmatpush.bf16.msra.mxu0 %v9664
    %13781 = vmatpush.bf16.msra.mxu0 %v9640
    %13782 = vmatmul.bf16.gmra.mxu0 %v2460
    %v13783 = vpop.f32.mrf.mxu0
    %v13784 = vadd.f32 %v13771, %v13783
    %v13785 = vpop.f32.mrf.mxu0
    %13786 = vdwg.mxu0
    %13787 = vmatpush.bf16.msra.mxu0 %v10000
    %13788 = vmatpush.bf16.msra.mxu0 %v9976
    %13789 = vmatpush.bf16.msra.mxu0 %v9952
    %13790 = vmatpush.bf16.msra.mxu0 %v9928
    %13791 = vmatpush.bf16.msra.mxu0 %v9904
    %13792 = vmatpush.bf16.msra.mxu0 %v9880
    %13793 = vmatpush.bf16.msra.mxu0 %v9856
    %13794 = vmatpush.bf16.msra.mxu0 %v9832
    %13795 = vmatmul.bf16.gmra.mxu0 %v2461
    %v13796 = vpop.f32.mrf.mxu0
    %v13797 = vadd.f32 %v13784, %v13796
    %v13798 = vpop.f32.mrf.mxu0
    %13799 = vdwg.mxu0
    %13800 = vmatpush.bf16.msra.mxu0 %v10192
    %13801 = vmatpush.bf16.msra.mxu0 %v10168
    %13802 = vmatpush.bf16.msra.mxu0 %v10144
    %13803 = vmatpush.bf16.msra.mxu0 %v10120
    %13804 = vmatpush.bf16.msra.mxu0 %v10096
    %13805 = vmatpush.bf16.msra.mxu0 %v10072
    %13806 = vmatpush.bf16.msra.mxu0 %v10048
    %13807 = vmatpush.bf16.msra.mxu0 %v10024
    %13808 = vmatmul.bf16.gmra.mxu0 %v2462
    %v13809 = vpop.f32.mrf.mxu0
    %v13810 = vadd.f32 %v13797, %v13809
    %v13811 = vpop.f32.mrf.mxu0
    %13812 = vdwg.mxu0
    %13813 = vmatpush.bf16.msra.mxu0 %v8849
    %13814 = vmatpush.bf16.msra.mxu0 %v8825
    %13815 = vmatpush.bf16.msra.mxu0 %v8801
    %13816 = vmatpush.bf16.msra.mxu0 %v8777
    %13817 = vmatpush.bf16.msra.mxu0 %v8753
    %13818 = vmatpush.bf16.msra.mxu0 %v8729
    %13819 = vmatpush.bf16.msra.mxu0 %v8705
    %13820 = vmatpush.bf16.msra.mxu0 %v8681
    %13821 = vmatmul.bf16.gmra.mxu0 %v2455
    %v13822 = vpop.f32.mrf.mxu0
    %v13823 = vadd.f32 %v4025, %v13822
    %v13824 = vpop.f32.mrf.mxu0
    %13825 = vdwg.mxu0
    %13826 = vmatpush.bf16.msra.mxu0 %v9041
    %13827 = vmatpush.bf16.msra.mxu0 %v9017
    %13828 = vmatpush.bf16.msra.mxu0 %v8993
    %13829 = vmatpush.bf16.msra.mxu0 %v8969
    %13830 = vmatpush.bf16.msra.mxu0 %v8945
    %13831 = vmatpush.bf16.msra.mxu0 %v8921
    %13832 = vmatpush.bf16.msra.mxu0 %v8897
    %13833 = vmatpush.bf16.msra.mxu0 %v8873
    %13834 = vmatmul.bf16.gmra.mxu0 %v2456
    %v13835 = vpop.f32.mrf.mxu0
    %v13836 = vadd.f32 %v13823, %v13835
    %v13837 = vpop.f32.mrf.mxu0
    %13838 = vdwg.mxu0
    %13839 = vmatpush.bf16.msra.mxu0 %v9233
    %13840 = vmatpush.bf16.msra.mxu0 %v9209
    %13841 = vmatpush.bf16.msra.mxu0 %v9185
    %13842 = vmatpush.bf16.msra.mxu0 %v9161
    %13843 = vmatpush.bf16.msra.mxu0 %v9137
    %13844 = vmatpush.bf16.msra.mxu0 %v9113
    %13845 = vmatpush.bf16.msra.mxu0 %v9089
    %13846 = vmatpush.bf16.msra.mxu0 %v9065
    %13847 = vmatmul.bf16.gmra.mxu0 %v2457
    %v13848 = vpop.f32.mrf.mxu0
    %v13849 = vadd.f32 %v13836, %v13848
    %v13850 = vpop.f32.mrf.mxu0
    %13851 = vdwg.mxu0
    %13852 = vmatpush.bf16.msra.mxu0 %v9425
    %13853 = vmatpush.bf16.msra.mxu0 %v9401
    %13854 = vmatpush.bf16.msra.mxu0 %v9377
    %13855 = vmatpush.bf16.msra.mxu0 %v9353
    %13856 = vmatpush.bf16.msra.mxu0 %v9329
    %13857 = vmatpush.bf16.msra.mxu0 %v9305
    %13858 = vmatpush.bf16.msra.mxu0 %v9281
    %13859 = vmatpush.bf16.msra.mxu0 %v9257
    %13860 = vmatmul.bf16.gmra.mxu0 %v2458
    %v13861 = vpop.f32.mrf.mxu0
    %v13862 = vadd.f32 %v13849, %v13861
    %v13863 = vpop.f32.mrf.mxu0
    %13864 = vdwg.mxu0
    %13865 = vmatpush.bf16.msra.mxu0 %v9617
    %13866 = vmatpush.bf16.msra.mxu0 %v9593
    %13867 = vmatpush.bf16.msra.mxu0 %v9569
    %13868 = vmatpush.bf16.msra.mxu0 %v9545
    %13869 = vmatpush.bf16.msra.mxu0 %v9521
    %13870 = vmatpush.bf16.msra.mxu0 %v9497
    %13871 = vmatpush.bf16.msra.mxu0 %v9473
    %13872 = vmatpush.bf16.msra.mxu0 %v9449
    %13873 = vmatmul.bf16.gmra.mxu0 %v2459
    %v13874 = vpop.f32.mrf.mxu0
    %v13875 = vadd.f32 %v13862, %v13874
    %v13876 = vpop.f32.mrf.mxu0
    %13877 = vdwg.mxu0
    %13878 = vmatpush.bf16.msra.mxu0 %v9809
    %13879 = vmatpush.bf16.msra.mxu0 %v9785
    %13880 = vmatpush.bf16.msra.mxu0 %v9761
    %13881 = vmatpush.bf16.msra.mxu0 %v9737
    %13882 = vmatpush.bf16.msra.mxu0 %v9713
    %13883 = vmatpush.bf16.msra.mxu0 %v9689
    %13884 = vmatpush.bf16.msra.mxu0 %v9665
    %13885 = vmatpush.bf16.msra.mxu0 %v9641
    %13886 = vmatmul.bf16.gmra.mxu0 %v2460
    %v13887 = vpop.f32.mrf.mxu0
    %v13888 = vadd.f32 %v13875, %v13887
    %v13889 = vpop.f32.mrf.mxu0
    %13890 = vdwg.mxu0
    %13891 = vmatpush.bf16.msra.mxu0 %v10001
    %13892 = vmatpush.bf16.msra.mxu0 %v9977
    %13893 = vmatpush.bf16.msra.mxu0 %v9953
    %13894 = vmatpush.bf16.msra.mxu0 %v9929
    %13895 = vmatpush.bf16.msra.mxu0 %v9905
    %13896 = vmatpush.bf16.msra.mxu0 %v9881
    %13897 = vmatpush.bf16.msra.mxu0 %v9857
    %13898 = vmatpush.bf16.msra.mxu0 %v9833
    %13899 = vmatmul.bf16.gmra.mxu0 %v2461
    %v13900 = vpop.f32.mrf.mxu0
    %v13901 = vadd.f32 %v13888, %v13900
    %v13902 = vpop.f32.mrf.mxu0
    %13903 = vdwg.mxu0
    %13904 = vmatpush.bf16.msra.mxu0 %v10193
    %13905 = vmatpush.bf16.msra.mxu0 %v10169
    %13906 = vmatpush.bf16.msra.mxu0 %v10145
    %13907 = vmatpush.bf16.msra.mxu0 %v10121
    %13908 = vmatpush.bf16.msra.mxu0 %v10097
    %13909 = vmatpush.bf16.msra.mxu0 %v10073
    %13910 = vmatpush.bf16.msra.mxu0 %v10049
    %13911 = vmatpush.bf16.msra.mxu0 %v10025
    %13912 = vmatmul.bf16.gmra.mxu0 %v2462
    %v13913 = vpop.f32.mrf.mxu0
    %v13914 = vadd.f32 %v13901, %v13913
    %v13915 = vpop.f32.mrf.mxu0
    %13916 = vdwg.mxu0
    %13917 = vmatpush.bf16.msra.mxu0 %v8850
    %13918 = vmatpush.bf16.msra.mxu0 %v8826
    %13919 = vmatpush.bf16.msra.mxu0 %v8802
    %13920 = vmatpush.bf16.msra.mxu0 %v8778
    %13921 = vmatpush.bf16.msra.mxu0 %v8754
    %13922 = vmatpush.bf16.msra.mxu0 %v8730
    %13923 = vmatpush.bf16.msra.mxu0 %v8706
    %13924 = vmatpush.bf16.msra.mxu0 %v8682
    %13925 = vmatmul.bf16.gmra.mxu0 %v2455
    %v13926 = vpop.f32.mrf.mxu0
    %v13927 = vadd.f32 %v4026, %v13926
    %v13928 = vpop.f32.mrf.mxu0
    %13929 = vdwg.mxu0
    %13930 = vmatpush.bf16.msra.mxu0 %v9042
    %13931 = vmatpush.bf16.msra.mxu0 %v9018
    %13932 = vmatpush.bf16.msra.mxu0 %v8994
    %13933 = vmatpush.bf16.msra.mxu0 %v8970
    %13934 = vmatpush.bf16.msra.mxu0 %v8946
    %13935 = vmatpush.bf16.msra.mxu0 %v8922
    %13936 = vmatpush.bf16.msra.mxu0 %v8898
    %13937 = vmatpush.bf16.msra.mxu0 %v8874
    %13938 = vmatmul.bf16.gmra.mxu0 %v2456
    %v13939 = vpop.f32.mrf.mxu0
    %v13940 = vadd.f32 %v13927, %v13939
    %v13941 = vpop.f32.mrf.mxu0
    %13942 = vdwg.mxu0
    %13943 = vmatpush.bf16.msra.mxu0 %v9234
    %13944 = vmatpush.bf16.msra.mxu0 %v9210
    %13945 = vmatpush.bf16.msra.mxu0 %v9186
    %13946 = vmatpush.bf16.msra.mxu0 %v9162
    %13947 = vmatpush.bf16.msra.mxu0 %v9138
    %13948 = vmatpush.bf16.msra.mxu0 %v9114
    %13949 = vmatpush.bf16.msra.mxu0 %v9090
    %13950 = vmatpush.bf16.msra.mxu0 %v9066
    %13951 = vmatmul.bf16.gmra.mxu0 %v2457
    %v13952 = vpop.f32.mrf.mxu0
    %v13953 = vadd.f32 %v13940, %v13952
    %v13954 = vpop.f32.mrf.mxu0
    %13955 = vdwg.mxu0
    %13956 = vmatpush.bf16.msra.mxu0 %v9426
    %13957 = vmatpush.bf16.msra.mxu0 %v9402
    %13958 = vmatpush.bf16.msra.mxu0 %v9378
    %13959 = vmatpush.bf16.msra.mxu0 %v9354
    %13960 = vmatpush.bf16.msra.mxu0 %v9330
    %13961 = vmatpush.bf16.msra.mxu0 %v9306
    %13962 = vmatpush.bf16.msra.mxu0 %v9282
    %13963 = vmatpush.bf16.msra.mxu0 %v9258
    %13964 = vmatmul.bf16.gmra.mxu0 %v2458
    %v13965 = vpop.f32.mrf.mxu0
    %v13966 = vadd.f32 %v13953, %v13965
    %v13967 = vpop.f32.mrf.mxu0
    %13968 = vdwg.mxu0
    %13969 = vmatpush.bf16.msra.mxu0 %v9618
    %13970 = vmatpush.bf16.msra.mxu0 %v9594
    %13971 = vmatpush.bf16.msra.mxu0 %v9570
    %13972 = vmatpush.bf16.msra.mxu0 %v9546
    %13973 = vmatpush.bf16.msra.mxu0 %v9522
    %13974 = vmatpush.bf16.msra.mxu0 %v9498
    %13975 = vmatpush.bf16.msra.mxu0 %v9474
    %13976 = vmatpush.bf16.msra.mxu0 %v9450
    %13977 = vmatmul.bf16.gmra.mxu0 %v2459
    %v13978 = vpop.f32.mrf.mxu0
    %v13979 = vadd.f32 %v13966, %v13978
    %v13980 = vpop.f32.mrf.mxu0
    %13981 = vdwg.mxu0
    %13982 = vmatpush.bf16.msra.mxu0 %v9810
    %13983 = vmatpush.bf16.msra.mxu0 %v9786
    %13984 = vmatpush.bf16.msra.mxu0 %v9762
    %13985 = vmatpush.bf16.msra.mxu0 %v9738
    %13986 = vmatpush.bf16.msra.mxu0 %v9714
    %13987 = vmatpush.bf16.msra.mxu0 %v9690
    %13988 = vmatpush.bf16.msra.mxu0 %v9666
    %13989 = vmatpush.bf16.msra.mxu0 %v9642
    %13990 = vmatmul.bf16.gmra.mxu0 %v2460
    %v13991 = vpop.f32.mrf.mxu0
    %v13992 = vadd.f32 %v13979, %v13991
    %v13993 = vpop.f32.mrf.mxu0
    %13994 = vdwg.mxu0
    %13995 = vmatpush.bf16.msra.mxu0 %v10002
    %13996 = vmatpush.bf16.msra.mxu0 %v9978
    %13997 = vmatpush.bf16.msra.mxu0 %v9954
    %13998 = vmatpush.bf16.msra.mxu0 %v9930
    %13999 = vmatpush.bf16.msra.mxu0 %v9906
    %14000 = vmatpush.bf16.msra.mxu0 %v9882
    %14001 = vmatpush.bf16.msra.mxu0 %v9858
    %14002 = vmatpush.bf16.msra.mxu0 %v9834
    %14003 = vmatmul.bf16.gmra.mxu0 %v2461
    %v14004 = vpop.f32.mrf.mxu0
    %v14005 = vadd.f32 %v13992, %v14004
    %v14006 = vpop.f32.mrf.mxu0
    %14007 = vdwg.mxu0
    %14008 = vmatpush.bf16.msra.mxu0 %v10194
    %14009 = vmatpush.bf16.msra.mxu0 %v10170
    %14010 = vmatpush.bf16.msra.mxu0 %v10146
    %14011 = vmatpush.bf16.msra.mxu0 %v10122
    %14012 = vmatpush.bf16.msra.mxu0 %v10098
    %14013 = vmatpush.bf16.msra.mxu0 %v10074
    %14014 = vmatpush.bf16.msra.mxu0 %v10050
    %14015 = vmatpush.bf16.msra.mxu0 %v10026
    %14016 = vmatmul.bf16.gmra.mxu0 %v2462
    %v14017 = vpop.f32.mrf.mxu0
    %v14018 = vadd.f32 %v14005, %v14017
    %v14019 = vpop.f32.mrf.mxu0
    %14020 = vdwg.mxu0
    %14021 = vmatpush.bf16.msra.mxu0 %v8851
    %14022 = vmatpush.bf16.msra.mxu0 %v8827
    %14023 = vmatpush.bf16.msra.mxu0 %v8803
    %14024 = vmatpush.bf16.msra.mxu0 %v8779
    %14025 = vmatpush.bf16.msra.mxu0 %v8755
    %14026 = vmatpush.bf16.msra.mxu0 %v8731
    %14027 = vmatpush.bf16.msra.mxu0 %v8707
    %14028 = vmatpush.bf16.msra.mxu0 %v8683
    %14029 = vmatmul.bf16.gmra.mxu0 %v2455
    %v14030 = vpop.f32.mrf.mxu0
    %v14031 = vadd.f32 %v4027, %v14030
    %v14032 = vpop.f32.mrf.mxu0
    %14033 = vdwg.mxu0
    %14034 = vmatpush.bf16.msra.mxu0 %v9043
    %14035 = vmatpush.bf16.msra.mxu0 %v9019
    %14036 = vmatpush.bf16.msra.mxu0 %v8995
    %14037 = vmatpush.bf16.msra.mxu0 %v8971
    %14038 = vmatpush.bf16.msra.mxu0 %v8947
    %14039 = vmatpush.bf16.msra.mxu0 %v8923
    %14040 = vmatpush.bf16.msra.mxu0 %v8899
    %14041 = vmatpush.bf16.msra.mxu0 %v8875
    %14042 = vmatmul.bf16.gmra.mxu0 %v2456
    %v14043 = vpop.f32.mrf.mxu0
    %v14044 = vadd.f32 %v14031, %v14043
    %v14045 = vpop.f32.mrf.mxu0
    %14046 = vdwg.mxu0
    %14047 = vmatpush.bf16.msra.mxu0 %v9235
    %14048 = vmatpush.bf16.msra.mxu0 %v9211
    %14049 = vmatpush.bf16.msra.mxu0 %v9187
    %14050 = vmatpush.bf16.msra.mxu0 %v9163
    %14051 = vmatpush.bf16.msra.mxu0 %v9139
    %14052 = vmatpush.bf16.msra.mxu0 %v9115
    %14053 = vmatpush.bf16.msra.mxu0 %v9091
    %14054 = vmatpush.bf16.msra.mxu0 %v9067
    %14055 = vmatmul.bf16.gmra.mxu0 %v2457
    %v14056 = vpop.f32.mrf.mxu0
    %v14057 = vadd.f32 %v14044, %v14056
    %v14058 = vpop.f32.mrf.mxu0
    %14059 = vdwg.mxu0
    %14060 = vmatpush.bf16.msra.mxu0 %v9427
    %14061 = vmatpush.bf16.msra.mxu0 %v9403
    %14062 = vmatpush.bf16.msra.mxu0 %v9379
    %14063 = vmatpush.bf16.msra.mxu0 %v9355
    %14064 = vmatpush.bf16.msra.mxu0 %v9331
    %14065 = vmatpush.bf16.msra.mxu0 %v9307
    %14066 = vmatpush.bf16.msra.mxu0 %v9283
    %14067 = vmatpush.bf16.msra.mxu0 %v9259
    %14068 = vmatmul.bf16.gmra.mxu0 %v2458
    %v14069 = vpop.f32.mrf.mxu0
    %v14070 = vadd.f32 %v14057, %v14069
    %v14071 = vpop.f32.mrf.mxu0
    %14072 = vdwg.mxu0
    %14073 = vmatpush.bf16.msra.mxu0 %v9619
    %14074 = vmatpush.bf16.msra.mxu0 %v9595
    %14075 = vmatpush.bf16.msra.mxu0 %v9571
    %14076 = vmatpush.bf16.msra.mxu0 %v9547
    %14077 = vmatpush.bf16.msra.mxu0 %v9523
    %14078 = vmatpush.bf16.msra.mxu0 %v9499
    %14079 = vmatpush.bf16.msra.mxu0 %v9475
    %14080 = vmatpush.bf16.msra.mxu0 %v9451
    %14081 = vmatmul.bf16.gmra.mxu0 %v2459
    %v14082 = vpop.f32.mrf.mxu0
    %v14083 = vadd.f32 %v14070, %v14082
    %v14084 = vpop.f32.mrf.mxu0
    %14085 = vdwg.mxu0
    %14086 = vmatpush.bf16.msra.mxu0 %v9811
    %14087 = vmatpush.bf16.msra.mxu0 %v9787
    %14088 = vmatpush.bf16.msra.mxu0 %v9763
    %14089 = vmatpush.bf16.msra.mxu0 %v9739
    %14090 = vmatpush.bf16.msra.mxu0 %v9715
    %14091 = vmatpush.bf16.msra.mxu0 %v9691
    %14092 = vmatpush.bf16.msra.mxu0 %v9667
    %14093 = vmatpush.bf16.msra.mxu0 %v9643
    %14094 = vmatmul.bf16.gmra.mxu0 %v2460
    %v14095 = vpop.f32.mrf.mxu0
    %v14096 = vadd.f32 %v14083, %v14095
    %v14097 = vpop.f32.mrf.mxu0
    %14098 = vdwg.mxu0
    %14099 = vmatpush.bf16.msra.mxu0 %v10003
    %14100 = vmatpush.bf16.msra.mxu0 %v9979
    %14101 = vmatpush.bf16.msra.mxu0 %v9955
    %14102 = vmatpush.bf16.msra.mxu0 %v9931
    %14103 = vmatpush.bf16.msra.mxu0 %v9907
    %14104 = vmatpush.bf16.msra.mxu0 %v9883
    %14105 = vmatpush.bf16.msra.mxu0 %v9859
    %14106 = vmatpush.bf16.msra.mxu0 %v9835
    %14107 = vmatmul.bf16.gmra.mxu0 %v2461
    %v14108 = vpop.f32.mrf.mxu0
    %v14109 = vadd.f32 %v14096, %v14108
    %v14110 = vpop.f32.mrf.mxu0
    %14111 = vdwg.mxu0
    %14112 = vmatpush.bf16.msra.mxu0 %v10195
    %14113 = vmatpush.bf16.msra.mxu0 %v10171
    %14114 = vmatpush.bf16.msra.mxu0 %v10147
    %14115 = vmatpush.bf16.msra.mxu0 %v10123
    %14116 = vmatpush.bf16.msra.mxu0 %v10099
    %14117 = vmatpush.bf16.msra.mxu0 %v10075
    %14118 = vmatpush.bf16.msra.mxu0 %v10051
    %14119 = vmatpush.bf16.msra.mxu0 %v10027
    %14120 = vmatmul.bf16.gmra.mxu0 %v2462
    %v14121 = vpop.f32.mrf.mxu0
    %v14122 = vadd.f32 %v14109, %v14121
    %v14123 = vpop.f32.mrf.mxu0
    %14124 = vdwg.mxu0
    %14125 = vmatpush.bf16.msra.mxu0 %v8852
    %14126 = vmatpush.bf16.msra.mxu0 %v8828
    %14127 = vmatpush.bf16.msra.mxu0 %v8804
    %14128 = vmatpush.bf16.msra.mxu0 %v8780
    %14129 = vmatpush.bf16.msra.mxu0 %v8756
    %14130 = vmatpush.bf16.msra.mxu0 %v8732
    %14131 = vmatpush.bf16.msra.mxu0 %v8708
    %14132 = vmatpush.bf16.msra.mxu0 %v8684
    %14133 = vmatmul.bf16.gmra.mxu0 %v2455
    %v14134 = vpop.f32.mrf.mxu0
    %v14135 = vadd.f32 %v4028, %v14134
    %v14136 = vpop.f32.mrf.mxu0
    %14137 = vdwg.mxu0
    %14138 = vmatpush.bf16.msra.mxu0 %v9044
    %14139 = vmatpush.bf16.msra.mxu0 %v9020
    %14140 = vmatpush.bf16.msra.mxu0 %v8996
    %14141 = vmatpush.bf16.msra.mxu0 %v8972
    %14142 = vmatpush.bf16.msra.mxu0 %v8948
    %14143 = vmatpush.bf16.msra.mxu0 %v8924
    %14144 = vmatpush.bf16.msra.mxu0 %v8900
    %14145 = vmatpush.bf16.msra.mxu0 %v8876
    %14146 = vmatmul.bf16.gmra.mxu0 %v2456
    %v14147 = vpop.f32.mrf.mxu0
    %v14148 = vadd.f32 %v14135, %v14147
    %v14149 = vpop.f32.mrf.mxu0
    %14150 = vdwg.mxu0
    %14151 = vmatpush.bf16.msra.mxu0 %v9236
    %14152 = vmatpush.bf16.msra.mxu0 %v9212
    %14153 = vmatpush.bf16.msra.mxu0 %v9188
    %14154 = vmatpush.bf16.msra.mxu0 %v9164
    %14155 = vmatpush.bf16.msra.mxu0 %v9140
    %14156 = vmatpush.bf16.msra.mxu0 %v9116
    %14157 = vmatpush.bf16.msra.mxu0 %v9092
    %14158 = vmatpush.bf16.msra.mxu0 %v9068
    %14159 = vmatmul.bf16.gmra.mxu0 %v2457
    %v14160 = vpop.f32.mrf.mxu0
    %v14161 = vadd.f32 %v14148, %v14160
    %v14162 = vpop.f32.mrf.mxu0
    %14163 = vdwg.mxu0
    %14164 = vmatpush.bf16.msra.mxu0 %v9428
    %14165 = vmatpush.bf16.msra.mxu0 %v9404
    %14166 = vmatpush.bf16.msra.mxu0 %v9380
    %14167 = vmatpush.bf16.msra.mxu0 %v9356
    %14168 = vmatpush.bf16.msra.mxu0 %v9332
    %14169 = vmatpush.bf16.msra.mxu0 %v9308
    %14170 = vmatpush.bf16.msra.mxu0 %v9284
    %14171 = vmatpush.bf16.msra.mxu0 %v9260
    %14172 = vmatmul.bf16.gmra.mxu0 %v2458
    %v14173 = vpop.f32.mrf.mxu0
    %v14174 = vadd.f32 %v14161, %v14173
    %v14175 = vpop.f32.mrf.mxu0
    %14176 = vdwg.mxu0
    %14177 = vmatpush.bf16.msra.mxu0 %v9620
    %14178 = vmatpush.bf16.msra.mxu0 %v9596
    %14179 = vmatpush.bf16.msra.mxu0 %v9572
    %14180 = vmatpush.bf16.msra.mxu0 %v9548
    %14181 = vmatpush.bf16.msra.mxu0 %v9524
    %14182 = vmatpush.bf16.msra.mxu0 %v9500
    %14183 = vmatpush.bf16.msra.mxu0 %v9476
    %14184 = vmatpush.bf16.msra.mxu0 %v9452
    %14185 = vmatmul.bf16.gmra.mxu0 %v2459
    %v14186 = vpop.f32.mrf.mxu0
    %v14187 = vadd.f32 %v14174, %v14186
    %v14188 = vpop.f32.mrf.mxu0
    %14189 = vdwg.mxu0
    %14190 = vmatpush.bf16.msra.mxu0 %v9812
    %14191 = vmatpush.bf16.msra.mxu0 %v9788
    %14192 = vmatpush.bf16.msra.mxu0 %v9764
    %14193 = vmatpush.bf16.msra.mxu0 %v9740
    %14194 = vmatpush.bf16.msra.mxu0 %v9716
    %14195 = vmatpush.bf16.msra.mxu0 %v9692
    %14196 = vmatpush.bf16.msra.mxu0 %v9668
    %14197 = vmatpush.bf16.msra.mxu0 %v9644
    %14198 = vmatmul.bf16.gmra.mxu0 %v2460
    %v14199 = vpop.f32.mrf.mxu0
    %v14200 = vadd.f32 %v14187, %v14199
    %v14201 = vpop.f32.mrf.mxu0
    %14202 = vdwg.mxu0
    %14203 = vmatpush.bf16.msra.mxu0 %v10004
    %14204 = vmatpush.bf16.msra.mxu0 %v9980
    %14205 = vmatpush.bf16.msra.mxu0 %v9956
    %14206 = vmatpush.bf16.msra.mxu0 %v9932
    %14207 = vmatpush.bf16.msra.mxu0 %v9908
    %14208 = vmatpush.bf16.msra.mxu0 %v9884
    %14209 = vmatpush.bf16.msra.mxu0 %v9860
    %14210 = vmatpush.bf16.msra.mxu0 %v9836
    %14211 = vmatmul.bf16.gmra.mxu0 %v2461
    %v14212 = vpop.f32.mrf.mxu0
    %v14213 = vadd.f32 %v14200, %v14212
    %v14214 = vpop.f32.mrf.mxu0
    %14215 = vdwg.mxu0
    %14216 = vmatpush.bf16.msra.mxu0 %v10196
    %14217 = vmatpush.bf16.msra.mxu0 %v10172
    %14218 = vmatpush.bf16.msra.mxu0 %v10148
    %14219 = vmatpush.bf16.msra.mxu0 %v10124
    %14220 = vmatpush.bf16.msra.mxu0 %v10100
    %14221 = vmatpush.bf16.msra.mxu0 %v10076
    %14222 = vmatpush.bf16.msra.mxu0 %v10052
    %14223 = vmatpush.bf16.msra.mxu0 %v10028
    %14224 = vmatmul.bf16.gmra.mxu0 %v2462
    %v14225 = vpop.f32.mrf.mxu0
    %v14226 = vadd.f32 %v14213, %v14225
    %v14227 = vpop.f32.mrf.mxu0
    %14228 = vdwg.mxu0
    %v14229 = vxor.u32 %v12666, 2147483648
    %v14230 = vxor.u32 %v12770, 2147483648
    %v14231 = vxor.u32 %v12874, 2147483648
    %v14232 = vxor.u32 %v12978, 2147483648
    %v14233 = vmul.f32 %v14229, 1.442695
    %v14234 = vpow.pop %v14233
    %v14235 = vmul.f32 %v14230, 1.442695
    %v14236 = vpow.pop %v14235
    %v14237 = vmul.f32 %v14231, 1.442695
    %v14238 = vpow.pop %v14237
    %v14239 = vmul.f32 %v14232, 1.442695
    %v14240 = vpow.pop %v14239
    %v14241 = vadd.f32 %v14234, 1.0
    %v14242 = vadd.f32 %v14236, 1.0
    %v14243 = vadd.f32 %v14238, 1.0
    %v14244 = vadd.f32 %v14240, 1.0
    %v14245 = vrcp.pop %v14241
    %v14246 = vmul.f32 %v14241, %v14245
    %v14247 = vsub.f32 1.0, %v14246
    %v14248 = vmul.f32 %v14245, %v14247
    %v14249 = vadd.f32 %v14245, %v14248
    %vm14250 = vweird.f32 %v14241
    %vm14251 = vweird.f32 %v14245
    %vm14252 = vmor %vm14250, %vm14251
    %v14253 = vsel %vm14252, %v14245, %v14249
    %v14254 = vand.u32 2147483647, %v14241
    %vm14255 = vcmp.eq.f32.partialorder %v14254, 8.507059e+37
    %v14256 = vand.u32 %v14241, 2147483648
    %v14257 = vor.u32 1.1754944e-38, %v14256
    %v14258 = vsel %vm14255, %v14257, %v14253
    %v14259 = vmul.f32 1.0, %v14258
    %v14260 = vrcp.pop %v14242
    %v14261 = vmul.f32 %v14242, %v14260
    %v14262 = vsub.f32 1.0, %v14261
    %v14263 = vmul.f32 %v14260, %v14262
    %v14264 = vadd.f32 %v14260, %v14263
    %vm14265 = vweird.f32 %v14242
    %vm14266 = vweird.f32 %v14260
    %vm14267 = vmor %vm14265, %vm14266
    %v14268 = vsel %vm14267, %v14260, %v14264
    %v14269 = vand.u32 2147483647, %v14242
    %vm14270 = vcmp.eq.f32.partialorder %v14269, 8.507059e+37
    %v14271 = vand.u32 %v14242, 2147483648
    %v14272 = vor.u32 1.1754944e-38, %v14271
    %v14273 = vsel %vm14270, %v14272, %v14268
    %v14274 = vmul.f32 1.0, %v14273
    %v14275 = vrcp.pop %v14243
    %v14276 = vmul.f32 %v14243, %v14275
    %v14277 = vsub.f32 1.0, %v14276
    %v14278 = vmul.f32 %v14275, %v14277
    %v14279 = vadd.f32 %v14275, %v14278
    %vm14280 = vweird.f32 %v14243
    %vm14281 = vweird.f32 %v14275
    %vm14282 = vmor %vm14280, %vm14281
    %v14283 = vsel %vm14282, %v14275, %v14279
    %v14284 = vand.u32 2147483647, %v14243
    %vm14285 = vcmp.eq.f32.partialorder %v14284, 8.507059e+37
    %v14286 = vand.u32 %v14243, 2147483648
    %v14287 = vor.u32 1.1754944e-38, %v14286
    %v14288 = vsel %vm14285, %v14287, %v14283
    %v14289 = vmul.f32 1.0, %v14288
    %v14290 = vrcp.pop %v14244
    %v14291 = vmul.f32 %v14244, %v14290
    %v14292 = vsub.f32 1.0, %v14291
    %v14293 = vmul.f32 %v14290, %v14292
    %v14294 = vadd.f32 %v14290, %v14293
    %vm14295 = vweird.f32 %v14244
    %vm14296 = vweird.f32 %v14290
    %vm14297 = vmor %vm14295, %vm14296
    %v14298 = vsel %vm14297, %v14290, %v14294
    %v14299 = vand.u32 2147483647, %v14244
    %vm14300 = vcmp.eq.f32.partialorder %v14299, 8.507059e+37
    %v14301 = vand.u32 %v14244, 2147483648
    %v14302 = vor.u32 1.1754944e-38, %v14301
    %v14303 = vsel %vm14300, %v14302, %v14298
    %v14304 = vmul.f32 1.0, %v14303
    %v14305 = vxor.u32 %v11834, 2147483648
    %v14306 = vxor.u32 %v11938, 2147483648
    %v14307 = vxor.u32 %v12042, 2147483648
    %v14308 = vxor.u32 %v12146, 2147483648
    %v14309 = vmul.f32 %v14305, 1.442695
    %v14310 = vpow.pop %v14309
    %v14311 = vmul.f32 %v14306, 1.442695
    %v14312 = vpow.pop %v14311
    %v14313 = vmul.f32 %v14307, 1.442695
    %v14314 = vpow.pop %v14313
    %v14315 = vmul.f32 %v14308, 1.442695
    %v14316 = vpow.pop %v14315
    %v14317 = vadd.f32 %v14310, 1.0
    %v14318 = vadd.f32 %v14312, 1.0
    %v14319 = vadd.f32 %v14314, 1.0
    %v14320 = vadd.f32 %v14316, 1.0
    %v14321 = vrcp.pop %v14317
    %v14322 = vmul.f32 %v14317, %v14321
    %v14323 = vsub.f32 1.0, %v14322
    %v14324 = vmul.f32 %v14321, %v14323
    %v14325 = vadd.f32 %v14321, %v14324
    %vm14326 = vweird.f32 %v14317
    %vm14327 = vweird.f32 %v14321
    %vm14328 = vmor %vm14326, %vm14327
    %v14329 = vsel %vm14328, %v14321, %v14325
    %v14330 = vand.u32 2147483647, %v14317
    %vm14331 = vcmp.eq.f32.partialorder %v14330, 8.507059e+37
    %v14332 = vand.u32 %v14317, 2147483648
    %v14333 = vor.u32 1.1754944e-38, %v14332
    %v14334 = vsel %vm14331, %v14333, %v14329
    %v14335 = vmul.f32 1.0, %v14334
    %v14336 = vrcp.pop %v14318
    %v14337 = vmul.f32 %v14318, %v14336
    %v14338 = vsub.f32 1.0, %v14337
    %v14339 = vmul.f32 %v14336, %v14338
    %v14340 = vadd.f32 %v14336, %v14339
    %vm14341 = vweird.f32 %v14318
    %vm14342 = vweird.f32 %v14336
    %vm14343 = vmor %vm14341, %vm14342
    %v14344 = vsel %vm14343, %v14336, %v14340
    %v14345 = vand.u32 2147483647, %v14318
    %vm14346 = vcmp.eq.f32.partialorder %v14345, 8.507059e+37
    %v14347 = vand.u32 %v14318, 2147483648
    %v14348 = vor.u32 1.1754944e-38, %v14347
    %v14349 = vsel %vm14346, %v14348, %v14344
    %v14350 = vmul.f32 1.0, %v14349
    %v14351 = vrcp.pop %v14319
    %v14352 = vmul.f32 %v14319, %v14351
    %v14353 = vsub.f32 1.0, %v14352
    %v14354 = vmul.f32 %v14351, %v14353
    %v14355 = vadd.f32 %v14351, %v14354
    %vm14356 = vweird.f32 %v14319
    %vm14357 = vweird.f32 %v14351
    %vm14358 = vmor %vm14356, %vm14357
    %v14359 = vsel %vm14358, %v14351, %v14355
    %v14360 = vand.u32 2147483647, %v14319
    %vm14361 = vcmp.eq.f32.partialorder %v14360, 8.507059e+37
    %v14362 = vand.u32 %v14319, 2147483648
    %v14363 = vor.u32 1.1754944e-38, %v14362
    %v14364 = vsel %vm14361, %v14363, %v14359
    %v14365 = vmul.f32 1.0, %v14364
    %v14366 = vrcp.pop %v14320
    %v14367 = vmul.f32 %v14320, %v14366
    %v14368 = vsub.f32 1.0, %v14367
    %v14369 = vmul.f32 %v14366, %v14368
    %v14370 = vadd.f32 %v14366, %v14369
    %vm14371 = vweird.f32 %v14320
    %vm14372 = vweird.f32 %v14366
    %vm14373 = vmor %vm14371, %vm14372
    %v14374 = vsel %vm14373, %v14366, %v14370
    %v14375 = vand.u32 2147483647, %v14320
    %vm14376 = vcmp.eq.f32.partialorder %v14375, 8.507059e+37
    %v14377 = vand.u32 %v14320, 2147483648
    %v14378 = vor.u32 1.1754944e-38, %v14377
    %v14379 = vsel %vm14376, %v14378, %v14374
    %v14380 = vmul.f32 1.0, %v14379
    %v14381 = vtanh.pop %v12250
    %v14382 = vtanh.pop %v12354
    %v14383 = vtanh.pop %v12458
    %v14384 = vtanh.pop %v12562
    %v14385 = vmul.f32 %v14335, %v14381
    %v14386 = vmul.f32 %v14350, %v14382
    %v14387 = vmul.f32 %v14365, %v14383
    %v14388 = vmul.f32 %v14380, %v14384
    %v14389 = vtanh.pop %v14385
    %v14390 = vtanh.pop %v14386
    %v14391 = vtanh.pop %v14387
    %v14392 = vtanh.pop %v14388
    %v14393 = vmul.f32 %v14259, %v14389
    %v14394 = vmul.f32 %v14274, %v14390
    %v14395 = vmul.f32 %v14289, %v14391
    %v14396 = vmul.f32 %v14304, %v14392
    %v14397 = vxor.u32 %v13914, 2147483648
    %v14398 = vxor.u32 %v14018, 2147483648
    %v14399 = vxor.u32 %v14122, 2147483648
    %v14400 = vxor.u32 %v14226, 2147483648
    %v14401 = vmul.f32 %v14397, 1.442695
    %v14402 = vpow.pop %v14401
    %v14403 = vmul.f32 %v14398, 1.442695
    %v14404 = vpow.pop %v14403
    %v14405 = vmul.f32 %v14399, 1.442695
    %v14406 = vpow.pop %v14405
    %v14407 = vmul.f32 %v14400, 1.442695
    %v14408 = vpow.pop %v14407
    %v14409 = vadd.f32 %v14402, 1.0
    %v14410 = vadd.f32 %v14404, 1.0
    %v14411 = vadd.f32 %v14406, 1.0
    %v14412 = vadd.f32 %v14408, 1.0
    %v14413 = vrcp.pop %v14409
    %v14414 = vmul.f32 %v14409, %v14413
    %v14415 = vsub.f32 1.0, %v14414
    %v14416 = vmul.f32 %v14413, %v14415
    %v14417 = vadd.f32 %v14413, %v14416
    %vm14418 = vweird.f32 %v14409
    %vm14419 = vweird.f32 %v14413
    %vm14420 = vmor %vm14418, %vm14419
    %v14421 = vsel %vm14420, %v14413, %v14417
    %v14422 = vand.u32 2147483647, %v14409
    %vm14423 = vcmp.eq.f32.partialorder %v14422, 8.507059e+37
    %v14424 = vand.u32 %v14409, 2147483648
    %v14425 = vor.u32 1.1754944e-38, %v14424
    %v14426 = vsel %vm14423, %v14425, %v14421
    %v14427 = vmul.f32 1.0, %v14426
    %v14428 = vrcp.pop %v14410
    %v14429 = vmul.f32 %v14410, %v14428
    %v14430 = vsub.f32 1.0, %v14429
    %v14431 = vmul.f32 %v14428, %v14430
    %v14432 = vadd.f32 %v14428, %v14431
    %vm14433 = vweird.f32 %v14410
    %vm14434 = vweird.f32 %v14428
    %vm14435 = vmor %vm14433, %vm14434
    %v14436 = vsel %vm14435, %v14428, %v14432
    %v14437 = vand.u32 2147483647, %v14410
    %vm14438 = vcmp.eq.f32.partialorder %v14437, 8.507059e+37
    %v14439 = vand.u32 %v14410, 2147483648
    %v14440 = vor.u32 1.1754944e-38, %v14439
    %v14441 = vsel %vm14438, %v14440, %v14436
    %v14442 = vmul.f32 1.0, %v14441
    %v14443 = vrcp.pop %v14411
    %v14444 = vmul.f32 %v14411, %v14443
    %v14445 = vsub.f32 1.0, %v14444
    %v14446 = vmul.f32 %v14443, %v14445
    %v14447 = vadd.f32 %v14443, %v14446
    %vm14448 = vweird.f32 %v14411
    %vm14449 = vweird.f32 %v14443
    %vm14450 = vmor %vm14448, %vm14449
    %v14451 = vsel %vm14450, %v14443, %v14447
    %v14452 = vand.u32 2147483647, %v14411
    %vm14453 = vcmp.eq.f32.partialorder %v14452, 8.507059e+37
    %v14454 = vand.u32 %v14411, 2147483648
    %v14455 = vor.u32 1.1754944e-38, %v14454
    %v14456 = vsel %vm14453, %v14455, %v14451
    %v14457 = vmul.f32 1.0, %v14456
    %v14458 = vrcp.pop %v14412
    %v14459 = vmul.f32 %v14412, %v14458
    %v14460 = vsub.f32 1.0, %v14459
    %v14461 = vmul.f32 %v14458, %v14460
    %v14462 = vadd.f32 %v14458, %v14461
    %vm14463 = vweird.f32 %v14412
    %vm14464 = vweird.f32 %v14458
    %vm14465 = vmor %vm14463, %vm14464
    %v14466 = vsel %vm14465, %v14458, %v14462
    %v14467 = vand.u32 2147483647, %v14412
    %vm14468 = vcmp.eq.f32.partialorder %v14467, 8.507059e+37
    %v14469 = vand.u32 %v14412, 2147483648
    %v14470 = vor.u32 1.1754944e-38, %v14469
    %v14471 = vsel %vm14468, %v14470, %v14466
    %v14472 = vmul.f32 1.0, %v14471
    %v14473 = vxor.u32 %v13082, 2147483648
    %v14474 = vxor.u32 %v13186, 2147483648
    %v14475 = vxor.u32 %v13290, 2147483648
    %v14476 = vxor.u32 %v13394, 2147483648
    %v14477 = vmul.f32 %v14473, 1.442695
    %v14478 = vpow.pop %v14477
    %v14479 = vmul.f32 %v14474, 1.442695
    %v14480 = vpow.pop %v14479
    %v14481 = vmul.f32 %v14475, 1.442695
    %v14482 = vpow.pop %v14481
    %v14483 = vmul.f32 %v14476, 1.442695
    %v14484 = vpow.pop %v14483
    %v14485 = vadd.f32 %v14478, 1.0
    %v14486 = vadd.f32 %v14480, 1.0
    %v14487 = vadd.f32 %v14482, 1.0
    %v14488 = vadd.f32 %v14484, 1.0
    %v14489 = vrcp.pop %v14485
    %v14490 = vmul.f32 %v14485, %v14489
    %v14491 = vsub.f32 1.0, %v14490
    %v14492 = vmul.f32 %v14489, %v14491
    %v14493 = vadd.f32 %v14489, %v14492
    %vm14494 = vweird.f32 %v14485
    %vm14495 = vweird.f32 %v14489
    %vm14496 = vmor %vm14494, %vm14495
    %v14497 = vsel %vm14496, %v14489, %v14493
    %v14498 = vand.u32 2147483647, %v14485
    %vm14499 = vcmp.eq.f32.partialorder %v14498, 8.507059e+37
    %v14500 = vand.u32 %v14485, 2147483648
    %v14501 = vor.u32 1.1754944e-38, %v14500
    %v14502 = vsel %vm14499, %v14501, %v14497
    %v14503 = vmul.f32 1.0, %v14502
    %v14504 = vrcp.pop %v14486
    %v14505 = vmul.f32 %v14486, %v14504
    %v14506 = vsub.f32 1.0, %v14505
    %v14507 = vmul.f32 %v14504, %v14506
    %v14508 = vadd.f32 %v14504, %v14507
    %vm14509 = vweird.f32 %v14486
    %vm14510 = vweird.f32 %v14504
    %vm14511 = vmor %vm14509, %vm14510
    %v14512 = vsel %vm14511, %v14504, %v14508
    %v14513 = vand.u32 2147483647, %v14486
    %vm14514 = vcmp.eq.f32.partialorder %v14513, 8.507059e+37
    %v14515 = vand.u32 %v14486, 2147483648
    %v14516 = vor.u32 1.1754944e-38, %v14515
    %v14517 = vsel %vm14514, %v14516, %v14512
    %v14518 = vmul.f32 1.0, %v14517
    %v14519 = vrcp.pop %v14487
    %v14520 = vmul.f32 %v14487, %v14519
    %v14521 = vsub.f32 1.0, %v14520
    %v14522 = vmul.f32 %v14519, %v14521
    %v14523 = vadd.f32 %v14519, %v14522
    %vm14524 = vweird.f32 %v14487
    %vm14525 = vweird.f32 %v14519
    %vm14526 = vmor %vm14524, %vm14525
    %v14527 = vsel %vm14526, %v14519, %v14523
    %v14528 = vand.u32 2147483647, %v14487
    %vm14529 = vcmp.eq.f32.partialorder %v14528, 8.507059e+37
    %v14530 = vand.u32 %v14487, 2147483648
    %v14531 = vor.u32 1.1754944e-38, %v14530
    %v14532 = vsel %vm14529, %v14531, %v14527
    %v14533 = vmul.f32 1.0, %v14532
    %v14534 = vrcp.pop %v14488
    %v14535 = vmul.f32 %v14488, %v14534
    %v14536 = vsub.f32 1.0, %v14535
    %v14537 = vmul.f32 %v14534, %v14536
    %v14538 = vadd.f32 %v14534, %v14537
    %vm14539 = vweird.f32 %v14488
    %vm14540 = vweird.f32 %v14534
    %vm14541 = vmor %vm14539, %vm14540
    %v14542 = vsel %vm14541, %v14534, %v14538
    %v14543 = vand.u32 2147483647, %v14488
    %vm14544 = vcmp.eq.f32.partialorder %v14543, 8.507059e+37
    %v14545 = vand.u32 %v14488, 2147483648
    %v14546 = vor.u32 1.1754944e-38, %v14545
    %v14547 = vsel %vm14544, %v14546, %v14542
    %v14548 = vmul.f32 1.0, %v14547
    %v14549 = vtanh.pop %v13498
    %v14550 = vtanh.pop %v13602
    %v14551 = vtanh.pop %v13706
    %v14552 = vtanh.pop %v13810
    %v14553 = vmul.f32 %v14503, %v14549
    %v14554 = vmul.f32 %v14518, %v14550
    %v14555 = vmul.f32 %v14533, %v14551
    %v14556 = vmul.f32 %v14548, %v14552
    %v14557 = vtanh.pop %v14553
    %v14558 = vtanh.pop %v14554
    %v14559 = vtanh.pop %v14555
    %v14560 = vtanh.pop %v14556
    %v14561 = vmul.f32 %v14427, %v14557
    %v14562 = vmul.f32 %v14442, %v14558
    %v14563 = vmul.f32 %v14457, %v14559
    %v14564 = vmul.f32 %v14472, %v14560
    %v14565 = vmul.f32 %v1869, %v14393
    %v14566 = vmul.f32 %v1882, %v14394
    %v14567 = vmul.f32 %v1895, %v14395
    %v14568 = vmul.f32 %v1908, %v14396
    %v14569 = vmul.f32 %v2077, %v14561
    %v14570 = vmul.f32 %v2090, %v14562
    %v14571 = vmul.f32 %v2103, %v14563
    %v14572 = vmul.f32 %v2116, %v14564
    %14573 = vst [vmem:[#allocation11] sm:$0xff] %v14565
    %14574 = vst [vmem:[#allocation11 + $0x8] sm:$0xff] %v14566
    %14575 = vst [vmem:[#allocation11 + $0x10] sm:$0xff] %v14567
    %14576 = vst [vmem:[#allocation11 + $0x18] sm:$0xff] %v14568
    %14577 = vst [vmem:[#allocation11 + $0x20] sm:$0xff] %v14569
    %14578 = vst [vmem:[#allocation11 + $0x28] sm:$0xff] %v14570
    %14579 = vst [vmem:[#allocation11 + $0x30] sm:$0xff] %v14571
    %14580 = vst [vmem:[#allocation11 + $0x38] sm:$0xff] %v14572
    // Predicated region
    $region42: #{tpu_custom_call.1} parent=1 // pred_check
      _
    $region43: #{tpu_custom_call.1} parent=1 // pred_check_branch
      %14582 = sbr.rel (0) target = $region45
    $region44: #{tpu_custom_call.1} parent=1 // pred_region
      %14584 = vsyncadd [#allocation4], 0
      %s14586 = sshll.u32 [#allocation11], 4
      %s14587 = int_to_ptr.vmem [resolvable:$true] %s14586
      %s14588 = sshll.u32 %s5, 4
      %s14589 = int_to_ptr.hbm [resolvable:$true] %s14588
      %14591 = dma.vmem_to_hbm [thread:$0]  %s14587, 1024, %s14589, [#allocation4]
    $region45: #{tpu_custom_call.1} parent=1 // pred_fallthru
      _
    // Predicated region
    $region46: #{tpu_custom_call.1} parent=1 // pred_check
      _
    $region47: #{tpu_custom_call.1} parent=1 // pred_check_branch
      %14593 = sbr.rel (0) target = $region49
    $region48: #{tpu_custom_call.1} parent=1 // pred_region
      %14595 = dma.done [#allocation4], 1024
    $region49: #{tpu_custom_call.1} parent=1 // pred_fallthru
      _
    %14596 = vsyncpa [#allocation3], 1
    %14597 = vsyncpa [#allocation6], 1
    %14598 = vsyncpa [#allocation9], 1
    %14599 = vsyncpa [#allocation4], 1

</llo_original>
